<compile_context>
chip_gen: v6e
topology: v6e:2x2x1
jax: 0.10.0
libtpu: 0.0.40
codegen_flags: <defaults>
</compile_context>

<pallas_src>
import functools
import math

import jax
import jax.numpy as jnp
from jax.experimental import pallas as pl
from jax.experimental.pallas import tpu as pltpu

_MXU_DTYPE = jnp.bfloat16   # MXU operand dtype; accumulation stays f32.
_LN_EPS = 1e-5              # PyTorch LayerNorm default (biased variance).

# Row layout of the packed per-layer (L, 16, D) vector slab.
_R_BQ, _R_BK, _R_BV, _R_BO = 0, 1, 2, 3          # self-attn biases
_R_CBQ, _R_CBK, _R_CBV, _R_CBO = 4, 5, 6, 7      # cross-attn biases
_R_L2B = 8                                       # linear2 bias
_R_N1G, _R_N1B = 9, 10                           # norm1 gamma / beta
_R_N2G, _R_N2B = 11, 12                          # norm2 gamma / beta
_R_N3G, _R_N3B = 13, 14                          # norm3 gamma / beta
# row 15: padding (keeps the slab 16 rows = 2 sublane groups)


def _layer_norm_f32(y, gamma, beta):
    """LayerNorm over the last dim; y is f32, gamma/beta are (1, D)."""
    mean = jnp.mean(y, axis=-1, keepdims=True)
    yc = y - mean
    var = jnp.mean(yc * yc, axis=-1, keepdims=True)
    inv = jax.lax.rsqrt(var + _LN_EPS)
    return yc * inv * gamma + beta


# ---------------------------------------------------------------------------
# Single fused kernel: all decoder layers + final LayerNorm.
# ---------------------------------------------------------------------------
def _decoder_kernel(x_ref, qpos_ref, mem_ref, pos_ref,
                    attn_w_ref, lin1_w_ref, lin2_w_ref, lin1_b_ref,
                    vecs_ref, normf_ref, o_ref,
                    *, num_layers, num_heads, batch, tq, tk, scale):
    D = x_ref.shape[-1]
    dh = D // num_heads

    x = x_ref[...].astype(jnp.float32)            # (B*Tq, D) running activation
    qpos = qpos_ref[...].astype(jnp.float32)      # (B*Tq, D)
    mem = mem_ref[...].astype(jnp.float32)        # (B*Tk, D)
    pos = pos_ref[...].astype(jnp.float32)        # (B*Tk, D)
    lin1_b = lin1_b_ref[...]                      # (L, FF) f32
    vecs = vecs_ref[...]                          # (L, 16, D) f32

    # Cross-attention key/value sources: computed ONCE, reused by every layer.
    memk_c = (mem + pos).astype(_MXU_DTYPE)
    memv_c = mem.astype(_MXU_DTYPE)

    def attention(x_res, q_c, k_c, v_c, w4, bq, bk, bv, bo, g, be, t_q, t_k):
        """x_res f32 (B*t_q, D); q_c/k_c/v_c bf16; w4 bf16 slab (4, D, D)
        ordered [wq, wk, wv, wo]; returns LN(x_res + out_proj(MHA))."""
        # Full-width, batch-folded projections (M = B*t, K = N = D).
        q = jnp.dot(q_c, w4[0], preferred_element_type=jnp.float32) + bq
        k = jnp.dot(k_c, w4[1], preferred_element_type=jnp.float32) + bk
        v = jnp.dot(v_c, w4[2], preferred_element_type=jnp.float32) + bv

        outs = []
        for b in range(batch):                        # unrolled at trace time
            q_b = (q[b * t_q:(b + 1) * t_q] * scale).astype(_MXU_DTYPE)
            k_b = k[b * t_k:(b + 1) * t_k].astype(_MXU_DTYPE)
            v_b = v[b * t_k:(b + 1) * t_k].astype(_MXU_DTYPE)
            heads = []
            for h in range(num_heads):                # unrolled at trace time
                sl = slice(h * dh, (h + 1) * dh)
                # scores: contract head dims directly (no materialized k.T)
                s = jax.lax.dot_general(
                    q_b[:, sl], k_b[:, sl],
                    (((1,), (1,)), ((), ())),
                    preferred_element_type=jnp.float32)        # (t_q, t_k)
                s = s - jnp.max(s, axis=-1, keepdims=True)
                p = jnp.exp(s)
                p = p / jnp.sum(p, axis=-1, keepdims=True)      # exact softmax
                heads.append(jnp.dot(p.astype(_MXU_DTYPE), v_b[:, sl],
                                     preferred_element_type=jnp.float32))
            outs.append(jnp.concatenate(heads, axis=-1))        # (t_q, D)
        attn = jnp.concatenate(outs, axis=0)                    # (B*t_q, D)

        proj = jnp.dot(attn.astype(_MXU_DTYPE), w4[3],
                       preferred_element_type=jnp.float32) + bo
        return _layer_norm_f32(proj + x_res, g, be)

    for l in range(num_layers):                       # unrolled at trace time
        wl = attn_w_ref[l]                            # (8, D, D) bf16
        vl = vecs[l]                                  # (16, D) f32

        # --- self-attention: q = k = x + query_pos, v = x, residual = x ------
        qk_c = (x + qpos).astype(_MXU_DTYPE)
        x = attention(
            x, qk_c, qk_c, x.astype(_MXU_DTYPE), wl[0:4],
            vl[_R_BQ:_R_BQ + 1], vl[_R_BK:_R_BK + 1],
            vl[_R_BV:_R_BV + 1], vl[_R_BO:_R_BO + 1],
            vl[_R_N1G:_R_N1G + 1], vl[_R_N1B:_R_N1B + 1], tq, tq)

        # --- cross-attention: q = x + query_pos, k = memory + pos, v = memory
        x = attention(
            x, (x + qpos).astype(_MXU_DTYPE), memk_c, memv_c, wl[4:8],
            vl[_R_CBQ:_R_CBQ + 1], vl[_R_CBK:_R_CBK + 1],
            vl[_R_CBV:_R_CBV + 1], vl[_R_CBO:_R_CBO + 1],
            vl[_R_N2G:_R_N2G + 1], vl[_R_N2B:_R_N2B + 1], tq, tk)

        # --- feed-forward: LN(x + lin2(relu(lin1(x)))) ------------------------
        hid = jnp.dot(x.astype(_MXU_DTYPE), lin1_w_ref[l],
                      preferred_element_type=jnp.float32) + lin1_b[l:l + 1]
        hid = jnp.maximum(hid, 0.0)
        y = jnp.dot(hid.astype(_MXU_DTYPE), lin2_w_ref[l],
                    preferred_element_type=jnp.float32) + vl[_R_L2B:_R_L2B + 1]
        x = _layer_norm_f32(y + x, vl[_R_N3G:_R_N3G + 1], vl[_R_N3B:_R_N3B + 1])

    # --- final self.norm (epilogue) ------------------------------------------
    nf = normf_ref[...]                               # (2, D): [gamma, beta]
    o_ref[...] = _layer_norm_f32(x, nf[0:1], nf[1:2]).astype(o_ref.dtype)


# ---------------------------------------------------------------------------
# Module glue: one boundary transpose/flatten, ONE pallas_call.
# ---------------------------------------------------------------------------
def transformer_decoder_forward(tgt, memory, params, num_heads, pos, query_pos):
    T, B, D = tgt.shape
    S = memory.shape[0]
    num_layers = params["attn_w"].shape[0]
    dh = D // num_heads
    scale = 1.0 / math.sqrt(dh)

    # one-time layout change (L, B, D) -> (B*L, D): batch-folded slabs
    x = jnp.transpose(tgt, (1, 0, 2)).reshape(B * T, D)
    qpos = jnp.transpose(query_pos, (1, 0, 2)).reshape(B * T, D)
    mem = jnp.transpose(memory, (1, 0, 2)).reshape(B * S, D)
    posb = jnp.transpose(pos, (1, 0, 2)).reshape(B * S, D)

    def full(a):
        nd = a.ndim
        return pl.BlockSpec(a.shape, lambda i, _nd=nd: (0,) * _nd)

    args = (x, qpos, mem, posb,
            params["attn_w"], params["lin1_w"], params["lin2_w"],
            params["lin1_b"], params["vecs"], params["norm_f"])

    kern = functools.partial(
        _decoder_kernel, num_layers=num_layers, num_heads=num_heads,
        batch=B, tq=T, tk=S, scale=scale)

    out2d = pl.pallas_call(
        kern,
        out_shape=jax.ShapeDtypeStruct((B * T, D), tgt.dtype),
        grid=(1,),
        in_specs=[full(a) for a in args],
        out_specs=pl.BlockSpec((B * T, D), lambda i: (0, 0)),
        compiler_params=pltpu.CompilerParams(
            dimension_semantics=("arbitrary",)),
    )(*args)

    out = jnp.transpose(out2d.reshape(B, T, D), (1, 0, 2))   # back to (T, B, D)
    return out[None, ...]                                    # .unsqueeze(0)


# ---------------------------------------------------------------------------
# Deterministic parameter init (packed, weights pre-cast to bf16).
#   attn_w: (L, 8, D, D) bf16  rows [self wq,wk,wv,wo, cross wq,wk,wv,wo]
#   lin1_w: (L, D, FF) bf16, lin2_w: (L, FF, D) bf16
#   lin1_b: (L, FF) f32, vecs: (L, 16, D) f32 (biases + LN params, see _R_*)
#   norm_f: (2, D) f32 (final LayerNorm gamma, beta)
# ---------------------------------------------------------------------------
def init_params(key, num_layers, d_model, nhead, dim_ff):
    L, D, FF = num_layers, d_model, dim_ff
    ks = jax.random.split(key, 3)

    def dense(k, shape):
        return (jax.random.normal(k, shape, jnp.float32) * 0.02).astype(_MXU_DTYPE)

    attn_w = dense(ks[0], (L, 8, D, D))
    lin1_w = dense(ks[1], (L, D, FF))
    lin2_w = dense(ks[2], (L, FF, D))
    lin1_b = jnp.zeros((L, FF), jnp.float32)

    vecs = jnp.zeros((L, 16, D), jnp.float32)
    for r in (_R_N1G, _R_N2G, _R_N3G):               # LayerNorm gammas = 1
        vecs = vecs.at[:, r, :].set(1.0)

    norm_f = jnp.concatenate(
        [jnp.ones((1, D), jnp.float32), jnp.zeros((1, D), jnp.float32)], axis=0)

    return {"attn_w": attn_w, "lin1_w": lin1_w, "lin2_w": lin2_w,
            "lin1_b": lin1_b, "vecs": vecs, "norm_f": norm_f}


# ---------------------------------------------------------------------------
if __name__ == "__main__":
    num_layers = 2
    d_model = 32
    nhead = 4
    dim_ff = 64
    T, S, B = 8, 16, 2      # num queries, memory length, batch

    key = jax.random.PRNGKey(0)
    k_tgt, k_mem, k_pos, k_qpos, k_par = jax.random.split(key, 5)

    tgt = jax.random.normal(k_tgt, (T, B, d_model), jnp.float32)
    memory = jax.random.normal(k_mem, (S, B, d_model), jnp.float32)
    pos = jax.random.normal(k_pos, (S, B, d_model), jnp.float32)
    query_pos = jax.random.normal(k_qpos, (T, B, d_model), jnp.float32)

    params = init_params(k_par, num_layers, d_model, nhead, dim_ff)

    @jax.jit
    def fwd(tgt, memory, pos, query_pos, params):
        return transformer_decoder_forward(tgt, memory, params, nhead, pos, query_pos)

    out = fwd(tgt, memory, pos, query_pos, params)
    out = jax.block_until_ready(out)
    assert out.shape == (1, T, B, d_model), out.shape
    print("KERNEL_OK")
</pallas_src>

<mosaic_0001>
module attributes {stable_mosaic.version = 11 : i64} {
  func.func @_decoder_kernel(%arg0: i32, %arg1: memref<16x32xf32, #tpu.memory_space<vmem>>, %arg2: memref<16x32xf32, #tpu.memory_space<vmem>>, %arg3: memref<32x32xf32, #tpu.memory_space<vmem>>, %arg4: memref<32x32xf32, #tpu.memory_space<vmem>>, %arg5: memref<2x8x32x32xbf16, #tpu.memory_space<vmem>>, %arg6: memref<2x32x64xbf16, #tpu.memory_space<vmem>>, %arg7: memref<2x64x32xbf16, #tpu.memory_space<vmem>>, %arg8: memref<2x64xf32, #tpu.memory_space<vmem>>, %arg9: memref<2x16x32xf32, #tpu.memory_space<vmem>>, %arg10: memref<2x32xf32, #tpu.memory_space<vmem>>, %arg11: memref<16x32xf32, #tpu.memory_space<vmem>>) attributes {dimension_semantics = [#tpu.dimension_semantics<arbitrary>], iteration_bounds = array<i64: 1>, scalar_prefetch = 0 : i64, scratch_operands = 0 : i64, tpu.core_type = #tpu.core_type<tc>, window_params = [{pipeline_mode = #tpu.pipeline_mode<synchronous>, transform_indices = @transform_0, window_bounds = array<i64: 16, 32>}, {pipeline_mode = #tpu.pipeline_mode<synchronous>, transform_indices = @transform_1, window_bounds = array<i64: 16, 32>}, {pipeline_mode = #tpu.pipeline_mode<synchronous>, transform_indices = @transform_2, window_bounds = array<i64: 32, 32>}, {pipeline_mode = #tpu.pipeline_mode<synchronous>, transform_indices = @transform_3, window_bounds = array<i64: 32, 32>}, {pipeline_mode = #tpu.pipeline_mode<synchronous>, transform_indices = @transform_4, window_bounds = array<i64: 2, 8, 32, 32>}, {pipeline_mode = #tpu.pipeline_mode<synchronous>, transform_indices = @transform_5, window_bounds = array<i64: 2, 32, 64>}, {pipeline_mode = #tpu.pipeline_mode<synchronous>, transform_indices = @transform_6, window_bounds = array<i64: 2, 64, 32>}, {pipeline_mode = #tpu.pipeline_mode<synchronous>, transform_indices = @transform_7, window_bounds = array<i64: 2, 64>}, {pipeline_mode = #tpu.pipeline_mode<synchronous>, transform_indices = @transform_8, window_bounds = array<i64: 2, 16, 32>}, {pipeline_mode = #tpu.pipeline_mode<synchronous>, transform_indices = @transform_9, window_bounds = array<i64: 2, 32>}, {pipeline_mode = #tpu.pipeline_mode<synchronous>, transform_indices = @transform_10, window_bounds = array<i64: 16, 32>}]} {
    %c0 = arith.constant 0 : index
    %c0_0 = arith.constant 0 : index
    %0 = vector.load %arg1[%c0, %c0_0] : memref<16x32xf32, #tpu.memory_space<vmem>>, vector<16x32xf32>
    %c0_1 = arith.constant 0 : index
    %c0_2 = arith.constant 0 : index
    %1 = vector.load %arg2[%c0_1, %c0_2] : memref<16x32xf32, #tpu.memory_space<vmem>>, vector<16x32xf32>
    %c0_3 = arith.constant 0 : index
    %c0_4 = arith.constant 0 : index
    %2 = vector.load %arg3[%c0_3, %c0_4] : memref<32x32xf32, #tpu.memory_space<vmem>>, vector<32x32xf32>
    %c0_5 = arith.constant 0 : index
    %c0_6 = arith.constant 0 : index
    %3 = vector.load %arg4[%c0_5, %c0_6] : memref<32x32xf32, #tpu.memory_space<vmem>>, vector<32x32xf32>
    %c0_7 = arith.constant 0 : index
    %c0_8 = arith.constant 0 : index
    %4 = vector.load %arg8[%c0_7, %c0_8] : memref<2x64xf32, #tpu.memory_space<vmem>>, vector<2x64xf32>
    %c0_9 = arith.constant 0 : index
    %c0_10 = arith.constant 0 : index
    %c0_11 = arith.constant 0 : index
    %5 = vector.load %arg9[%c0_9, %c0_10, %c0_11] : memref<2x16x32xf32, #tpu.memory_space<vmem>>, vector<2x16x32xf32>
    %6 = arith.addf %2, %3 : vector<32x32xf32>
    %7 = arith.truncf %6 : vector<32x32xf32> to vector<32x32xbf16>
    %8 = arith.truncf %2 : vector<32x32xf32> to vector<32x32xbf16>
    %c0_12 = arith.constant 0 : index
    %c0_13 = arith.constant 0 : index
    %c0_14 = arith.constant 0 : index
    %c0_15 = arith.constant 0 : index
    %9 = vector.load %arg5[%c0_12, %c0_13, %c0_14, %c0_15] : memref<2x8x32x32xbf16, #tpu.memory_space<vmem>>, vector<1x8x32x32xbf16>
    %10 = vector.shape_cast %9 : vector<1x8x32x32xbf16> to vector<8x32x32xbf16>
    %11 = vector.extract_strided_slice %5 {offsets = [0, 0, 0], sizes = [1, 16, 32], strides = [1, 1, 1]} : vector<2x16x32xf32> to vector<1x16x32xf32>
    %12 = vector.shape_cast %11 : vector<1x16x32xf32> to vector<16x32xf32>
    %13 = arith.addf %0, %1 : vector<16x32xf32>
    %14 = arith.truncf %13 : vector<16x32xf32> to vector<16x32xbf16>
    %15 = arith.truncf %0 : vector<16x32xf32> to vector<16x32xbf16>
    %16 = vector.extract_strided_slice %10 {offsets = [0, 0, 0], sizes = [4, 32, 32], strides = [1, 1, 1]} : vector<8x32x32xbf16> to vector<4x32x32xbf16>
    %17 = vector.extract_strided_slice %12 {offsets = [0, 0], sizes = [1, 32], strides = [1, 1]} : vector<16x32xf32> to vector<1x32xf32>
    %18 = vector.extract_strided_slice %12 {offsets = [1, 0], sizes = [1, 32], strides = [1, 1]} : vector<16x32xf32> to vector<1x32xf32>
    %19 = vector.extract_strided_slice %12 {offsets = [2, 0], sizes = [1, 32], strides = [1, 1]} : vector<16x32xf32> to vector<1x32xf32>
    %20 = vector.extract_strided_slice %12 {offsets = [3, 0], sizes = [1, 32], strides = [1, 1]} : vector<16x32xf32> to vector<1x32xf32>
    %21 = vector.extract_strided_slice %12 {offsets = [9, 0], sizes = [1, 32], strides = [1, 1]} : vector<16x32xf32> to vector<1x32xf32>
    %22 = vector.extract_strided_slice %12 {offsets = [10, 0], sizes = [1, 32], strides = [1, 1]} : vector<16x32xf32> to vector<1x32xf32>
    %23 = vector.extract_strided_slice %16 {offsets = [0, 0, 0], sizes = [1, 32, 32], strides = [1, 1, 1]} : vector<4x32x32xbf16> to vector<1x32x32xbf16>
    %24 = vector.shape_cast %23 : vector<1x32x32xbf16> to vector<32x32xbf16>
    %cst = arith.constant dense<0.000000e+00> : vector<16x32xf32>
    %25 = tpu.matmul %14, %24, %cst {dimension_numbers = #tpu.dot_dimension_numbers<[1], [0], [0], [1], [0, 0, 1, 1], [], []>} : vector<16x32xbf16>, vector<32x32xbf16>, vector<16x32xf32> -> vector<16x32xf32>
    %26 = vector.broadcast %17 : vector<1x32xf32> to vector<16x32xf32>
    %27 = arith.addf %25, %26 : vector<16x32xf32>
    %28 = vector.extract_strided_slice %16 {offsets = [1, 0, 0], sizes = [1, 32, 32], strides = [1, 1, 1]} : vector<4x32x32xbf16> to vector<1x32x32xbf16>
    %29 = vector.shape_cast %28 : vector<1x32x32xbf16> to vector<32x32xbf16>
    %cst_16 = arith.constant dense<0.000000e+00> : vector<16x32xf32>
    %30 = tpu.matmul %14, %29, %cst_16 {dimension_numbers = #tpu.dot_dimension_numbers<[1], [0], [0], [1], [0, 0, 1, 1], [], []>} : vector<16x32xbf16>, vector<32x32xbf16>, vector<16x32xf32> -> vector<16x32xf32>
    %31 = vector.broadcast %18 : vector<1x32xf32> to vector<16x32xf32>
    %32 = arith.addf %30, %31 : vector<16x32xf32>
    %33 = vector.extract_strided_slice %16 {offsets = [2, 0, 0], sizes = [1, 32, 32], strides = [1, 1, 1]} : vector<4x32x32xbf16> to vector<1x32x32xbf16>
    %34 = vector.shape_cast %33 : vector<1x32x32xbf16> to vector<32x32xbf16>
    %cst_17 = arith.constant dense<0.000000e+00> : vector<16x32xf32>
    %35 = tpu.matmul %15, %34, %cst_17 {dimension_numbers = #tpu.dot_dimension_numbers<[1], [0], [0], [1], [0, 0, 1, 1], [], []>} : vector<16x32xbf16>, vector<32x32xbf16>, vector<16x32xf32> -> vector<16x32xf32>
    %36 = vector.broadcast %19 : vector<1x32xf32> to vector<16x32xf32>
    %37 = arith.addf %35, %36 : vector<16x32xf32>
    %38 = vector.extract_strided_slice %27 {offsets = [0, 0], sizes = [8, 32], strides = [1, 1]} : vector<16x32xf32> to vector<8x32xf32>
    %cst_18 = arith.constant 0.353553385 : f32
    %39 = vector.broadcast %cst_18 : f32 to vector<8x32xf32>
    %40 = arith.mulf %38, %39 : vector<8x32xf32>
    %41 = arith.truncf %40 : vector<8x32xf32> to vector<8x32xbf16>
    %42 = vector.extract_strided_slice %32 {offsets = [0, 0], sizes = [8, 32], strides = [1, 1]} : vector<16x32xf32> to vector<8x32xf32>
    %43 = arith.truncf %42 : vector<8x32xf32> to vector<8x32xbf16>
    %44 = vector.extract_strided_slice %37 {offsets = [0, 0], sizes = [8, 32], strides = [1, 1]} : vector<16x32xf32> to vector<8x32xf32>
    %45 = arith.truncf %44 : vector<8x32xf32> to vector<8x32xbf16>
    %46 = vector.extract_strided_slice %41 {offsets = [0, 0], sizes = [8, 8], strides = [1, 1]} : vector<8x32xbf16> to vector<8x8xbf16>
    %47 = vector.extract_strided_slice %43 {offsets = [0, 0], sizes = [8, 8], strides = [1, 1]} : vector<8x32xbf16> to vector<8x8xbf16>
    %cst_19 = arith.constant dense<0.000000e+00> : vector<8x8xf32>
    %48 = tpu.matmul %46, %47, %cst_19 {dimension_numbers = #tpu.dot_dimension_numbers<[1], [1], [0], [0], [0, 0, 1, 0], [], []>} : vector<8x8xbf16>, vector<8x8xbf16>, vector<8x8xf32> -> vector<8x8xf32>
    %cst_20 = arith.constant dense<0xFF800000> : vector<8xf32>
    %49 = vector.multi_reduction <maximumf>, %48, %cst_20 [1] : vector<8x8xf32> to vector<8xf32>
    %50 = vector.shape_cast %49 : vector<8xf32> to vector<8x1xf32>
    %51 = vector.broadcast %50 : vector<8x1xf32> to vector<8x8xf32>
    %52 = arith.subf %48, %51 : vector<8x8xf32>
    %53 = math.exp %52 : vector<8x8xf32>
    %cst_21 = arith.constant dense<0.000000e+00> : vector<8xf32>
    %54 = vector.multi_reduction <add>, %53, %cst_21 [1] : vector<8x8xf32> to vector<8xf32>
    %55 = vector.shape_cast %54 : vector<8xf32> to vector<8x1xf32>
    %56 = vector.broadcast %55 : vector<8x1xf32> to vector<8x8xf32>
    %57 = arith.divf %53, %56 : vector<8x8xf32>
    %58 = arith.truncf %57 : vector<8x8xf32> to vector<8x8xbf16>
    %59 = vector.extract_strided_slice %45 {offsets = [0, 0], sizes = [8, 8], strides = [1, 1]} : vector<8x32xbf16> to vector<8x8xbf16>
    %cst_22 = arith.constant dense<0.000000e+00> : vector<8x8xf32>
    %60 = tpu.matmul %58, %59, %cst_22 {dimension_numbers = #tpu.dot_dimension_numbers<[1], [0], [0], [1], [0, 0, 1, 1], [], []>} : vector<8x8xbf16>, vector<8x8xbf16>, vector<8x8xf32> -> vector<8x8xf32>
    %61 = vector.extract_strided_slice %41 {offsets = [0, 8], sizes = [8, 8], strides = [1, 1]} : vector<8x32xbf16> to vector<8x8xbf16>
    %62 = vector.extract_strided_slice %43 {offsets = [0, 8], sizes = [8, 8], strides = [1, 1]} : vector<8x32xbf16> to vector<8x8xbf16>
    %cst_23 = arith.constant dense<0.000000e+00> : vector<8x8xf32>
    %63 = tpu.matmul %61, %62, %cst_23 {dimension_numbers = #tpu.dot_dimension_numbers<[1], [1], [0], [0], [0, 0, 1, 0], [], []>} : vector<8x8xbf16>, vector<8x8xbf16>, vector<8x8xf32> -> vector<8x8xf32>
    %cst_24 = arith.constant dense<0xFF800000> : vector<8xf32>
    %64 = vector.multi_reduction <maximumf>, %63, %cst_24 [1] : vector<8x8xf32> to vector<8xf32>
    %65 = vector.shape_cast %64 : vector<8xf32> to vector<8x1xf32>
    %66 = vector.broadcast %65 : vector<8x1xf32> to vector<8x8xf32>
    %67 = arith.subf %63, %66 : vector<8x8xf32>
    %68 = math.exp %67 : vector<8x8xf32>
    %cst_25 = arith.constant dense<0.000000e+00> : vector<8xf32>
    %69 = vector.multi_reduction <add>, %68, %cst_25 [1] : vector<8x8xf32> to vector<8xf32>
    %70 = vector.shape_cast %69 : vector<8xf32> to vector<8x1xf32>
    %71 = vector.broadcast %70 : vector<8x1xf32> to vector<8x8xf32>
    %72 = arith.divf %68, %71 : vector<8x8xf32>
    %73 = arith.truncf %72 : vector<8x8xf32> to vector<8x8xbf16>
    %74 = vector.extract_strided_slice %45 {offsets = [0, 8], sizes = [8, 8], strides = [1, 1]} : vector<8x32xbf16> to vector<8x8xbf16>
    %cst_26 = arith.constant dense<0.000000e+00> : vector<8x8xf32>
    %75 = tpu.matmul %73, %74, %cst_26 {dimension_numbers = #tpu.dot_dimension_numbers<[1], [0], [0], [1], [0, 0, 1, 1], [], []>} : vector<8x8xbf16>, vector<8x8xbf16>, vector<8x8xf32> -> vector<8x8xf32>
    %76 = vector.extract_strided_slice %41 {offsets = [0, 16], sizes = [8, 8], strides = [1, 1]} : vector<8x32xbf16> to vector<8x8xbf16>
    %77 = vector.extract_strided_slice %43 {offsets = [0, 16], sizes = [8, 8], strides = [1, 1]} : vector<8x32xbf16> to vector<8x8xbf16>
    %cst_27 = arith.constant dense<0.000000e+00> : vector<8x8xf32>
    %78 = tpu.matmul %76, %77, %cst_27 {dimension_numbers = #tpu.dot_dimension_numbers<[1], [1], [0], [0], [0, 0, 1, 0], [], []>} : vector<8x8xbf16>, vector<8x8xbf16>, vector<8x8xf32> -> vector<8x8xf32>
    %cst_28 = arith.constant dense<0xFF800000> : vector<8xf32>
    %79 = vector.multi_reduction <maximumf>, %78, %cst_28 [1] : vector<8x8xf32> to vector<8xf32>
    %80 = vector.shape_cast %79 : vector<8xf32> to vector<8x1xf32>
    %81 = vector.broadcast %80 : vector<8x1xf32> to vector<8x8xf32>
    %82 = arith.subf %78, %81 : vector<8x8xf32>
    %83 = math.exp %82 : vector<8x8xf32>
    %cst_29 = arith.constant dense<0.000000e+00> : vector<8xf32>
    %84 = vector.multi_reduction <add>, %83, %cst_29 [1] : vector<8x8xf32> to vector<8xf32>
    %85 = vector.shape_cast %84 : vector<8xf32> to vector<8x1xf32>
    %86 = vector.broadcast %85 : vector<8x1xf32> to vector<8x8xf32>
    %87 = arith.divf %83, %86 : vector<8x8xf32>
    %88 = arith.truncf %87 : vector<8x8xf32> to vector<8x8xbf16>
    %89 = vector.extract_strided_slice %45 {offsets = [0, 16], sizes = [8, 8], strides = [1, 1]} : vector<8x32xbf16> to vector<8x8xbf16>
    %cst_30 = arith.constant dense<0.000000e+00> : vector<8x8xf32>
    %90 = tpu.matmul %88, %89, %cst_30 {dimension_numbers = #tpu.dot_dimension_numbers<[1], [0], [0], [1], [0, 0, 1, 1], [], []>} : vector<8x8xbf16>, vector<8x8xbf16>, vector<8x8xf32> -> vector<8x8xf32>
    %91 = vector.extract_strided_slice %41 {offsets = [0, 24], sizes = [8, 8], strides = [1, 1]} : vector<8x32xbf16> to vector<8x8xbf16>
    %92 = vector.extract_strided_slice %43 {offsets = [0, 24], sizes = [8, 8], strides = [1, 1]} : vector<8x32xbf16> to vector<8x8xbf16>
    %cst_31 = arith.constant dense<0.000000e+00> : vector<8x8xf32>
    %93 = tpu.matmul %91, %92, %cst_31 {dimension_numbers = #tpu.dot_dimension_numbers<[1], [1], [0], [0], [0, 0, 1, 0], [], []>} : vector<8x8xbf16>, vector<8x8xbf16>, vector<8x8xf32> -> vector<8x8xf32>
    %cst_32 = arith.constant dense<0xFF800000> : vector<8xf32>
    %94 = vector.multi_reduction <maximumf>, %93, %cst_32 [1] : vector<8x8xf32> to vector<8xf32>
    %95 = vector.shape_cast %94 : vector<8xf32> to vector<8x1xf32>
    %96 = vector.broadcast %95 : vector<8x1xf32> to vector<8x8xf32>
    %97 = arith.subf %93, %96 : vector<8x8xf32>
    %98 = math.exp %97 : vector<8x8xf32>
    %cst_33 = arith.constant dense<0.000000e+00> : vector<8xf32>
    %99 = vector.multi_reduction <add>, %98, %cst_33 [1] : vector<8x8xf32> to vector<8xf32>
    %100 = vector.shape_cast %99 : vector<8xf32> to vector<8x1xf32>
    %101 = vector.broadcast %100 : vector<8x1xf32> to vector<8x8xf32>
    %102 = arith.divf %98, %101 : vector<8x8xf32>
    %103 = arith.truncf %102 : vector<8x8xf32> to vector<8x8xbf16>
    %104 = vector.extract_strided_slice %45 {offsets = [0, 24], sizes = [8, 8], strides = [1, 1]} : vector<8x32xbf16> to vector<8x8xbf16>
    %cst_34 = arith.constant dense<0.000000e+00> : vector<8x8xf32>
    %105 = tpu.matmul %103, %104, %cst_34 {dimension_numbers = #tpu.dot_dimension_numbers<[1], [0], [0], [1], [0, 0, 1, 1], [], []>} : vector<8x8xbf16>, vector<8x8xbf16>, vector<8x8xf32> -> vector<8x8xf32>
    %106 = tpu.concatenate %60, %75, %90, %105 in 1 : vector<8x8xf32>, vector<8x8xf32>, vector<8x8xf32>, vector<8x8xf32> -> vector<8x32xf32>
    %107 = vector.extract_strided_slice %27 {offsets = [8, 0], sizes = [8, 32], strides = [1, 1]} : vector<16x32xf32> to vector<8x32xf32>
    %cst_35 = arith.constant 0.353553385 : f32
    %108 = vector.broadcast %cst_35 : f32 to vector<8x32xf32>
    %109 = arith.mulf %107, %108 : vector<8x32xf32>
    %110 = arith.truncf %109 : vector<8x32xf32> to vector<8x32xbf16>
    %111 = vector.extract_strided_slice %32 {offsets = [8, 0], sizes = [8, 32], strides = [1, 1]} : vector<16x32xf32> to vector<8x32xf32>
    %112 = arith.truncf %111 : vector<8x32xf32> to vector<8x32xbf16>
    %113 = vector.extract_strided_slice %37 {offsets = [8, 0], sizes = [8, 32], strides = [1, 1]} : vector<16x32xf32> to vector<8x32xf32>
    %114 = arith.truncf %113 : vector<8x32xf32> to vector<8x32xbf16>
    %115 = vector.extract_strided_slice %110 {offsets = [0, 0], sizes = [8, 8], strides = [1, 1]} : vector<8x32xbf16> to vector<8x8xbf16>
    %116 = vector.extract_strided_slice %112 {offsets = [0, 0], sizes = [8, 8], strides = [1, 1]} : vector<8x32xbf16> to vector<8x8xbf16>
    %cst_36 = arith.constant dense<0.000000e+00> : vector<8x8xf32>
    %117 = tpu.matmul %115, %116, %cst_36 {dimension_numbers = #tpu.dot_dimension_numbers<[1], [1], [0], [0], [0, 0, 1, 0], [], []>} : vector<8x8xbf16>, vector<8x8xbf16>, vector<8x8xf32> -> vector<8x8xf32>
    %cst_37 = arith.constant dense<0xFF800000> : vector<8xf32>
    %118 = vector.multi_reduction <maximumf>, %117, %cst_37 [1] : vector<8x8xf32> to vector<8xf32>
    %119 = vector.shape_cast %118 : vector<8xf32> to vector<8x1xf32>
    %120 = vector.broadcast %119 : vector<8x1xf32> to vector<8x8xf32>
    %121 = arith.subf %117, %120 : vector<8x8xf32>
    %122 = math.exp %121 : vector<8x8xf32>
    %cst_38 = arith.constant dense<0.000000e+00> : vector<8xf32>
    %123 = vector.multi_reduction <add>, %122, %cst_38 [1] : vector<8x8xf32> to vector<8xf32>
    %124 = vector.shape_cast %123 : vector<8xf32> to vector<8x1xf32>
    %125 = vector.broadcast %124 : vector<8x1xf32> to vector<8x8xf32>
    %126 = arith.divf %122, %125 : vector<8x8xf32>
    %127 = arith.truncf %126 : vector<8x8xf32> to vector<8x8xbf16>
    %128 = vector.extract_strided_slice %114 {offsets = [0, 0], sizes = [8, 8], strides = [1, 1]} : vector<8x32xbf16> to vector<8x8xbf16>
    %cst_39 = arith.constant dense<0.000000e+00> : vector<8x8xf32>
    %129 = tpu.matmul %127, %128, %cst_39 {dimension_numbers = #tpu.dot_dimension_numbers<[1], [0], [0], [1], [0, 0, 1, 1], [], []>} : vector<8x8xbf16>, vector<8x8xbf16>, vector<8x8xf32> -> vector<8x8xf32>
    %130 = vector.extract_strided_slice %110 {offsets = [0, 8], sizes = [8, 8], strides = [1, 1]} : vector<8x32xbf16> to vector<8x8xbf16>
    %131 = vector.extract_strided_slice %112 {offsets = [0, 8], sizes = [8, 8], strides = [1, 1]} : vector<8x32xbf16> to vector<8x8xbf16>
    %cst_40 = arith.constant dense<0.000000e+00> : vector<8x8xf32>
    %132 = tpu.matmul %130, %131, %cst_40 {dimension_numbers = #tpu.dot_dimension_numbers<[1], [1], [0], [0], [0, 0, 1, 0], [], []>} : vector<8x8xbf16>, vector<8x8xbf16>, vector<8x8xf32> -> vector<8x8xf32>
    %cst_41 = arith.constant dense<0xFF800000> : vector<8xf32>
    %133 = vector.multi_reduction <maximumf>, %132, %cst_41 [1] : vector<8x8xf32> to vector<8xf32>
    %134 = vector.shape_cast %133 : vector<8xf32> to vector<8x1xf32>
    %135 = vector.broadcast %134 : vector<8x1xf32> to vector<8x8xf32>
    %136 = arith.subf %132, %135 : vector<8x8xf32>
    %137 = math.exp %136 : vector<8x8xf32>
    %cst_42 = arith.constant dense<0.000000e+00> : vector<8xf32>
    %138 = vector.multi_reduction <add>, %137, %cst_42 [1] : vector<8x8xf32> to vector<8xf32>
    %139 = vector.shape_cast %138 : vector<8xf32> to vector<8x1xf32>
    %140 = vector.broadcast %139 : vector<8x1xf32> to vector<8x8xf32>
    %141 = arith.divf %137, %140 : vector<8x8xf32>
    %142 = arith.truncf %141 : vector<8x8xf32> to vector<8x8xbf16>
    %143 = vector.extract_strided_slice %114 {offsets = [0, 8], sizes = [8, 8], strides = [1, 1]} : vector<8x32xbf16> to vector<8x8xbf16>
    %cst_43 = arith.constant dense<0.000000e+00> : vector<8x8xf32>
    %144 = tpu.matmul %142, %143, %cst_43 {dimension_numbers = #tpu.dot_dimension_numbers<[1], [0], [0], [1], [0, 0, 1, 1], [], []>} : vector<8x8xbf16>, vector<8x8xbf16>, vector<8x8xf32> -> vector<8x8xf32>
    %145 = vector.extract_strided_slice %110 {offsets = [0, 16], sizes = [8, 8], strides = [1, 1]} : vector<8x32xbf16> to vector<8x8xbf16>
    %146 = vector.extract_strided_slice %112 {offsets = [0, 16], sizes = [8, 8], strides = [1, 1]} : vector<8x32xbf16> to vector<8x8xbf16>
    %cst_44 = arith.constant dense<0.000000e+00> : vector<8x8xf32>
    %147 = tpu.matmul %145, %146, %cst_44 {dimension_numbers = #tpu.dot_dimension_numbers<[1], [1], [0], [0], [0, 0, 1, 0], [], []>} : vector<8x8xbf16>, vector<8x8xbf16>, vector<8x8xf32> -> vector<8x8xf32>
    %cst_45 = arith.constant dense<0xFF800000> : vector<8xf32>
    %148 = vector.multi_reduction <maximumf>, %147, %cst_45 [1] : vector<8x8xf32> to vector<8xf32>
    %149 = vector.shape_cast %148 : vector<8xf32> to vector<8x1xf32>
    %150 = vector.broadcast %149 : vector<8x1xf32> to vector<8x8xf32>
    %151 = arith.subf %147, %150 : vector<8x8xf32>
    %152 = math.exp %151 : vector<8x8xf32>
    %cst_46 = arith.constant dense<0.000000e+00> : vector<8xf32>
    %153 = vector.multi_reduction <add>, %152, %cst_46 [1] : vector<8x8xf32> to vector<8xf32>
    %154 = vector.shape_cast %153 : vector<8xf32> to vector<8x1xf32>
    %155 = vector.broadcast %154 : vector<8x1xf32> to vector<8x8xf32>
    %156 = arith.divf %152, %155 : vector<8x8xf32>
    %157 = arith.truncf %156 : vector<8x8xf32> to vector<8x8xbf16>
    %158 = vector.extract_strided_slice %114 {offsets = [0, 16], sizes = [8, 8], strides = [1, 1]} : vector<8x32xbf16> to vector<8x8xbf16>
    %cst_47 = arith.constant dense<0.000000e+00> : vector<8x8xf32>
    %159 = tpu.matmul %157, %158, %cst_47 {dimension_numbers = #tpu.dot_dimension_numbers<[1], [0], [0], [1], [0, 0, 1, 1], [], []>} : vector<8x8xbf16>, vector<8x8xbf16>, vector<8x8xf32> -> vector<8x8xf32>
    %160 = vector.extract_strided_slice %110 {offsets = [0, 24], sizes = [8, 8], strides = [1, 1]} : vector<8x32xbf16> to vector<8x8xbf16>
    %161 = vector.extract_strided_slice %112 {offsets = [0, 24], sizes = [8, 8], strides = [1, 1]} : vector<8x32xbf16> to vector<8x8xbf16>
    %cst_48 = arith.constant dense<0.000000e+00> : vector<8x8xf32>
    %162 = tpu.matmul %160, %161, %cst_48 {dimension_numbers = #tpu.dot_dimension_numbers<[1], [1], [0], [0], [0, 0, 1, 0], [], []>} : vector<8x8xbf16>, vector<8x8xbf16>, vector<8x8xf32> -> vector<8x8xf32>
    %cst_49 = arith.constant dense<0xFF800000> : vector<8xf32>
    %163 = vector.multi_reduction <maximumf>, %162, %cst_49 [1] : vector<8x8xf32> to vector<8xf32>
    %164 = vector.shape_cast %163 : vector<8xf32> to vector<8x1xf32>
    %165 = vector.broadcast %164 : vector<8x1xf32> to vector<8x8xf32>
    %166 = arith.subf %162, %165 : vector<8x8xf32>
    %167 = math.exp %166 : vector<8x8xf32>
    %cst_50 = arith.constant dense<0.000000e+00> : vector<8xf32>
    %168 = vector.multi_reduction <add>, %167, %cst_50 [1] : vector<8x8xf32> to vector<8xf32>
    %169 = vector.shape_cast %168 : vector<8xf32> to vector<8x1xf32>
    %170 = vector.broadcast %169 : vector<8x1xf32> to vector<8x8xf32>
    %171 = arith.divf %167, %170 : vector<8x8xf32>
    %172 = arith.truncf %171 : vector<8x8xf32> to vector<8x8xbf16>
    %173 = vector.extract_strided_slice %114 {offsets = [0, 24], sizes = [8, 8], strides = [1, 1]} : vector<8x32xbf16> to vector<8x8xbf16>
    %cst_51 = arith.constant dense<0.000000e+00> : vector<8x8xf32>
    %174 = tpu.matmul %172, %173, %cst_51 {dimension_numbers = #tpu.dot_dimension_numbers<[1], [0], [0], [1], [0, 0, 1, 1], [], []>} : vector<8x8xbf16>, vector<8x8xbf16>, vector<8x8xf32> -> vector<8x8xf32>
    %175 = tpu.concatenate %129, %144, %159, %174 in 1 : vector<8x8xf32>, vector<8x8xf32>, vector<8x8xf32>, vector<8x8xf32> -> vector<8x32xf32>
    %176 = tpu.concatenate %106, %175 in 0 : vector<8x32xf32>, vector<8x32xf32> -> vector<16x32xf32>
    %177 = arith.truncf %176 : vector<16x32xf32> to vector<16x32xbf16>
    %178 = vector.extract_strided_slice %16 {offsets = [3, 0, 0], sizes = [1, 32, 32], strides = [1, 1, 1]} : vector<4x32x32xbf16> to vector<1x32x32xbf16>
    %179 = vector.shape_cast %178 : vector<1x32x32xbf16> to vector<32x32xbf16>
    %cst_52 = arith.constant dense<0.000000e+00> : vector<16x32xf32>
    %180 = tpu.matmul %177, %179, %cst_52 {dimension_numbers = #tpu.dot_dimension_numbers<[1], [0], [0], [1], [0, 0, 1, 1], [], []>} : vector<16x32xbf16>, vector<32x32xbf16>, vector<16x32xf32> -> vector<16x32xf32>
    %181 = vector.broadcast %20 : vector<1x32xf32> to vector<16x32xf32>
    %182 = arith.addf %180, %181 : vector<16x32xf32>
    %183 = arith.addf %182, %0 : vector<16x32xf32>
    %cst_53 = arith.constant dense<0.000000e+00> : vector<16xf32>
    %184 = vector.multi_reduction <add>, %183, %cst_53 [1] : vector<16x32xf32> to vector<16xf32>
    %185 = vector.shape_cast %184 : vector<16xf32> to vector<16x1xf32>
    %cst_54 = arith.constant 3.200000e+01 : f32
    %186 = vector.broadcast %cst_54 : f32 to vector<16x1xf32>
    %187 = arith.divf %185, %186 : vector<16x1xf32>
    %188 = vector.broadcast %187 : vector<16x1xf32> to vector<16x32xf32>
    %189 = arith.subf %183, %188 : vector<16x32xf32>
    %190 = arith.mulf %189, %189 : vector<16x32xf32>
    %cst_55 = arith.constant dense<0.000000e+00> : vector<16xf32>
    %191 = vector.multi_reduction <add>, %190, %cst_55 [1] : vector<16x32xf32> to vector<16xf32>
    %192 = vector.shape_cast %191 : vector<16xf32> to vector<16x1xf32>
    %cst_56 = arith.constant 3.200000e+01 : f32
    %193 = vector.broadcast %cst_56 : f32 to vector<16x1xf32>
    %194 = arith.divf %192, %193 : vector<16x1xf32>
    %cst_57 = arith.constant 9.99999974E-6 : f32
    %195 = vector.broadcast %cst_57 : f32 to vector<16x1xf32>
    %196 = arith.addf %194, %195 : vector<16x1xf32>
    %197 = math.rsqrt %196 : vector<16x1xf32>
    %198 = vector.broadcast %197 : vector<16x1xf32> to vector<16x32xf32>
    %199 = arith.mulf %189, %198 : vector<16x32xf32>
    %200 = vector.broadcast %21 : vector<1x32xf32> to vector<16x32xf32>
    %201 = arith.mulf %199, %200 : vector<16x32xf32>
    %202 = vector.broadcast %22 : vector<1x32xf32> to vector<16x32xf32>
    %203 = arith.addf %201, %202 : vector<16x32xf32>
    %204 = arith.addf %203, %1 : vector<16x32xf32>
    %205 = arith.truncf %204 : vector<16x32xf32> to vector<16x32xbf16>
    %206 = vector.extract_strided_slice %10 {offsets = [4, 0, 0], sizes = [4, 32, 32], strides = [1, 1, 1]} : vector<8x32x32xbf16> to vector<4x32x32xbf16>
    %207 = vector.extract_strided_slice %12 {offsets = [4, 0], sizes = [1, 32], strides = [1, 1]} : vector<16x32xf32> to vector<1x32xf32>
    %208 = vector.extract_strided_slice %12 {offsets = [5, 0], sizes = [1, 32], strides = [1, 1]} : vector<16x32xf32> to vector<1x32xf32>
    %209 = vector.extract_strided_slice %12 {offsets = [6, 0], sizes = [1, 32], strides = [1, 1]} : vector<16x32xf32> to vector<1x32xf32>
    %210 = vector.extract_strided_slice %12 {offsets = [7, 0], sizes = [1, 32], strides = [1, 1]} : vector<16x32xf32> to vector<1x32xf32>
    %211 = vector.extract_strided_slice %12 {offsets = [11, 0], sizes = [1, 32], strides = [1, 1]} : vector<16x32xf32> to vector<1x32xf32>
    %212 = vector.extract_strided_slice %12 {offsets = [12, 0], sizes = [1, 32], strides = [1, 1]} : vector<16x32xf32> to vector<1x32xf32>
    %213 = vector.extract_strided_slice %206 {offsets = [0, 0, 0], sizes = [1, 32, 32], strides = [1, 1, 1]} : vector<4x32x32xbf16> to vector<1x32x32xbf16>
    %214 = vector.shape_cast %213 : vector<1x32x32xbf16> to vector<32x32xbf16>
    %cst_58 = arith.constant dense<0.000000e+00> : vector<16x32xf32>
    %215 = tpu.matmul %205, %214, %cst_58 {dimension_numbers = #tpu.dot_dimension_numbers<[1], [0], [0], [1], [0, 0, 1, 1], [], []>} : vector<16x32xbf16>, vector<32x32xbf16>, vector<16x32xf32> -> vector<16x32xf32>
    %216 = vector.broadcast %207 : vector<1x32xf32> to vector<16x32xf32>
    %217 = arith.addf %215, %216 : vector<16x32xf32>
    %218 = vector.extract_strided_slice %206 {offsets = [1, 0, 0], sizes = [1, 32, 32], strides = [1, 1, 1]} : vector<4x32x32xbf16> to vector<1x32x32xbf16>
    %219 = vector.shape_cast %218 : vector<1x32x32xbf16> to vector<32x32xbf16>
    %cst_59 = arith.constant dense<0.000000e+00> : vector<32x32xf32>
    %220 = tpu.matmul %7, %219, %cst_59 {dimension_numbers = #tpu.dot_dimension_numbers<[1], [0], [0], [1], [0, 0, 1, 1], [], []>} : vector<32x32xbf16>, vector<32x32xbf16>, vector<32x32xf32> -> vector<32x32xf32>
    %221 = vector.broadcast %208 : vector<1x32xf32> to vector<32x32xf32>
    %222 = arith.addf %220, %221 : vector<32x32xf32>
    %223 = vector.extract_strided_slice %206 {offsets = [2, 0, 0], sizes = [1, 32, 32], strides = [1, 1, 1]} : vector<4x32x32xbf16> to vector<1x32x32xbf16>
    %224 = vector.shape_cast %223 : vector<1x32x32xbf16> to vector<32x32xbf16>
    %cst_60 = arith.constant dense<0.000000e+00> : vector<32x32xf32>
    %225 = tpu.matmul %8, %224, %cst_60 {dimension_numbers = #tpu.dot_dimension_numbers<[1], [0], [0], [1], [0, 0, 1, 1], [], []>} : vector<32x32xbf16>, vector<32x32xbf16>, vector<32x32xf32> -> vector<32x32xf32>
    %226 = vector.broadcast %209 : vector<1x32xf32> to vector<32x32xf32>
    %227 = arith.addf %225, %226 : vector<32x32xf32>
    %228 = vector.extract_strided_slice %217 {offsets = [0, 0], sizes = [8, 32], strides = [1, 1]} : vector<16x32xf32> to vector<8x32xf32>
    %cst_61 = arith.constant 0.353553385 : f32
    %229 = vector.broadcast %cst_61 : f32 to vector<8x32xf32>
    %230 = arith.mulf %228, %229 : vector<8x32xf32>
    %231 = arith.truncf %230 : vector<8x32xf32> to vector<8x32xbf16>
    %232 = vector.extract_strided_slice %222 {offsets = [0, 0], sizes = [16, 32], strides = [1, 1]} : vector<32x32xf32> to vector<16x32xf32>
    %233 = arith.truncf %232 : vector<16x32xf32> to vector<16x32xbf16>
    %234 = vector.extract_strided_slice %227 {offsets = [0, 0], sizes = [16, 32], strides = [1, 1]} : vector<32x32xf32> to vector<16x32xf32>
    %235 = arith.truncf %234 : vector<16x32xf32> to vector<16x32xbf16>
    %236 = vector.extract_strided_slice %231 {offsets = [0, 0], sizes = [8, 8], strides = [1, 1]} : vector<8x32xbf16> to vector<8x8xbf16>
    %237 = vector.extract_strided_slice %233 {offsets = [0, 0], sizes = [16, 8], strides = [1, 1]} : vector<16x32xbf16> to vector<16x8xbf16>
    %cst_62 = arith.constant dense<0.000000e+00> : vector<8x16xf32>
    %238 = tpu.matmul %236, %237, %cst_62 {dimension_numbers = #tpu.dot_dimension_numbers<[1], [1], [0], [0], [0, 0, 1, 0], [], []>} : vector<8x8xbf16>, vector<16x8xbf16>, vector<8x16xf32> -> vector<8x16xf32>
    %cst_63 = arith.constant dense<0xFF800000> : vector<8xf32>
    %239 = vector.multi_reduction <maximumf>, %238, %cst_63 [1] : vector<8x16xf32> to vector<8xf32>
    %240 = vector.shape_cast %239 : vector<8xf32> to vector<8x1xf32>
    %241 = vector.broadcast %240 : vector<8x1xf32> to vector<8x16xf32>
    %242 = arith.subf %238, %241 : vector<8x16xf32>
    %243 = math.exp %242 : vector<8x16xf32>
    %cst_64 = arith.constant dense<0.000000e+00> : vector<8xf32>
    %244 = vector.multi_reduction <add>, %243, %cst_64 [1] : vector<8x16xf32> to vector<8xf32>
    %245 = vector.shape_cast %244 : vector<8xf32> to vector<8x1xf32>
    %246 = vector.broadcast %245 : vector<8x1xf32> to vector<8x16xf32>
    %247 = arith.divf %243, %246 : vector<8x16xf32>
    %248 = arith.truncf %247 : vector<8x16xf32> to vector<8x16xbf16>
    %249 = vector.extract_strided_slice %235 {offsets = [0, 0], sizes = [16, 8], strides = [1, 1]} : vector<16x32xbf16> to vector<16x8xbf16>
    %cst_65 = arith.constant dense<0.000000e+00> : vector<8x8xf32>
    %250 = tpu.matmul %248, %249, %cst_65 {dimension_numbers = #tpu.dot_dimension_numbers<[1], [0], [0], [1], [0, 0, 1, 1], [], []>} : vector<8x16xbf16>, vector<16x8xbf16>, vector<8x8xf32> -> vector<8x8xf32>
    %251 = vector.extract_strided_slice %231 {offsets = [0, 8], sizes = [8, 8], strides = [1, 1]} : vector<8x32xbf16> to vector<8x8xbf16>
    %252 = vector.extract_strided_slice %233 {offsets = [0, 8], sizes = [16, 8], strides = [1, 1]} : vector<16x32xbf16> to vector<16x8xbf16>
    %cst_66 = arith.constant dense<0.000000e+00> : vector<8x16xf32>
    %253 = tpu.matmul %251, %252, %cst_66 {dimension_numbers = #tpu.dot_dimension_numbers<[1], [1], [0], [0], [0, 0, 1, 0], [], []>} : vector<8x8xbf16>, vector<16x8xbf16>, vector<8x16xf32> -> vector<8x16xf32>
    %cst_67 = arith.constant dense<0xFF800000> : vector<8xf32>
    %254 = vector.multi_reduction <maximumf>, %253, %cst_67 [1] : vector<8x16xf32> to vector<8xf32>
    %255 = vector.shape_cast %254 : vector<8xf32> to vector<8x1xf32>
    %256 = vector.broadcast %255 : vector<8x1xf32> to vector<8x16xf32>
    %257 = arith.subf %253, %256 : vector<8x16xf32>
    %258 = math.exp %257 : vector<8x16xf32>
    %cst_68 = arith.constant dense<0.000000e+00> : vector<8xf32>
    %259 = vector.multi_reduction <add>, %258, %cst_68 [1] : vector<8x16xf32> to vector<8xf32>
    %260 = vector.shape_cast %259 : vector<8xf32> to vector<8x1xf32>
    %261 = vector.broadcast %260 : vector<8x1xf32> to vector<8x16xf32>
    %262 = arith.divf %258, %261 : vector<8x16xf32>
    %263 = arith.truncf %262 : vector<8x16xf32> to vector<8x16xbf16>
    %264 = vector.extract_strided_slice %235 {offsets = [0, 8], sizes = [16, 8], strides = [1, 1]} : vector<16x32xbf16> to vector<16x8xbf16>
    %cst_69 = arith.constant dense<0.000000e+00> : vector<8x8xf32>
    %265 = tpu.matmul %263, %264, %cst_69 {dimension_numbers = #tpu.dot_dimension_numbers<[1], [0], [0], [1], [0, 0, 1, 1], [], []>} : vector<8x16xbf16>, vector<16x8xbf16>, vector<8x8xf32> -> vector<8x8xf32>
    %266 = vector.extract_strided_slice %231 {offsets = [0, 16], sizes = [8, 8], strides = [1, 1]} : vector<8x32xbf16> to vector<8x8xbf16>
    %267 = vector.extract_strided_slice %233 {offsets = [0, 16], sizes = [16, 8], strides = [1, 1]} : vector<16x32xbf16> to vector<16x8xbf16>
    %cst_70 = arith.constant dense<0.000000e+00> : vector<8x16xf32>
    %268 = tpu.matmul %266, %267, %cst_70 {dimension_numbers = #tpu.dot_dimension_numbers<[1], [1], [0], [0], [0, 0, 1, 0], [], []>} : vector<8x8xbf16>, vector<16x8xbf16>, vector<8x16xf32> -> vector<8x16xf32>
    %cst_71 = arith.constant dense<0xFF800000> : vector<8xf32>
    %269 = vector.multi_reduction <maximumf>, %268, %cst_71 [1] : vector<8x16xf32> to vector<8xf32>
    %270 = vector.shape_cast %269 : vector<8xf32> to vector<8x1xf32>
    %271 = vector.broadcast %270 : vector<8x1xf32> to vector<8x16xf32>
    %272 = arith.subf %268, %271 : vector<8x16xf32>
    %273 = math.exp %272 : vector<8x16xf32>
    %cst_72 = arith.constant dense<0.000000e+00> : vector<8xf32>
    %274 = vector.multi_reduction <add>, %273, %cst_72 [1] : vector<8x16xf32> to vector<8xf32>
    %275 = vector.shape_cast %274 : vector<8xf32> to vector<8x1xf32>
    %276 = vector.broadcast %275 : vector<8x1xf32> to vector<8x16xf32>
    %277 = arith.divf %273, %276 : vector<8x16xf32>
    %278 = arith.truncf %277 : vector<8x16xf32> to vector<8x16xbf16>
    %279 = vector.extract_strided_slice %235 {offsets = [0, 16], sizes = [16, 8], strides = [1, 1]} : vector<16x32xbf16> to vector<16x8xbf16>
    %cst_73 = arith.constant dense<0.000000e+00> : vector<8x8xf32>
    %280 = tpu.matmul %278, %279, %cst_73 {dimension_numbers = #tpu.dot_dimension_numbers<[1], [0], [0], [1], [0, 0, 1, 1], [], []>} : vector<8x16xbf16>, vector<16x8xbf16>, vector<8x8xf32> -> vector<8x8xf32>
    %281 = vector.extract_strided_slice %231 {offsets = [0, 24], sizes = [8, 8], strides = [1, 1]} : vector<8x32xbf16> to vector<8x8xbf16>
    %282 = vector.extract_strided_slice %233 {offsets = [0, 24], sizes = [16, 8], strides = [1, 1]} : vector<16x32xbf16> to vector<16x8xbf16>
    %cst_74 = arith.constant dense<0.000000e+00> : vector<8x16xf32>
    %283 = tpu.matmul %281, %282, %cst_74 {dimension_numbers = #tpu.dot_dimension_numbers<[1], [1], [0], [0], [0, 0, 1, 0], [], []>} : vector<8x8xbf16>, vector<16x8xbf16>, vector<8x16xf32> -> vector<8x16xf32>
    %cst_75 = arith.constant dense<0xFF800000> : vector<8xf32>
    %284 = vector.multi_reduction <maximumf>, %283, %cst_75 [1] : vector<8x16xf32> to vector<8xf32>
    %285 = vector.shape_cast %284 : vector<8xf32> to vector<8x1xf32>
    %286 = vector.broadcast %285 : vector<8x1xf32> to vector<8x16xf32>
    %287 = arith.subf %283, %286 : vector<8x16xf32>
    %288 = math.exp %287 : vector<8x16xf32>
    %cst_76 = arith.constant dense<0.000000e+00> : vector<8xf32>
    %289 = vector.multi_reduction <add>, %288, %cst_76 [1] : vector<8x16xf32> to vector<8xf32>
    %290 = vector.shape_cast %289 : vector<8xf32> to vector<8x1xf32>
    %291 = vector.broadcast %290 : vector<8x1xf32> to vector<8x16xf32>
    %292 = arith.divf %288, %291 : vector<8x16xf32>
    %293 = arith.truncf %292 : vector<8x16xf32> to vector<8x16xbf16>
    %294 = vector.extract_strided_slice %235 {offsets = [0, 24], sizes = [16, 8], strides = [1, 1]} : vector<16x32xbf16> to vector<16x8xbf16>
    %cst_77 = arith.constant dense<0.000000e+00> : vector<8x8xf32>
    %295 = tpu.matmul %293, %294, %cst_77 {dimension_numbers = #tpu.dot_dimension_numbers<[1], [0], [0], [1], [0, 0, 1, 1], [], []>} : vector<8x16xbf16>, vector<16x8xbf16>, vector<8x8xf32> -> vector<8x8xf32>
    %296 = tpu.concatenate %250, %265, %280, %295 in 1 : vector<8x8xf32>, vector<8x8xf32>, vector<8x8xf32>, vector<8x8xf32> -> vector<8x32xf32>
    %297 = vector.extract_strided_slice %217 {offsets = [8, 0], sizes = [8, 32], strides = [1, 1]} : vector<16x32xf32> to vector<8x32xf32>
    %cst_78 = arith.constant 0.353553385 : f32
    %298 = vector.broadcast %cst_78 : f32 to vector<8x32xf32>
    %299 = arith.mulf %297, %298 : vector<8x32xf32>
    %300 = arith.truncf %299 : vector<8x32xf32> to vector<8x32xbf16>
    %301 = vector.extract_strided_slice %222 {offsets = [16, 0], sizes = [16, 32], strides = [1, 1]} : vector<32x32xf32> to vector<16x32xf32>
    %302 = arith.truncf %301 : vector<16x32xf32> to vector<16x32xbf16>
    %303 = vector.extract_strided_slice %227 {offsets = [16, 0], sizes = [16, 32], strides = [1, 1]} : vector<32x32xf32> to vector<16x32xf32>
    %304 = arith.truncf %303 : vector<16x32xf32> to vector<16x32xbf16>
    %305 = vector.extract_strided_slice %300 {offsets = [0, 0], sizes = [8, 8], strides = [1, 1]} : vector<8x32xbf16> to vector<8x8xbf16>
    %306 = vector.extract_strided_slice %302 {offsets = [0, 0], sizes = [16, 8], strides = [1, 1]} : vector<16x32xbf16> to vector<16x8xbf16>
    %cst_79 = arith.constant dense<0.000000e+00> : vector<8x16xf32>
    %307 = tpu.matmul %305, %306, %cst_79 {dimension_numbers = #tpu.dot_dimension_numbers<[1], [1], [0], [0], [0, 0, 1, 0], [], []>} : vector<8x8xbf16>, vector<16x8xbf16>, vector<8x16xf32> -> vector<8x16xf32>
    %cst_80 = arith.constant dense<0xFF800000> : vector<8xf32>
    %308 = vector.multi_reduction <maximumf>, %307, %cst_80 [1] : vector<8x16xf32> to vector<8xf32>
    %309 = vector.shape_cast %308 : vector<8xf32> to vector<8x1xf32>
    %310 = vector.broadcast %309 : vector<8x1xf32> to vector<8x16xf32>
    %311 = arith.subf %307, %310 : vector<8x16xf32>
    %312 = math.exp %311 : vector<8x16xf32>
    %cst_81 = arith.constant dense<0.000000e+00> : vector<8xf32>
    %313 = vector.multi_reduction <add>, %312, %cst_81 [1] : vector<8x16xf32> to vector<8xf32>
    %314 = vector.shape_cast %313 : vector<8xf32> to vector<8x1xf32>
    %315 = vector.broadcast %314 : vector<8x1xf32> to vector<8x16xf32>
    %316 = arith.divf %312, %315 : vector<8x16xf32>
    %317 = arith.truncf %316 : vector<8x16xf32> to vector<8x16xbf16>
    %318 = vector.extract_strided_slice %304 {offsets = [0, 0], sizes = [16, 8], strides = [1, 1]} : vector<16x32xbf16> to vector<16x8xbf16>
    %cst_82 = arith.constant dense<0.000000e+00> : vector<8x8xf32>
    %319 = tpu.matmul %317, %318, %cst_82 {dimension_numbers = #tpu.dot_dimension_numbers<[1], [0], [0], [1], [0, 0, 1, 1], [], []>} : vector<8x16xbf16>, vector<16x8xbf16>, vector<8x8xf32> -> vector<8x8xf32>
    %320 = vector.extract_strided_slice %300 {offsets = [0, 8], sizes = [8, 8], strides = [1, 1]} : vector<8x32xbf16> to vector<8x8xbf16>
    %321 = vector.extract_strided_slice %302 {offsets = [0, 8], sizes = [16, 8], strides = [1, 1]} : vector<16x32xbf16> to vector<16x8xbf16>
    %cst_83 = arith.constant dense<0.000000e+00> : vector<8x16xf32>
    %322 = tpu.matmul %320, %321, %cst_83 {dimension_numbers = #tpu.dot_dimension_numbers<[1], [1], [0], [0], [0, 0, 1, 0], [], []>} : vector<8x8xbf16>, vector<16x8xbf16>, vector<8x16xf32> -> vector<8x16xf32>
    %cst_84 = arith.constant dense<0xFF800000> : vector<8xf32>
    %323 = vector.multi_reduction <maximumf>, %322, %cst_84 [1] : vector<8x16xf32> to vector<8xf32>
    %324 = vector.shape_cast %323 : vector<8xf32> to vector<8x1xf32>
    %325 = vector.broadcast %324 : vector<8x1xf32> to vector<8x16xf32>
    %326 = arith.subf %322, %325 : vector<8x16xf32>
    %327 = math.exp %326 : vector<8x16xf32>
    %cst_85 = arith.constant dense<0.000000e+00> : vector<8xf32>
    %328 = vector.multi_reduction <add>, %327, %cst_85 [1] : vector<8x16xf32> to vector<8xf32>
    %329 = vector.shape_cast %328 : vector<8xf32> to vector<8x1xf32>
    %330 = vector.broadcast %329 : vector<8x1xf32> to vector<8x16xf32>
    %331 = arith.divf %327, %330 : vector<8x16xf32>
    %332 = arith.truncf %331 : vector<8x16xf32> to vector<8x16xbf16>
    %333 = vector.extract_strided_slice %304 {offsets = [0, 8], sizes = [16, 8], strides = [1, 1]} : vector<16x32xbf16> to vector<16x8xbf16>
    %cst_86 = arith.constant dense<0.000000e+00> : vector<8x8xf32>
    %334 = tpu.matmul %332, %333, %cst_86 {dimension_numbers = #tpu.dot_dimension_numbers<[1], [0], [0], [1], [0, 0, 1, 1], [], []>} : vector<8x16xbf16>, vector<16x8xbf16>, vector<8x8xf32> -> vector<8x8xf32>
    %335 = vector.extract_strided_slice %300 {offsets = [0, 16], sizes = [8, 8], strides = [1, 1]} : vector<8x32xbf16> to vector<8x8xbf16>
    %336 = vector.extract_strided_slice %302 {offsets = [0, 16], sizes = [16, 8], strides = [1, 1]} : vector<16x32xbf16> to vector<16x8xbf16>
    %cst_87 = arith.constant dense<0.000000e+00> : vector<8x16xf32>
    %337 = tpu.matmul %335, %336, %cst_87 {dimension_numbers = #tpu.dot_dimension_numbers<[1], [1], [0], [0], [0, 0, 1, 0], [], []>} : vector<8x8xbf16>, vector<16x8xbf16>, vector<8x16xf32> -> vector<8x16xf32>
    %cst_88 = arith.constant dense<0xFF800000> : vector<8xf32>
    %338 = vector.multi_reduction <maximumf>, %337, %cst_88 [1] : vector<8x16xf32> to vector<8xf32>
    %339 = vector.shape_cast %338 : vector<8xf32> to vector<8x1xf32>
    %340 = vector.broadcast %339 : vector<8x1xf32> to vector<8x16xf32>
    %341 = arith.subf %337, %340 : vector<8x16xf32>
    %342 = math.exp %341 : vector<8x16xf32>
    %cst_89 = arith.constant dense<0.000000e+00> : vector<8xf32>
    %343 = vector.multi_reduction <add>, %342, %cst_89 [1] : vector<8x16xf32> to vector<8xf32>
    %344 = vector.shape_cast %343 : vector<8xf32> to vector<8x1xf32>
    %345 = vector.broadcast %344 : vector<8x1xf32> to vector<8x16xf32>
    %346 = arith.divf %342, %345 : vector<8x16xf32>
    %347 = arith.truncf %346 : vector<8x16xf32> to vector<8x16xbf16>
    %348 = vector.extract_strided_slice %304 {offsets = [0, 16], sizes = [16, 8], strides = [1, 1]} : vector<16x32xbf16> to vector<16x8xbf16>
    %cst_90 = arith.constant dense<0.000000e+00> : vector<8x8xf32>
    %349 = tpu.matmul %347, %348, %cst_90 {dimension_numbers = #tpu.dot_dimension_numbers<[1], [0], [0], [1], [0, 0, 1, 1], [], []>} : vector<8x16xbf16>, vector<16x8xbf16>, vector<8x8xf32> -> vector<8x8xf32>
    %350 = vector.extract_strided_slice %300 {offsets = [0, 24], sizes = [8, 8], strides = [1, 1]} : vector<8x32xbf16> to vector<8x8xbf16>
    %351 = vector.extract_strided_slice %302 {offsets = [0, 24], sizes = [16, 8], strides = [1, 1]} : vector<16x32xbf16> to vector<16x8xbf16>
    %cst_91 = arith.constant dense<0.000000e+00> : vector<8x16xf32>
    %352 = tpu.matmul %350, %351, %cst_91 {dimension_numbers = #tpu.dot_dimension_numbers<[1], [1], [0], [0], [0, 0, 1, 0], [], []>} : vector<8x8xbf16>, vector<16x8xbf16>, vector<8x16xf32> -> vector<8x16xf32>
    %cst_92 = arith.constant dense<0xFF800000> : vector<8xf32>
    %353 = vector.multi_reduction <maximumf>, %352, %cst_92 [1] : vector<8x16xf32> to vector<8xf32>
    %354 = vector.shape_cast %353 : vector<8xf32> to vector<8x1xf32>
    %355 = vector.broadcast %354 : vector<8x1xf32> to vector<8x16xf32>
    %356 = arith.subf %352, %355 : vector<8x16xf32>
    %357 = math.exp %356 : vector<8x16xf32>
    %cst_93 = arith.constant dense<0.000000e+00> : vector<8xf32>
    %358 = vector.multi_reduction <add>, %357, %cst_93 [1] : vector<8x16xf32> to vector<8xf32>
    %359 = vector.shape_cast %358 : vector<8xf32> to vector<8x1xf32>
    %360 = vector.broadcast %359 : vector<8x1xf32> to vector<8x16xf32>
    %361 = arith.divf %357, %360 : vector<8x16xf32>
    %362 = arith.truncf %361 : vector<8x16xf32> to vector<8x16xbf16>
    %363 = vector.extract_strided_slice %304 {offsets = [0, 24], sizes = [16, 8], strides = [1, 1]} : vector<16x32xbf16> to vector<16x8xbf16>
    %cst_94 = arith.constant dense<0.000000e+00> : vector<8x8xf32>
    %364 = tpu.matmul %362, %363, %cst_94 {dimension_numbers = #tpu.dot_dimension_numbers<[1], [0], [0], [1], [0, 0, 1, 1], [], []>} : vector<8x16xbf16>, vector<16x8xbf16>, vector<8x8xf32> -> vector<8x8xf32>
    %365 = tpu.concatenate %319, %334, %349, %364 in 1 : vector<8x8xf32>, vector<8x8xf32>, vector<8x8xf32>, vector<8x8xf32> -> vector<8x32xf32>
    %366 = tpu.concatenate %296, %365 in 0 : vector<8x32xf32>, vector<8x32xf32> -> vector<16x32xf32>
    %367 = arith.truncf %366 : vector<16x32xf32> to vector<16x32xbf16>
    %368 = vector.extract_strided_slice %206 {offsets = [3, 0, 0], sizes = [1, 32, 32], strides = [1, 1, 1]} : vector<4x32x32xbf16> to vector<1x32x32xbf16>
    %369 = vector.shape_cast %368 : vector<1x32x32xbf16> to vector<32x32xbf16>
    %cst_95 = arith.constant dense<0.000000e+00> : vector<16x32xf32>
    %370 = tpu.matmul %367, %369, %cst_95 {dimension_numbers = #tpu.dot_dimension_numbers<[1], [0], [0], [1], [0, 0, 1, 1], [], []>} : vector<16x32xbf16>, vector<32x32xbf16>, vector<16x32xf32> -> vector<16x32xf32>
    %371 = vector.broadcast %210 : vector<1x32xf32> to vector<16x32xf32>
    %372 = arith.addf %370, %371 : vector<16x32xf32>
    %373 = arith.addf %372, %203 : vector<16x32xf32>
    %cst_96 = arith.constant dense<0.000000e+00> : vector<16xf32>
    %374 = vector.multi_reduction <add>, %373, %cst_96 [1] : vector<16x32xf32> to vector<16xf32>
    %375 = vector.shape_cast %374 : vector<16xf32> to vector<16x1xf32>
    %cst_97 = arith.constant 3.200000e+01 : f32
    %376 = vector.broadcast %cst_97 : f32 to vector<16x1xf32>
    %377 = arith.divf %375, %376 : vector<16x1xf32>
    %378 = vector.broadcast %377 : vector<16x1xf32> to vector<16x32xf32>
    %379 = arith.subf %373, %378 : vector<16x32xf32>
    %380 = arith.mulf %379, %379 : vector<16x32xf32>
    %cst_98 = arith.constant dense<0.000000e+00> : vector<16xf32>
    %381 = vector.multi_reduction <add>, %380, %cst_98 [1] : vector<16x32xf32> to vector<16xf32>
    %382 = vector.shape_cast %381 : vector<16xf32> to vector<16x1xf32>
    %cst_99 = arith.constant 3.200000e+01 : f32
    %383 = vector.broadcast %cst_99 : f32 to vector<16x1xf32>
    %384 = arith.divf %382, %383 : vector<16x1xf32>
    %cst_100 = arith.constant 9.99999974E-6 : f32
    %385 = vector.broadcast %cst_100 : f32 to vector<16x1xf32>
    %386 = arith.addf %384, %385 : vector<16x1xf32>
    %387 = math.rsqrt %386 : vector<16x1xf32>
    %388 = vector.broadcast %387 : vector<16x1xf32> to vector<16x32xf32>
    %389 = arith.mulf %379, %388 : vector<16x32xf32>
    %390 = vector.broadcast %211 : vector<1x32xf32> to vector<16x32xf32>
    %391 = arith.mulf %389, %390 : vector<16x32xf32>
    %392 = vector.broadcast %212 : vector<1x32xf32> to vector<16x32xf32>
    %393 = arith.addf %391, %392 : vector<16x32xf32>
    %394 = arith.truncf %393 : vector<16x32xf32> to vector<16x32xbf16>
    %c0_101 = arith.constant 0 : index
    %c0_102 = arith.constant 0 : index
    %c0_103 = arith.constant 0 : index
    %395 = vector.load %arg6[%c0_101, %c0_102, %c0_103] : memref<2x32x64xbf16, #tpu.memory_space<vmem>>, vector<1x32x64xbf16>
    %396 = vector.shape_cast %395 : vector<1x32x64xbf16> to vector<32x64xbf16>
    %cst_104 = arith.constant dense<0.000000e+00> : vector<16x64xf32>
    %397 = tpu.matmul %394, %396, %cst_104 {dimension_numbers = #tpu.dot_dimension_numbers<[1], [0], [0], [1], [0, 0, 1, 1], [], []>} : vector<16x32xbf16>, vector<32x64xbf16>, vector<16x64xf32> -> vector<16x64xf32>
    %398 = vector.extract_strided_slice %4 {offsets = [0, 0], sizes = [1, 64], strides = [1, 1]} : vector<2x64xf32> to vector<1x64xf32>
    %399 = vector.broadcast %398 : vector<1x64xf32> to vector<16x64xf32>
    %400 = arith.addf %397, %399 : vector<16x64xf32>
    %cst_105 = arith.constant 0.000000e+00 : f32
    %401 = vector.broadcast %cst_105 : f32 to vector<16x64xf32>
    %402 = arith.maximumf %400, %401 : vector<16x64xf32>
    %403 = arith.truncf %402 : vector<16x64xf32> to vector<16x64xbf16>
    %c0_106 = arith.constant 0 : index
    %c0_107 = arith.constant 0 : index
    %c0_108 = arith.constant 0 : index
    %404 = vector.load %arg7[%c0_106, %c0_107, %c0_108] : memref<2x64x32xbf16, #tpu.memory_space<vmem>>, vector<1x64x32xbf16>
    %405 = vector.shape_cast %404 : vector<1x64x32xbf16> to vector<64x32xbf16>
    %cst_109 = arith.constant dense<0.000000e+00> : vector<16x32xf32>
    %406 = tpu.matmul %403, %405, %cst_109 {dimension_numbers = #tpu.dot_dimension_numbers<[1], [0], [0], [1], [0, 0, 1, 1], [], []>} : vector<16x64xbf16>, vector<64x32xbf16>, vector<16x32xf32> -> vector<16x32xf32>
    %407 = vector.extract_strided_slice %12 {offsets = [8, 0], sizes = [1, 32], strides = [1, 1]} : vector<16x32xf32> to vector<1x32xf32>
    %408 = vector.broadcast %407 : vector<1x32xf32> to vector<16x32xf32>
    %409 = arith.addf %406, %408 : vector<16x32xf32>
    %410 = arith.addf %409, %393 : vector<16x32xf32>
    %411 = vector.extract_strided_slice %12 {offsets = [13, 0], sizes = [1, 32], strides = [1, 1]} : vector<16x32xf32> to vector<1x32xf32>
    %412 = vector.extract_strided_slice %12 {offsets = [14, 0], sizes = [1, 32], strides = [1, 1]} : vector<16x32xf32> to vector<1x32xf32>
    %cst_110 = arith.constant dense<0.000000e+00> : vector<16xf32>
    %413 = vector.multi_reduction <add>, %410, %cst_110 [1] : vector<16x32xf32> to vector<16xf32>
    %414 = vector.shape_cast %413 : vector<16xf32> to vector<16x1xf32>
    %cst_111 = arith.constant 3.200000e+01 : f32
    %415 = vector.broadcast %cst_111 : f32 to vector<16x1xf32>
    %416 = arith.divf %414, %415 : vector<16x1xf32>
    %417 = vector.broadcast %416 : vector<16x1xf32> to vector<16x32xf32>
    %418 = arith.subf %410, %417 : vector<16x32xf32>
    %419 = arith.mulf %418, %418 : vector<16x32xf32>
    %cst_112 = arith.constant dense<0.000000e+00> : vector<16xf32>
    %420 = vector.multi_reduction <add>, %419, %cst_112 [1] : vector<16x32xf32> to vector<16xf32>
    %421 = vector.shape_cast %420 : vector<16xf32> to vector<16x1xf32>
    %cst_113 = arith.constant 3.200000e+01 : f32
    %422 = vector.broadcast %cst_113 : f32 to vector<16x1xf32>
    %423 = arith.divf %421, %422 : vector<16x1xf32>
    %cst_114 = arith.constant 9.99999974E-6 : f32
    %424 = vector.broadcast %cst_114 : f32 to vector<16x1xf32>
    %425 = arith.addf %423, %424 : vector<16x1xf32>
    %426 = math.rsqrt %425 : vector<16x1xf32>
    %427 = vector.broadcast %426 : vector<16x1xf32> to vector<16x32xf32>
    %428 = arith.mulf %418, %427 : vector<16x32xf32>
    %429 = vector.broadcast %411 : vector<1x32xf32> to vector<16x32xf32>
    %430 = arith.mulf %428, %429 : vector<16x32xf32>
    %431 = vector.broadcast %412 : vector<1x32xf32> to vector<16x32xf32>
    %432 = arith.addf %430, %431 : vector<16x32xf32>
    %c1 = arith.constant 1 : index
    %c0_115 = arith.constant 0 : index
    %c0_116 = arith.constant 0 : index
    %c0_117 = arith.constant 0 : index
    %433 = vector.load %arg5[%c1, %c0_115, %c0_116, %c0_117] : memref<2x8x32x32xbf16, #tpu.memory_space<vmem>>, vector<1x8x32x32xbf16>
    %434 = vector.shape_cast %433 : vector<1x8x32x32xbf16> to vector<8x32x32xbf16>
    %435 = vector.extract_strided_slice %5 {offsets = [1, 0, 0], sizes = [1, 16, 32], strides = [1, 1, 1]} : vector<2x16x32xf32> to vector<1x16x32xf32>
    %436 = vector.shape_cast %435 : vector<1x16x32xf32> to vector<16x32xf32>
    %437 = arith.addf %432, %1 : vector<16x32xf32>
    %438 = arith.truncf %437 : vector<16x32xf32> to vector<16x32xbf16>
    %439 = arith.truncf %432 : vector<16x32xf32> to vector<16x32xbf16>
    %440 = vector.extract_strided_slice %434 {offsets = [0, 0, 0], sizes = [4, 32, 32], strides = [1, 1, 1]} : vector<8x32x32xbf16> to vector<4x32x32xbf16>
    %441 = vector.extract_strided_slice %436 {offsets = [0, 0], sizes = [1, 32], strides = [1, 1]} : vector<16x32xf32> to vector<1x32xf32>
    %442 = vector.extract_strided_slice %436 {offsets = [1, 0], sizes = [1, 32], strides = [1, 1]} : vector<16x32xf32> to vector<1x32xf32>
    %443 = vector.extract_strided_slice %436 {offsets = [2, 0], sizes = [1, 32], strides = [1, 1]} : vector<16x32xf32> to vector<1x32xf32>
    %444 = vector.extract_strided_slice %436 {offsets = [3, 0], sizes = [1, 32], strides = [1, 1]} : vector<16x32xf32> to vector<1x32xf32>
    %445 = vector.extract_strided_slice %436 {offsets = [9, 0], sizes = [1, 32], strides = [1, 1]} : vector<16x32xf32> to vector<1x32xf32>
    %446 = vector.extract_strided_slice %436 {offsets = [10, 0], sizes = [1, 32], strides = [1, 1]} : vector<16x32xf32> to vector<1x32xf32>
    %447 = vector.extract_strided_slice %440 {offsets = [0, 0, 0], sizes = [1, 32, 32], strides = [1, 1, 1]} : vector<4x32x32xbf16> to vector<1x32x32xbf16>
    %448 = vector.shape_cast %447 : vector<1x32x32xbf16> to vector<32x32xbf16>
    %cst_118 = arith.constant dense<0.000000e+00> : vector<16x32xf32>
    %449 = tpu.matmul %438, %448, %cst_118 {dimension_numbers = #tpu.dot_dimension_numbers<[1], [0], [0], [1], [0, 0, 1, 1], [], []>} : vector<16x32xbf16>, vector<32x32xbf16>, vector<16x32xf32> -> vector<16x32xf32>
    %450 = vector.broadcast %441 : vector<1x32xf32> to vector<16x32xf32>
    %451 = arith.addf %449, %450 : vector<16x32xf32>
    %452 = vector.extract_strided_slice %440 {offsets = [1, 0, 0], sizes = [1, 32, 32], strides = [1, 1, 1]} : vector<4x32x32xbf16> to vector<1x32x32xbf16>
    %453 = vector.shape_cast %452 : vector<1x32x32xbf16> to vector<32x32xbf16>
    %cst_119 = arith.constant dense<0.000000e+00> : vector<16x32xf32>
    %454 = tpu.matmul %438, %453, %cst_119 {dimension_numbers = #tpu.dot_dimension_numbers<[1], [0], [0], [1], [0, 0, 1, 1], [], []>} : vector<16x32xbf16>, vector<32x32xbf16>, vector<16x32xf32> -> vector<16x32xf32>
    %455 = vector.broadcast %442 : vector<1x32xf32> to vector<16x32xf32>
    %456 = arith.addf %454, %455 : vector<16x32xf32>
    %457 = vector.extract_strided_slice %440 {offsets = [2, 0, 0], sizes = [1, 32, 32], strides = [1, 1, 1]} : vector<4x32x32xbf16> to vector<1x32x32xbf16>
    %458 = vector.shape_cast %457 : vector<1x32x32xbf16> to vector<32x32xbf16>
    %cst_120 = arith.constant dense<0.000000e+00> : vector<16x32xf32>
    %459 = tpu.matmul %439, %458, %cst_120 {dimension_numbers = #tpu.dot_dimension_numbers<[1], [0], [0], [1], [0, 0, 1, 1], [], []>} : vector<16x32xbf16>, vector<32x32xbf16>, vector<16x32xf32> -> vector<16x32xf32>
    %460 = vector.broadcast %443 : vector<1x32xf32> to vector<16x32xf32>
    %461 = arith.addf %459, %460 : vector<16x32xf32>
    %462 = vector.extract_strided_slice %451 {offsets = [0, 0], sizes = [8, 32], strides = [1, 1]} : vector<16x32xf32> to vector<8x32xf32>
    %cst_121 = arith.constant 0.353553385 : f32
    %463 = vector.broadcast %cst_121 : f32 to vector<8x32xf32>
    %464 = arith.mulf %462, %463 : vector<8x32xf32>
    %465 = arith.truncf %464 : vector<8x32xf32> to vector<8x32xbf16>
    %466 = vector.extract_strided_slice %456 {offsets = [0, 0], sizes = [8, 32], strides = [1, 1]} : vector<16x32xf32> to vector<8x32xf32>
    %467 = arith.truncf %466 : vector<8x32xf32> to vector<8x32xbf16>
    %468 = vector.extract_strided_slice %461 {offsets = [0, 0], sizes = [8, 32], strides = [1, 1]} : vector<16x32xf32> to vector<8x32xf32>
    %469 = arith.truncf %468 : vector<8x32xf32> to vector<8x32xbf16>
    %470 = vector.extract_strided_slice %465 {offsets = [0, 0], sizes = [8, 8], strides = [1, 1]} : vector<8x32xbf16> to vector<8x8xbf16>
    %471 = vector.extract_strided_slice %467 {offsets = [0, 0], sizes = [8, 8], strides = [1, 1]} : vector<8x32xbf16> to vector<8x8xbf16>
    %cst_122 = arith.constant dense<0.000000e+00> : vector<8x8xf32>
    %472 = tpu.matmul %470, %471, %cst_122 {dimension_numbers = #tpu.dot_dimension_numbers<[1], [1], [0], [0], [0, 0, 1, 0], [], []>} : vector<8x8xbf16>, vector<8x8xbf16>, vector<8x8xf32> -> vector<8x8xf32>
    %cst_123 = arith.constant dense<0xFF800000> : vector<8xf32>
    %473 = vector.multi_reduction <maximumf>, %472, %cst_123 [1] : vector<8x8xf32> to vector<8xf32>
    %474 = vector.shape_cast %473 : vector<8xf32> to vector<8x1xf32>
    %475 = vector.broadcast %474 : vector<8x1xf32> to vector<8x8xf32>
    %476 = arith.subf %472, %475 : vector<8x8xf32>
    %477 = math.exp %476 : vector<8x8xf32>
    %cst_124 = arith.constant dense<0.000000e+00> : vector<8xf32>
    %478 = vector.multi_reduction <add>, %477, %cst_124 [1] : vector<8x8xf32> to vector<8xf32>
    %479 = vector.shape_cast %478 : vector<8xf32> to vector<8x1xf32>
    %480 = vector.broadcast %479 : vector<8x1xf32> to vector<8x8xf32>
    %481 = arith.divf %477, %480 : vector<8x8xf32>
    %482 = arith.truncf %481 : vector<8x8xf32> to vector<8x8xbf16>
    %483 = vector.extract_strided_slice %469 {offsets = [0, 0], sizes = [8, 8], strides = [1, 1]} : vector<8x32xbf16> to vector<8x8xbf16>
    %cst_125 = arith.constant dense<0.000000e+00> : vector<8x8xf32>
    %484 = tpu.matmul %482, %483, %cst_125 {dimension_numbers = #tpu.dot_dimension_numbers<[1], [0], [0], [1], [0, 0, 1, 1], [], []>} : vector<8x8xbf16>, vector<8x8xbf16>, vector<8x8xf32> -> vector<8x8xf32>
    %485 = vector.extract_strided_slice %465 {offsets = [0, 8], sizes = [8, 8], strides = [1, 1]} : vector<8x32xbf16> to vector<8x8xbf16>
    %486 = vector.extract_strided_slice %467 {offsets = [0, 8], sizes = [8, 8], strides = [1, 1]} : vector<8x32xbf16> to vector<8x8xbf16>
    %cst_126 = arith.constant dense<0.000000e+00> : vector<8x8xf32>
    %487 = tpu.matmul %485, %486, %cst_126 {dimension_numbers = #tpu.dot_dimension_numbers<[1], [1], [0], [0], [0, 0, 1, 0], [], []>} : vector<8x8xbf16>, vector<8x8xbf16>, vector<8x8xf32> -> vector<8x8xf32>
    %cst_127 = arith.constant dense<0xFF800000> : vector<8xf32>
    %488 = vector.multi_reduction <maximumf>, %487, %cst_127 [1] : vector<8x8xf32> to vector<8xf32>
    %489 = vector.shape_cast %488 : vector<8xf32> to vector<8x1xf32>
    %490 = vector.broadcast %489 : vector<8x1xf32> to vector<8x8xf32>
    %491 = arith.subf %487, %490 : vector<8x8xf32>
    %492 = math.exp %491 : vector<8x8xf32>
    %cst_128 = arith.constant dense<0.000000e+00> : vector<8xf32>
    %493 = vector.multi_reduction <add>, %492, %cst_128 [1] : vector<8x8xf32> to vector<8xf32>
    %494 = vector.shape_cast %493 : vector<8xf32> to vector<8x1xf32>
    %495 = vector.broadcast %494 : vector<8x1xf32> to vector<8x8xf32>
    %496 = arith.divf %492, %495 : vector<8x8xf32>
    %497 = arith.truncf %496 : vector<8x8xf32> to vector<8x8xbf16>
    %498 = vector.extract_strided_slice %469 {offsets = [0, 8], sizes = [8, 8], strides = [1, 1]} : vector<8x32xbf16> to vector<8x8xbf16>
    %cst_129 = arith.constant dense<0.000000e+00> : vector<8x8xf32>
    %499 = tpu.matmul %497, %498, %cst_129 {dimension_numbers = #tpu.dot_dimension_numbers<[1], [0], [0], [1], [0, 0, 1, 1], [], []>} : vector<8x8xbf16>, vector<8x8xbf16>, vector<8x8xf32> -> vector<8x8xf32>
    %500 = vector.extract_strided_slice %465 {offsets = [0, 16], sizes = [8, 8], strides = [1, 1]} : vector<8x32xbf16> to vector<8x8xbf16>
    %501 = vector.extract_strided_slice %467 {offsets = [0, 16], sizes = [8, 8], strides = [1, 1]} : vector<8x32xbf16> to vector<8x8xbf16>
    %cst_130 = arith.constant dense<0.000000e+00> : vector<8x8xf32>
    %502 = tpu.matmul %500, %501, %cst_130 {dimension_numbers = #tpu.dot_dimension_numbers<[1], [1], [0], [0], [0, 0, 1, 0], [], []>} : vector<8x8xbf16>, vector<8x8xbf16>, vector<8x8xf32> -> vector<8x8xf32>
    %cst_131 = arith.constant dense<0xFF800000> : vector<8xf32>
    %503 = vector.multi_reduction <maximumf>, %502, %cst_131 [1] : vector<8x8xf32> to vector<8xf32>
    %504 = vector.shape_cast %503 : vector<8xf32> to vector<8x1xf32>
    %505 = vector.broadcast %504 : vector<8x1xf32> to vector<8x8xf32>
    %506 = arith.subf %502, %505 : vector<8x8xf32>
    %507 = math.exp %506 : vector<8x8xf32>
    %cst_132 = arith.constant dense<0.000000e+00> : vector<8xf32>
    %508 = vector.multi_reduction <add>, %507, %cst_132 [1] : vector<8x8xf32> to vector<8xf32>
    %509 = vector.shape_cast %508 : vector<8xf32> to vector<8x1xf32>
    %510 = vector.broadcast %509 : vector<8x1xf32> to vector<8x8xf32>
    %511 = arith.divf %507, %510 : vector<8x8xf32>
    %512 = arith.truncf %511 : vector<8x8xf32> to vector<8x8xbf16>
    %513 = vector.extract_strided_slice %469 {offsets = [0, 16], sizes = [8, 8], strides = [1, 1]} : vector<8x32xbf16> to vector<8x8xbf16>
    %cst_133 = arith.constant dense<0.000000e+00> : vector<8x8xf32>
    %514 = tpu.matmul %512, %513, %cst_133 {dimension_numbers = #tpu.dot_dimension_numbers<[1], [0], [0], [1], [0, 0, 1, 1], [], []>} : vector<8x8xbf16>, vector<8x8xbf16>, vector<8x8xf32> -> vector<8x8xf32>
    %515 = vector.extract_strided_slice %465 {offsets = [0, 24], sizes = [8, 8], strides = [1, 1]} : vector<8x32xbf16> to vector<8x8xbf16>
    %516 = vector.extract_strided_slice %467 {offsets = [0, 24], sizes = [8, 8], strides = [1, 1]} : vector<8x32xbf16> to vector<8x8xbf16>
    %cst_134 = arith.constant dense<0.000000e+00> : vector<8x8xf32>
    %517 = tpu.matmul %515, %516, %cst_134 {dimension_numbers = #tpu.dot_dimension_numbers<[1], [1], [0], [0], [0, 0, 1, 0], [], []>} : vector<8x8xbf16>, vector<8x8xbf16>, vector<8x8xf32> -> vector<8x8xf32>
    %cst_135 = arith.constant dense<0xFF800000> : vector<8xf32>
    %518 = vector.multi_reduction <maximumf>, %517, %cst_135 [1] : vector<8x8xf32> to vector<8xf32>
    %519 = vector.shape_cast %518 : vector<8xf32> to vector<8x1xf32>
    %520 = vector.broadcast %519 : vector<8x1xf32> to vector<8x8xf32>
    %521 = arith.subf %517, %520 : vector<8x8xf32>
    %522 = math.exp %521 : vector<8x8xf32>
    %cst_136 = arith.constant dense<0.000000e+00> : vector<8xf32>
    %523 = vector.multi_reduction <add>, %522, %cst_136 [1] : vector<8x8xf32> to vector<8xf32>
    %524 = vector.shape_cast %523 : vector<8xf32> to vector<8x1xf32>
    %525 = vector.broadcast %524 : vector<8x1xf32> to vector<8x8xf32>
    %526 = arith.divf %522, %525 : vector<8x8xf32>
    %527 = arith.truncf %526 : vector<8x8xf32> to vector<8x8xbf16>
    %528 = vector.extract_strided_slice %469 {offsets = [0, 24], sizes = [8, 8], strides = [1, 1]} : vector<8x32xbf16> to vector<8x8xbf16>
    %cst_137 = arith.constant dense<0.000000e+00> : vector<8x8xf32>
    %529 = tpu.matmul %527, %528, %cst_137 {dimension_numbers = #tpu.dot_dimension_numbers<[1], [0], [0], [1], [0, 0, 1, 1], [], []>} : vector<8x8xbf16>, vector<8x8xbf16>, vector<8x8xf32> -> vector<8x8xf32>
    %530 = tpu.concatenate %484, %499, %514, %529 in 1 : vector<8x8xf32>, vector<8x8xf32>, vector<8x8xf32>, vector<8x8xf32> -> vector<8x32xf32>
    %531 = vector.extract_strided_slice %451 {offsets = [8, 0], sizes = [8, 32], strides = [1, 1]} : vector<16x32xf32> to vector<8x32xf32>
    %cst_138 = arith.constant 0.353553385 : f32
    %532 = vector.broadcast %cst_138 : f32 to vector<8x32xf32>
    %533 = arith.mulf %531, %532 : vector<8x32xf32>
    %534 = arith.truncf %533 : vector<8x32xf32> to vector<8x32xbf16>
    %535 = vector.extract_strided_slice %456 {offsets = [8, 0], sizes = [8, 32], strides = [1, 1]} : vector<16x32xf32> to vector<8x32xf32>
    %536 = arith.truncf %535 : vector<8x32xf32> to vector<8x32xbf16>
    %537 = vector.extract_strided_slice %461 {offsets = [8, 0], sizes = [8, 32], strides = [1, 1]} : vector<16x32xf32> to vector<8x32xf32>
    %538 = arith.truncf %537 : vector<8x32xf32> to vector<8x32xbf16>
    %539 = vector.extract_strided_slice %534 {offsets = [0, 0], sizes = [8, 8], strides = [1, 1]} : vector<8x32xbf16> to vector<8x8xbf16>
    %540 = vector.extract_strided_slice %536 {offsets = [0, 0], sizes = [8, 8], strides = [1, 1]} : vector<8x32xbf16> to vector<8x8xbf16>
    %cst_139 = arith.constant dense<0.000000e+00> : vector<8x8xf32>
    %541 = tpu.matmul %539, %540, %cst_139 {dimension_numbers = #tpu.dot_dimension_numbers<[1], [1], [0], [0], [0, 0, 1, 0], [], []>} : vector<8x8xbf16>, vector<8x8xbf16>, vector<8x8xf32> -> vector<8x8xf32>
    %cst_140 = arith.constant dense<0xFF800000> : vector<8xf32>
    %542 = vector.multi_reduction <maximumf>, %541, %cst_140 [1] : vector<8x8xf32> to vector<8xf32>
    %543 = vector.shape_cast %542 : vector<8xf32> to vector<8x1xf32>
    %544 = vector.broadcast %543 : vector<8x1xf32> to vector<8x8xf32>
    %545 = arith.subf %541, %544 : vector<8x8xf32>
    %546 = math.exp %545 : vector<8x8xf32>
    %cst_141 = arith.constant dense<0.000000e+00> : vector<8xf32>
    %547 = vector.multi_reduction <add>, %546, %cst_141 [1] : vector<8x8xf32> to vector<8xf32>
    %548 = vector.shape_cast %547 : vector<8xf32> to vector<8x1xf32>
    %549 = vector.broadcast %548 : vector<8x1xf32> to vector<8x8xf32>
    %550 = arith.divf %546, %549 : vector<8x8xf32>
    %551 = arith.truncf %550 : vector<8x8xf32> to vector<8x8xbf16>
    %552 = vector.extract_strided_slice %538 {offsets = [0, 0], sizes = [8, 8], strides = [1, 1]} : vector<8x32xbf16> to vector<8x8xbf16>
    %cst_142 = arith.constant dense<0.000000e+00> : vector<8x8xf32>
    %553 = tpu.matmul %551, %552, %cst_142 {dimension_numbers = #tpu.dot_dimension_numbers<[1], [0], [0], [1], [0, 0, 1, 1], [], []>} : vector<8x8xbf16>, vector<8x8xbf16>, vector<8x8xf32> -> vector<8x8xf32>
    %554 = vector.extract_strided_slice %534 {offsets = [0, 8], sizes = [8, 8], strides = [1, 1]} : vector<8x32xbf16> to vector<8x8xbf16>
    %555 = vector.extract_strided_slice %536 {offsets = [0, 8], sizes = [8, 8], strides = [1, 1]} : vector<8x32xbf16> to vector<8x8xbf16>
    %cst_143 = arith.constant dense<0.000000e+00> : vector<8x8xf32>
    %556 = tpu.matmul %554, %555, %cst_143 {dimension_numbers = #tpu.dot_dimension_numbers<[1], [1], [0], [0], [0, 0, 1, 0], [], []>} : vector<8x8xbf16>, vector<8x8xbf16>, vector<8x8xf32> -> vector<8x8xf32>
    %cst_144 = arith.constant dense<0xFF800000> : vector<8xf32>
    %557 = vector.multi_reduction <maximumf>, %556, %cst_144 [1] : vector<8x8xf32> to vector<8xf32>
    %558 = vector.shape_cast %557 : vector<8xf32> to vector<8x1xf32>
    %559 = vector.broadcast %558 : vector<8x1xf32> to vector<8x8xf32>
    %560 = arith.subf %556, %559 : vector<8x8xf32>
    %561 = math.exp %560 : vector<8x8xf32>
    %cst_145 = arith.constant dense<0.000000e+00> : vector<8xf32>
    %562 = vector.multi_reduction <add>, %561, %cst_145 [1] : vector<8x8xf32> to vector<8xf32>
    %563 = vector.shape_cast %562 : vector<8xf32> to vector<8x1xf32>
    %564 = vector.broadcast %563 : vector<8x1xf32> to vector<8x8xf32>
    %565 = arith.divf %561, %564 : vector<8x8xf32>
    %566 = arith.truncf %565 : vector<8x8xf32> to vector<8x8xbf16>
    %567 = vector.extract_strided_slice %538 {offsets = [0, 8], sizes = [8, 8], strides = [1, 1]} : vector<8x32xbf16> to vector<8x8xbf16>
    %cst_146 = arith.constant dense<0.000000e+00> : vector<8x8xf32>
    %568 = tpu.matmul %566, %567, %cst_146 {dimension_numbers = #tpu.dot_dimension_numbers<[1], [0], [0], [1], [0, 0, 1, 1], [], []>} : vector<8x8xbf16>, vector<8x8xbf16>, vector<8x8xf32> -> vector<8x8xf32>
    %569 = vector.extract_strided_slice %534 {offsets = [0, 16], sizes = [8, 8], strides = [1, 1]} : vector<8x32xbf16> to vector<8x8xbf16>
    %570 = vector.extract_strided_slice %536 {offsets = [0, 16], sizes = [8, 8], strides = [1, 1]} : vector<8x32xbf16> to vector<8x8xbf16>
    %cst_147 = arith.constant dense<0.000000e+00> : vector<8x8xf32>
    %571 = tpu.matmul %569, %570, %cst_147 {dimension_numbers = #tpu.dot_dimension_numbers<[1], [1], [0], [0], [0, 0, 1, 0], [], []>} : vector<8x8xbf16>, vector<8x8xbf16>, vector<8x8xf32> -> vector<8x8xf32>
    %cst_148 = arith.constant dense<0xFF800000> : vector<8xf32>
    %572 = vector.multi_reduction <maximumf>, %571, %cst_148 [1] : vector<8x8xf32> to vector<8xf32>
    %573 = vector.shape_cast %572 : vector<8xf32> to vector<8x1xf32>
    %574 = vector.broadcast %573 : vector<8x1xf32> to vector<8x8xf32>
    %575 = arith.subf %571, %574 : vector<8x8xf32>
    %576 = math.exp %575 : vector<8x8xf32>
    %cst_149 = arith.constant dense<0.000000e+00> : vector<8xf32>
    %577 = vector.multi_reduction <add>, %576, %cst_149 [1] : vector<8x8xf32> to vector<8xf32>
    %578 = vector.shape_cast %577 : vector<8xf32> to vector<8x1xf32>
    %579 = vector.broadcast %578 : vector<8x1xf32> to vector<8x8xf32>
    %580 = arith.divf %576, %579 : vector<8x8xf32>
    %581 = arith.truncf %580 : vector<8x8xf32> to vector<8x8xbf16>
    %582 = vector.extract_strided_slice %538 {offsets = [0, 16], sizes = [8, 8], strides = [1, 1]} : vector<8x32xbf16> to vector<8x8xbf16>
    %cst_150 = arith.constant dense<0.000000e+00> : vector<8x8xf32>
    %583 = tpu.matmul %581, %582, %cst_150 {dimension_numbers = #tpu.dot_dimension_numbers<[1], [0], [0], [1], [0, 0, 1, 1], [], []>} : vector<8x8xbf16>, vector<8x8xbf16>, vector<8x8xf32> -> vector<8x8xf32>
    %584 = vector.extract_strided_slice %534 {offsets = [0, 24], sizes = [8, 8], strides = [1, 1]} : vector<8x32xbf16> to vector<8x8xbf16>
    %585 = vector.extract_strided_slice %536 {offsets = [0, 24], sizes = [8, 8], strides = [1, 1]} : vector<8x32xbf16> to vector<8x8xbf16>
    %cst_151 = arith.constant dense<0.000000e+00> : vector<8x8xf32>
    %586 = tpu.matmul %584, %585, %cst_151 {dimension_numbers = #tpu.dot_dimension_numbers<[1], [1], [0], [0], [0, 0, 1, 0], [], []>} : vector<8x8xbf16>, vector<8x8xbf16>, vector<8x8xf32> -> vector<8x8xf32>
    %cst_152 = arith.constant dense<0xFF800000> : vector<8xf32>
    %587 = vector.multi_reduction <maximumf>, %586, %cst_152 [1] : vector<8x8xf32> to vector<8xf32>
    %588 = vector.shape_cast %587 : vector<8xf32> to vector<8x1xf32>
    %589 = vector.broadcast %588 : vector<8x1xf32> to vector<8x8xf32>
    %590 = arith.subf %586, %589 : vector<8x8xf32>
    %591 = math.exp %590 : vector<8x8xf32>
    %cst_153 = arith.constant dense<0.000000e+00> : vector<8xf32>
    %592 = vector.multi_reduction <add>, %591, %cst_153 [1] : vector<8x8xf32> to vector<8xf32>
    %593 = vector.shape_cast %592 : vector<8xf32> to vector<8x1xf32>
    %594 = vector.broadcast %593 : vector<8x1xf32> to vector<8x8xf32>
    %595 = arith.divf %591, %594 : vector<8x8xf32>
    %596 = arith.truncf %595 : vector<8x8xf32> to vector<8x8xbf16>
    %597 = vector.extract_strided_slice %538 {offsets = [0, 24], sizes = [8, 8], strides = [1, 1]} : vector<8x32xbf16> to vector<8x8xbf16>
    %cst_154 = arith.constant dense<0.000000e+00> : vector<8x8xf32>
    %598 = tpu.matmul %596, %597, %cst_154 {dimension_numbers = #tpu.dot_dimension_numbers<[1], [0], [0], [1], [0, 0, 1, 1], [], []>} : vector<8x8xbf16>, vector<8x8xbf16>, vector<8x8xf32> -> vector<8x8xf32>
    %599 = tpu.concatenate %553, %568, %583, %598 in 1 : vector<8x8xf32>, vector<8x8xf32>, vector<8x8xf32>, vector<8x8xf32> -> vector<8x32xf32>
    %600 = tpu.concatenate %530, %599 in 0 : vector<8x32xf32>, vector<8x32xf32> -> vector<16x32xf32>
    %601 = arith.truncf %600 : vector<16x32xf32> to vector<16x32xbf16>
    %602 = vector.extract_strided_slice %440 {offsets = [3, 0, 0], sizes = [1, 32, 32], strides = [1, 1, 1]} : vector<4x32x32xbf16> to vector<1x32x32xbf16>
    %603 = vector.shape_cast %602 : vector<1x32x32xbf16> to vector<32x32xbf16>
    %cst_155 = arith.constant dense<0.000000e+00> : vector<16x32xf32>
    %604 = tpu.matmul %601, %603, %cst_155 {dimension_numbers = #tpu.dot_dimension_numbers<[1], [0], [0], [1], [0, 0, 1, 1], [], []>} : vector<16x32xbf16>, vector<32x32xbf16>, vector<16x32xf32> -> vector<16x32xf32>
    %605 = vector.broadcast %444 : vector<1x32xf32> to vector<16x32xf32>
    %606 = arith.addf %604, %605 : vector<16x32xf32>
    %607 = arith.addf %606, %432 : vector<16x32xf32>
    %cst_156 = arith.constant dense<0.000000e+00> : vector<16xf32>
    %608 = vector.multi_reduction <add>, %607, %cst_156 [1] : vector<16x32xf32> to vector<16xf32>
    %609 = vector.shape_cast %608 : vector<16xf32> to vector<16x1xf32>
    %cst_157 = arith.constant 3.200000e+01 : f32
    %610 = vector.broadcast %cst_157 : f32 to vector<16x1xf32>
    %611 = arith.divf %609, %610 : vector<16x1xf32>
    %612 = vector.broadcast %611 : vector<16x1xf32> to vector<16x32xf32>
    %613 = arith.subf %607, %612 : vector<16x32xf32>
    %614 = arith.mulf %613, %613 : vector<16x32xf32>
    %cst_158 = arith.constant dense<0.000000e+00> : vector<16xf32>
    %615 = vector.multi_reduction <add>, %614, %cst_158 [1] : vector<16x32xf32> to vector<16xf32>
    %616 = vector.shape_cast %615 : vector<16xf32> to vector<16x1xf32>
    %cst_159 = arith.constant 3.200000e+01 : f32
    %617 = vector.broadcast %cst_159 : f32 to vector<16x1xf32>
    %618 = arith.divf %616, %617 : vector<16x1xf32>
    %cst_160 = arith.constant 9.99999974E-6 : f32
    %619 = vector.broadcast %cst_160 : f32 to vector<16x1xf32>
    %620 = arith.addf %618, %619 : vector<16x1xf32>
    %621 = math.rsqrt %620 : vector<16x1xf32>
    %622 = vector.broadcast %621 : vector<16x1xf32> to vector<16x32xf32>
    %623 = arith.mulf %613, %622 : vector<16x32xf32>
    %624 = vector.broadcast %445 : vector<1x32xf32> to vector<16x32xf32>
    %625 = arith.mulf %623, %624 : vector<16x32xf32>
    %626 = vector.broadcast %446 : vector<1x32xf32> to vector<16x32xf32>
    %627 = arith.addf %625, %626 : vector<16x32xf32>
    %628 = arith.addf %627, %1 : vector<16x32xf32>
    %629 = arith.truncf %628 : vector<16x32xf32> to vector<16x32xbf16>
    %630 = vector.extract_strided_slice %434 {offsets = [4, 0, 0], sizes = [4, 32, 32], strides = [1, 1, 1]} : vector<8x32x32xbf16> to vector<4x32x32xbf16>
    %631 = vector.extract_strided_slice %436 {offsets = [4, 0], sizes = [1, 32], strides = [1, 1]} : vector<16x32xf32> to vector<1x32xf32>
    %632 = vector.extract_strided_slice %436 {offsets = [5, 0], sizes = [1, 32], strides = [1, 1]} : vector<16x32xf32> to vector<1x32xf32>
    %633 = vector.extract_strided_slice %436 {offsets = [6, 0], sizes = [1, 32], strides = [1, 1]} : vector<16x32xf32> to vector<1x32xf32>
    %634 = vector.extract_strided_slice %436 {offsets = [7, 0], sizes = [1, 32], strides = [1, 1]} : vector<16x32xf32> to vector<1x32xf32>
    %635 = vector.extract_strided_slice %436 {offsets = [11, 0], sizes = [1, 32], strides = [1, 1]} : vector<16x32xf32> to vector<1x32xf32>
    %636 = vector.extract_strided_slice %436 {offsets = [12, 0], sizes = [1, 32], strides = [1, 1]} : vector<16x32xf32> to vector<1x32xf32>
    %637 = vector.extract_strided_slice %630 {offsets = [0, 0, 0], sizes = [1, 32, 32], strides = [1, 1, 1]} : vector<4x32x32xbf16> to vector<1x32x32xbf16>
    %638 = vector.shape_cast %637 : vector<1x32x32xbf16> to vector<32x32xbf16>
    %cst_161 = arith.constant dense<0.000000e+00> : vector<16x32xf32>
    %639 = tpu.matmul %629, %638, %cst_161 {dimension_numbers = #tpu.dot_dimension_numbers<[1], [0], [0], [1], [0, 0, 1, 1], [], []>} : vector<16x32xbf16>, vector<32x32xbf16>, vector<16x32xf32> -> vector<16x32xf32>
    %640 = vector.broadcast %631 : vector<1x32xf32> to vector<16x32xf32>
    %641 = arith.addf %639, %640 : vector<16x32xf32>
    %642 = vector.extract_strided_slice %630 {offsets = [1, 0, 0], sizes = [1, 32, 32], strides = [1, 1, 1]} : vector<4x32x32xbf16> to vector<1x32x32xbf16>
    %643 = vector.shape_cast %642 : vector<1x32x32xbf16> to vector<32x32xbf16>
    %cst_162 = arith.constant dense<0.000000e+00> : vector<32x32xf32>
    %644 = tpu.matmul %7, %643, %cst_162 {dimension_numbers = #tpu.dot_dimension_numbers<[1], [0], [0], [1], [0, 0, 1, 1], [], []>} : vector<32x32xbf16>, vector<32x32xbf16>, vector<32x32xf32> -> vector<32x32xf32>
    %645 = vector.broadcast %632 : vector<1x32xf32> to vector<32x32xf32>
    %646 = arith.addf %644, %645 : vector<32x32xf32>
    %647 = vector.extract_strided_slice %630 {offsets = [2, 0, 0], sizes = [1, 32, 32], strides = [1, 1, 1]} : vector<4x32x32xbf16> to vector<1x32x32xbf16>
    %648 = vector.shape_cast %647 : vector<1x32x32xbf16> to vector<32x32xbf16>
    %cst_163 = arith.constant dense<0.000000e+00> : vector<32x32xf32>
    %649 = tpu.matmul %8, %648, %cst_163 {dimension_numbers = #tpu.dot_dimension_numbers<[1], [0], [0], [1], [0, 0, 1, 1], [], []>} : vector<32x32xbf16>, vector<32x32xbf16>, vector<32x32xf32> -> vector<32x32xf32>
    %650 = vector.broadcast %633 : vector<1x32xf32> to vector<32x32xf32>
    %651 = arith.addf %649, %650 : vector<32x32xf32>
    %652 = vector.extract_strided_slice %641 {offsets = [0, 0], sizes = [8, 32], strides = [1, 1]} : vector<16x32xf32> to vector<8x32xf32>
    %cst_164 = arith.constant 0.353553385 : f32
    %653 = vector.broadcast %cst_164 : f32 to vector<8x32xf32>
    %654 = arith.mulf %652, %653 : vector<8x32xf32>
    %655 = arith.truncf %654 : vector<8x32xf32> to vector<8x32xbf16>
    %656 = vector.extract_strided_slice %646 {offsets = [0, 0], sizes = [16, 32], strides = [1, 1]} : vector<32x32xf32> to vector<16x32xf32>
    %657 = arith.truncf %656 : vector<16x32xf32> to vector<16x32xbf16>
    %658 = vector.extract_strided_slice %651 {offsets = [0, 0], sizes = [16, 32], strides = [1, 1]} : vector<32x32xf32> to vector<16x32xf32>
    %659 = arith.truncf %658 : vector<16x32xf32> to vector<16x32xbf16>
    %660 = vector.extract_strided_slice %655 {offsets = [0, 0], sizes = [8, 8], strides = [1, 1]} : vector<8x32xbf16> to vector<8x8xbf16>
    %661 = vector.extract_strided_slice %657 {offsets = [0, 0], sizes = [16, 8], strides = [1, 1]} : vector<16x32xbf16> to vector<16x8xbf16>
    %cst_165 = arith.constant dense<0.000000e+00> : vector<8x16xf32>
    %662 = tpu.matmul %660, %661, %cst_165 {dimension_numbers = #tpu.dot_dimension_numbers<[1], [1], [0], [0], [0, 0, 1, 0], [], []>} : vector<8x8xbf16>, vector<16x8xbf16>, vector<8x16xf32> -> vector<8x16xf32>
    %cst_166 = arith.constant dense<0xFF800000> : vector<8xf32>
    %663 = vector.multi_reduction <maximumf>, %662, %cst_166 [1] : vector<8x16xf32> to vector<8xf32>
    %664 = vector.shape_cast %663 : vector<8xf32> to vector<8x1xf32>
    %665 = vector.broadcast %664 : vector<8x1xf32> to vector<8x16xf32>
    %666 = arith.subf %662, %665 : vector<8x16xf32>
    %667 = math.exp %666 : vector<8x16xf32>
    %cst_167 = arith.constant dense<0.000000e+00> : vector<8xf32>
    %668 = vector.multi_reduction <add>, %667, %cst_167 [1] : vector<8x16xf32> to vector<8xf32>
    %669 = vector.shape_cast %668 : vector<8xf32> to vector<8x1xf32>
    %670 = vector.broadcast %669 : vector<8x1xf32> to vector<8x16xf32>
    %671 = arith.divf %667, %670 : vector<8x16xf32>
    %672 = arith.truncf %671 : vector<8x16xf32> to vector<8x16xbf16>
    %673 = vector.extract_strided_slice %659 {offsets = [0, 0], sizes = [16, 8], strides = [1, 1]} : vector<16x32xbf16> to vector<16x8xbf16>
    %cst_168 = arith.constant dense<0.000000e+00> : vector<8x8xf32>
    %674 = tpu.matmul %672, %673, %cst_168 {dimension_numbers = #tpu.dot_dimension_numbers<[1], [0], [0], [1], [0, 0, 1, 1], [], []>} : vector<8x16xbf16>, vector<16x8xbf16>, vector<8x8xf32> -> vector<8x8xf32>
    %675 = vector.extract_strided_slice %655 {offsets = [0, 8], sizes = [8, 8], strides = [1, 1]} : vector<8x32xbf16> to vector<8x8xbf16>
    %676 = vector.extract_strided_slice %657 {offsets = [0, 8], sizes = [16, 8], strides = [1, 1]} : vector<16x32xbf16> to vector<16x8xbf16>
    %cst_169 = arith.constant dense<0.000000e+00> : vector<8x16xf32>
    %677 = tpu.matmul %675, %676, %cst_169 {dimension_numbers = #tpu.dot_dimension_numbers<[1], [1], [0], [0], [0, 0, 1, 0], [], []>} : vector<8x8xbf16>, vector<16x8xbf16>, vector<8x16xf32> -> vector<8x16xf32>
    %cst_170 = arith.constant dense<0xFF800000> : vector<8xf32>
    %678 = vector.multi_reduction <maximumf>, %677, %cst_170 [1] : vector<8x16xf32> to vector<8xf32>
    %679 = vector.shape_cast %678 : vector<8xf32> to vector<8x1xf32>
    %680 = vector.broadcast %679 : vector<8x1xf32> to vector<8x16xf32>
    %681 = arith.subf %677, %680 : vector<8x16xf32>
    %682 = math.exp %681 : vector<8x16xf32>
    %cst_171 = arith.constant dense<0.000000e+00> : vector<8xf32>
    %683 = vector.multi_reduction <add>, %682, %cst_171 [1] : vector<8x16xf32> to vector<8xf32>
    %684 = vector.shape_cast %683 : vector<8xf32> to vector<8x1xf32>
    %685 = vector.broadcast %684 : vector<8x1xf32> to vector<8x16xf32>
    %686 = arith.divf %682, %685 : vector<8x16xf32>
    %687 = arith.truncf %686 : vector<8x16xf32> to vector<8x16xbf16>
    %688 = vector.extract_strided_slice %659 {offsets = [0, 8], sizes = [16, 8], strides = [1, 1]} : vector<16x32xbf16> to vector<16x8xbf16>
    %cst_172 = arith.constant dense<0.000000e+00> : vector<8x8xf32>
    %689 = tpu.matmul %687, %688, %cst_172 {dimension_numbers = #tpu.dot_dimension_numbers<[1], [0], [0], [1], [0, 0, 1, 1], [], []>} : vector<8x16xbf16>, vector<16x8xbf16>, vector<8x8xf32> -> vector<8x8xf32>
    %690 = vector.extract_strided_slice %655 {offsets = [0, 16], sizes = [8, 8], strides = [1, 1]} : vector<8x32xbf16> to vector<8x8xbf16>
    %691 = vector.extract_strided_slice %657 {offsets = [0, 16], sizes = [16, 8], strides = [1, 1]} : vector<16x32xbf16> to vector<16x8xbf16>
    %cst_173 = arith.constant dense<0.000000e+00> : vector<8x16xf32>
    %692 = tpu.matmul %690, %691, %cst_173 {dimension_numbers = #tpu.dot_dimension_numbers<[1], [1], [0], [0], [0, 0, 1, 0], [], []>} : vector<8x8xbf16>, vector<16x8xbf16>, vector<8x16xf32> -> vector<8x16xf32>
    %cst_174 = arith.constant dense<0xFF800000> : vector<8xf32>
    %693 = vector.multi_reduction <maximumf>, %692, %cst_174 [1] : vector<8x16xf32> to vector<8xf32>
    %694 = vector.shape_cast %693 : vector<8xf32> to vector<8x1xf32>
    %695 = vector.broadcast %694 : vector<8x1xf32> to vector<8x16xf32>
    %696 = arith.subf %692, %695 : vector<8x16xf32>
    %697 = math.exp %696 : vector<8x16xf32>
    %cst_175 = arith.constant dense<0.000000e+00> : vector<8xf32>
    %698 = vector.multi_reduction <add>, %697, %cst_175 [1] : vector<8x16xf32> to vector<8xf32>
    %699 = vector.shape_cast %698 : vector<8xf32> to vector<8x1xf32>
    %700 = vector.broadcast %699 : vector<8x1xf32> to vector<8x16xf32>
    %701 = arith.divf %697, %700 : vector<8x16xf32>
    %702 = arith.truncf %701 : vector<8x16xf32> to vector<8x16xbf16>
    %703 = vector.extract_strided_slice %659 {offsets = [0, 16], sizes = [16, 8], strides = [1, 1]} : vector<16x32xbf16> to vector<16x8xbf16>
    %cst_176 = arith.constant dense<0.000000e+00> : vector<8x8xf32>
    %704 = tpu.matmul %702, %703, %cst_176 {dimension_numbers = #tpu.dot_dimension_numbers<[1], [0], [0], [1], [0, 0, 1, 1], [], []>} : vector<8x16xbf16>, vector<16x8xbf16>, vector<8x8xf32> -> vector<8x8xf32>
    %705 = vector.extract_strided_slice %655 {offsets = [0, 24], sizes = [8, 8], strides = [1, 1]} : vector<8x32xbf16> to vector<8x8xbf16>
    %706 = vector.extract_strided_slice %657 {offsets = [0, 24], sizes = [16, 8], strides = [1, 1]} : vector<16x32xbf16> to vector<16x8xbf16>
    %cst_177 = arith.constant dense<0.000000e+00> : vector<8x16xf32>
    %707 = tpu.matmul %705, %706, %cst_177 {dimension_numbers = #tpu.dot_dimension_numbers<[1], [1], [0], [0], [0, 0, 1, 0], [], []>} : vector<8x8xbf16>, vector<16x8xbf16>, vector<8x16xf32> -> vector<8x16xf32>
    %cst_178 = arith.constant dense<0xFF800000> : vector<8xf32>
    %708 = vector.multi_reduction <maximumf>, %707, %cst_178 [1] : vector<8x16xf32> to vector<8xf32>
    %709 = vector.shape_cast %708 : vector<8xf32> to vector<8x1xf32>
    %710 = vector.broadcast %709 : vector<8x1xf32> to vector<8x16xf32>
    %711 = arith.subf %707, %710 : vector<8x16xf32>
    %712 = math.exp %711 : vector<8x16xf32>
    %cst_179 = arith.constant dense<0.000000e+00> : vector<8xf32>
    %713 = vector.multi_reduction <add>, %712, %cst_179 [1] : vector<8x16xf32> to vector<8xf32>
    %714 = vector.shape_cast %713 : vector<8xf32> to vector<8x1xf32>
    %715 = vector.broadcast %714 : vector<8x1xf32> to vector<8x16xf32>
    %716 = arith.divf %712, %715 : vector<8x16xf32>
    %717 = arith.truncf %716 : vector<8x16xf32> to vector<8x16xbf16>
    %718 = vector.extract_strided_slice %659 {offsets = [0, 24], sizes = [16, 8], strides = [1, 1]} : vector<16x32xbf16> to vector<16x8xbf16>
    %cst_180 = arith.constant dense<0.000000e+00> : vector<8x8xf32>
    %719 = tpu.matmul %717, %718, %cst_180 {dimension_numbers = #tpu.dot_dimension_numbers<[1], [0], [0], [1], [0, 0, 1, 1], [], []>} : vector<8x16xbf16>, vector<16x8xbf16>, vector<8x8xf32> -> vector<8x8xf32>
    %720 = tpu.concatenate %674, %689, %704, %719 in 1 : vector<8x8xf32>, vector<8x8xf32>, vector<8x8xf32>, vector<8x8xf32> -> vector<8x32xf32>
    %721 = vector.extract_strided_slice %641 {offsets = [8, 0], sizes = [8, 32], strides = [1, 1]} : vector<16x32xf32> to vector<8x32xf32>
    %cst_181 = arith.constant 0.353553385 : f32
    %722 = vector.broadcast %cst_181 : f32 to vector<8x32xf32>
    %723 = arith.mulf %721, %722 : vector<8x32xf32>
    %724 = arith.truncf %723 : vector<8x32xf32> to vector<8x32xbf16>
    %725 = vector.extract_strided_slice %646 {offsets = [16, 0], sizes = [16, 32], strides = [1, 1]} : vector<32x32xf32> to vector<16x32xf32>
    %726 = arith.truncf %725 : vector<16x32xf32> to vector<16x32xbf16>
    %727 = vector.extract_strided_slice %651 {offsets = [16, 0], sizes = [16, 32], strides = [1, 1]} : vector<32x32xf32> to vector<16x32xf32>
    %728 = arith.truncf %727 : vector<16x32xf32> to vector<16x32xbf16>
    %729 = vector.extract_strided_slice %724 {offsets = [0, 0], sizes = [8, 8], strides = [1, 1]} : vector<8x32xbf16> to vector<8x8xbf16>
    %730 = vector.extract_strided_slice %726 {offsets = [0, 0], sizes = [16, 8], strides = [1, 1]} : vector<16x32xbf16> to vector<16x8xbf16>
    %cst_182 = arith.constant dense<0.000000e+00> : vector<8x16xf32>
    %731 = tpu.matmul %729, %730, %cst_182 {dimension_numbers = #tpu.dot_dimension_numbers<[1], [1], [0], [0], [0, 0, 1, 0], [], []>} : vector<8x8xbf16>, vector<16x8xbf16>, vector<8x16xf32> -> vector<8x16xf32>
    %cst_183 = arith.constant dense<0xFF800000> : vector<8xf32>
    %732 = vector.multi_reduction <maximumf>, %731, %cst_183 [1] : vector<8x16xf32> to vector<8xf32>
    %733 = vector.shape_cast %732 : vector<8xf32> to vector<8x1xf32>
    %734 = vector.broadcast %733 : vector<8x1xf32> to vector<8x16xf32>
    %735 = arith.subf %731, %734 : vector<8x16xf32>
    %736 = math.exp %735 : vector<8x16xf32>
    %cst_184 = arith.constant dense<0.000000e+00> : vector<8xf32>
    %737 = vector.multi_reduction <add>, %736, %cst_184 [1] : vector<8x16xf32> to vector<8xf32>
    %738 = vector.shape_cast %737 : vector<8xf32> to vector<8x1xf32>
    %739 = vector.broadcast %738 : vector<8x1xf32> to vector<8x16xf32>
    %740 = arith.divf %736, %739 : vector<8x16xf32>
    %741 = arith.truncf %740 : vector<8x16xf32> to vector<8x16xbf16>
    %742 = vector.extract_strided_slice %728 {offsets = [0, 0], sizes = [16, 8], strides = [1, 1]} : vector<16x32xbf16> to vector<16x8xbf16>
    %cst_185 = arith.constant dense<0.000000e+00> : vector<8x8xf32>
    %743 = tpu.matmul %741, %742, %cst_185 {dimension_numbers = #tpu.dot_dimension_numbers<[1], [0], [0], [1], [0, 0, 1, 1], [], []>} : vector<8x16xbf16>, vector<16x8xbf16>, vector<8x8xf32> -> vector<8x8xf32>
    %744 = vector.extract_strided_slice %724 {offsets = [0, 8], sizes = [8, 8], strides = [1, 1]} : vector<8x32xbf16> to vector<8x8xbf16>
    %745 = vector.extract_strided_slice %726 {offsets = [0, 8], sizes = [16, 8], strides = [1, 1]} : vector<16x32xbf16> to vector<16x8xbf16>
    %cst_186 = arith.constant dense<0.000000e+00> : vector<8x16xf32>
    %746 = tpu.matmul %744, %745, %cst_186 {dimension_numbers = #tpu.dot_dimension_numbers<[1], [1], [0], [0], [0, 0, 1, 0], [], []>} : vector<8x8xbf16>, vector<16x8xbf16>, vector<8x16xf32> -> vector<8x16xf32>
    %cst_187 = arith.constant dense<0xFF800000> : vector<8xf32>
    %747 = vector.multi_reduction <maximumf>, %746, %cst_187 [1] : vector<8x16xf32> to vector<8xf32>
    %748 = vector.shape_cast %747 : vector<8xf32> to vector<8x1xf32>
    %749 = vector.broadcast %748 : vector<8x1xf32> to vector<8x16xf32>
    %750 = arith.subf %746, %749 : vector<8x16xf32>
    %751 = math.exp %750 : vector<8x16xf32>
    %cst_188 = arith.constant dense<0.000000e+00> : vector<8xf32>
    %752 = vector.multi_reduction <add>, %751, %cst_188 [1] : vector<8x16xf32> to vector<8xf32>
    %753 = vector.shape_cast %752 : vector<8xf32> to vector<8x1xf32>
    %754 = vector.broadcast %753 : vector<8x1xf32> to vector<8x16xf32>
    %755 = arith.divf %751, %754 : vector<8x16xf32>
    %756 = arith.truncf %755 : vector<8x16xf32> to vector<8x16xbf16>
    %757 = vector.extract_strided_slice %728 {offsets = [0, 8], sizes = [16, 8], strides = [1, 1]} : vector<16x32xbf16> to vector<16x8xbf16>
    %cst_189 = arith.constant dense<0.000000e+00> : vector<8x8xf32>
    %758 = tpu.matmul %756, %757, %cst_189 {dimension_numbers = #tpu.dot_dimension_numbers<[1], [0], [0], [1], [0, 0, 1, 1], [], []>} : vector<8x16xbf16>, vector<16x8xbf16>, vector<8x8xf32> -> vector<8x8xf32>
    %759 = vector.extract_strided_slice %724 {offsets = [0, 16], sizes = [8, 8], strides = [1, 1]} : vector<8x32xbf16> to vector<8x8xbf16>
    %760 = vector.extract_strided_slice %726 {offsets = [0, 16], sizes = [16, 8], strides = [1, 1]} : vector<16x32xbf16> to vector<16x8xbf16>
    %cst_190 = arith.constant dense<0.000000e+00> : vector<8x16xf32>
    %761 = tpu.matmul %759, %760, %cst_190 {dimension_numbers = #tpu.dot_dimension_numbers<[1], [1], [0], [0], [0, 0, 1, 0], [], []>} : vector<8x8xbf16>, vector<16x8xbf16>, vector<8x16xf32> -> vector<8x16xf32>
    %cst_191 = arith.constant dense<0xFF800000> : vector<8xf32>
    %762 = vector.multi_reduction <maximumf>, %761, %cst_191 [1] : vector<8x16xf32> to vector<8xf32>
    %763 = vector.shape_cast %762 : vector<8xf32> to vector<8x1xf32>
    %764 = vector.broadcast %763 : vector<8x1xf32> to vector<8x16xf32>
    %765 = arith.subf %761, %764 : vector<8x16xf32>
    %766 = math.exp %765 : vector<8x16xf32>
    %cst_192 = arith.constant dense<0.000000e+00> : vector<8xf32>
    %767 = vector.multi_reduction <add>, %766, %cst_192 [1] : vector<8x16xf32> to vector<8xf32>
    %768 = vector.shape_cast %767 : vector<8xf32> to vector<8x1xf32>
    %769 = vector.broadcast %768 : vector<8x1xf32> to vector<8x16xf32>
    %770 = arith.divf %766, %769 : vector<8x16xf32>
    %771 = arith.truncf %770 : vector<8x16xf32> to vector<8x16xbf16>
    %772 = vector.extract_strided_slice %728 {offsets = [0, 16], sizes = [16, 8], strides = [1, 1]} : vector<16x32xbf16> to vector<16x8xbf16>
    %cst_193 = arith.constant dense<0.000000e+00> : vector<8x8xf32>
    %773 = tpu.matmul %771, %772, %cst_193 {dimension_numbers = #tpu.dot_dimension_numbers<[1], [0], [0], [1], [0, 0, 1, 1], [], []>} : vector<8x16xbf16>, vector<16x8xbf16>, vector<8x8xf32> -> vector<8x8xf32>
    %774 = vector.extract_strided_slice %724 {offsets = [0, 24], sizes = [8, 8], strides = [1, 1]} : vector<8x32xbf16> to vector<8x8xbf16>
    %775 = vector.extract_strided_slice %726 {offsets = [0, 24], sizes = [16, 8], strides = [1, 1]} : vector<16x32xbf16> to vector<16x8xbf16>
    %cst_194 = arith.constant dense<0.000000e+00> : vector<8x16xf32>
    %776 = tpu.matmul %774, %775, %cst_194 {dimension_numbers = #tpu.dot_dimension_numbers<[1], [1], [0], [0], [0, 0, 1, 0], [], []>} : vector<8x8xbf16>, vector<16x8xbf16>, vector<8x16xf32> -> vector<8x16xf32>
    %cst_195 = arith.constant dense<0xFF800000> : vector<8xf32>
    %777 = vector.multi_reduction <maximumf>, %776, %cst_195 [1] : vector<8x16xf32> to vector<8xf32>
    %778 = vector.shape_cast %777 : vector<8xf32> to vector<8x1xf32>
    %779 = vector.broadcast %778 : vector<8x1xf32> to vector<8x16xf32>
    %780 = arith.subf %776, %779 : vector<8x16xf32>
    %781 = math.exp %780 : vector<8x16xf32>
    %cst_196 = arith.constant dense<0.000000e+00> : vector<8xf32>
    %782 = vector.multi_reduction <add>, %781, %cst_196 [1] : vector<8x16xf32> to vector<8xf32>
    %783 = vector.shape_cast %782 : vector<8xf32> to vector<8x1xf32>
    %784 = vector.broadcast %783 : vector<8x1xf32> to vector<8x16xf32>
    %785 = arith.divf %781, %784 : vector<8x16xf32>
    %786 = arith.truncf %785 : vector<8x16xf32> to vector<8x16xbf16>
    %787 = vector.extract_strided_slice %728 {offsets = [0, 24], sizes = [16, 8], strides = [1, 1]} : vector<16x32xbf16> to vector<16x8xbf16>
    %cst_197 = arith.constant dense<0.000000e+00> : vector<8x8xf32>
    %788 = tpu.matmul %786, %787, %cst_197 {dimension_numbers = #tpu.dot_dimension_numbers<[1], [0], [0], [1], [0, 0, 1, 1], [], []>} : vector<8x16xbf16>, vector<16x8xbf16>, vector<8x8xf32> -> vector<8x8xf32>
    %789 = tpu.concatenate %743, %758, %773, %788 in 1 : vector<8x8xf32>, vector<8x8xf32>, vector<8x8xf32>, vector<8x8xf32> -> vector<8x32xf32>
    %790 = tpu.concatenate %720, %789 in 0 : vector<8x32xf32>, vector<8x32xf32> -> vector<16x32xf32>
    %791 = arith.truncf %790 : vector<16x32xf32> to vector<16x32xbf16>
    %792 = vector.extract_strided_slice %630 {offsets = [3, 0, 0], sizes = [1, 32, 32], strides = [1, 1, 1]} : vector<4x32x32xbf16> to vector<1x32x32xbf16>
    %793 = vector.shape_cast %792 : vector<1x32x32xbf16> to vector<32x32xbf16>
    %cst_198 = arith.constant dense<0.000000e+00> : vector<16x32xf32>
    %794 = tpu.matmul %791, %793, %cst_198 {dimension_numbers = #tpu.dot_dimension_numbers<[1], [0], [0], [1], [0, 0, 1, 1], [], []>} : vector<16x32xbf16>, vector<32x32xbf16>, vector<16x32xf32> -> vector<16x32xf32>
    %795 = vector.broadcast %634 : vector<1x32xf32> to vector<16x32xf32>
    %796 = arith.addf %794, %795 : vector<16x32xf32>
    %797 = arith.addf %796, %627 : vector<16x32xf32>
    %cst_199 = arith.constant dense<0.000000e+00> : vector<16xf32>
    %798 = vector.multi_reduction <add>, %797, %cst_199 [1] : vector<16x32xf32> to vector<16xf32>
    %799 = vector.shape_cast %798 : vector<16xf32> to vector<16x1xf32>
    %cst_200 = arith.constant 3.200000e+01 : f32
    %800 = vector.broadcast %cst_200 : f32 to vector<16x1xf32>
    %801 = arith.divf %799, %800 : vector<16x1xf32>
    %802 = vector.broadcast %801 : vector<16x1xf32> to vector<16x32xf32>
    %803 = arith.subf %797, %802 : vector<16x32xf32>
    %804 = arith.mulf %803, %803 : vector<16x32xf32>
    %cst_201 = arith.constant dense<0.000000e+00> : vector<16xf32>
    %805 = vector.multi_reduction <add>, %804, %cst_201 [1] : vector<16x32xf32> to vector<16xf32>
    %806 = vector.shape_cast %805 : vector<16xf32> to vector<16x1xf32>
    %cst_202 = arith.constant 3.200000e+01 : f32
    %807 = vector.broadcast %cst_202 : f32 to vector<16x1xf32>
    %808 = arith.divf %806, %807 : vector<16x1xf32>
    %cst_203 = arith.constant 9.99999974E-6 : f32
    %809 = vector.broadcast %cst_203 : f32 to vector<16x1xf32>
    %810 = arith.addf %808, %809 : vector<16x1xf32>
    %811 = math.rsqrt %810 : vector<16x1xf32>
    %812 = vector.broadcast %811 : vector<16x1xf32> to vector<16x32xf32>
    %813 = arith.mulf %803, %812 : vector<16x32xf32>
    %814 = vector.broadcast %635 : vector<1x32xf32> to vector<16x32xf32>
    %815 = arith.mulf %813, %814 : vector<16x32xf32>
    %816 = vector.broadcast %636 : vector<1x32xf32> to vector<16x32xf32>
    %817 = arith.addf %815, %816 : vector<16x32xf32>
    %818 = arith.truncf %817 : vector<16x32xf32> to vector<16x32xbf16>
    %c1_204 = arith.constant 1 : index
    %c0_205 = arith.constant 0 : index
    %c0_206 = arith.constant 0 : index
    %819 = vector.load %arg6[%c1_204, %c0_205, %c0_206] : memref<2x32x64xbf16, #tpu.memory_space<vmem>>, vector<1x32x64xbf16>
    %820 = vector.shape_cast %819 : vector<1x32x64xbf16> to vector<32x64xbf16>
    %cst_207 = arith.constant dense<0.000000e+00> : vector<16x64xf32>
    %821 = tpu.matmul %818, %820, %cst_207 {dimension_numbers = #tpu.dot_dimension_numbers<[1], [0], [0], [1], [0, 0, 1, 1], [], []>} : vector<16x32xbf16>, vector<32x64xbf16>, vector<16x64xf32> -> vector<16x64xf32>
    %822 = vector.extract_strided_slice %4 {offsets = [1, 0], sizes = [1, 64], strides = [1, 1]} : vector<2x64xf32> to vector<1x64xf32>
    %823 = vector.broadcast %822 : vector<1x64xf32> to vector<16x64xf32>
    %824 = arith.addf %821, %823 : vector<16x64xf32>
    %cst_208 = arith.constant 0.000000e+00 : f32
    %825 = vector.broadcast %cst_208 : f32 to vector<16x64xf32>
    %826 = arith.maximumf %824, %825 : vector<16x64xf32>
    %827 = arith.truncf %826 : vector<16x64xf32> to vector<16x64xbf16>
    %c1_209 = arith.constant 1 : index
    %c0_210 = arith.constant 0 : index
    %c0_211 = arith.constant 0 : index
    %828 = vector.load %arg7[%c1_209, %c0_210, %c0_211] : memref<2x64x32xbf16, #tpu.memory_space<vmem>>, vector<1x64x32xbf16>
    %829 = vector.shape_cast %828 : vector<1x64x32xbf16> to vector<64x32xbf16>
    %cst_212 = arith.constant dense<0.000000e+00> : vector<16x32xf32>
    %830 = tpu.matmul %827, %829, %cst_212 {dimension_numbers = #tpu.dot_dimension_numbers<[1], [0], [0], [1], [0, 0, 1, 1], [], []>} : vector<16x64xbf16>, vector<64x32xbf16>, vector<16x32xf32> -> vector<16x32xf32>
    %831 = vector.extract_strided_slice %436 {offsets = [8, 0], sizes = [1, 32], strides = [1, 1]} : vector<16x32xf32> to vector<1x32xf32>
    %832 = vector.broadcast %831 : vector<1x32xf32> to vector<16x32xf32>
    %833 = arith.addf %830, %832 : vector<16x32xf32>
    %834 = arith.addf %833, %817 : vector<16x32xf32>
    %835 = vector.extract_strided_slice %436 {offsets = [13, 0], sizes = [1, 32], strides = [1, 1]} : vector<16x32xf32> to vector<1x32xf32>
    %836 = vector.extract_strided_slice %436 {offsets = [14, 0], sizes = [1, 32], strides = [1, 1]} : vector<16x32xf32> to vector<1x32xf32>
    %cst_213 = arith.constant dense<0.000000e+00> : vector<16xf32>
    %837 = vector.multi_reduction <add>, %834, %cst_213 [1] : vector<16x32xf32> to vector<16xf32>
    %838 = vector.shape_cast %837 : vector<16xf32> to vector<16x1xf32>
    %cst_214 = arith.constant 3.200000e+01 : f32
    %839 = vector.broadcast %cst_214 : f32 to vector<16x1xf32>
    %840 = arith.divf %838, %839 : vector<16x1xf32>
    %841 = vector.broadcast %840 : vector<16x1xf32> to vector<16x32xf32>
    %842 = arith.subf %834, %841 : vector<16x32xf32>
    %843 = arith.mulf %842, %842 : vector<16x32xf32>
    %cst_215 = arith.constant dense<0.000000e+00> : vector<16xf32>
    %844 = vector.multi_reduction <add>, %843, %cst_215 [1] : vector<16x32xf32> to vector<16xf32>
    %845 = vector.shape_cast %844 : vector<16xf32> to vector<16x1xf32>
    %cst_216 = arith.constant 3.200000e+01 : f32
    %846 = vector.broadcast %cst_216 : f32 to vector<16x1xf32>
    %847 = arith.divf %845, %846 : vector<16x1xf32>
    %cst_217 = arith.constant 9.99999974E-6 : f32
    %848 = vector.broadcast %cst_217 : f32 to vector<16x1xf32>
    %849 = arith.addf %847, %848 : vector<16x1xf32>
    %850 = math.rsqrt %849 : vector<16x1xf32>
    %851 = vector.broadcast %850 : vector<16x1xf32> to vector<16x32xf32>
    %852 = arith.mulf %842, %851 : vector<16x32xf32>
    %853 = vector.broadcast %835 : vector<1x32xf32> to vector<16x32xf32>
    %854 = arith.mulf %852, %853 : vector<16x32xf32>
    %855 = vector.broadcast %836 : vector<1x32xf32> to vector<16x32xf32>
    %856 = arith.addf %854, %855 : vector<16x32xf32>
    %c0_218 = arith.constant 0 : index
    %c0_219 = arith.constant 0 : index
    %857 = vector.load %arg10[%c0_218, %c0_219] : memref<2x32xf32, #tpu.memory_space<vmem>>, vector<2x32xf32>
    %858 = vector.extract_strided_slice %857 {offsets = [0, 0], sizes = [1, 32], strides = [1, 1]} : vector<2x32xf32> to vector<1x32xf32>
    %859 = vector.extract_strided_slice %857 {offsets = [1, 0], sizes = [1, 32], strides = [1, 1]} : vector<2x32xf32> to vector<1x32xf32>
    %cst_220 = arith.constant dense<0.000000e+00> : vector<16xf32>
    %860 = vector.multi_reduction <add>, %856, %cst_220 [1] : vector<16x32xf32> to vector<16xf32>
    %861 = vector.shape_cast %860 : vector<16xf32> to vector<16x1xf32>
    %cst_221 = arith.constant 3.200000e+01 : f32
    %862 = vector.broadcast %cst_221 : f32 to vector<16x1xf32>
    %863 = arith.divf %861, %862 : vector<16x1xf32>
    %864 = vector.broadcast %863 : vector<16x1xf32> to vector<16x32xf32>
    %865 = arith.subf %856, %864 : vector<16x32xf32>
    %866 = arith.mulf %865, %865 : vector<16x32xf32>
    %cst_222 = arith.constant dense<0.000000e+00> : vector<16xf32>
    %867 = vector.multi_reduction <add>, %866, %cst_222 [1] : vector<16x32xf32> to vector<16xf32>
    %868 = vector.shape_cast %867 : vector<16xf32> to vector<16x1xf32>
    %cst_223 = arith.constant 3.200000e+01 : f32
    %869 = vector.broadcast %cst_223 : f32 to vector<16x1xf32>
    %870 = arith.divf %868, %869 : vector<16x1xf32>
    %cst_224 = arith.constant 9.99999974E-6 : f32
    %871 = vector.broadcast %cst_224 : f32 to vector<16x1xf32>
    %872 = arith.addf %870, %871 : vector<16x1xf32>
    %873 = math.rsqrt %872 : vector<16x1xf32>
    %874 = vector.broadcast %873 : vector<16x1xf32> to vector<16x32xf32>
    %875 = arith.mulf %865, %874 : vector<16x32xf32>
    %876 = vector.broadcast %858 : vector<1x32xf32> to vector<16x32xf32>
    %877 = arith.mulf %875, %876 : vector<16x32xf32>
    %878 = vector.broadcast %859 : vector<1x32xf32> to vector<16x32xf32>
    %879 = arith.addf %877, %878 : vector<16x32xf32>
    %c0_225 = arith.constant 0 : index
    %c0_226 = arith.constant 0 : index
    %880 = vector.load %arg11[%c0_225, %c0_226] : memref<16x32xf32, #tpu.memory_space<vmem>>, vector<16x32xf32>
    tpu.vector_store %arg11[%c0_225, %c0_226], %879 {strides = array<i32>} : memref<16x32xf32, #tpu.memory_space<vmem>>, vector<16x32xf32>,
    return
  }
  func.func @transform_0(%arg0: i32) -> (i32, i32) {
    %c0_i32 = arith.constant 0 : i32
    %c0_i32_0 = arith.constant 0 : i32
    %c0_i32_1 = arith.constant 0 : i32
    return %c0_i32, %c0_i32_0 : i32, i32
  }
  func.func @transform_1(%arg0: i32) -> (i32, i32) {
    %c0_i32 = arith.constant 0 : i32
    %c0_i32_0 = arith.constant 0 : i32
    %c0_i32_1 = arith.constant 0 : i32
    return %c0_i32, %c0_i32_0 : i32, i32
  }
  func.func @transform_2(%arg0: i32) -> (i32, i32) {
    %c0_i32 = arith.constant 0 : i32
    %c0_i32_0 = arith.constant 0 : i32
    %c0_i32_1 = arith.constant 0 : i32
    return %c0_i32, %c0_i32_0 : i32, i32
  }
  func.func @transform_3(%arg0: i32) -> (i32, i32) {
    %c0_i32 = arith.constant 0 : i32
    %c0_i32_0 = arith.constant 0 : i32
    %c0_i32_1 = arith.constant 0 : i32
    return %c0_i32, %c0_i32_0 : i32, i32
  }
  func.func @transform_4(%arg0: i32) -> (i32, i32, i32, i32) {
    %c0_i32 = arith.constant 0 : i32
    %c0_i32_0 = arith.constant 0 : i32
    %c0_i32_1 = arith.constant 0 : i32
    %c0_i32_2 = arith.constant 0 : i32
    %c0_i32_3 = arith.constant 0 : i32
    return %c0_i32, %c0_i32_0, %c0_i32_1, %c0_i32_2 : i32, i32, i32, i32
  }
  func.func @transform_5(%arg0: i32) -> (i32, i32, i32) {
    %c0_i32 = arith.constant 0 : i32
    %c0_i32_0 = arith.constant 0 : i32
    %c0_i32_1 = arith.constant 0 : i32
    %c0_i32_2 = arith.constant 0 : i32
    return %c0_i32, %c0_i32_0, %c0_i32_1 : i32, i32, i32
  }
  func.func @transform_6(%arg0: i32) -> (i32, i32, i32) {
    %c0_i32 = arith.constant 0 : i32
    %c0_i32_0 = arith.constant 0 : i32
    %c0_i32_1 = arith.constant 0 : i32
    %c0_i32_2 = arith.constant 0 : i32
    return %c0_i32, %c0_i32_0, %c0_i32_1 : i32, i32, i32
  }
  func.func @transform_7(%arg0: i32) -> (i32, i32) {
    %c0_i32 = arith.constant 0 : i32
    %c0_i32_0 = arith.constant 0 : i32
    %c0_i32_1 = arith.constant 0 : i32
    return %c0_i32, %c0_i32_0 : i32, i32
  }
  func.func @transform_8(%arg0: i32) -> (i32, i32, i32) {
    %c0_i32 = arith.constant 0 : i32
    %c0_i32_0 = arith.constant 0 : i32
    %c0_i32_1 = arith.constant 0 : i32
    %c0_i32_2 = arith.constant 0 : i32
    return %c0_i32, %c0_i32_0, %c0_i32_1 : i32, i32, i32
  }
  func.func @transform_9(%arg0: i32) -> (i32, i32) {
    %c0_i32 = arith.constant 0 : i32
    %c0_i32_0 = arith.constant 0 : i32
    %c0_i32_1 = arith.constant 0 : i32
    return %c0_i32, %c0_i32_0 : i32, i32
  }
  func.func @transform_10(%arg0: i32) -> (i32, i32) {
    %c0_i32 = arith.constant 0 : i32
    %c0_i32_0 = arith.constant 0 : i32
    %c0_i32_1 = arith.constant 0 : i32
    return %c0_i32, %c0_i32_0 : i32, i32
  }
}

</mosaic_0001>

<llo_original>
// kernel: fwd.1
$region0: #{fwd.1}
  #allocation0 [shape = 'u32[]', space=smem, size = 0x4, offset = 0x4, fixed_abs, tag = 'smem constant byte address 0x4 - core index']
  #allocation1 [shape = 'u32[144,128]{1,0:T(1,128)}', space=vmem, size = 0x12000, scoped, tag = 'internal scratch']
  %s0 = inlined_call_operand.vmem [shape: f32[16,32], index: 0, kind: input, shape index: {}]
  %s1 = inlined_call_operand.vmem [shape: f32[16,32], index: 1, kind: input, shape index: {}]
  %s2 = inlined_call_operand.vmem [shape: f32[32,32], index: 2, kind: input, shape index: {}]
  %s3 = inlined_call_operand.vmem [shape: f32[32,32], index: 3, kind: input, shape index: {}]
  %s4 = inlined_call_operand.vmem [shape: bf16[2,8,32,32], index: 4, kind: input, shape index: {}]
  %s5 = inlined_call_operand.hbm [shape: bf16[2,32,64], index: 5, kind: input, shape index: {}]
  %s6 = inlined_call_operand.vmem [shape: bf16[2,64,32], index: 6, kind: input, shape index: {}]
  %s7 = inlined_call_operand.vmem [shape: f32[2,64], index: 7, kind: input, shape index: {}]
  %s8 = inlined_call_operand.hbm [shape: f32[2,16,32], index: 8, kind: input, shape index: {}]
  %s9 = inlined_call_operand.vmem [shape: f32[2,32], index: 9, kind: input, shape index: {}]
  %s10 = inlined_call_operand.vmem [shape: f32[16,32], index: 10, kind: output, shape index: {}]
  %s11 = sld [smem:[#allocation0]]
  $region58: #{fwd.1} parent=0
    _
  %s13 = ssub.s32 1, %s11
  %s14 = scalar_select 0, %s13, %s11
  $region1: #{fwd.1} parent=0
    #allocation2 [shape = 'u8[16384]{0}', space=vmem, size = 0x4000, scoped, tag = 'input window, operand 5, single buffered']
    #allocation3 [shape = 's32[1]{0}', space=sflag, size = 0x4, scoped, tag = 'scoped memory for fwd.1']
    #allocation4 [shape = 'u8[16384]{0}', space=vmem, size = 0x4000, scoped, tag = 'input window, operand 8, single buffered']
    #allocation5 [shape = 's32[1]{0}', space=sflag, size = 0x4, scoped, tag = 'scoped memory for fwd.1']
    %15 = vsyncpa [#allocation3], 0
    %16 = vsyncpa [#allocation5], 0
    // Predicated region
    $region2: #{fwd.1} parent=1 // pred_check
      _
    $region3: #{fwd.1} parent=1 // pred_check_branch
      %18 = sbr.rel (0) target = $region5
    $region4: #{fwd.1} parent=1 // pred_region
      _
    $region5: #{fwd.1} parent=1 // pred_fallthru
      _
    // Predicated region
    $region6: #{fwd.1} parent=1 // pred_check
      _
    $region7: #{fwd.1} parent=1 // pred_check_branch
      %20 = sbr.rel (0) target = $region9
    $region8: #{fwd.1} parent=1 // pred_region
      _
    $region9: #{fwd.1} parent=1 // pred_fallthru
      _
    // Predicated region
    $region10: #{fwd.1} parent=1 // pred_check
      _
    $region11: #{fwd.1} parent=1 // pred_check_branch
      %22 = sbr.rel (0) target = $region13
    $region12: #{fwd.1} parent=1 // pred_region
      _
    $region13: #{fwd.1} parent=1 // pred_fallthru
      _
    // Predicated region
    $region14: #{fwd.1} parent=1 // pred_check
      _
    $region15: #{fwd.1} parent=1 // pred_check_branch
      %24 = sbr.rel (0) target = $region17
    $region16: #{fwd.1} parent=1 // pred_region
      _
    $region17: #{fwd.1} parent=1 // pred_fallthru
      _
    // Predicated region
    $region18: #{fwd.1} parent=1 // pred_check
      _
    $region19: #{fwd.1} parent=1 // pred_check_branch
      %26 = sbr.rel (0) target = $region21
    $region20: #{fwd.1} parent=1 // pred_region
      _
    $region21: #{fwd.1} parent=1 // pred_fallthru
      _
    // Predicated region
    $region22: #{fwd.1} parent=1 // pred_check
      _
    $region23: #{fwd.1} parent=1 // pred_check_branch
      %28 = sbr.rel (0) target = $region25
    $region24: #{fwd.1} parent=1 // pred_region
      %s30 = ssub.s32 512, 512
      %31 = vsyncadd [#allocation3], %s30
      %s32 = sshll.u32 [#allocation2], 4
      %s33 = int_to_ptr.vmem [resolvable:$true] %s32
      %38 = dma.hbm_to_vmem [thread:$0]  %s5, 512, %s33, [#allocation3], 64, 64, 4
    $region25: #{fwd.1} parent=1 // pred_fallthru
      _
    // Predicated region
    $region26: #{fwd.1} parent=1 // pred_check
      _
    $region27: #{fwd.1} parent=1 // pred_check_branch
      %40 = sbr.rel (0) target = $region29
    $region28: #{fwd.1} parent=1 // pred_region
      _
    $region29: #{fwd.1} parent=1 // pred_fallthru
      _
    // Predicated region
    $region30: #{fwd.1} parent=1 // pred_check
      _
    $region31: #{fwd.1} parent=1 // pred_check_branch
      %42 = sbr.rel (0) target = $region33
    $region32: #{fwd.1} parent=1 // pred_region
      _
    $region33: #{fwd.1} parent=1 // pred_fallthru
      _
    // Predicated region
    $region34: #{fwd.1} parent=1 // pred_check
      _
    $region35: #{fwd.1} parent=1 // pred_check_branch
      %44 = sbr.rel (0) target = $region37
    $region36: #{fwd.1} parent=1 // pred_region
      %s46 = ssub.s32 512, 512
      %47 = vsyncadd [#allocation5], %s46
      %s48 = sshll.u32 [#allocation4], 4
      %s49 = int_to_ptr.vmem [resolvable:$true] %s48
      %54 = dma.hbm_to_vmem [thread:$0]  %s8, 512, %s49, [#allocation5], 128, 128, 8
    $region37: #{fwd.1} parent=1 // pred_fallthru
      _
    // Predicated region
    $region38: #{fwd.1} parent=1 // pred_check
      _
    $region39: #{fwd.1} parent=1 // pred_check_branch
      %56 = sbr.rel (0) target = $region41
    $region40: #{fwd.1} parent=1 // pred_region
      _
    $region41: #{fwd.1} parent=1 // pred_fallthru
      _
    // Predicated region
    $region42: #{fwd.1} parent=1 // pred_check
      _
    $region43: #{fwd.1} parent=1 // pred_check_branch
      %58 = sbr.rel (0) target = $region45
    $region44: #{fwd.1} parent=1 // pred_region
      %59 = dma.done [#allocation3], 512
    $region45: #{fwd.1} parent=1 // pred_fallthru
      _
    // Predicated region
    $region46: #{fwd.1} parent=1 // pred_check
      _
    $region47: #{fwd.1} parent=1 // pred_check_branch
      %61 = sbr.rel (0) target = $region49
    $region48: #{fwd.1} parent=1 // pred_region
      %62 = dma.done [#allocation5], 512
    $region49: #{fwd.1} parent=1 // pred_fallthru
      _
    %v64 = vld [vmem:[%s0] sm:$0xff]
    %v65 = vld [vmem:[%s0 + $0x8] sm:$0xff]
    %v66 = vld [vmem:[%s1] sm:$0xff]
    %v67 = vld [vmem:[%s1 + $0x8] sm:$0xff]
    %v68 = vld [vmem:[%s2] sm:$0xff]
    %v69 = vld [vmem:[%s2 + $0x8] sm:$0xff]
    %v70 = vld [vmem:[%s2 + $0x10] sm:$0xff]
    %v71 = vld [vmem:[%s2 + $0x18] sm:$0xff]
    %v72 = vld [vmem:[%s3] sm:$0xff]
    %v73 = vld [vmem:[%s3 + $0x8] sm:$0xff]
    %v74 = vld [vmem:[%s3 + $0x10] sm:$0xff]
    %v75 = vld [vmem:[%s3 + $0x18] sm:$0xff]
    %v76 = vld [vmem:[%s7] sm:$0x3]
    %v77 = vld [vmem:[#allocation4] sm:$0xff]
    %v78 = vld [vmem:[#allocation4 + $0x8] sm:$0xff]
    %v79 = vld [vmem:[#allocation4 + $0x10] sm:$0xff]
    %v80 = vld [vmem:[#allocation4 + $0x18] sm:$0xff]
    %v81 = vadd.f32 %v68, %v72
    %v82 = vadd.f32 %v69, %v73
    %v83 = vadd.f32 %v70, %v74
    %v84 = vadd.f32 %v71, %v75
    %v85 = vpack.c.bf16 %v82, %v81
    %v86 = vpack.c.bf16 %v84, %v83
    %v87 = vpack.c.bf16 %v69, %v68
    %v88 = vpack.c.bf16 %v71, %v70
    %v89 = vld [vmem:[%s4] sm:$0xf]
    %v90 = vld [vmem:[%s4 + $0x4] sm:$0xf]
    %v91 = vld [vmem:[%s4 + $0x8] sm:$0xf]
    %v92 = vld [vmem:[%s4 + $0xc] sm:$0xf]
    %v93 = vld [vmem:[%s4 + $0x10] sm:$0xf]
    %v94 = vld [vmem:[%s4 + $0x14] sm:$0xf]
    %v95 = vld [vmem:[%s4 + $0x18] sm:$0xf]
    %v96 = vld [vmem:[%s4 + $0x1c] sm:$0xf]
    %v97 = vld [vmem:[%s4 + $0x20] sm:$0xf]
    %v98 = vld [vmem:[%s4 + $0x24] sm:$0xf]
    %v99 = vld [vmem:[%s4 + $0x28] sm:$0xf]
    %v100 = vld [vmem:[%s4 + $0x2c] sm:$0xf]
    %v101 = vld [vmem:[%s4 + $0x30] sm:$0xf]
    %v102 = vld [vmem:[%s4 + $0x34] sm:$0xf]
    %v103 = vld [vmem:[%s4 + $0x38] sm:$0xf]
    %v104 = vld [vmem:[%s4 + $0x3c] sm:$0xf]
    %v105 = vld [vmem:[%s4 + $0x40] sm:$0xf]
    %v106 = vld [vmem:[%s4 + $0x44] sm:$0xf]
    %v107 = vld [vmem:[%s4 + $0x48] sm:$0xf]
    %v108 = vld [vmem:[%s4 + $0x4c] sm:$0xf]
    %v109 = vld [vmem:[%s4 + $0x50] sm:$0xf]
    %v110 = vld [vmem:[%s4 + $0x54] sm:$0xf]
    %v111 = vld [vmem:[%s4 + $0x58] sm:$0xf]
    %v112 = vld [vmem:[%s4 + $0x5c] sm:$0xf]
    %v113 = vld [vmem:[%s4 + $0x60] sm:$0xf]
    %v114 = vld [vmem:[%s4 + $0x64] sm:$0xf]
    %v115 = vld [vmem:[%s4 + $0x68] sm:$0xf]
    %v116 = vld [vmem:[%s4 + $0x6c] sm:$0xf]
    %v117 = vld [vmem:[%s4 + $0x70] sm:$0xf]
    %v118 = vld [vmem:[%s4 + $0x74] sm:$0xf]
    %v119 = vld [vmem:[%s4 + $0x78] sm:$0xf]
    %v120 = vld [vmem:[%s4 + $0x7c] sm:$0xf]
    %v121 = vadd.f32 %v64, %v66
    %v122 = vadd.f32 %v65, %v67
    %v123 = vpack.c.bf16 %v122, %v121
    %v124 = vpack.c.bf16 %v65, %v64
    %v125 = vlaneseq
    %v126 = vshrl.u32 %v125, 7
    %v127 = vsub.s32 0, %v126
    %v128 = vrot.slane %v77, %v127
    %v133 = vunpack.c.l.b16 %v89
    %v134 = vunpack.c.l.b16 %v90
    %v135 = vunpack.c.l.b16 %v91
    %v136 = vunpack.c.l.b16 %v92
    %v137 = vpack.c.b16 %v134, %v133
    %v138 = vpack.c.b16 %v136, %v135
    %vm141 = vcmask 261120
    %v143 = vsel %vm141, %v123, 0
    %145 = vmatprep.subr.bf16.mxu0 0
    %146 = vmatpush1.bf16.msra.mxu0 0
    %147 = vmatprep.subr.bf16.mxu0 0
    %148 = vmatpush1.bf16.msra.mxu0 0
    %149 = vmatprep.subr.bf16.mxu0 0
    %150 = vmatpush1.bf16.msra.mxu0 0
    %151 = vmatprep.subr.bf16.mxu0 0
    %152 = vmatpush1.bf16.msra.mxu0 0
    %153 = vmatprep.subr.bf16.mxu0 0
    %154 = vmatpush1.bf16.msra.mxu0 0
    %155 = vmatprep.subr.bf16.mxu0 0
    %156 = vmatpush1.bf16.msra.mxu0 0
    %157 = vmatprep.subr.bf16.mxu0 0
    %158 = vmatpush1.bf16.msra.mxu0 %v138
    %159 = vmatprep.subr.bf16.mxu0 0
    %160 = vmatpush1.bf16.msra.mxu0 %v137
    %161 = vmatprep.subr.bf16.mxu0 0
    %162 = vmatpush2.bf16.msra.mxu0 0
    %163 = vmatprep.subr.bf16.mxu0 0
    %164 = vmatpush2.bf16.msra.mxu0 0
    %165 = vmatprep.subr.bf16.mxu0 0
    %166 = vmatpush2.bf16.msra.mxu0 0
    %167 = vmatprep.subr.bf16.mxu0 0
    %168 = vmatpush2.bf16.msra.mxu0 0
    %169 = vmatprep.subr.bf16.mxu0 0
    %170 = vmatpush2.bf16.msra.mxu0 0
    %171 = vmatprep.subr.bf16.mxu0 0
    %172 = vmatpush2.bf16.msra.mxu0 0
    %173 = vmatprep.subr.bf16.mxu0 0
    %174 = vmatpush2.bf16.msra.mxu0 0
    %175 = vmatprep.subr.bf16.mxu0 0
    %176 = vmatpush2.bf16.msra.mxu0 0
    %177 = vmatprep.mubr.bf16.mxu0 0
    %178 = vmatmul.mubr.bf16.gmra.mxu0 %v143
    %v179 = vpop.f32.mrf.mxu0
    %v180 = vadd.f32 %v128, %v179
    %v181 = vpop.f32.mrf.mxu0
    %v182 = vpop.f32.mrf.mxu0
    %v183 = vadd.f32 %v128, %v182
    %v184 = vpop.f32.mrf.mxu0
    %185 = vdwg.mxu0
    %v186 = vlaneseq
    %v187 = vshrl.u32 %v186, 7
    %v188 = vsub.s32 1, %v187
    %v189 = vrot.slane %v77, %v188
    %v194 = vunpack.c.l.b16 %v93
    %v195 = vunpack.c.l.b16 %v94
    %v196 = vunpack.c.l.b16 %v95
    %v197 = vunpack.c.l.b16 %v96
    %v198 = vpack.c.b16 %v195, %v194
    %v199 = vpack.c.b16 %v197, %v196
    %202 = vmatprep.subr.bf16.mxu0 0
    %203 = vmatpush1.bf16.msra.mxu0 0
    %204 = vmatprep.subr.bf16.mxu0 0
    %205 = vmatpush1.bf16.msra.mxu0 0
    %206 = vmatprep.subr.bf16.mxu0 0
    %207 = vmatpush1.bf16.msra.mxu0 0
    %208 = vmatprep.subr.bf16.mxu0 0
    %209 = vmatpush1.bf16.msra.mxu0 0
    %210 = vmatprep.subr.bf16.mxu0 0
    %211 = vmatpush1.bf16.msra.mxu0 0
    %212 = vmatprep.subr.bf16.mxu0 0
    %213 = vmatpush1.bf16.msra.mxu0 0
    %214 = vmatprep.subr.bf16.mxu0 0
    %215 = vmatpush1.bf16.msra.mxu0 %v199
    %216 = vmatprep.subr.bf16.mxu0 0
    %217 = vmatpush1.bf16.msra.mxu0 %v198
    %218 = vmatprep.subr.bf16.mxu0 0
    %219 = vmatpush2.bf16.msra.mxu0 0
    %220 = vmatprep.subr.bf16.mxu0 0
    %221 = vmatpush2.bf16.msra.mxu0 0
    %222 = vmatprep.subr.bf16.mxu0 0
    %223 = vmatpush2.bf16.msra.mxu0 0
    %224 = vmatprep.subr.bf16.mxu0 0
    %225 = vmatpush2.bf16.msra.mxu0 0
    %226 = vmatprep.subr.bf16.mxu0 0
    %227 = vmatpush2.bf16.msra.mxu0 0
    %228 = vmatprep.subr.bf16.mxu0 0
    %229 = vmatpush2.bf16.msra.mxu0 0
    %230 = vmatprep.subr.bf16.mxu0 0
    %231 = vmatpush2.bf16.msra.mxu0 0
    %232 = vmatprep.subr.bf16.mxu0 0
    %233 = vmatpush2.bf16.msra.mxu0 0
    %234 = vmatprep.mubr.bf16.mxu0 0
    %235 = vmatmul.mubr.bf16.gmra.mxu0 %v143
    %v236 = vpop.f32.mrf.mxu0
    %v237 = vadd.f32 %v189, %v236
    %v238 = vpop.f32.mrf.mxu0
    %v239 = vpop.f32.mrf.mxu0
    %v240 = vadd.f32 %v189, %v239
    %v241 = vpop.f32.mrf.mxu0
    %242 = vdwg.mxu0
    %v243 = vlaneseq
    %v244 = vshrl.u32 %v243, 7
    %v245 = vsub.s32 2, %v244
    %v246 = vrot.slane %v77, %v245
    %v251 = vunpack.c.l.b16 %v97
    %v252 = vunpack.c.l.b16 %v98
    %v253 = vunpack.c.l.b16 %v99
    %v254 = vunpack.c.l.b16 %v100
    %v255 = vpack.c.b16 %v252, %v251
    %v256 = vpack.c.b16 %v254, %v253
    %v260 = vsel %vm141, %v124, 0
    %262 = vmatprep.subr.bf16.mxu0 0
    %263 = vmatpush1.bf16.msra.mxu0 0
    %264 = vmatprep.subr.bf16.mxu0 0
    %265 = vmatpush1.bf16.msra.mxu0 0
    %266 = vmatprep.subr.bf16.mxu0 0
    %267 = vmatpush1.bf16.msra.mxu0 0
    %268 = vmatprep.subr.bf16.mxu0 0
    %269 = vmatpush1.bf16.msra.mxu0 0
    %270 = vmatprep.subr.bf16.mxu0 0
    %271 = vmatpush1.bf16.msra.mxu0 0
    %272 = vmatprep.subr.bf16.mxu0 0
    %273 = vmatpush1.bf16.msra.mxu0 0
    %274 = vmatprep.subr.bf16.mxu0 0
    %275 = vmatpush1.bf16.msra.mxu0 %v256
    %276 = vmatprep.subr.bf16.mxu0 0
    %277 = vmatpush1.bf16.msra.mxu0 %v255
    %278 = vmatprep.subr.bf16.mxu0 0
    %279 = vmatpush2.bf16.msra.mxu0 0
    %280 = vmatprep.subr.bf16.mxu0 0
    %281 = vmatpush2.bf16.msra.mxu0 0
    %282 = vmatprep.subr.bf16.mxu0 0
    %283 = vmatpush2.bf16.msra.mxu0 0
    %284 = vmatprep.subr.bf16.mxu0 0
    %285 = vmatpush2.bf16.msra.mxu0 0
    %286 = vmatprep.subr.bf16.mxu0 0
    %287 = vmatpush2.bf16.msra.mxu0 0
    %288 = vmatprep.subr.bf16.mxu0 0
    %289 = vmatpush2.bf16.msra.mxu0 0
    %290 = vmatprep.subr.bf16.mxu0 0
    %291 = vmatpush2.bf16.msra.mxu0 0
    %292 = vmatprep.subr.bf16.mxu0 0
    %293 = vmatpush2.bf16.msra.mxu0 0
    %294 = vmatprep.mubr.bf16.mxu0 0
    %295 = vmatmul.mubr.bf16.gmra.mxu0 %v260
    %v296 = vpop.f32.mrf.mxu0
    %v297 = vadd.f32 %v246, %v296
    %v298 = vpop.f32.mrf.mxu0
    %v299 = vpop.f32.mrf.mxu0
    %v300 = vadd.f32 %v246, %v299
    %v301 = vpop.f32.mrf.mxu0
    %302 = vdwg.mxu0
    %v303 = vmul.f32 %v180, 0.35355338
    %v304 = vpack.c.bf16 %v303, %v303
    %v305 = vpack.c.bf16 %v237, %v237
    %v306 = vpack.c.bf16 %v297, %v297
    %vm307 = vcmask 64512
    %v309 = vsel %vm307, %v304, 0
    %v312 = vsel %vm307, %v305, 0
    %314 = vmatprep.subr.bf16.mxu0 0
    %315 = vmatpush1.bf16.xpose.msra.mxu0 0
    %316 = vmatprep.subr.bf16.mxu0 0
    %317 = vmatpush1.bf16.xpose.msra.mxu0 0
    %318 = vmatprep.subr.bf16.mxu0 0
    %319 = vmatpush1.bf16.xpose.msra.mxu0 0
    %320 = vmatprep.subr.bf16.mxu0 0
    %321 = vmatpush1.bf16.xpose.msra.mxu0 0
    %322 = vmatprep.subr.bf16.mxu0 0
    %323 = vmatpush1.bf16.xpose.msra.mxu0 0
    %324 = vmatprep.subr.bf16.mxu0 0
    %325 = vmatpush1.bf16.xpose.msra.mxu0 0
    %326 = vmatprep.subr.bf16.mxu0 0
    %327 = vmatpush1.bf16.xpose.msra.mxu0 0
    %328 = vmatprep.subr.bf16.mxu0 0
    %329 = vmatpush1.bf16.xpose.msra.mxu0 %v312
    %330 = vmatprep.subr.bf16.mxu0 0
    %331 = vmatpush2.bf16.xpose.msra.mxu0 0
    %332 = vmatprep.subr.bf16.mxu0 0
    %333 = vmatpush2.bf16.xpose.msra.mxu0 0
    %334 = vmatprep.subr.bf16.mxu0 0
    %335 = vmatpush2.bf16.xpose.msra.mxu0 0
    %336 = vmatprep.subr.bf16.mxu0 0
    %337 = vmatpush2.bf16.xpose.msra.mxu0 0
    %338 = vmatprep.subr.bf16.mxu0 0
    %339 = vmatpush2.bf16.xpose.msra.mxu0 0
    %340 = vmatprep.subr.bf16.mxu0 0
    %341 = vmatpush2.bf16.xpose.msra.mxu0 0
    %342 = vmatprep.subr.bf16.mxu0 0
    %343 = vmatpush2.bf16.xpose.msra.mxu0 0
    %344 = vmatprep.subr.bf16.mxu0 0
    %345 = vmatpush2.bf16.xpose.msra.mxu0 0
    %346 = vmatprep.mubr.bf16.mxu0 0
    %347 = vmatmul.mubr.bf16.gmra.mxu0 %v309
    %v348 = vpop.f32.mrf.mxu0
    %v349 = vadd.f32 0.0, %v348
    %v350 = vpop.f32.mrf.mxu0
    %v351 = vpop.f32.mrf.mxu0
    %v352 = vpop.f32.mrf.mxu0
    %353 = vdwg.mxu0
    %v354 = vsel %vm307, %v349, -inf
    %355 = vmax.xlane.f32.xlu0 %v354
    %v356 = vpop.xlane.xlu0 %355
    %v357 = vsub.f32 %v349, %v356
    %v358 = vmul.f32 %v357, 1.442695
    %v359 = vpow.pop %v358
    %v360 = vsel %vm307, %v359, 0.0
    %361 = vadd.xlane.f32.xlu0 %v360
    %v362 = vpop.xlane.xlu0 %361
    %v363 = vrcp.pop %v362
    %v364 = vmul.f32 %v359, %v363
    %v365 = vpack.c.bf16 %v364, %v364
    %v367 = vsel %vm307, %v365, 0
    %vm369 = vcmask 1043456
    %v371 = vsel %vm369, %v306, 0
    %373 = vmatprep.subr.bf16.mxu0 0
    %374 = vmatpush1.bf16.msra.mxu0 0
    %375 = vmatprep.subr.bf16.mxu0 0
    %376 = vmatpush1.bf16.msra.mxu0 0
    %377 = vmatprep.subr.bf16.mxu0 0
    %378 = vmatpush1.bf16.msra.mxu0 0
    %379 = vmatprep.subr.bf16.mxu0 0
    %380 = vmatpush1.bf16.msra.mxu0 0
    %381 = vmatprep.subr.bf16.mxu0 0
    %382 = vmatpush1.bf16.msra.mxu0 0
    %383 = vmatprep.subr.bf16.mxu0 0
    %384 = vmatpush1.bf16.msra.mxu0 0
    %385 = vmatprep.subr.bf16.mxu0 0
    %386 = vmatpush1.bf16.msra.mxu0 0
    %387 = vmatprep.subr.bf16.mxu0 0
    %388 = vmatpush1.bf16.msra.mxu0 %v371
    %389 = vmatprep.subr.bf16.mxu0 0
    %390 = vmatpush2.bf16.msra.mxu0 0
    %391 = vmatprep.subr.bf16.mxu0 0
    %392 = vmatpush2.bf16.msra.mxu0 0
    %393 = vmatprep.subr.bf16.mxu0 0
    %394 = vmatpush2.bf16.msra.mxu0 0
    %395 = vmatprep.subr.bf16.mxu0 0
    %396 = vmatpush2.bf16.msra.mxu0 0
    %397 = vmatprep.subr.bf16.mxu0 0
    %398 = vmatpush2.bf16.msra.mxu0 0
    %399 = vmatprep.subr.bf16.mxu0 0
    %400 = vmatpush2.bf16.msra.mxu0 0
    %401 = vmatprep.subr.bf16.mxu0 0
    %402 = vmatpush2.bf16.msra.mxu0 0
    %403 = vmatprep.subr.bf16.mxu0 0
    %404 = vmatpush2.bf16.msra.mxu0 0
    %405 = vmatprep.mubr.bf16.mxu0 0
    %406 = vmatmul.mubr.bf16.gmra.mxu0 %v367
    %v407 = vpop.f32.mrf.mxu0
    %v408 = vadd.f32 0.0, %v407
    %v409 = vpop.f32.mrf.mxu0
    %v410 = vpop.f32.mrf.mxu0
    %v411 = vpop.f32.mrf.mxu0
    %412 = vdwg.mxu0
    %414 = vrot.lane.b32.xlu0 %v304, 120
    %v415 = vpop.permute.xlu0 %414
    %417 = vrot.lane.b32.xlu0 %v305, 120
    %v418 = vpop.permute.xlu0 %417
    %v420 = vsel %vm307, %v415, 0
    %v423 = vsel %vm307, %v418, 0
    %425 = vmatprep.subr.bf16.mxu0 0
    %426 = vmatpush1.bf16.xpose.msra.mxu0 0
    %427 = vmatprep.subr.bf16.mxu0 0
    %428 = vmatpush1.bf16.xpose.msra.mxu0 0
    %429 = vmatprep.subr.bf16.mxu0 0
    %430 = vmatpush1.bf16.xpose.msra.mxu0 0
    %431 = vmatprep.subr.bf16.mxu0 0
    %432 = vmatpush1.bf16.xpose.msra.mxu0 0
    %433 = vmatprep.subr.bf16.mxu0 0
    %434 = vmatpush1.bf16.xpose.msra.mxu0 0
    %435 = vmatprep.subr.bf16.mxu0 0
    %436 = vmatpush1.bf16.xpose.msra.mxu0 0
    %437 = vmatprep.subr.bf16.mxu0 0
    %438 = vmatpush1.bf16.xpose.msra.mxu0 0
    %439 = vmatprep.subr.bf16.mxu0 0
    %440 = vmatpush1.bf16.xpose.msra.mxu0 %v423
    %441 = vmatprep.subr.bf16.mxu0 0
    %442 = vmatpush2.bf16.xpose.msra.mxu0 0
    %443 = vmatprep.subr.bf16.mxu0 0
    %444 = vmatpush2.bf16.xpose.msra.mxu0 0
    %445 = vmatprep.subr.bf16.mxu0 0
    %446 = vmatpush2.bf16.xpose.msra.mxu0 0
    %447 = vmatprep.subr.bf16.mxu0 0
    %448 = vmatpush2.bf16.xpose.msra.mxu0 0
    %449 = vmatprep.subr.bf16.mxu0 0
    %450 = vmatpush2.bf16.xpose.msra.mxu0 0
    %451 = vmatprep.subr.bf16.mxu0 0
    %452 = vmatpush2.bf16.xpose.msra.mxu0 0
    %453 = vmatprep.subr.bf16.mxu0 0
    %454 = vmatpush2.bf16.xpose.msra.mxu0 0
    %455 = vmatprep.subr.bf16.mxu0 0
    %456 = vmatpush2.bf16.xpose.msra.mxu0 0
    %457 = vmatprep.mubr.bf16.mxu0 0
    %458 = vmatmul.mubr.bf16.gmra.mxu0 %v420
    %v459 = vpop.f32.mrf.mxu0
    %v460 = vadd.f32 0.0, %v459
    %v461 = vpop.f32.mrf.mxu0
    %v462 = vpop.f32.mrf.mxu0
    %v463 = vpop.f32.mrf.mxu0
    %464 = vdwg.mxu0
    %v465 = vsel %vm307, %v460, -inf
    %466 = vmax.xlane.f32.xlu0 %v465
    %v467 = vpop.xlane.xlu0 %466
    %v468 = vsub.f32 %v460, %v467
    %v469 = vmul.f32 %v468, 1.442695
    %v470 = vpow.pop %v469
    %v471 = vsel %vm307, %v470, 0.0
    %472 = vadd.xlane.f32.xlu0 %v471
    %v473 = vpop.xlane.xlu0 %472
    %v474 = vrcp.pop %v473
    %v475 = vmul.f32 %v470, %v474
    %v476 = vpack.c.bf16 %v475, %v475
    %478 = vrot.lane.b32.xlu0 %v306, 120
    %v479 = vpop.permute.xlu0 %478
    %v481 = vsel %vm307, %v476, 0
    %v484 = vsel %vm369, %v479, 0
    %486 = vmatprep.subr.bf16.mxu0 0
    %487 = vmatpush1.bf16.msra.mxu0 0
    %488 = vmatprep.subr.bf16.mxu0 0
    %489 = vmatpush1.bf16.msra.mxu0 0
    %490 = vmatprep.subr.bf16.mxu0 0
    %491 = vmatpush1.bf16.msra.mxu0 0
    %492 = vmatprep.subr.bf16.mxu0 0
    %493 = vmatpush1.bf16.msra.mxu0 0
    %494 = vmatprep.subr.bf16.mxu0 0
    %495 = vmatpush1.bf16.msra.mxu0 0
    %496 = vmatprep.subr.bf16.mxu0 0
    %497 = vmatpush1.bf16.msra.mxu0 0
    %498 = vmatprep.subr.bf16.mxu0 0
    %499 = vmatpush1.bf16.msra.mxu0 0
    %500 = vmatprep.subr.bf16.mxu0 0
    %501 = vmatpush1.bf16.msra.mxu0 %v484
    %502 = vmatprep.subr.bf16.mxu0 0
    %503 = vmatpush2.bf16.msra.mxu0 0
    %504 = vmatprep.subr.bf16.mxu0 0
    %505 = vmatpush2.bf16.msra.mxu0 0
    %506 = vmatprep.subr.bf16.mxu0 0
    %507 = vmatpush2.bf16.msra.mxu0 0
    %508 = vmatprep.subr.bf16.mxu0 0
    %509 = vmatpush2.bf16.msra.mxu0 0
    %510 = vmatprep.subr.bf16.mxu0 0
    %511 = vmatpush2.bf16.msra.mxu0 0
    %512 = vmatprep.subr.bf16.mxu0 0
    %513 = vmatpush2.bf16.msra.mxu0 0
    %514 = vmatprep.subr.bf16.mxu0 0
    %515 = vmatpush2.bf16.msra.mxu0 0
    %516 = vmatprep.subr.bf16.mxu0 0
    %517 = vmatpush2.bf16.msra.mxu0 0
    %518 = vmatprep.mubr.bf16.mxu0 0
    %519 = vmatmul.mubr.bf16.gmra.mxu0 %v481
    %v520 = vpop.f32.mrf.mxu0
    %v521 = vadd.f32 0.0, %v520
    %v522 = vpop.f32.mrf.mxu0
    %v523 = vpop.f32.mrf.mxu0
    %v524 = vpop.f32.mrf.mxu0
    %525 = vdwg.mxu0
    %526 = vrot.lane.b32.xlu0 %v304, 112
    %v527 = vpop.permute.xlu0 %526
    %528 = vrot.lane.b32.xlu0 %v305, 112
    %v529 = vpop.permute.xlu0 %528
    %v531 = vsel %vm307, %v527, 0
    %v534 = vsel %vm307, %v529, 0
    %536 = vmatprep.subr.bf16.mxu0 0
    %537 = vmatpush1.bf16.xpose.msra.mxu0 0
    %538 = vmatprep.subr.bf16.mxu0 0
    %539 = vmatpush1.bf16.xpose.msra.mxu0 0
    %540 = vmatprep.subr.bf16.mxu0 0
    %541 = vmatpush1.bf16.xpose.msra.mxu0 0
    %542 = vmatprep.subr.bf16.mxu0 0
    %543 = vmatpush1.bf16.xpose.msra.mxu0 0
    %544 = vmatprep.subr.bf16.mxu0 0
    %545 = vmatpush1.bf16.xpose.msra.mxu0 0
    %546 = vmatprep.subr.bf16.mxu0 0
    %547 = vmatpush1.bf16.xpose.msra.mxu0 0
    %548 = vmatprep.subr.bf16.mxu0 0
    %549 = vmatpush1.bf16.xpose.msra.mxu0 0
    %550 = vmatprep.subr.bf16.mxu0 0
    %551 = vmatpush1.bf16.xpose.msra.mxu0 %v534
    %552 = vmatprep.subr.bf16.mxu0 0
    %553 = vmatpush2.bf16.xpose.msra.mxu0 0
    %554 = vmatprep.subr.bf16.mxu0 0
    %555 = vmatpush2.bf16.xpose.msra.mxu0 0
    %556 = vmatprep.subr.bf16.mxu0 0
    %557 = vmatpush2.bf16.xpose.msra.mxu0 0
    %558 = vmatprep.subr.bf16.mxu0 0
    %559 = vmatpush2.bf16.xpose.msra.mxu0 0
    %560 = vmatprep.subr.bf16.mxu0 0
    %561 = vmatpush2.bf16.xpose.msra.mxu0 0
    %562 = vmatprep.subr.bf16.mxu0 0
    %563 = vmatpush2.bf16.xpose.msra.mxu0 0
    %564 = vmatprep.subr.bf16.mxu0 0
    %565 = vmatpush2.bf16.xpose.msra.mxu0 0
    %566 = vmatprep.subr.bf16.mxu0 0
    %567 = vmatpush2.bf16.xpose.msra.mxu0 0
    %568 = vmatprep.mubr.bf16.mxu0 0
    %569 = vmatmul.mubr.bf16.gmra.mxu0 %v531
    %v570 = vpop.f32.mrf.mxu0
    %v571 = vadd.f32 0.0, %v570
    %v572 = vpop.f32.mrf.mxu0
    %v573 = vpop.f32.mrf.mxu0
    %v574 = vpop.f32.mrf.mxu0
    %575 = vdwg.mxu0
    %v576 = vsel %vm307, %v571, -inf
    %577 = vmax.xlane.f32.xlu0 %v576
    %v578 = vpop.xlane.xlu0 %577
    %v579 = vsub.f32 %v571, %v578
    %v580 = vmul.f32 %v579, 1.442695
    %v581 = vpow.pop %v580
    %v582 = vsel %vm307, %v581, 0.0
    %583 = vadd.xlane.f32.xlu0 %v582
    %v584 = vpop.xlane.xlu0 %583
    %v585 = vrcp.pop %v584
    %v586 = vmul.f32 %v581, %v585
    %v587 = vpack.c.bf16 %v586, %v586
    %588 = vrot.lane.b32.xlu0 %v306, 112
    %v589 = vpop.permute.xlu0 %588
    %v591 = vsel %vm307, %v587, 0
    %v594 = vsel %vm369, %v589, 0
    %596 = vmatprep.subr.bf16.mxu0 0
    %597 = vmatpush1.bf16.msra.mxu0 0
    %598 = vmatprep.subr.bf16.mxu0 0
    %599 = vmatpush1.bf16.msra.mxu0 0
    %600 = vmatprep.subr.bf16.mxu0 0
    %601 = vmatpush1.bf16.msra.mxu0 0
    %602 = vmatprep.subr.bf16.mxu0 0
    %603 = vmatpush1.bf16.msra.mxu0 0
    %604 = vmatprep.subr.bf16.mxu0 0
    %605 = vmatpush1.bf16.msra.mxu0 0
    %606 = vmatprep.subr.bf16.mxu0 0
    %607 = vmatpush1.bf16.msra.mxu0 0
    %608 = vmatprep.subr.bf16.mxu0 0
    %609 = vmatpush1.bf16.msra.mxu0 0
    %610 = vmatprep.subr.bf16.mxu0 0
    %611 = vmatpush1.bf16.msra.mxu0 %v594
    %612 = vmatprep.subr.bf16.mxu0 0
    %613 = vmatpush2.bf16.msra.mxu0 0
    %614 = vmatprep.subr.bf16.mxu0 0
    %615 = vmatpush2.bf16.msra.mxu0 0
    %616 = vmatprep.subr.bf16.mxu0 0
    %617 = vmatpush2.bf16.msra.mxu0 0
    %618 = vmatprep.subr.bf16.mxu0 0
    %619 = vmatpush2.bf16.msra.mxu0 0
    %620 = vmatprep.subr.bf16.mxu0 0
    %621 = vmatpush2.bf16.msra.mxu0 0
    %622 = vmatprep.subr.bf16.mxu0 0
    %623 = vmatpush2.bf16.msra.mxu0 0
    %624 = vmatprep.subr.bf16.mxu0 0
    %625 = vmatpush2.bf16.msra.mxu0 0
    %626 = vmatprep.subr.bf16.mxu0 0
    %627 = vmatpush2.bf16.msra.mxu0 0
    %628 = vmatprep.mubr.bf16.mxu0 0
    %629 = vmatmul.mubr.bf16.gmra.mxu0 %v591
    %v630 = vpop.f32.mrf.mxu0
    %v631 = vadd.f32 0.0, %v630
    %v632 = vpop.f32.mrf.mxu0
    %v633 = vpop.f32.mrf.mxu0
    %v634 = vpop.f32.mrf.mxu0
    %635 = vdwg.mxu0
    %636 = vrot.lane.b32.xlu0 %v304, 104
    %v637 = vpop.permute.xlu0 %636
    %638 = vrot.lane.b32.xlu0 %v305, 104
    %v639 = vpop.permute.xlu0 %638
    %v641 = vsel %vm307, %v637, 0
    %v644 = vsel %vm307, %v639, 0
    %646 = vmatprep.subr.bf16.mxu0 0
    %647 = vmatpush1.bf16.xpose.msra.mxu0 0
    %648 = vmatprep.subr.bf16.mxu0 0
    %649 = vmatpush1.bf16.xpose.msra.mxu0 0
    %650 = vmatprep.subr.bf16.mxu0 0
    %651 = vmatpush1.bf16.xpose.msra.mxu0 0
    %652 = vmatprep.subr.bf16.mxu0 0
    %653 = vmatpush1.bf16.xpose.msra.mxu0 0
    %654 = vmatprep.subr.bf16.mxu0 0
    %655 = vmatpush1.bf16.xpose.msra.mxu0 0
    %656 = vmatprep.subr.bf16.mxu0 0
    %657 = vmatpush1.bf16.xpose.msra.mxu0 0
    %658 = vmatprep.subr.bf16.mxu0 0
    %659 = vmatpush1.bf16.xpose.msra.mxu0 0
    %660 = vmatprep.subr.bf16.mxu0 0
    %661 = vmatpush1.bf16.xpose.msra.mxu0 %v644
    %662 = vmatprep.subr.bf16.mxu0 0
    %663 = vmatpush2.bf16.xpose.msra.mxu0 0
    %664 = vmatprep.subr.bf16.mxu0 0
    %665 = vmatpush2.bf16.xpose.msra.mxu0 0
    %666 = vmatprep.subr.bf16.mxu0 0
    %667 = vmatpush2.bf16.xpose.msra.mxu0 0
    %668 = vmatprep.subr.bf16.mxu0 0
    %669 = vmatpush2.bf16.xpose.msra.mxu0 0
    %670 = vmatprep.subr.bf16.mxu0 0
    %671 = vmatpush2.bf16.xpose.msra.mxu0 0
    %672 = vmatprep.subr.bf16.mxu0 0
    %673 = vmatpush2.bf16.xpose.msra.mxu0 0
    %674 = vmatprep.subr.bf16.mxu0 0
    %675 = vmatpush2.bf16.xpose.msra.mxu0 0
    %676 = vmatprep.subr.bf16.mxu0 0
    %677 = vmatpush2.bf16.xpose.msra.mxu0 0
    %678 = vmatprep.mubr.bf16.mxu0 0
    %679 = vmatmul.mubr.bf16.gmra.mxu0 %v641
    %v680 = vpop.f32.mrf.mxu0
    %v681 = vadd.f32 0.0, %v680
    %v682 = vpop.f32.mrf.mxu0
    %v683 = vpop.f32.mrf.mxu0
    %v684 = vpop.f32.mrf.mxu0
    %685 = vdwg.mxu0
    %v686 = vsel %vm307, %v681, -inf
    %687 = vmax.xlane.f32.xlu0 %v686
    %v688 = vpop.xlane.xlu0 %687
    %v689 = vsub.f32 %v681, %v688
    %v690 = vmul.f32 %v689, 1.442695
    %v691 = vpow.pop %v690
    %v692 = vsel %vm307, %v691, 0.0
    %693 = vadd.xlane.f32.xlu0 %v692
    %v694 = vpop.xlane.xlu0 %693
    %v695 = vrcp.pop %v694
    %v696 = vmul.f32 %v691, %v695
    %v697 = vpack.c.bf16 %v696, %v696
    %698 = vrot.lane.b32.xlu0 %v306, 104
    %v699 = vpop.permute.xlu0 %698
    %v701 = vsel %vm307, %v697, 0
    %v704 = vsel %vm369, %v699, 0
    %706 = vmatprep.subr.bf16.mxu0 0
    %707 = vmatpush1.bf16.msra.mxu0 0
    %708 = vmatprep.subr.bf16.mxu0 0
    %709 = vmatpush1.bf16.msra.mxu0 0
    %710 = vmatprep.subr.bf16.mxu0 0
    %711 = vmatpush1.bf16.msra.mxu0 0
    %712 = vmatprep.subr.bf16.mxu0 0
    %713 = vmatpush1.bf16.msra.mxu0 0
    %714 = vmatprep.subr.bf16.mxu0 0
    %715 = vmatpush1.bf16.msra.mxu0 0
    %716 = vmatprep.subr.bf16.mxu0 0
    %717 = vmatpush1.bf16.msra.mxu0 0
    %718 = vmatprep.subr.bf16.mxu0 0
    %719 = vmatpush1.bf16.msra.mxu0 0
    %720 = vmatprep.subr.bf16.mxu0 0
    %721 = vmatpush1.bf16.msra.mxu0 %v704
    %722 = vmatprep.subr.bf16.mxu0 0
    %723 = vmatpush2.bf16.msra.mxu0 0
    %724 = vmatprep.subr.bf16.mxu0 0
    %725 = vmatpush2.bf16.msra.mxu0 0
    %726 = vmatprep.subr.bf16.mxu0 0
    %727 = vmatpush2.bf16.msra.mxu0 0
    %728 = vmatprep.subr.bf16.mxu0 0
    %729 = vmatpush2.bf16.msra.mxu0 0
    %730 = vmatprep.subr.bf16.mxu0 0
    %731 = vmatpush2.bf16.msra.mxu0 0
    %732 = vmatprep.subr.bf16.mxu0 0
    %733 = vmatpush2.bf16.msra.mxu0 0
    %734 = vmatprep.subr.bf16.mxu0 0
    %735 = vmatpush2.bf16.msra.mxu0 0
    %736 = vmatprep.subr.bf16.mxu0 0
    %737 = vmatpush2.bf16.msra.mxu0 0
    %738 = vmatprep.mubr.bf16.mxu0 0
    %739 = vmatmul.mubr.bf16.gmra.mxu0 %v701
    %v740 = vpop.f32.mrf.mxu0
    %v741 = vadd.f32 0.0, %v740
    %v742 = vpop.f32.mrf.mxu0
    %v743 = vpop.f32.mrf.mxu0
    %v744 = vpop.f32.mrf.mxu0
    %745 = vdwg.mxu0
    %747 = vrot.lane.b32.xlu0 %v521, 8
    %v748 = vpop.permute.xlu0 %747
    %751 = vrot.lane.b32.xlu0 %v631, 16
    %v752 = vpop.permute.xlu0 %751
    %755 = vrot.lane.b32.xlu0 %v741, 24
    %v756 = vpop.permute.xlu0 %755
    %v758 = vsel %vm307, %v408, %v748
    %vm759 = vcmask 130048
    %v760 = vsel %vm759, %v758, %v752
    %vm761 = vcmask 195584
    %v762 = vsel %vm761, %v760, %v756
    %v763 = vmul.f32 %v183, 0.35355338
    %v764 = vpack.c.bf16 %v763, %v763
    %v765 = vpack.c.bf16 %v240, %v240
    %v766 = vpack.c.bf16 %v300, %v300
    %v768 = vsel %vm307, %v764, 0
    %v771 = vsel %vm307, %v765, 0
    %773 = vmatprep.subr.bf16.mxu0 0
    %774 = vmatpush1.bf16.xpose.msra.mxu0 0
    %775 = vmatprep.subr.bf16.mxu0 0
    %776 = vmatpush1.bf16.xpose.msra.mxu0 0
    %777 = vmatprep.subr.bf16.mxu0 0
    %778 = vmatpush1.bf16.xpose.msra.mxu0 0
    %779 = vmatprep.subr.bf16.mxu0 0
    %780 = vmatpush1.bf16.xpose.msra.mxu0 0
    %781 = vmatprep.subr.bf16.mxu0 0
    %782 = vmatpush1.bf16.xpose.msra.mxu0 0
    %783 = vmatprep.subr.bf16.mxu0 0
    %784 = vmatpush1.bf16.xpose.msra.mxu0 0
    %785 = vmatprep.subr.bf16.mxu0 0
    %786 = vmatpush1.bf16.xpose.msra.mxu0 0
    %787 = vmatprep.subr.bf16.mxu0 0
    %788 = vmatpush1.bf16.xpose.msra.mxu0 %v771
    %789 = vmatprep.subr.bf16.mxu0 0
    %790 = vmatpush2.bf16.xpose.msra.mxu0 0
    %791 = vmatprep.subr.bf16.mxu0 0
    %792 = vmatpush2.bf16.xpose.msra.mxu0 0
    %793 = vmatprep.subr.bf16.mxu0 0
    %794 = vmatpush2.bf16.xpose.msra.mxu0 0
    %795 = vmatprep.subr.bf16.mxu0 0
    %796 = vmatpush2.bf16.xpose.msra.mxu0 0
    %797 = vmatprep.subr.bf16.mxu0 0
    %798 = vmatpush2.bf16.xpose.msra.mxu0 0
    %799 = vmatprep.subr.bf16.mxu0 0
    %800 = vmatpush2.bf16.xpose.msra.mxu0 0
    %801 = vmatprep.subr.bf16.mxu0 0
    %802 = vmatpush2.bf16.xpose.msra.mxu0 0
    %803 = vmatprep.subr.bf16.mxu0 0
    %804 = vmatpush2.bf16.xpose.msra.mxu0 0
    %805 = vmatprep.mubr.bf16.mxu0 0
    %806 = vmatmul.mubr.bf16.gmra.mxu0 %v768
    %v807 = vpop.f32.mrf.mxu0
    %v808 = vadd.f32 0.0, %v807
    %v809 = vpop.f32.mrf.mxu0
    %v810 = vpop.f32.mrf.mxu0
    %v811 = vpop.f32.mrf.mxu0
    %812 = vdwg.mxu0
    %v813 = vsel %vm307, %v808, -inf
    %814 = vmax.xlane.f32.xlu0 %v813
    %v815 = vpop.xlane.xlu0 %814
    %v816 = vsub.f32 %v808, %v815
    %v817 = vmul.f32 %v816, 1.442695
    %v818 = vpow.pop %v817
    %v819 = vsel %vm307, %v818, 0.0
    %820 = vadd.xlane.f32.xlu0 %v819
    %v821 = vpop.xlane.xlu0 %820
    %v822 = vrcp.pop %v821
    %v823 = vmul.f32 %v818, %v822
    %v824 = vpack.c.bf16 %v823, %v823
    %v826 = vsel %vm307, %v824, 0
    %v829 = vsel %vm369, %v766, 0
    %831 = vmatprep.subr.bf16.mxu0 0
    %832 = vmatpush1.bf16.msra.mxu0 0
    %833 = vmatprep.subr.bf16.mxu0 0
    %834 = vmatpush1.bf16.msra.mxu0 0
    %835 = vmatprep.subr.bf16.mxu0 0
    %836 = vmatpush1.bf16.msra.mxu0 0
    %837 = vmatprep.subr.bf16.mxu0 0
    %838 = vmatpush1.bf16.msra.mxu0 0
    %839 = vmatprep.subr.bf16.mxu0 0
    %840 = vmatpush1.bf16.msra.mxu0 0
    %841 = vmatprep.subr.bf16.mxu0 0
    %842 = vmatpush1.bf16.msra.mxu0 0
    %843 = vmatprep.subr.bf16.mxu0 0
    %844 = vmatpush1.bf16.msra.mxu0 0
    %845 = vmatprep.subr.bf16.mxu0 0
    %846 = vmatpush1.bf16.msra.mxu0 %v829
    %847 = vmatprep.subr.bf16.mxu0 0
    %848 = vmatpush2.bf16.msra.mxu0 0
    %849 = vmatprep.subr.bf16.mxu0 0
    %850 = vmatpush2.bf16.msra.mxu0 0
    %851 = vmatprep.subr.bf16.mxu0 0
    %852 = vmatpush2.bf16.msra.mxu0 0
    %853 = vmatprep.subr.bf16.mxu0 0
    %854 = vmatpush2.bf16.msra.mxu0 0
    %855 = vmatprep.subr.bf16.mxu0 0
    %856 = vmatpush2.bf16.msra.mxu0 0
    %857 = vmatprep.subr.bf16.mxu0 0
    %858 = vmatpush2.bf16.msra.mxu0 0
    %859 = vmatprep.subr.bf16.mxu0 0
    %860 = vmatpush2.bf16.msra.mxu0 0
    %861 = vmatprep.subr.bf16.mxu0 0
    %862 = vmatpush2.bf16.msra.mxu0 0
    %863 = vmatprep.mubr.bf16.mxu0 0
    %864 = vmatmul.mubr.bf16.gmra.mxu0 %v826
    %v865 = vpop.f32.mrf.mxu0
    %v866 = vadd.f32 0.0, %v865
    %v867 = vpop.f32.mrf.mxu0
    %v868 = vpop.f32.mrf.mxu0
    %v869 = vpop.f32.mrf.mxu0
    %870 = vdwg.mxu0
    %872 = vrot.lane.b32.xlu0 %v764, 120
    %v873 = vpop.permute.xlu0 %872
    %875 = vrot.lane.b32.xlu0 %v765, 120
    %v876 = vpop.permute.xlu0 %875
    %v878 = vsel %vm307, %v873, 0
    %v881 = vsel %vm307, %v876, 0
    %883 = vmatprep.subr.bf16.mxu0 0
    %884 = vmatpush1.bf16.xpose.msra.mxu0 0
    %885 = vmatprep.subr.bf16.mxu0 0
    %886 = vmatpush1.bf16.xpose.msra.mxu0 0
    %887 = vmatprep.subr.bf16.mxu0 0
    %888 = vmatpush1.bf16.xpose.msra.mxu0 0
    %889 = vmatprep.subr.bf16.mxu0 0
    %890 = vmatpush1.bf16.xpose.msra.mxu0 0
    %891 = vmatprep.subr.bf16.mxu0 0
    %892 = vmatpush1.bf16.xpose.msra.mxu0 0
    %893 = vmatprep.subr.bf16.mxu0 0
    %894 = vmatpush1.bf16.xpose.msra.mxu0 0
    %895 = vmatprep.subr.bf16.mxu0 0
    %896 = vmatpush1.bf16.xpose.msra.mxu0 0
    %897 = vmatprep.subr.bf16.mxu0 0
    %898 = vmatpush1.bf16.xpose.msra.mxu0 %v881
    %899 = vmatprep.subr.bf16.mxu0 0
    %900 = vmatpush2.bf16.xpose.msra.mxu0 0
    %901 = vmatprep.subr.bf16.mxu0 0
    %902 = vmatpush2.bf16.xpose.msra.mxu0 0
    %903 = vmatprep.subr.bf16.mxu0 0
    %904 = vmatpush2.bf16.xpose.msra.mxu0 0
    %905 = vmatprep.subr.bf16.mxu0 0
    %906 = vmatpush2.bf16.xpose.msra.mxu0 0
    %907 = vmatprep.subr.bf16.mxu0 0
    %908 = vmatpush2.bf16.xpose.msra.mxu0 0
    %909 = vmatprep.subr.bf16.mxu0 0
    %910 = vmatpush2.bf16.xpose.msra.mxu0 0
    %911 = vmatprep.subr.bf16.mxu0 0
    %912 = vmatpush2.bf16.xpose.msra.mxu0 0
    %913 = vmatprep.subr.bf16.mxu0 0
    %914 = vmatpush2.bf16.xpose.msra.mxu0 0
    %915 = vmatprep.mubr.bf16.mxu0 0
    %916 = vmatmul.mubr.bf16.gmra.mxu0 %v878
    %v917 = vpop.f32.mrf.mxu0
    %v918 = vadd.f32 0.0, %v917
    %v919 = vpop.f32.mrf.mxu0
    %v920 = vpop.f32.mrf.mxu0
    %v921 = vpop.f32.mrf.mxu0
    %922 = vdwg.mxu0
    %v923 = vsel %vm307, %v918, -inf
    %924 = vmax.xlane.f32.xlu0 %v923
    %v925 = vpop.xlane.xlu0 %924
    %v926 = vsub.f32 %v918, %v925
    %v927 = vmul.f32 %v926, 1.442695
    %v928 = vpow.pop %v927
    %v929 = vsel %vm307, %v928, 0.0
    %930 = vadd.xlane.f32.xlu0 %v929
    %v931 = vpop.xlane.xlu0 %930
    %v932 = vrcp.pop %v931
    %v933 = vmul.f32 %v928, %v932
    %v934 = vpack.c.bf16 %v933, %v933
    %936 = vrot.lane.b32.xlu0 %v766, 120
    %v937 = vpop.permute.xlu0 %936
    %v939 = vsel %vm307, %v934, 0
    %v942 = vsel %vm369, %v937, 0
    %944 = vmatprep.subr.bf16.mxu0 0
    %945 = vmatpush1.bf16.msra.mxu0 0
    %946 = vmatprep.subr.bf16.mxu0 0
    %947 = vmatpush1.bf16.msra.mxu0 0
    %948 = vmatprep.subr.bf16.mxu0 0
    %949 = vmatpush1.bf16.msra.mxu0 0
    %950 = vmatprep.subr.bf16.mxu0 0
    %951 = vmatpush1.bf16.msra.mxu0 0
    %952 = vmatprep.subr.bf16.mxu0 0
    %953 = vmatpush1.bf16.msra.mxu0 0
    %954 = vmatprep.subr.bf16.mxu0 0
    %955 = vmatpush1.bf16.msra.mxu0 0
    %956 = vmatprep.subr.bf16.mxu0 0
    %957 = vmatpush1.bf16.msra.mxu0 0
    %958 = vmatprep.subr.bf16.mxu0 0
    %959 = vmatpush1.bf16.msra.mxu0 %v942
    %960 = vmatprep.subr.bf16.mxu0 0
    %961 = vmatpush2.bf16.msra.mxu0 0
    %962 = vmatprep.subr.bf16.mxu0 0
    %963 = vmatpush2.bf16.msra.mxu0 0
    %964 = vmatprep.subr.bf16.mxu0 0
    %965 = vmatpush2.bf16.msra.mxu0 0
    %966 = vmatprep.subr.bf16.mxu0 0
    %967 = vmatpush2.bf16.msra.mxu0 0
    %968 = vmatprep.subr.bf16.mxu0 0
    %969 = vmatpush2.bf16.msra.mxu0 0
    %970 = vmatprep.subr.bf16.mxu0 0
    %971 = vmatpush2.bf16.msra.mxu0 0
    %972 = vmatprep.subr.bf16.mxu0 0
    %973 = vmatpush2.bf16.msra.mxu0 0
    %974 = vmatprep.subr.bf16.mxu0 0
    %975 = vmatpush2.bf16.msra.mxu0 0
    %976 = vmatprep.mubr.bf16.mxu0 0
    %977 = vmatmul.mubr.bf16.gmra.mxu0 %v939
    %v978 = vpop.f32.mrf.mxu0
    %v979 = vadd.f32 0.0, %v978
    %v980 = vpop.f32.mrf.mxu0
    %v981 = vpop.f32.mrf.mxu0
    %v982 = vpop.f32.mrf.mxu0
    %983 = vdwg.mxu0
    %984 = vrot.lane.b32.xlu0 %v764, 112
    %v985 = vpop.permute.xlu0 %984
    %986 = vrot.lane.b32.xlu0 %v765, 112
    %v987 = vpop.permute.xlu0 %986
    %v989 = vsel %vm307, %v985, 0
    %v992 = vsel %vm307, %v987, 0
    %994 = vmatprep.subr.bf16.mxu0 0
    %995 = vmatpush1.bf16.xpose.msra.mxu0 0
    %996 = vmatprep.subr.bf16.mxu0 0
    %997 = vmatpush1.bf16.xpose.msra.mxu0 0
    %998 = vmatprep.subr.bf16.mxu0 0
    %999 = vmatpush1.bf16.xpose.msra.mxu0 0
    %1000 = vmatprep.subr.bf16.mxu0 0
    %1001 = vmatpush1.bf16.xpose.msra.mxu0 0
    %1002 = vmatprep.subr.bf16.mxu0 0
    %1003 = vmatpush1.bf16.xpose.msra.mxu0 0
    %1004 = vmatprep.subr.bf16.mxu0 0
    %1005 = vmatpush1.bf16.xpose.msra.mxu0 0
    %1006 = vmatprep.subr.bf16.mxu0 0
    %1007 = vmatpush1.bf16.xpose.msra.mxu0 0
    %1008 = vmatprep.subr.bf16.mxu0 0
    %1009 = vmatpush1.bf16.xpose.msra.mxu0 %v992
    %1010 = vmatprep.subr.bf16.mxu0 0
    %1011 = vmatpush2.bf16.xpose.msra.mxu0 0
    %1012 = vmatprep.subr.bf16.mxu0 0
    %1013 = vmatpush2.bf16.xpose.msra.mxu0 0
    %1014 = vmatprep.subr.bf16.mxu0 0
    %1015 = vmatpush2.bf16.xpose.msra.mxu0 0
    %1016 = vmatprep.subr.bf16.mxu0 0
    %1017 = vmatpush2.bf16.xpose.msra.mxu0 0
    %1018 = vmatprep.subr.bf16.mxu0 0
    %1019 = vmatpush2.bf16.xpose.msra.mxu0 0
    %1020 = vmatprep.subr.bf16.mxu0 0
    %1021 = vmatpush2.bf16.xpose.msra.mxu0 0
    %1022 = vmatprep.subr.bf16.mxu0 0
    %1023 = vmatpush2.bf16.xpose.msra.mxu0 0
    %1024 = vmatprep.subr.bf16.mxu0 0
    %1025 = vmatpush2.bf16.xpose.msra.mxu0 0
    %1026 = vmatprep.mubr.bf16.mxu0 0
    %1027 = vmatmul.mubr.bf16.gmra.mxu0 %v989
    %v1028 = vpop.f32.mrf.mxu0
    %v1029 = vadd.f32 0.0, %v1028
    %v1030 = vpop.f32.mrf.mxu0
    %v1031 = vpop.f32.mrf.mxu0
    %v1032 = vpop.f32.mrf.mxu0
    %1033 = vdwg.mxu0
    %v1034 = vsel %vm307, %v1029, -inf
    %1035 = vmax.xlane.f32.xlu0 %v1034
    %v1036 = vpop.xlane.xlu0 %1035
    %v1037 = vsub.f32 %v1029, %v1036
    %v1038 = vmul.f32 %v1037, 1.442695
    %v1039 = vpow.pop %v1038
    %v1040 = vsel %vm307, %v1039, 0.0
    %1041 = vadd.xlane.f32.xlu0 %v1040
    %v1042 = vpop.xlane.xlu0 %1041
    %v1043 = vrcp.pop %v1042
    %v1044 = vmul.f32 %v1039, %v1043
    %v1045 = vpack.c.bf16 %v1044, %v1044
    %1046 = vrot.lane.b32.xlu0 %v766, 112
    %v1047 = vpop.permute.xlu0 %1046
    %v1049 = vsel %vm307, %v1045, 0
    %v1052 = vsel %vm369, %v1047, 0
    %1054 = vmatprep.subr.bf16.mxu0 0
    %1055 = vmatpush1.bf16.msra.mxu0 0
    %1056 = vmatprep.subr.bf16.mxu0 0
    %1057 = vmatpush1.bf16.msra.mxu0 0
    %1058 = vmatprep.subr.bf16.mxu0 0
    %1059 = vmatpush1.bf16.msra.mxu0 0
    %1060 = vmatprep.subr.bf16.mxu0 0
    %1061 = vmatpush1.bf16.msra.mxu0 0
    %1062 = vmatprep.subr.bf16.mxu0 0
    %1063 = vmatpush1.bf16.msra.mxu0 0
    %1064 = vmatprep.subr.bf16.mxu0 0
    %1065 = vmatpush1.bf16.msra.mxu0 0
    %1066 = vmatprep.subr.bf16.mxu0 0
    %1067 = vmatpush1.bf16.msra.mxu0 0
    %1068 = vmatprep.subr.bf16.mxu0 0
    %1069 = vmatpush1.bf16.msra.mxu0 %v1052
    %1070 = vmatprep.subr.bf16.mxu0 0
    %1071 = vmatpush2.bf16.msra.mxu0 0
    %1072 = vmatprep.subr.bf16.mxu0 0
    %1073 = vmatpush2.bf16.msra.mxu0 0
    %1074 = vmatprep.subr.bf16.mxu0 0
    %1075 = vmatpush2.bf16.msra.mxu0 0
    %1076 = vmatprep.subr.bf16.mxu0 0
    %1077 = vmatpush2.bf16.msra.mxu0 0
    %1078 = vmatprep.subr.bf16.mxu0 0
    %1079 = vmatpush2.bf16.msra.mxu0 0
    %1080 = vmatprep.subr.bf16.mxu0 0
    %1081 = vmatpush2.bf16.msra.mxu0 0
    %1082 = vmatprep.subr.bf16.mxu0 0
    %1083 = vmatpush2.bf16.msra.mxu0 0
    %1084 = vmatprep.subr.bf16.mxu0 0
    %1085 = vmatpush2.bf16.msra.mxu0 0
    %1086 = vmatprep.mubr.bf16.mxu0 0
    %1087 = vmatmul.mubr.bf16.gmra.mxu0 %v1049
    %v1088 = vpop.f32.mrf.mxu0
    %v1089 = vadd.f32 0.0, %v1088
    %v1090 = vpop.f32.mrf.mxu0
    %v1091 = vpop.f32.mrf.mxu0
    %v1092 = vpop.f32.mrf.mxu0
    %1093 = vdwg.mxu0
    %1094 = vrot.lane.b32.xlu0 %v764, 104
    %v1095 = vpop.permute.xlu0 %1094
    %1096 = vrot.lane.b32.xlu0 %v765, 104
    %v1097 = vpop.permute.xlu0 %1096
    %v1099 = vsel %vm307, %v1095, 0
    %v1102 = vsel %vm307, %v1097, 0
    %1104 = vmatprep.subr.bf16.mxu0 0
    %1105 = vmatpush1.bf16.xpose.msra.mxu0 0
    %1106 = vmatprep.subr.bf16.mxu0 0
    %1107 = vmatpush1.bf16.xpose.msra.mxu0 0
    %1108 = vmatprep.subr.bf16.mxu0 0
    %1109 = vmatpush1.bf16.xpose.msra.mxu0 0
    %1110 = vmatprep.subr.bf16.mxu0 0
    %1111 = vmatpush1.bf16.xpose.msra.mxu0 0
    %1112 = vmatprep.subr.bf16.mxu0 0
    %1113 = vmatpush1.bf16.xpose.msra.mxu0 0
    %1114 = vmatprep.subr.bf16.mxu0 0
    %1115 = vmatpush1.bf16.xpose.msra.mxu0 0
    %1116 = vmatprep.subr.bf16.mxu0 0
    %1117 = vmatpush1.bf16.xpose.msra.mxu0 0
    %1118 = vmatprep.subr.bf16.mxu0 0
    %1119 = vmatpush1.bf16.xpose.msra.mxu0 %v1102
    %1120 = vmatprep.subr.bf16.mxu0 0
    %1121 = vmatpush2.bf16.xpose.msra.mxu0 0
    %1122 = vmatprep.subr.bf16.mxu0 0
    %1123 = vmatpush2.bf16.xpose.msra.mxu0 0
    %1124 = vmatprep.subr.bf16.mxu0 0
    %1125 = vmatpush2.bf16.xpose.msra.mxu0 0
    %1126 = vmatprep.subr.bf16.mxu0 0
    %1127 = vmatpush2.bf16.xpose.msra.mxu0 0
    %1128 = vmatprep.subr.bf16.mxu0 0
    %1129 = vmatpush2.bf16.xpose.msra.mxu0 0
    %1130 = vmatprep.subr.bf16.mxu0 0
    %1131 = vmatpush2.bf16.xpose.msra.mxu0 0
    %1132 = vmatprep.subr.bf16.mxu0 0
    %1133 = vmatpush2.bf16.xpose.msra.mxu0 0
    %1134 = vmatprep.subr.bf16.mxu0 0
    %1135 = vmatpush2.bf16.xpose.msra.mxu0 0
    %1136 = vmatprep.mubr.bf16.mxu0 0
    %1137 = vmatmul.mubr.bf16.gmra.mxu0 %v1099
    %v1138 = vpop.f32.mrf.mxu0
    %v1139 = vadd.f32 0.0, %v1138
    %v1140 = vpop.f32.mrf.mxu0
    %v1141 = vpop.f32.mrf.mxu0
    %v1142 = vpop.f32.mrf.mxu0
    %1143 = vdwg.mxu0
    %v1144 = vsel %vm307, %v1139, -inf
    %1145 = vmax.xlane.f32.xlu0 %v1144
    %v1146 = vpop.xlane.xlu0 %1145
    %v1147 = vsub.f32 %v1139, %v1146
    %v1148 = vmul.f32 %v1147, 1.442695
    %v1149 = vpow.pop %v1148
    %v1150 = vsel %vm307, %v1149, 0.0
    %1151 = vadd.xlane.f32.xlu0 %v1150
    %v1152 = vpop.xlane.xlu0 %1151
    %v1153 = vrcp.pop %v1152
    %v1154 = vmul.f32 %v1149, %v1153
    %v1155 = vpack.c.bf16 %v1154, %v1154
    %1156 = vrot.lane.b32.xlu0 %v766, 104
    %v1157 = vpop.permute.xlu0 %1156
    %v1159 = vsel %vm307, %v1155, 0
    %v1162 = vsel %vm369, %v1157, 0
    %1164 = vmatprep.subr.bf16.mxu0 0
    %1165 = vmatpush1.bf16.msra.mxu0 0
    %1166 = vmatprep.subr.bf16.mxu0 0
    %1167 = vmatpush1.bf16.msra.mxu0 0
    %1168 = vmatprep.subr.bf16.mxu0 0
    %1169 = vmatpush1.bf16.msra.mxu0 0
    %1170 = vmatprep.subr.bf16.mxu0 0
    %1171 = vmatpush1.bf16.msra.mxu0 0
    %1172 = vmatprep.subr.bf16.mxu0 0
    %1173 = vmatpush1.bf16.msra.mxu0 0
    %1174 = vmatprep.subr.bf16.mxu0 0
    %1175 = vmatpush1.bf16.msra.mxu0 0
    %1176 = vmatprep.subr.bf16.mxu0 0
    %1177 = vmatpush1.bf16.msra.mxu0 0
    %1178 = vmatprep.subr.bf16.mxu0 0
    %1179 = vmatpush1.bf16.msra.mxu0 %v1162
    %1180 = vmatprep.subr.bf16.mxu0 0
    %1181 = vmatpush2.bf16.msra.mxu0 0
    %1182 = vmatprep.subr.bf16.mxu0 0
    %1183 = vmatpush2.bf16.msra.mxu0 0
    %1184 = vmatprep.subr.bf16.mxu0 0
    %1185 = vmatpush2.bf16.msra.mxu0 0
    %1186 = vmatprep.subr.bf16.mxu0 0
    %1187 = vmatpush2.bf16.msra.mxu0 0
    %1188 = vmatprep.subr.bf16.mxu0 0
    %1189 = vmatpush2.bf16.msra.mxu0 0
    %1190 = vmatprep.subr.bf16.mxu0 0
    %1191 = vmatpush2.bf16.msra.mxu0 0
    %1192 = vmatprep.subr.bf16.mxu0 0
    %1193 = vmatpush2.bf16.msra.mxu0 0
    %1194 = vmatprep.subr.bf16.mxu0 0
    %1195 = vmatpush2.bf16.msra.mxu0 0
    %1196 = vmatprep.mubr.bf16.mxu0 0
    %1197 = vmatmul.mubr.bf16.gmra.mxu0 %v1159
    %v1198 = vpop.f32.mrf.mxu0
    %v1199 = vadd.f32 0.0, %v1198
    %v1200 = vpop.f32.mrf.mxu0
    %v1201 = vpop.f32.mrf.mxu0
    %v1202 = vpop.f32.mrf.mxu0
    %1203 = vdwg.mxu0
    %1205 = vrot.lane.b32.xlu0 %v979, 8
    %v1206 = vpop.permute.xlu0 %1205
    %1209 = vrot.lane.b32.xlu0 %v1089, 16
    %v1210 = vpop.permute.xlu0 %1209
    %1213 = vrot.lane.b32.xlu0 %v1199, 24
    %v1214 = vpop.permute.xlu0 %1213
    %v1216 = vsel %vm307, %v866, %v1206
    %v1217 = vsel %vm759, %v1216, %v1210
    %v1218 = vsel %vm761, %v1217, %v1214
    %v1219 = vpack.c.bf16 %v1218, %v762
    %v1220 = vlaneseq
    %v1221 = vshrl.u32 %v1220, 7
    %v1222 = vsub.s32 3, %v1221
    %v1223 = vrot.slane %v77, %v1222
    %v1228 = vunpack.c.l.b16 %v101
    %v1229 = vunpack.c.l.b16 %v102
    %v1230 = vunpack.c.l.b16 %v103
    %v1231 = vunpack.c.l.b16 %v104
    %v1232 = vpack.c.b16 %v1229, %v1228
    %v1233 = vpack.c.b16 %v1231, %v1230
    %v1237 = vsel %vm141, %v1219, 0
    %1239 = vmatprep.subr.bf16.mxu0 0
    %1240 = vmatpush1.bf16.msra.mxu0 0
    %1241 = vmatprep.subr.bf16.mxu0 0
    %1242 = vmatpush1.bf16.msra.mxu0 0
    %1243 = vmatprep.subr.bf16.mxu0 0
    %1244 = vmatpush1.bf16.msra.mxu0 0
    %1245 = vmatprep.subr.bf16.mxu0 0
    %1246 = vmatpush1.bf16.msra.mxu0 0
    %1247 = vmatprep.subr.bf16.mxu0 0
    %1248 = vmatpush1.bf16.msra.mxu0 0
    %1249 = vmatprep.subr.bf16.mxu0 0
    %1250 = vmatpush1.bf16.msra.mxu0 0
    %1251 = vmatprep.subr.bf16.mxu0 0
    %1252 = vmatpush1.bf16.msra.mxu0 %v1233
    %1253 = vmatprep.subr.bf16.mxu0 0
    %1254 = vmatpush1.bf16.msra.mxu0 %v1232
    %1255 = vmatprep.subr.bf16.mxu0 0
    %1256 = vmatpush2.bf16.msra.mxu0 0
    %1257 = vmatprep.subr.bf16.mxu0 0
    %1258 = vmatpush2.bf16.msra.mxu0 0
    %1259 = vmatprep.subr.bf16.mxu0 0
    %1260 = vmatpush2.bf16.msra.mxu0 0
    %1261 = vmatprep.subr.bf16.mxu0 0
    %1262 = vmatpush2.bf16.msra.mxu0 0
    %1263 = vmatprep.subr.bf16.mxu0 0
    %1264 = vmatpush2.bf16.msra.mxu0 0
    %1265 = vmatprep.subr.bf16.mxu0 0
    %1266 = vmatpush2.bf16.msra.mxu0 0
    %1267 = vmatprep.subr.bf16.mxu0 0
    %1268 = vmatpush2.bf16.msra.mxu0 0
    %1269 = vmatprep.subr.bf16.mxu0 0
    %1270 = vmatpush2.bf16.msra.mxu0 0
    %1271 = vmatprep.mubr.bf16.mxu0 0
    %1272 = vmatmul.mubr.bf16.gmra.mxu0 %v1237
    %v1273 = vpop.f32.mrf.mxu0
    %v1274 = vadd.f32 %v1223, %v1273
    %v1275 = vpop.f32.mrf.mxu0
    %v1276 = vpop.f32.mrf.mxu0
    %v1277 = vadd.f32 %v1223, %v1276
    %v1278 = vpop.f32.mrf.mxu0
    %1279 = vdwg.mxu0
    %v1280 = vadd.f32 %v1274, %v64
    %v1281 = vadd.f32 %v1277, %v65
    %v1282 = vsel %vm141, %v1280, 0.0
    %1283 = vadd.xlane.f32.xlu0 %v1282
    %v1284 = vpop.xlane.xlu0 %1283
    %v1285 = vsel %vm141, %v1281, 0.0
    %1286 = vadd.xlane.f32.xlu0 %v1285
    %v1287 = vpop.xlane.xlu0 %1286
    %v1288 = vrcp.pop 32.0
    %v1289 = vmul.f32 %v1284, %v1288
    %v1290 = vmul.f32 %v1287, %v1288
    %v1291 = vsub.f32 %v1280, %v1289
    %v1292 = vsub.f32 %v1281, %v1290
    %v1293 = vmul.f32 %v1291, %v1291
    %v1294 = vmul.f32 %v1292, %v1292
    %v1295 = vsel %vm141, %v1293, 0.0
    %1296 = vadd.xlane.f32.xlu0 %v1295
    %v1297 = vpop.xlane.xlu0 %1296
    %v1298 = vsel %vm141, %v1294, 0.0
    %1299 = vadd.xlane.f32.xlu0 %v1298
    %v1300 = vpop.xlane.xlu0 %1299
    %v1301 = vmul.f32 %v1297, %v1288
    %v1302 = vmul.f32 %v1300, %v1288
    %v1303 = vadd.f32 %v1301, 1e-05
    %v1304 = vadd.f32 %v1302, 1e-05
    %v1305 = vrsqrt.pop %v1303
    %v1306 = vrsqrt.pop %v1304
    %v1307 = vmul.f32 %v1291, %v1305
    %v1308 = vmul.f32 %v1292, %v1306
    %v1309 = vlaneseq
    %v1310 = vshrl.u32 %v1309, 7
    %v1311 = vsub.s32 1, %v1310
    %v1312 = vrot.slane %v78, %v1311
    %v1313 = vmul.f32 %v1307, %v1312
    %v1314 = vmul.f32 %v1308, %v1312
    %v1315 = vlaneseq
    %v1316 = vshrl.u32 %v1315, 7
    %v1317 = vsub.s32 2, %v1316
    %v1318 = vrot.slane %v78, %v1317
    %v1319 = vadd.f32 %v1313, %v1318
    %v1320 = vadd.f32 %v1314, %v1318
    %v1321 = vadd.f32 %v1319, %v66
    %v1322 = vadd.f32 %v1320, %v67
    %v1323 = vpack.c.bf16 %v1322, %v1321
    %v1324 = vlaneseq
    %v1325 = vshrl.u32 %v1324, 7
    %v1326 = vsub.s32 4, %v1325
    %v1327 = vrot.slane %v77, %v1326
    %v1332 = vunpack.c.l.b16 %v105
    %v1333 = vunpack.c.l.b16 %v106
    %v1334 = vunpack.c.l.b16 %v107
    %v1335 = vunpack.c.l.b16 %v108
    %v1336 = vpack.c.b16 %v1333, %v1332
    %v1337 = vpack.c.b16 %v1335, %v1334
    %v1341 = vsel %vm141, %v1323, 0
    %1343 = vmatprep.subr.bf16.mxu0 0
    %1344 = vmatpush1.bf16.msra.mxu0 0
    %1345 = vmatprep.subr.bf16.mxu0 0
    %1346 = vmatpush1.bf16.msra.mxu0 0
    %1347 = vmatprep.subr.bf16.mxu0 0
    %1348 = vmatpush1.bf16.msra.mxu0 0
    %1349 = vmatprep.subr.bf16.mxu0 0
    %1350 = vmatpush1.bf16.msra.mxu0 0
    %1351 = vmatprep.subr.bf16.mxu0 0
    %1352 = vmatpush1.bf16.msra.mxu0 0
    %1353 = vmatprep.subr.bf16.mxu0 0
    %1354 = vmatpush1.bf16.msra.mxu0 0
    %1355 = vmatprep.subr.bf16.mxu0 0
    %1356 = vmatpush1.bf16.msra.mxu0 %v1337
    %1357 = vmatprep.subr.bf16.mxu0 0
    %1358 = vmatpush1.bf16.msra.mxu0 %v1336
    %1359 = vmatprep.subr.bf16.mxu0 0
    %1360 = vmatpush2.bf16.msra.mxu0 0
    %1361 = vmatprep.subr.bf16.mxu0 0
    %1362 = vmatpush2.bf16.msra.mxu0 0
    %1363 = vmatprep.subr.bf16.mxu0 0
    %1364 = vmatpush2.bf16.msra.mxu0 0
    %1365 = vmatprep.subr.bf16.mxu0 0
    %1366 = vmatpush2.bf16.msra.mxu0 0
    %1367 = vmatprep.subr.bf16.mxu0 0
    %1368 = vmatpush2.bf16.msra.mxu0 0
    %1369 = vmatprep.subr.bf16.mxu0 0
    %1370 = vmatpush2.bf16.msra.mxu0 0
    %1371 = vmatprep.subr.bf16.mxu0 0
    %1372 = vmatpush2.bf16.msra.mxu0 0
    %1373 = vmatprep.subr.bf16.mxu0 0
    %1374 = vmatpush2.bf16.msra.mxu0 0
    %1375 = vmatprep.mubr.bf16.mxu0 0
    %1376 = vmatmul.mubr.bf16.gmra.mxu0 %v1341
    %v1377 = vpop.f32.mrf.mxu0
    %v1378 = vadd.f32 %v1327, %v1377
    %v1379 = vpop.f32.mrf.mxu0
    %v1380 = vpop.f32.mrf.mxu0
    %v1381 = vadd.f32 %v1327, %v1380
    %v1382 = vpop.f32.mrf.mxu0
    %1383 = vdwg.mxu0
    %v1384 = vlaneseq
    %v1385 = vshrl.u32 %v1384, 7
    %v1386 = vsub.s32 5, %v1385
    %v1387 = vrot.slane %v77, %v1386
    %v1392 = vunpack.c.l.b16 %v109
    %v1393 = vunpack.c.l.b16 %v110
    %v1394 = vunpack.c.l.b16 %v111
    %v1395 = vunpack.c.l.b16 %v112
    %v1396 = vpack.c.b16 %v1393, %v1392
    %v1397 = vpack.c.b16 %v1395, %v1394
    %v1401 = vsel %vm141, %v85, 0
    %v1404 = vsel %vm141, %v86, 0
    %1406 = vmatprep.subr.bf16.mxu0 0
    %1407 = vmatpush1.bf16.msra.mxu0 0
    %1408 = vmatprep.subr.bf16.mxu0 0
    %1409 = vmatpush1.bf16.msra.mxu0 0
    %1410 = vmatprep.subr.bf16.mxu0 0
    %1411 = vmatpush1.bf16.msra.mxu0 0
    %1412 = vmatprep.subr.bf16.mxu0 0
    %1413 = vmatpush1.bf16.msra.mxu0 0
    %1414 = vmatprep.subr.bf16.mxu0 0
    %1415 = vmatpush1.bf16.msra.mxu0 0
    %1416 = vmatprep.subr.bf16.mxu0 0
    %1417 = vmatpush1.bf16.msra.mxu0 0
    %1418 = vmatprep.subr.bf16.mxu0 0
    %1419 = vmatpush1.bf16.msra.mxu0 %v1397
    %1420 = vmatprep.subr.bf16.mxu0 0
    %1421 = vmatpush1.bf16.msra.mxu0 %v1396
    %1422 = vmatprep.subr.bf16.mxu0 0
    %1423 = vmatpush2.bf16.msra.mxu0 0
    %1424 = vmatprep.subr.bf16.mxu0 0
    %1425 = vmatpush2.bf16.msra.mxu0 0
    %1426 = vmatprep.subr.bf16.mxu0 0
    %1427 = vmatpush2.bf16.msra.mxu0 0
    %1428 = vmatprep.subr.bf16.mxu0 0
    %1429 = vmatpush2.bf16.msra.mxu0 0
    %1430 = vmatprep.subr.bf16.mxu0 0
    %1431 = vmatpush2.bf16.msra.mxu0 0
    %1432 = vmatprep.subr.bf16.mxu0 0
    %1433 = vmatpush2.bf16.msra.mxu0 0
    %1434 = vmatprep.subr.bf16.mxu0 0
    %1435 = vmatpush2.bf16.msra.mxu0 0
    %1436 = vmatprep.subr.bf16.mxu0 0
    %1437 = vmatpush2.bf16.msra.mxu0 0
    %1438 = vmatprep.mubr.bf16.mxu0 0
    %1439 = vmatmul.mubr.bf16.gmra.mxu0 %v1401
    %v1440 = vpop.f32.mrf.mxu0
    %v1441 = vadd.f32 %v1387, %v1440
    %v1442 = vpop.f32.mrf.mxu0
    %v1443 = vpop.f32.mrf.mxu0
    %v1444 = vadd.f32 %v1387, %v1443
    %v1445 = vpop.f32.mrf.mxu0
    %1446 = vmatprep.mubr.bf16.mxu0 0
    %1447 = vmatmul.mubr.bf16.gmra.mxu0 %v1404
    %v1448 = vpop.f32.mrf.mxu0
    %v1449 = vadd.f32 %v1387, %v1448
    %v1450 = vpop.f32.mrf.mxu0
    %v1451 = vpop.f32.mrf.mxu0
    %v1452 = vadd.f32 %v1387, %v1451
    %v1453 = vpop.f32.mrf.mxu0
    %1454 = vdwg.mxu0
    %v1455 = vlaneseq
    %v1456 = vshrl.u32 %v1455, 7
    %v1457 = vsub.s32 6, %v1456
    %v1458 = vrot.slane %v77, %v1457
    %v1463 = vunpack.c.l.b16 %v113
    %v1464 = vunpack.c.l.b16 %v114
    %v1465 = vunpack.c.l.b16 %v115
    %v1466 = vunpack.c.l.b16 %v116
    %v1467 = vpack.c.b16 %v1464, %v1463
    %v1468 = vpack.c.b16 %v1466, %v1465
    %v1472 = vsel %vm141, %v87, 0
    %v1475 = vsel %vm141, %v88, 0
    %1477 = vmatprep.subr.bf16.mxu0 0
    %1478 = vmatpush1.bf16.msra.mxu0 0
    %1479 = vmatprep.subr.bf16.mxu0 0
    %1480 = vmatpush1.bf16.msra.mxu0 0
    %1481 = vmatprep.subr.bf16.mxu0 0
    %1482 = vmatpush1.bf16.msra.mxu0 0
    %1483 = vmatprep.subr.bf16.mxu0 0
    %1484 = vmatpush1.bf16.msra.mxu0 0
    %1485 = vmatprep.subr.bf16.mxu0 0
    %1486 = vmatpush1.bf16.msra.mxu0 0
    %1487 = vmatprep.subr.bf16.mxu0 0
    %1488 = vmatpush1.bf16.msra.mxu0 0
    %1489 = vmatprep.subr.bf16.mxu0 0
    %1490 = vmatpush1.bf16.msra.mxu0 %v1468
    %1491 = vmatprep.subr.bf16.mxu0 0
    %1492 = vmatpush1.bf16.msra.mxu0 %v1467
    %1493 = vmatprep.subr.bf16.mxu0 0
    %1494 = vmatpush2.bf16.msra.mxu0 0
    %1495 = vmatprep.subr.bf16.mxu0 0
    %1496 = vmatpush2.bf16.msra.mxu0 0
    %1497 = vmatprep.subr.bf16.mxu0 0
    %1498 = vmatpush2.bf16.msra.mxu0 0
    %1499 = vmatprep.subr.bf16.mxu0 0
    %1500 = vmatpush2.bf16.msra.mxu0 0
    %1501 = vmatprep.subr.bf16.mxu0 0
    %1502 = vmatpush2.bf16.msra.mxu0 0
    %1503 = vmatprep.subr.bf16.mxu0 0
    %1504 = vmatpush2.bf16.msra.mxu0 0
    %1505 = vmatprep.subr.bf16.mxu0 0
    %1506 = vmatpush2.bf16.msra.mxu0 0
    %1507 = vmatprep.subr.bf16.mxu0 0
    %1508 = vmatpush2.bf16.msra.mxu0 0
    %1509 = vmatprep.mubr.bf16.mxu0 0
    %1510 = vmatmul.mubr.bf16.gmra.mxu0 %v1472
    %v1511 = vpop.f32.mrf.mxu0
    %v1512 = vadd.f32 %v1458, %v1511
    %v1513 = vpop.f32.mrf.mxu0
    %v1514 = vpop.f32.mrf.mxu0
    %v1515 = vadd.f32 %v1458, %v1514
    %v1516 = vpop.f32.mrf.mxu0
    %1517 = vmatprep.mubr.bf16.mxu0 0
    %1518 = vmatmul.mubr.bf16.gmra.mxu0 %v1475
    %v1519 = vpop.f32.mrf.mxu0
    %v1520 = vadd.f32 %v1458, %v1519
    %v1521 = vpop.f32.mrf.mxu0
    %v1522 = vpop.f32.mrf.mxu0
    %v1523 = vadd.f32 %v1458, %v1522
    %v1524 = vpop.f32.mrf.mxu0
    %1525 = vdwg.mxu0
    %v1526 = vmul.f32 %v1378, 0.35355338
    %v1527 = vpack.c.bf16 %v1526, %v1526
    %v1528 = vpack.c.bf16 %v1444, %v1441
    %v1529 = vpack.c.bf16 %v1515, %v1512
    %v1531 = vsel %vm307, %v1527, 0
    %v1534 = vsel %vm307, %v1528, 0
    %1536 = vmatprep.subr.bf16.mxu0 0
    %1537 = vmatpush1.bf16.xpose.msra.mxu0 0
    %1538 = vmatprep.subr.bf16.mxu0 0
    %1539 = vmatpush1.bf16.xpose.msra.mxu0 0
    %1540 = vmatprep.subr.bf16.mxu0 0
    %1541 = vmatpush1.bf16.xpose.msra.mxu0 0
    %1542 = vmatprep.subr.bf16.mxu0 0
    %1543 = vmatpush1.bf16.xpose.msra.mxu0 0
    %1544 = vmatprep.subr.bf16.mxu0 0
    %1545 = vmatpush1.bf16.xpose.msra.mxu0 0
    %1546 = vmatprep.subr.bf16.mxu0 0
    %1547 = vmatpush1.bf16.xpose.msra.mxu0 0
    %1548 = vmatprep.subr.bf16.mxu0 0
    %1549 = vmatpush1.bf16.xpose.msra.mxu0 0
    %1550 = vmatprep.subr.bf16.mxu0 0
    %1551 = vmatpush1.bf16.xpose.msra.mxu0 %v1534
    %1552 = vmatprep.subr.bf16.mxu0 0
    %1553 = vmatpush2.bf16.xpose.msra.mxu0 0
    %1554 = vmatprep.subr.bf16.mxu0 0
    %1555 = vmatpush2.bf16.xpose.msra.mxu0 0
    %1556 = vmatprep.subr.bf16.mxu0 0
    %1557 = vmatpush2.bf16.xpose.msra.mxu0 0
    %1558 = vmatprep.subr.bf16.mxu0 0
    %1559 = vmatpush2.bf16.xpose.msra.mxu0 0
    %1560 = vmatprep.subr.bf16.mxu0 0
    %1561 = vmatpush2.bf16.xpose.msra.mxu0 0
    %1562 = vmatprep.subr.bf16.mxu0 0
    %1563 = vmatpush2.bf16.xpose.msra.mxu0 0
    %1564 = vmatprep.subr.bf16.mxu0 0
    %1565 = vmatpush2.bf16.xpose.msra.mxu0 0
    %1566 = vmatprep.subr.bf16.mxu0 0
    %1567 = vmatpush2.bf16.xpose.msra.mxu0 0
    %1568 = vmatprep.mubr.bf16.mxu0 0
    %1569 = vmatmul.mubr.bf16.gmra.mxu0 %v1531
    %v1570 = vpop.f32.mrf.mxu0
    %v1571 = vadd.f32 0.0, %v1570
    %v1572 = vpop.f32.mrf.mxu0
    %v1573 = vpop.f32.mrf.mxu0
    %v1574 = vpop.f32.mrf.mxu0
    %1575 = vdwg.mxu0
    %v1576 = vsel %vm759, %v1571, -inf
    %1577 = vmax.xlane.f32.xlu0 %v1576
    %v1578 = vpop.xlane.xlu0 %1577
    %v1579 = vsub.f32 %v1571, %v1578
    %v1580 = vmul.f32 %v1579, 1.442695
    %v1581 = vpow.pop %v1580
    %v1582 = vsel %vm759, %v1581, 0.0
    %1583 = vadd.xlane.f32.xlu0 %v1582
    %v1584 = vpop.xlane.xlu0 %1583
    %v1585 = vrcp.pop %v1584
    %v1586 = vmul.f32 %v1581, %v1585
    %v1587 = vpack.c.bf16 %v1586, %v1586
    %v1589 = vsel %vm759, %v1587, 0
    %1591 = vmatprep.subr.bf16.mxu0 0
    %1592 = vmatpush1.bf16.msra.mxu0 0
    %1593 = vmatprep.subr.bf16.mxu0 0
    %1594 = vmatpush1.bf16.msra.mxu0 0
    %1595 = vmatprep.subr.bf16.mxu0 0
    %1596 = vmatpush1.bf16.msra.mxu0 0
    %1597 = vmatprep.subr.bf16.mxu0 0
    %1598 = vmatpush1.bf16.msra.mxu0 0
    %1599 = vmatprep.subr.bf16.mxu0 0
    %1600 = vmatpush1.bf16.msra.mxu0 0
    %1601 = vmatprep.subr.bf16.mxu0 0
    %1602 = vmatpush1.bf16.msra.mxu0 0
    %1603 = vmatprep.subr.bf16.mxu0 0
    %1604 = vmatpush1.bf16.msra.mxu0 0
    %1605 = vmatprep.subr.bf16.mxu0 0
    %1606 = vmatpush1.bf16.msra.mxu0 %v1529
    %1607 = vmatprep.subr.bf16.mxu0 0
    %1608 = vmatpush2.bf16.msra.mxu0 0
    %1609 = vmatprep.subr.bf16.mxu0 0
    %1610 = vmatpush2.bf16.msra.mxu0 0
    %1611 = vmatprep.subr.bf16.mxu0 0
    %1612 = vmatpush2.bf16.msra.mxu0 0
    %1613 = vmatprep.subr.bf16.mxu0 0
    %1614 = vmatpush2.bf16.msra.mxu0 0
    %1615 = vmatprep.subr.bf16.mxu0 0
    %1616 = vmatpush2.bf16.msra.mxu0 0
    %1617 = vmatprep.subr.bf16.mxu0 0
    %1618 = vmatpush2.bf16.msra.mxu0 0
    %1619 = vmatprep.subr.bf16.mxu0 0
    %1620 = vmatpush2.bf16.msra.mxu0 0
    %1621 = vmatprep.subr.bf16.mxu0 0
    %1622 = vmatpush2.bf16.msra.mxu0 0
    %1623 = vmatprep.mubr.bf16.mxu0 0
    %1624 = vmatmul.mubr.bf16.gmra.mxu0 %v1589
    %v1625 = vpop.f32.mrf.mxu0
    %v1626 = vadd.f32 0.0, %v1625
    %v1627 = vpop.f32.mrf.mxu0
    %v1628 = vpop.f32.mrf.mxu0
    %v1629 = vpop.f32.mrf.mxu0
    %1630 = vdwg.mxu0
    %1632 = vrot.lane.b32.xlu0 %v1527, 120
    %v1633 = vpop.permute.xlu0 %1632
    %1635 = vrot.lane.b32.xlu0 %v1528, 120
    %v1636 = vpop.permute.xlu0 %1635
    %v1638 = vsel %vm307, %v1633, 0
    %v1641 = vsel %vm307, %v1636, 0
    %1643 = vmatprep.subr.bf16.mxu0 0
    %1644 = vmatpush1.bf16.xpose.msra.mxu0 0
    %1645 = vmatprep.subr.bf16.mxu0 0
    %1646 = vmatpush1.bf16.xpose.msra.mxu0 0
    %1647 = vmatprep.subr.bf16.mxu0 0
    %1648 = vmatpush1.bf16.xpose.msra.mxu0 0
    %1649 = vmatprep.subr.bf16.mxu0 0
    %1650 = vmatpush1.bf16.xpose.msra.mxu0 0
    %1651 = vmatprep.subr.bf16.mxu0 0
    %1652 = vmatpush1.bf16.xpose.msra.mxu0 0
    %1653 = vmatprep.subr.bf16.mxu0 0
    %1654 = vmatpush1.bf16.xpose.msra.mxu0 0
    %1655 = vmatprep.subr.bf16.mxu0 0
    %1656 = vmatpush1.bf16.xpose.msra.mxu0 0
    %1657 = vmatprep.subr.bf16.mxu0 0
    %1658 = vmatpush1.bf16.xpose.msra.mxu0 %v1641
    %1659 = vmatprep.subr.bf16.mxu0 0
    %1660 = vmatpush2.bf16.xpose.msra.mxu0 0
    %1661 = vmatprep.subr.bf16.mxu0 0
    %1662 = vmatpush2.bf16.xpose.msra.mxu0 0
    %1663 = vmatprep.subr.bf16.mxu0 0
    %1664 = vmatpush2.bf16.xpose.msra.mxu0 0
    %1665 = vmatprep.subr.bf16.mxu0 0
    %1666 = vmatpush2.bf16.xpose.msra.mxu0 0
    %1667 = vmatprep.subr.bf16.mxu0 0
    %1668 = vmatpush2.bf16.xpose.msra.mxu0 0
    %1669 = vmatprep.subr.bf16.mxu0 0
    %1670 = vmatpush2.bf16.xpose.msra.mxu0 0
    %1671 = vmatprep.subr.bf16.mxu0 0
    %1672 = vmatpush2.bf16.xpose.msra.mxu0 0
    %1673 = vmatprep.subr.bf16.mxu0 0
    %1674 = vmatpush2.bf16.xpose.msra.mxu0 0
    %1675 = vmatprep.mubr.bf16.mxu0 0
    %1676 = vmatmul.mubr.bf16.gmra.mxu0 %v1638
    %v1677 = vpop.f32.mrf.mxu0
    %v1678 = vadd.f32 0.0, %v1677
    %v1679 = vpop.f32.mrf.mxu0
    %v1680 = vpop.f32.mrf.mxu0
    %v1681 = vpop.f32.mrf.mxu0
    %1682 = vdwg.mxu0
    %v1683 = vsel %vm759, %v1678, -inf
    %1684 = vmax.xlane.f32.xlu0 %v1683
    %v1685 = vpop.xlane.xlu0 %1684
    %v1686 = vsub.f32 %v1678, %v1685
    %v1687 = vmul.f32 %v1686, 1.442695
    %v1688 = vpow.pop %v1687
    %v1689 = vsel %vm759, %v1688, 0.0
    %1690 = vadd.xlane.f32.xlu0 %v1689
    %v1691 = vpop.xlane.xlu0 %1690
    %v1692 = vrcp.pop %v1691
    %v1693 = vmul.f32 %v1688, %v1692
    %v1694 = vpack.c.bf16 %v1693, %v1693
    %1696 = vrot.lane.b32.xlu0 %v1529, 120
    %v1697 = vpop.permute.xlu0 %1696
    %v1700 = vsel %vm759, %v1694, 0
    %1702 = vmatprep.subr.bf16.mxu0 0
    %1703 = vmatpush1.bf16.msra.mxu0 0
    %1704 = vmatprep.subr.bf16.mxu0 0
    %1705 = vmatpush1.bf16.msra.mxu0 0
    %1706 = vmatprep.subr.bf16.mxu0 0
    %1707 = vmatpush1.bf16.msra.mxu0 0
    %1708 = vmatprep.subr.bf16.mxu0 0
    %1709 = vmatpush1.bf16.msra.mxu0 0
    %1710 = vmatprep.subr.bf16.mxu0 0
    %1711 = vmatpush1.bf16.msra.mxu0 0
    %1712 = vmatprep.subr.bf16.mxu0 0
    %1713 = vmatpush1.bf16.msra.mxu0 0
    %1714 = vmatprep.subr.bf16.mxu0 0
    %1715 = vmatpush1.bf16.msra.mxu0 0
    %1716 = vmatprep.subr.bf16.mxu0 0
    %1717 = vmatpush1.bf16.msra.mxu0 %v1697
    %1718 = vmatprep.subr.bf16.mxu0 0
    %1719 = vmatpush2.bf16.msra.mxu0 0
    %1720 = vmatprep.subr.bf16.mxu0 0
    %1721 = vmatpush2.bf16.msra.mxu0 0
    %1722 = vmatprep.subr.bf16.mxu0 0
    %1723 = vmatpush2.bf16.msra.mxu0 0
    %1724 = vmatprep.subr.bf16.mxu0 0
    %1725 = vmatpush2.bf16.msra.mxu0 0
    %1726 = vmatprep.subr.bf16.mxu0 0
    %1727 = vmatpush2.bf16.msra.mxu0 0
    %1728 = vmatprep.subr.bf16.mxu0 0
    %1729 = vmatpush2.bf16.msra.mxu0 0
    %1730 = vmatprep.subr.bf16.mxu0 0
    %1731 = vmatpush2.bf16.msra.mxu0 0
    %1732 = vmatprep.subr.bf16.mxu0 0
    %1733 = vmatpush2.bf16.msra.mxu0 0
    %1734 = vmatprep.mubr.bf16.mxu0 0
    %1735 = vmatmul.mubr.bf16.gmra.mxu0 %v1700
    %v1736 = vpop.f32.mrf.mxu0
    %v1737 = vadd.f32 0.0, %v1736
    %v1738 = vpop.f32.mrf.mxu0
    %v1739 = vpop.f32.mrf.mxu0
    %v1740 = vpop.f32.mrf.mxu0
    %1741 = vdwg.mxu0
    %1742 = vrot.lane.b32.xlu0 %v1527, 112
    %v1743 = vpop.permute.xlu0 %1742
    %1744 = vrot.lane.b32.xlu0 %v1528, 112
    %v1745 = vpop.permute.xlu0 %1744
    %v1747 = vsel %vm307, %v1743, 0
    %v1750 = vsel %vm307, %v1745, 0
    %1752 = vmatprep.subr.bf16.mxu0 0
    %1753 = vmatpush1.bf16.xpose.msra.mxu0 0
    %1754 = vmatprep.subr.bf16.mxu0 0
    %1755 = vmatpush1.bf16.xpose.msra.mxu0 0
    %1756 = vmatprep.subr.bf16.mxu0 0
    %1757 = vmatpush1.bf16.xpose.msra.mxu0 0
    %1758 = vmatprep.subr.bf16.mxu0 0
    %1759 = vmatpush1.bf16.xpose.msra.mxu0 0
    %1760 = vmatprep.subr.bf16.mxu0 0
    %1761 = vmatpush1.bf16.xpose.msra.mxu0 0
    %1762 = vmatprep.subr.bf16.mxu0 0
    %1763 = vmatpush1.bf16.xpose.msra.mxu0 0
    %1764 = vmatprep.subr.bf16.mxu0 0
    %1765 = vmatpush1.bf16.xpose.msra.mxu0 0
    %1766 = vmatprep.subr.bf16.mxu0 0
    %1767 = vmatpush1.bf16.xpose.msra.mxu0 %v1750
    %1768 = vmatprep.subr.bf16.mxu0 0
    %1769 = vmatpush2.bf16.xpose.msra.mxu0 0
    %1770 = vmatprep.subr.bf16.mxu0 0
    %1771 = vmatpush2.bf16.xpose.msra.mxu0 0
    %1772 = vmatprep.subr.bf16.mxu0 0
    %1773 = vmatpush2.bf16.xpose.msra.mxu0 0
    %1774 = vmatprep.subr.bf16.mxu0 0
    %1775 = vmatpush2.bf16.xpose.msra.mxu0 0
    %1776 = vmatprep.subr.bf16.mxu0 0
    %1777 = vmatpush2.bf16.xpose.msra.mxu0 0
    %1778 = vmatprep.subr.bf16.mxu0 0
    %1779 = vmatpush2.bf16.xpose.msra.mxu0 0
    %1780 = vmatprep.subr.bf16.mxu0 0
    %1781 = vmatpush2.bf16.xpose.msra.mxu0 0
    %1782 = vmatprep.subr.bf16.mxu0 0
    %1783 = vmatpush2.bf16.xpose.msra.mxu0 0
    %1784 = vmatprep.mubr.bf16.mxu0 0
    %1785 = vmatmul.mubr.bf16.gmra.mxu0 %v1747
    %v1786 = vpop.f32.mrf.mxu0
    %v1787 = vadd.f32 0.0, %v1786
    %v1788 = vpop.f32.mrf.mxu0
    %v1789 = vpop.f32.mrf.mxu0
    %v1790 = vpop.f32.mrf.mxu0
    %1791 = vdwg.mxu0
    %v1792 = vsel %vm759, %v1787, -inf
    %1793 = vmax.xlane.f32.xlu0 %v1792
    %v1794 = vpop.xlane.xlu0 %1793
    %v1795 = vsub.f32 %v1787, %v1794
    %v1796 = vmul.f32 %v1795, 1.442695
    %v1797 = vpow.pop %v1796
    %v1798 = vsel %vm759, %v1797, 0.0
    %1799 = vadd.xlane.f32.xlu0 %v1798
    %v1800 = vpop.xlane.xlu0 %1799
    %v1801 = vrcp.pop %v1800
    %v1802 = vmul.f32 %v1797, %v1801
    %v1803 = vpack.c.bf16 %v1802, %v1802
    %1804 = vrot.lane.b32.xlu0 %v1529, 112
    %v1805 = vpop.permute.xlu0 %1804
    %v1808 = vsel %vm759, %v1803, 0
    %1810 = vmatprep.subr.bf16.mxu0 0
    %1811 = vmatpush1.bf16.msra.mxu0 0
    %1812 = vmatprep.subr.bf16.mxu0 0
    %1813 = vmatpush1.bf16.msra.mxu0 0
    %1814 = vmatprep.subr.bf16.mxu0 0
    %1815 = vmatpush1.bf16.msra.mxu0 0
    %1816 = vmatprep.subr.bf16.mxu0 0
    %1817 = vmatpush1.bf16.msra.mxu0 0
    %1818 = vmatprep.subr.bf16.mxu0 0
    %1819 = vmatpush1.bf16.msra.mxu0 0
    %1820 = vmatprep.subr.bf16.mxu0 0
    %1821 = vmatpush1.bf16.msra.mxu0 0
    %1822 = vmatprep.subr.bf16.mxu0 0
    %1823 = vmatpush1.bf16.msra.mxu0 0
    %1824 = vmatprep.subr.bf16.mxu0 0
    %1825 = vmatpush1.bf16.msra.mxu0 %v1805
    %1826 = vmatprep.subr.bf16.mxu0 0
    %1827 = vmatpush2.bf16.msra.mxu0 0
    %1828 = vmatprep.subr.bf16.mxu0 0
    %1829 = vmatpush2.bf16.msra.mxu0 0
    %1830 = vmatprep.subr.bf16.mxu0 0
    %1831 = vmatpush2.bf16.msra.mxu0 0
    %1832 = vmatprep.subr.bf16.mxu0 0
    %1833 = vmatpush2.bf16.msra.mxu0 0
    %1834 = vmatprep.subr.bf16.mxu0 0
    %1835 = vmatpush2.bf16.msra.mxu0 0
    %1836 = vmatprep.subr.bf16.mxu0 0
    %1837 = vmatpush2.bf16.msra.mxu0 0
    %1838 = vmatprep.subr.bf16.mxu0 0
    %1839 = vmatpush2.bf16.msra.mxu0 0
    %1840 = vmatprep.subr.bf16.mxu0 0
    %1841 = vmatpush2.bf16.msra.mxu0 0
    %1842 = vmatprep.mubr.bf16.mxu0 0
    %1843 = vmatmul.mubr.bf16.gmra.mxu0 %v1808
    %v1844 = vpop.f32.mrf.mxu0
    %v1845 = vadd.f32 0.0, %v1844
    %v1846 = vpop.f32.mrf.mxu0
    %v1847 = vpop.f32.mrf.mxu0
    %v1848 = vpop.f32.mrf.mxu0
    %1849 = vdwg.mxu0
    %1850 = vrot.lane.b32.xlu0 %v1527, 104
    %v1851 = vpop.permute.xlu0 %1850
    %1852 = vrot.lane.b32.xlu0 %v1528, 104
    %v1853 = vpop.permute.xlu0 %1852
    %v1855 = vsel %vm307, %v1851, 0
    %v1858 = vsel %vm307, %v1853, 0
    %1860 = vmatprep.subr.bf16.mxu0 0
    %1861 = vmatpush1.bf16.xpose.msra.mxu0 0
    %1862 = vmatprep.subr.bf16.mxu0 0
    %1863 = vmatpush1.bf16.xpose.msra.mxu0 0
    %1864 = vmatprep.subr.bf16.mxu0 0
    %1865 = vmatpush1.bf16.xpose.msra.mxu0 0
    %1866 = vmatprep.subr.bf16.mxu0 0
    %1867 = vmatpush1.bf16.xpose.msra.mxu0 0
    %1868 = vmatprep.subr.bf16.mxu0 0
    %1869 = vmatpush1.bf16.xpose.msra.mxu0 0
    %1870 = vmatprep.subr.bf16.mxu0 0
    %1871 = vmatpush1.bf16.xpose.msra.mxu0 0
    %1872 = vmatprep.subr.bf16.mxu0 0
    %1873 = vmatpush1.bf16.xpose.msra.mxu0 0
    %1874 = vmatprep.subr.bf16.mxu0 0
    %1875 = vmatpush1.bf16.xpose.msra.mxu0 %v1858
    %1876 = vmatprep.subr.bf16.mxu0 0
    %1877 = vmatpush2.bf16.xpose.msra.mxu0 0
    %1878 = vmatprep.subr.bf16.mxu0 0
    %1879 = vmatpush2.bf16.xpose.msra.mxu0 0
    %1880 = vmatprep.subr.bf16.mxu0 0
    %1881 = vmatpush2.bf16.xpose.msra.mxu0 0
    %1882 = vmatprep.subr.bf16.mxu0 0
    %1883 = vmatpush2.bf16.xpose.msra.mxu0 0
    %1884 = vmatprep.subr.bf16.mxu0 0
    %1885 = vmatpush2.bf16.xpose.msra.mxu0 0
    %1886 = vmatprep.subr.bf16.mxu0 0
    %1887 = vmatpush2.bf16.xpose.msra.mxu0 0
    %1888 = vmatprep.subr.bf16.mxu0 0
    %1889 = vmatpush2.bf16.xpose.msra.mxu0 0
    %1890 = vmatprep.subr.bf16.mxu0 0
    %1891 = vmatpush2.bf16.xpose.msra.mxu0 0
    %1892 = vmatprep.mubr.bf16.mxu0 0
    %1893 = vmatmul.mubr.bf16.gmra.mxu0 %v1855
    %v1894 = vpop.f32.mrf.mxu0
    %v1895 = vadd.f32 0.0, %v1894
    %v1896 = vpop.f32.mrf.mxu0
    %v1897 = vpop.f32.mrf.mxu0
    %v1898 = vpop.f32.mrf.mxu0
    %1899 = vdwg.mxu0
    %v1900 = vsel %vm759, %v1895, -inf
    %1901 = vmax.xlane.f32.xlu0 %v1900
    %v1902 = vpop.xlane.xlu0 %1901
    %v1903 = vsub.f32 %v1895, %v1902
    %v1904 = vmul.f32 %v1903, 1.442695
    %v1905 = vpow.pop %v1904
    %v1906 = vsel %vm759, %v1905, 0.0
    %1907 = vadd.xlane.f32.xlu0 %v1906
    %v1908 = vpop.xlane.xlu0 %1907
    %v1909 = vrcp.pop %v1908
    %v1910 = vmul.f32 %v1905, %v1909
    %v1911 = vpack.c.bf16 %v1910, %v1910
    %1912 = vrot.lane.b32.xlu0 %v1529, 104
    %v1913 = vpop.permute.xlu0 %1912
    %v1916 = vsel %vm759, %v1911, 0
    %1918 = vmatprep.subr.bf16.mxu0 0
    %1919 = vmatpush1.bf16.msra.mxu0 0
    %1920 = vmatprep.subr.bf16.mxu0 0
    %1921 = vmatpush1.bf16.msra.mxu0 0
    %1922 = vmatprep.subr.bf16.mxu0 0
    %1923 = vmatpush1.bf16.msra.mxu0 0
    %1924 = vmatprep.subr.bf16.mxu0 0
    %1925 = vmatpush1.bf16.msra.mxu0 0
    %1926 = vmatprep.subr.bf16.mxu0 0
    %1927 = vmatpush1.bf16.msra.mxu0 0
    %1928 = vmatprep.subr.bf16.mxu0 0
    %1929 = vmatpush1.bf16.msra.mxu0 0
    %1930 = vmatprep.subr.bf16.mxu0 0
    %1931 = vmatpush1.bf16.msra.mxu0 0
    %1932 = vmatprep.subr.bf16.mxu0 0
    %1933 = vmatpush1.bf16.msra.mxu0 %v1913
    %1934 = vmatprep.subr.bf16.mxu0 0
    %1935 = vmatpush2.bf16.msra.mxu0 0
    %1936 = vmatprep.subr.bf16.mxu0 0
    %1937 = vmatpush2.bf16.msra.mxu0 0
    %1938 = vmatprep.subr.bf16.mxu0 0
    %1939 = vmatpush2.bf16.msra.mxu0 0
    %1940 = vmatprep.subr.bf16.mxu0 0
    %1941 = vmatpush2.bf16.msra.mxu0 0
    %1942 = vmatprep.subr.bf16.mxu0 0
    %1943 = vmatpush2.bf16.msra.mxu0 0
    %1944 = vmatprep.subr.bf16.mxu0 0
    %1945 = vmatpush2.bf16.msra.mxu0 0
    %1946 = vmatprep.subr.bf16.mxu0 0
    %1947 = vmatpush2.bf16.msra.mxu0 0
    %1948 = vmatprep.subr.bf16.mxu0 0
    %1949 = vmatpush2.bf16.msra.mxu0 0
    %1950 = vmatprep.mubr.bf16.mxu0 0
    %1951 = vmatmul.mubr.bf16.gmra.mxu0 %v1916
    %v1952 = vpop.f32.mrf.mxu0
    %v1953 = vadd.f32 0.0, %v1952
    %v1954 = vpop.f32.mrf.mxu0
    %v1955 = vpop.f32.mrf.mxu0
    %v1956 = vpop.f32.mrf.mxu0
    %1957 = vdwg.mxu0
    %1959 = vrot.lane.b32.xlu0 %v1737, 8
    %v1960 = vpop.permute.xlu0 %1959
    %1963 = vrot.lane.b32.xlu0 %v1845, 16
    %v1964 = vpop.permute.xlu0 %1963
    %1967 = vrot.lane.b32.xlu0 %v1953, 24
    %v1968 = vpop.permute.xlu0 %1967
    %v1970 = vsel %vm307, %v1626, %v1960
    %v1971 = vsel %vm759, %v1970, %v1964
    %v1972 = vsel %vm761, %v1971, %v1968
    %v1973 = vmul.f32 %v1381, 0.35355338
    %v1974 = vpack.c.bf16 %v1973, %v1973
    %v1975 = vpack.c.bf16 %v1452, %v1449
    %v1976 = vpack.c.bf16 %v1523, %v1520
    %v1978 = vsel %vm307, %v1974, 0
    %v1981 = vsel %vm307, %v1975, 0
    %1983 = vmatprep.subr.bf16.mxu0 0
    %1984 = vmatpush1.bf16.xpose.msra.mxu0 0
    %1985 = vmatprep.subr.bf16.mxu0 0
    %1986 = vmatpush1.bf16.xpose.msra.mxu0 0
    %1987 = vmatprep.subr.bf16.mxu0 0
    %1988 = vmatpush1.bf16.xpose.msra.mxu0 0
    %1989 = vmatprep.subr.bf16.mxu0 0
    %1990 = vmatpush1.bf16.xpose.msra.mxu0 0
    %1991 = vmatprep.subr.bf16.mxu0 0
    %1992 = vmatpush1.bf16.xpose.msra.mxu0 0
    %1993 = vmatprep.subr.bf16.mxu0 0
    %1994 = vmatpush1.bf16.xpose.msra.mxu0 0
    %1995 = vmatprep.subr.bf16.mxu0 0
    %1996 = vmatpush1.bf16.xpose.msra.mxu0 0
    %1997 = vmatprep.subr.bf16.mxu0 0
    %1998 = vmatpush1.bf16.xpose.msra.mxu0 %v1981
    %1999 = vmatprep.subr.bf16.mxu0 0
    %2000 = vmatpush2.bf16.xpose.msra.mxu0 0
    %2001 = vmatprep.subr.bf16.mxu0 0
    %2002 = vmatpush2.bf16.xpose.msra.mxu0 0
    %2003 = vmatprep.subr.bf16.mxu0 0
    %2004 = vmatpush2.bf16.xpose.msra.mxu0 0
    %2005 = vmatprep.subr.bf16.mxu0 0
    %2006 = vmatpush2.bf16.xpose.msra.mxu0 0
    %2007 = vmatprep.subr.bf16.mxu0 0
    %2008 = vmatpush2.bf16.xpose.msra.mxu0 0
    %2009 = vmatprep.subr.bf16.mxu0 0
    %2010 = vmatpush2.bf16.xpose.msra.mxu0 0
    %2011 = vmatprep.subr.bf16.mxu0 0
    %2012 = vmatpush2.bf16.xpose.msra.mxu0 0
    %2013 = vmatprep.subr.bf16.mxu0 0
    %2014 = vmatpush2.bf16.xpose.msra.mxu0 0
    %2015 = vmatprep.mubr.bf16.mxu0 0
    %2016 = vmatmul.mubr.bf16.gmra.mxu0 %v1978
    %v2017 = vpop.f32.mrf.mxu0
    %v2018 = vadd.f32 0.0, %v2017
    %v2019 = vpop.f32.mrf.mxu0
    %v2020 = vpop.f32.mrf.mxu0
    %v2021 = vpop.f32.mrf.mxu0
    %2022 = vdwg.mxu0
    %v2023 = vsel %vm759, %v2018, -inf
    %2024 = vmax.xlane.f32.xlu0 %v2023
    %v2025 = vpop.xlane.xlu0 %2024
    %v2026 = vsub.f32 %v2018, %v2025
    %v2027 = vmul.f32 %v2026, 1.442695
    %v2028 = vpow.pop %v2027
    %v2029 = vsel %vm759, %v2028, 0.0
    %2030 = vadd.xlane.f32.xlu0 %v2029
    %v2031 = vpop.xlane.xlu0 %2030
    %v2032 = vrcp.pop %v2031
    %v2033 = vmul.f32 %v2028, %v2032
    %v2034 = vpack.c.bf16 %v2033, %v2033
    %v2036 = vsel %vm759, %v2034, 0
    %2038 = vmatprep.subr.bf16.mxu0 0
    %2039 = vmatpush1.bf16.msra.mxu0 0
    %2040 = vmatprep.subr.bf16.mxu0 0
    %2041 = vmatpush1.bf16.msra.mxu0 0
    %2042 = vmatprep.subr.bf16.mxu0 0
    %2043 = vmatpush1.bf16.msra.mxu0 0
    %2044 = vmatprep.subr.bf16.mxu0 0
    %2045 = vmatpush1.bf16.msra.mxu0 0
    %2046 = vmatprep.subr.bf16.mxu0 0
    %2047 = vmatpush1.bf16.msra.mxu0 0
    %2048 = vmatprep.subr.bf16.mxu0 0
    %2049 = vmatpush1.bf16.msra.mxu0 0
    %2050 = vmatprep.subr.bf16.mxu0 0
    %2051 = vmatpush1.bf16.msra.mxu0 0
    %2052 = vmatprep.subr.bf16.mxu0 0
    %2053 = vmatpush1.bf16.msra.mxu0 %v1976
    %2054 = vmatprep.subr.bf16.mxu0 0
    %2055 = vmatpush2.bf16.msra.mxu0 0
    %2056 = vmatprep.subr.bf16.mxu0 0
    %2057 = vmatpush2.bf16.msra.mxu0 0
    %2058 = vmatprep.subr.bf16.mxu0 0
    %2059 = vmatpush2.bf16.msra.mxu0 0
    %2060 = vmatprep.subr.bf16.mxu0 0
    %2061 = vmatpush2.bf16.msra.mxu0 0
    %2062 = vmatprep.subr.bf16.mxu0 0
    %2063 = vmatpush2.bf16.msra.mxu0 0
    %2064 = vmatprep.subr.bf16.mxu0 0
    %2065 = vmatpush2.bf16.msra.mxu0 0
    %2066 = vmatprep.subr.bf16.mxu0 0
    %2067 = vmatpush2.bf16.msra.mxu0 0
    %2068 = vmatprep.subr.bf16.mxu0 0
    %2069 = vmatpush2.bf16.msra.mxu0 0
    %2070 = vmatprep.mubr.bf16.mxu0 0
    %2071 = vmatmul.mubr.bf16.gmra.mxu0 %v2036
    %v2072 = vpop.f32.mrf.mxu0
    %v2073 = vadd.f32 0.0, %v2072
    %v2074 = vpop.f32.mrf.mxu0
    %v2075 = vpop.f32.mrf.mxu0
    %v2076 = vpop.f32.mrf.mxu0
    %2077 = vdwg.mxu0
    %2079 = vrot.lane.b32.xlu0 %v1974, 120
    %v2080 = vpop.permute.xlu0 %2079
    %2082 = vrot.lane.b32.xlu0 %v1975, 120
    %v2083 = vpop.permute.xlu0 %2082
    %v2085 = vsel %vm307, %v2080, 0
    %v2088 = vsel %vm307, %v2083, 0
    %2090 = vmatprep.subr.bf16.mxu0 0
    %2091 = vmatpush1.bf16.xpose.msra.mxu0 0
    %2092 = vmatprep.subr.bf16.mxu0 0
    %2093 = vmatpush1.bf16.xpose.msra.mxu0 0
    %2094 = vmatprep.subr.bf16.mxu0 0
    %2095 = vmatpush1.bf16.xpose.msra.mxu0 0
    %2096 = vmatprep.subr.bf16.mxu0 0
    %2097 = vmatpush1.bf16.xpose.msra.mxu0 0
    %2098 = vmatprep.subr.bf16.mxu0 0
    %2099 = vmatpush1.bf16.xpose.msra.mxu0 0
    %2100 = vmatprep.subr.bf16.mxu0 0
    %2101 = vmatpush1.bf16.xpose.msra.mxu0 0
    %2102 = vmatprep.subr.bf16.mxu0 0
    %2103 = vmatpush1.bf16.xpose.msra.mxu0 0
    %2104 = vmatprep.subr.bf16.mxu0 0
    %2105 = vmatpush1.bf16.xpose.msra.mxu0 %v2088
    %2106 = vmatprep.subr.bf16.mxu0 0
    %2107 = vmatpush2.bf16.xpose.msra.mxu0 0
    %2108 = vmatprep.subr.bf16.mxu0 0
    %2109 = vmatpush2.bf16.xpose.msra.mxu0 0
    %2110 = vmatprep.subr.bf16.mxu0 0
    %2111 = vmatpush2.bf16.xpose.msra.mxu0 0
    %2112 = vmatprep.subr.bf16.mxu0 0
    %2113 = vmatpush2.bf16.xpose.msra.mxu0 0
    %2114 = vmatprep.subr.bf16.mxu0 0
    %2115 = vmatpush2.bf16.xpose.msra.mxu0 0
    %2116 = vmatprep.subr.bf16.mxu0 0
    %2117 = vmatpush2.bf16.xpose.msra.mxu0 0
    %2118 = vmatprep.subr.bf16.mxu0 0
    %2119 = vmatpush2.bf16.xpose.msra.mxu0 0
    %2120 = vmatprep.subr.bf16.mxu0 0
    %2121 = vmatpush2.bf16.xpose.msra.mxu0 0
    %2122 = vmatprep.mubr.bf16.mxu0 0
    %2123 = vmatmul.mubr.bf16.gmra.mxu0 %v2085
    %v2124 = vpop.f32.mrf.mxu0
    %v2125 = vadd.f32 0.0, %v2124
    %v2126 = vpop.f32.mrf.mxu0
    %v2127 = vpop.f32.mrf.mxu0
    %v2128 = vpop.f32.mrf.mxu0
    %2129 = vdwg.mxu0
    %v2130 = vsel %vm759, %v2125, -inf
    %2131 = vmax.xlane.f32.xlu0 %v2130
    %v2132 = vpop.xlane.xlu0 %2131
    %v2133 = vsub.f32 %v2125, %v2132
    %v2134 = vmul.f32 %v2133, 1.442695
    %v2135 = vpow.pop %v2134
    %v2136 = vsel %vm759, %v2135, 0.0
    %2137 = vadd.xlane.f32.xlu0 %v2136
    %v2138 = vpop.xlane.xlu0 %2137
    %v2139 = vrcp.pop %v2138
    %v2140 = vmul.f32 %v2135, %v2139
    %v2141 = vpack.c.bf16 %v2140, %v2140
    %2143 = vrot.lane.b32.xlu0 %v1976, 120
    %v2144 = vpop.permute.xlu0 %2143
    %v2147 = vsel %vm759, %v2141, 0
    %2149 = vmatprep.subr.bf16.mxu0 0
    %2150 = vmatpush1.bf16.msra.mxu0 0
    %2151 = vmatprep.subr.bf16.mxu0 0
    %2152 = vmatpush1.bf16.msra.mxu0 0
    %2153 = vmatprep.subr.bf16.mxu0 0
    %2154 = vmatpush1.bf16.msra.mxu0 0
    %2155 = vmatprep.subr.bf16.mxu0 0
    %2156 = vmatpush1.bf16.msra.mxu0 0
    %2157 = vmatprep.subr.bf16.mxu0 0
    %2158 = vmatpush1.bf16.msra.mxu0 0
    %2159 = vmatprep.subr.bf16.mxu0 0
    %2160 = vmatpush1.bf16.msra.mxu0 0
    %2161 = vmatprep.subr.bf16.mxu0 0
    %2162 = vmatpush1.bf16.msra.mxu0 0
    %2163 = vmatprep.subr.bf16.mxu0 0
    %2164 = vmatpush1.bf16.msra.mxu0 %v2144
    %2165 = vmatprep.subr.bf16.mxu0 0
    %2166 = vmatpush2.bf16.msra.mxu0 0
    %2167 = vmatprep.subr.bf16.mxu0 0
    %2168 = vmatpush2.bf16.msra.mxu0 0
    %2169 = vmatprep.subr.bf16.mxu0 0
    %2170 = vmatpush2.bf16.msra.mxu0 0
    %2171 = vmatprep.subr.bf16.mxu0 0
    %2172 = vmatpush2.bf16.msra.mxu0 0
    %2173 = vmatprep.subr.bf16.mxu0 0
    %2174 = vmatpush2.bf16.msra.mxu0 0
    %2175 = vmatprep.subr.bf16.mxu0 0
    %2176 = vmatpush2.bf16.msra.mxu0 0
    %2177 = vmatprep.subr.bf16.mxu0 0
    %2178 = vmatpush2.bf16.msra.mxu0 0
    %2179 = vmatprep.subr.bf16.mxu0 0
    %2180 = vmatpush2.bf16.msra.mxu0 0
    %2181 = vmatprep.mubr.bf16.mxu0 0
    %2182 = vmatmul.mubr.bf16.gmra.mxu0 %v2147
    %v2183 = vpop.f32.mrf.mxu0
    %v2184 = vadd.f32 0.0, %v2183
    %v2185 = vpop.f32.mrf.mxu0
    %v2186 = vpop.f32.mrf.mxu0
    %v2187 = vpop.f32.mrf.mxu0
    %2188 = vdwg.mxu0
    %2189 = vrot.lane.b32.xlu0 %v1974, 112
    %v2190 = vpop.permute.xlu0 %2189
    %2191 = vrot.lane.b32.xlu0 %v1975, 112
    %v2192 = vpop.permute.xlu0 %2191
    %v2194 = vsel %vm307, %v2190, 0
    %v2197 = vsel %vm307, %v2192, 0
    %2199 = vmatprep.subr.bf16.mxu0 0
    %2200 = vmatpush1.bf16.xpose.msra.mxu0 0
    %2201 = vmatprep.subr.bf16.mxu0 0
    %2202 = vmatpush1.bf16.xpose.msra.mxu0 0
    %2203 = vmatprep.subr.bf16.mxu0 0
    %2204 = vmatpush1.bf16.xpose.msra.mxu0 0
    %2205 = vmatprep.subr.bf16.mxu0 0
    %2206 = vmatpush1.bf16.xpose.msra.mxu0 0
    %2207 = vmatprep.subr.bf16.mxu0 0
    %2208 = vmatpush1.bf16.xpose.msra.mxu0 0
    %2209 = vmatprep.subr.bf16.mxu0 0
    %2210 = vmatpush1.bf16.xpose.msra.mxu0 0
    %2211 = vmatprep.subr.bf16.mxu0 0
    %2212 = vmatpush1.bf16.xpose.msra.mxu0 0
    %2213 = vmatprep.subr.bf16.mxu0 0
    %2214 = vmatpush1.bf16.xpose.msra.mxu0 %v2197
    %2215 = vmatprep.subr.bf16.mxu0 0
    %2216 = vmatpush2.bf16.xpose.msra.mxu0 0
    %2217 = vmatprep.subr.bf16.mxu0 0
    %2218 = vmatpush2.bf16.xpose.msra.mxu0 0
    %2219 = vmatprep.subr.bf16.mxu0 0
    %2220 = vmatpush2.bf16.xpose.msra.mxu0 0
    %2221 = vmatprep.subr.bf16.mxu0 0
    %2222 = vmatpush2.bf16.xpose.msra.mxu0 0
    %2223 = vmatprep.subr.bf16.mxu0 0
    %2224 = vmatpush2.bf16.xpose.msra.mxu0 0
    %2225 = vmatprep.subr.bf16.mxu0 0
    %2226 = vmatpush2.bf16.xpose.msra.mxu0 0
    %2227 = vmatprep.subr.bf16.mxu0 0
    %2228 = vmatpush2.bf16.xpose.msra.mxu0 0
    %2229 = vmatprep.subr.bf16.mxu0 0
    %2230 = vmatpush2.bf16.xpose.msra.mxu0 0
    %2231 = vmatprep.mubr.bf16.mxu0 0
    %2232 = vmatmul.mubr.bf16.gmra.mxu0 %v2194
    %v2233 = vpop.f32.mrf.mxu0
    %v2234 = vadd.f32 0.0, %v2233
    %v2235 = vpop.f32.mrf.mxu0
    %v2236 = vpop.f32.mrf.mxu0
    %v2237 = vpop.f32.mrf.mxu0
    %2238 = vdwg.mxu0
    %v2239 = vsel %vm759, %v2234, -inf
    %2240 = vmax.xlane.f32.xlu0 %v2239
    %v2241 = vpop.xlane.xlu0 %2240
    %v2242 = vsub.f32 %v2234, %v2241
    %v2243 = vmul.f32 %v2242, 1.442695
    %v2244 = vpow.pop %v2243
    %v2245 = vsel %vm759, %v2244, 0.0
    %2246 = vadd.xlane.f32.xlu0 %v2245
    %v2247 = vpop.xlane.xlu0 %2246
    %v2248 = vrcp.pop %v2247
    %v2249 = vmul.f32 %v2244, %v2248
    %v2250 = vpack.c.bf16 %v2249, %v2249
    %2251 = vrot.lane.b32.xlu0 %v1976, 112
    %v2252 = vpop.permute.xlu0 %2251
    %v2255 = vsel %vm759, %v2250, 0
    %2257 = vmatprep.subr.bf16.mxu0 0
    %2258 = vmatpush1.bf16.msra.mxu0 0
    %2259 = vmatprep.subr.bf16.mxu0 0
    %2260 = vmatpush1.bf16.msra.mxu0 0
    %2261 = vmatprep.subr.bf16.mxu0 0
    %2262 = vmatpush1.bf16.msra.mxu0 0
    %2263 = vmatprep.subr.bf16.mxu0 0
    %2264 = vmatpush1.bf16.msra.mxu0 0
    %2265 = vmatprep.subr.bf16.mxu0 0
    %2266 = vmatpush1.bf16.msra.mxu0 0
    %2267 = vmatprep.subr.bf16.mxu0 0
    %2268 = vmatpush1.bf16.msra.mxu0 0
    %2269 = vmatprep.subr.bf16.mxu0 0
    %2270 = vmatpush1.bf16.msra.mxu0 0
    %2271 = vmatprep.subr.bf16.mxu0 0
    %2272 = vmatpush1.bf16.msra.mxu0 %v2252
    %2273 = vmatprep.subr.bf16.mxu0 0
    %2274 = vmatpush2.bf16.msra.mxu0 0
    %2275 = vmatprep.subr.bf16.mxu0 0
    %2276 = vmatpush2.bf16.msra.mxu0 0
    %2277 = vmatprep.subr.bf16.mxu0 0
    %2278 = vmatpush2.bf16.msra.mxu0 0
    %2279 = vmatprep.subr.bf16.mxu0 0
    %2280 = vmatpush2.bf16.msra.mxu0 0
    %2281 = vmatprep.subr.bf16.mxu0 0
    %2282 = vmatpush2.bf16.msra.mxu0 0
    %2283 = vmatprep.subr.bf16.mxu0 0
    %2284 = vmatpush2.bf16.msra.mxu0 0
    %2285 = vmatprep.subr.bf16.mxu0 0
    %2286 = vmatpush2.bf16.msra.mxu0 0
    %2287 = vmatprep.subr.bf16.mxu0 0
    %2288 = vmatpush2.bf16.msra.mxu0 0
    %2289 = vmatprep.mubr.bf16.mxu0 0
    %2290 = vmatmul.mubr.bf16.gmra.mxu0 %v2255
    %v2291 = vpop.f32.mrf.mxu0
    %v2292 = vadd.f32 0.0, %v2291
    %v2293 = vpop.f32.mrf.mxu0
    %v2294 = vpop.f32.mrf.mxu0
    %v2295 = vpop.f32.mrf.mxu0
    %2296 = vdwg.mxu0
    %2297 = vrot.lane.b32.xlu0 %v1974, 104
    %v2298 = vpop.permute.xlu0 %2297
    %2299 = vrot.lane.b32.xlu0 %v1975, 104
    %v2300 = vpop.permute.xlu0 %2299
    %v2302 = vsel %vm307, %v2298, 0
    %v2305 = vsel %vm307, %v2300, 0
    %2307 = vmatprep.subr.bf16.mxu0 0
    %2308 = vmatpush1.bf16.xpose.msra.mxu0 0
    %2309 = vmatprep.subr.bf16.mxu0 0
    %2310 = vmatpush1.bf16.xpose.msra.mxu0 0
    %2311 = vmatprep.subr.bf16.mxu0 0
    %2312 = vmatpush1.bf16.xpose.msra.mxu0 0
    %2313 = vmatprep.subr.bf16.mxu0 0
    %2314 = vmatpush1.bf16.xpose.msra.mxu0 0
    %2315 = vmatprep.subr.bf16.mxu0 0
    %2316 = vmatpush1.bf16.xpose.msra.mxu0 0
    %2317 = vmatprep.subr.bf16.mxu0 0
    %2318 = vmatpush1.bf16.xpose.msra.mxu0 0
    %2319 = vmatprep.subr.bf16.mxu0 0
    %2320 = vmatpush1.bf16.xpose.msra.mxu0 0
    %2321 = vmatprep.subr.bf16.mxu0 0
    %2322 = vmatpush1.bf16.xpose.msra.mxu0 %v2305
    %2323 = vmatprep.subr.bf16.mxu0 0
    %2324 = vmatpush2.bf16.xpose.msra.mxu0 0
    %2325 = vmatprep.subr.bf16.mxu0 0
    %2326 = vmatpush2.bf16.xpose.msra.mxu0 0
    %2327 = vmatprep.subr.bf16.mxu0 0
    %2328 = vmatpush2.bf16.xpose.msra.mxu0 0
    %2329 = vmatprep.subr.bf16.mxu0 0
    %2330 = vmatpush2.bf16.xpose.msra.mxu0 0
    %2331 = vmatprep.subr.bf16.mxu0 0
    %2332 = vmatpush2.bf16.xpose.msra.mxu0 0
    %2333 = vmatprep.subr.bf16.mxu0 0
    %2334 = vmatpush2.bf16.xpose.msra.mxu0 0
    %2335 = vmatprep.subr.bf16.mxu0 0
    %2336 = vmatpush2.bf16.xpose.msra.mxu0 0
    %2337 = vmatprep.subr.bf16.mxu0 0
    %2338 = vmatpush2.bf16.xpose.msra.mxu0 0
    %2339 = vmatprep.mubr.bf16.mxu0 0
    %2340 = vmatmul.mubr.bf16.gmra.mxu0 %v2302
    %v2341 = vpop.f32.mrf.mxu0
    %v2342 = vadd.f32 0.0, %v2341
    %v2343 = vpop.f32.mrf.mxu0
    %v2344 = vpop.f32.mrf.mxu0
    %v2345 = vpop.f32.mrf.mxu0
    %2346 = vdwg.mxu0
    %v2347 = vsel %vm759, %v2342, -inf
    %2348 = vmax.xlane.f32.xlu0 %v2347
    %v2349 = vpop.xlane.xlu0 %2348
    %v2350 = vsub.f32 %v2342, %v2349
    %v2351 = vmul.f32 %v2350, 1.442695
    %v2352 = vpow.pop %v2351
    %v2353 = vsel %vm759, %v2352, 0.0
    %2354 = vadd.xlane.f32.xlu0 %v2353
    %v2355 = vpop.xlane.xlu0 %2354
    %v2356 = vrcp.pop %v2355
    %v2357 = vmul.f32 %v2352, %v2356
    %v2358 = vpack.c.bf16 %v2357, %v2357
    %2359 = vrot.lane.b32.xlu0 %v1976, 104
    %v2360 = vpop.permute.xlu0 %2359
    %v2363 = vsel %vm759, %v2358, 0
    %2365 = vmatprep.subr.bf16.mxu0 0
    %2366 = vmatpush1.bf16.msra.mxu0 0
    %2367 = vmatprep.subr.bf16.mxu0 0
    %2368 = vmatpush1.bf16.msra.mxu0 0
    %2369 = vmatprep.subr.bf16.mxu0 0
    %2370 = vmatpush1.bf16.msra.mxu0 0
    %2371 = vmatprep.subr.bf16.mxu0 0
    %2372 = vmatpush1.bf16.msra.mxu0 0
    %2373 = vmatprep.subr.bf16.mxu0 0
    %2374 = vmatpush1.bf16.msra.mxu0 0
    %2375 = vmatprep.subr.bf16.mxu0 0
    %2376 = vmatpush1.bf16.msra.mxu0 0
    %2377 = vmatprep.subr.bf16.mxu0 0
    %2378 = vmatpush1.bf16.msra.mxu0 0
    %2379 = vmatprep.subr.bf16.mxu0 0
    %2380 = vmatpush1.bf16.msra.mxu0 %v2360
    %2381 = vmatprep.subr.bf16.mxu0 0
    %2382 = vmatpush2.bf16.msra.mxu0 0
    %2383 = vmatprep.subr.bf16.mxu0 0
    %2384 = vmatpush2.bf16.msra.mxu0 0
    %2385 = vmatprep.subr.bf16.mxu0 0
    %2386 = vmatpush2.bf16.msra.mxu0 0
    %2387 = vmatprep.subr.bf16.mxu0 0
    %2388 = vmatpush2.bf16.msra.mxu0 0
    %2389 = vmatprep.subr.bf16.mxu0 0
    %2390 = vmatpush2.bf16.msra.mxu0 0
    %2391 = vmatprep.subr.bf16.mxu0 0
    %2392 = vmatpush2.bf16.msra.mxu0 0
    %2393 = vmatprep.subr.bf16.mxu0 0
    %2394 = vmatpush2.bf16.msra.mxu0 0
    %2395 = vmatprep.subr.bf16.mxu0 0
    %2396 = vmatpush2.bf16.msra.mxu0 0
    %2397 = vmatprep.mubr.bf16.mxu0 0
    %2398 = vmatmul.mubr.bf16.gmra.mxu0 %v2363
    %v2399 = vpop.f32.mrf.mxu0
    %v2400 = vadd.f32 0.0, %v2399
    %v2401 = vpop.f32.mrf.mxu0
    %v2402 = vpop.f32.mrf.mxu0
    %v2403 = vpop.f32.mrf.mxu0
    %2404 = vdwg.mxu0
    %2406 = vrot.lane.b32.xlu0 %v2184, 8
    %v2407 = vpop.permute.xlu0 %2406
    %2410 = vrot.lane.b32.xlu0 %v2292, 16
    %v2411 = vpop.permute.xlu0 %2410
    %2414 = vrot.lane.b32.xlu0 %v2400, 24
    %v2415 = vpop.permute.xlu0 %2414
    %v2417 = vsel %vm307, %v2073, %v2407
    %v2418 = vsel %vm759, %v2417, %v2411
    %v2419 = vsel %vm761, %v2418, %v2415
    %v2420 = vpack.c.bf16 %v2419, %v1972
    %v2421 = vlaneseq
    %v2422 = vshrl.u32 %v2421, 7
    %v2423 = vsub.s32 7, %v2422
    %v2424 = vrot.slane %v77, %v2423
    %v2429 = vunpack.c.l.b16 %v117
    %v2430 = vunpack.c.l.b16 %v118
    %v2431 = vunpack.c.l.b16 %v119
    %v2432 = vunpack.c.l.b16 %v120
    %v2433 = vpack.c.b16 %v2430, %v2429
    %v2434 = vpack.c.b16 %v2432, %v2431
    %v2438 = vsel %vm141, %v2420, 0
    %2440 = vmatprep.subr.bf16.mxu0 0
    %2441 = vmatpush1.bf16.msra.mxu0 0
    %2442 = vmatprep.subr.bf16.mxu0 0
    %2443 = vmatpush1.bf16.msra.mxu0 0
    %2444 = vmatprep.subr.bf16.mxu0 0
    %2445 = vmatpush1.bf16.msra.mxu0 0
    %2446 = vmatprep.subr.bf16.mxu0 0
    %2447 = vmatpush1.bf16.msra.mxu0 0
    %2448 = vmatprep.subr.bf16.mxu0 0
    %2449 = vmatpush1.bf16.msra.mxu0 0
    %2450 = vmatprep.subr.bf16.mxu0 0
    %2451 = vmatpush1.bf16.msra.mxu0 0
    %2452 = vmatprep.subr.bf16.mxu0 0
    %2453 = vmatpush1.bf16.msra.mxu0 %v2434
    %2454 = vmatprep.subr.bf16.mxu0 0
    %2455 = vmatpush1.bf16.msra.mxu0 %v2433
    %2456 = vmatprep.subr.bf16.mxu0 0
    %2457 = vmatpush2.bf16.msra.mxu0 0
    %2458 = vmatprep.subr.bf16.mxu0 0
    %2459 = vmatpush2.bf16.msra.mxu0 0
    %2460 = vmatprep.subr.bf16.mxu0 0
    %2461 = vmatpush2.bf16.msra.mxu0 0
    %2462 = vmatprep.subr.bf16.mxu0 0
    %2463 = vmatpush2.bf16.msra.mxu0 0
    %2464 = vmatprep.subr.bf16.mxu0 0
    %2465 = vmatpush2.bf16.msra.mxu0 0
    %2466 = vmatprep.subr.bf16.mxu0 0
    %2467 = vmatpush2.bf16.msra.mxu0 0
    %2468 = vmatprep.subr.bf16.mxu0 0
    %2469 = vmatpush2.bf16.msra.mxu0 0
    %2470 = vmatprep.subr.bf16.mxu0 0
    %2471 = vmatpush2.bf16.msra.mxu0 0
    %2472 = vmatprep.mubr.bf16.mxu0 0
    %2473 = vmatmul.mubr.bf16.gmra.mxu0 %v2438
    %v2474 = vpop.f32.mrf.mxu0
    %v2475 = vadd.f32 %v2424, %v2474
    %v2476 = vpop.f32.mrf.mxu0
    %v2477 = vpop.f32.mrf.mxu0
    %v2478 = vadd.f32 %v2424, %v2477
    %v2479 = vpop.f32.mrf.mxu0
    %2480 = vdwg.mxu0
    %v2481 = vadd.f32 %v2475, %v1319
    %v2482 = vadd.f32 %v2478, %v1320
    %v2483 = vsel %vm141, %v2481, 0.0
    %2484 = vadd.xlane.f32.xlu0 %v2483
    %v2485 = vpop.xlane.xlu0 %2484
    %v2486 = vsel %vm141, %v2482, 0.0
    %2487 = vadd.xlane.f32.xlu0 %v2486
    %v2488 = vpop.xlane.xlu0 %2487
    %v2489 = vmul.f32 %v2485, %v1288
    %v2490 = vmul.f32 %v2488, %v1288
    %v2491 = vsub.f32 %v2481, %v2489
    %v2492 = vsub.f32 %v2482, %v2490
    %v2493 = vmul.f32 %v2491, %v2491
    %v2494 = vmul.f32 %v2492, %v2492
    %v2495 = vsel %vm141, %v2493, 0.0
    %2496 = vadd.xlane.f32.xlu0 %v2495
    %v2497 = vpop.xlane.xlu0 %2496
    %v2498 = vsel %vm141, %v2494, 0.0
    %2499 = vadd.xlane.f32.xlu0 %v2498
    %v2500 = vpop.xlane.xlu0 %2499
    %v2501 = vmul.f32 %v2497, %v1288
    %v2502 = vmul.f32 %v2500, %v1288
    %v2503 = vadd.f32 %v2501, 1e-05
    %v2504 = vadd.f32 %v2502, 1e-05
    %v2505 = vrsqrt.pop %v2503
    %v2506 = vrsqrt.pop %v2504
    %v2507 = vmul.f32 %v2491, %v2505
    %v2508 = vmul.f32 %v2492, %v2506
    %v2509 = vlaneseq
    %v2510 = vshrl.u32 %v2509, 7
    %v2511 = vsub.s32 3, %v2510
    %v2512 = vrot.slane %v78, %v2511
    %v2513 = vmul.f32 %v2507, %v2512
    %v2514 = vmul.f32 %v2508, %v2512
    %v2515 = vlaneseq
    %v2516 = vshrl.u32 %v2515, 7
    %v2517 = vsub.s32 4, %v2516
    %v2518 = vrot.slane %v78, %v2517
    %v2519 = vadd.f32 %v2513, %v2518
    %v2520 = vadd.f32 %v2514, %v2518
    %v2521 = vpack.c.bf16 %v2520, %v2519
    %v2522 = vld [vmem:[#allocation2] sm:$0xf]
    %v2523 = vld [vmem:[#allocation2 + $0x4] sm:$0xf]
    %v2524 = vld [vmem:[#allocation2 + $0x8] sm:$0xf]
    %v2525 = vld [vmem:[#allocation2 + $0xc] sm:$0xf]
    %v2526 = vlaneseq
    %v2527 = vshrl.u32 %v2526, 7
    %v2528 = vsub.s32 0, %v2527
    %v2529 = vrot.slane %v76, %v2528
    %v2534 = vunpack.c.l.b16 %v2522
    %v2535 = vunpack.c.l.b16 %v2523
    %v2536 = vunpack.c.l.b16 %v2524
    %v2537 = vunpack.c.l.b16 %v2525
    %v2538 = vpack.c.b16 %v2535, %v2534
    %v2539 = vpack.c.b16 %v2537, %v2536
    %v2543 = vsel %vm141, %v2521, 0
    %2545 = vmatprep.subr.bf16.mxu0 0
    %2546 = vmatpush1.bf16.msra.mxu0 0
    %2547 = vmatprep.subr.bf16.mxu0 0
    %2548 = vmatpush1.bf16.msra.mxu0 0
    %2549 = vmatprep.subr.bf16.mxu0 0
    %2550 = vmatpush1.bf16.msra.mxu0 0
    %2551 = vmatprep.subr.bf16.mxu0 0
    %2552 = vmatpush1.bf16.msra.mxu0 0
    %2553 = vmatprep.subr.bf16.mxu0 0
    %2554 = vmatpush1.bf16.msra.mxu0 0
    %2555 = vmatprep.subr.bf16.mxu0 0
    %2556 = vmatpush1.bf16.msra.mxu0 0
    %2557 = vmatprep.subr.bf16.mxu0 0
    %2558 = vmatpush1.bf16.msra.mxu0 %v2539
    %2559 = vmatprep.subr.bf16.mxu0 0
    %2560 = vmatpush1.bf16.msra.mxu0 %v2538
    %2561 = vmatprep.subr.bf16.mxu0 0
    %2562 = vmatpush2.bf16.msra.mxu0 0
    %2563 = vmatprep.subr.bf16.mxu0 0
    %2564 = vmatpush2.bf16.msra.mxu0 0
    %2565 = vmatprep.subr.bf16.mxu0 0
    %2566 = vmatpush2.bf16.msra.mxu0 0
    %2567 = vmatprep.subr.bf16.mxu0 0
    %2568 = vmatpush2.bf16.msra.mxu0 0
    %2569 = vmatprep.subr.bf16.mxu0 0
    %2570 = vmatpush2.bf16.msra.mxu0 0
    %2571 = vmatprep.subr.bf16.mxu0 0
    %2572 = vmatpush2.bf16.msra.mxu0 0
    %2573 = vmatprep.subr.bf16.mxu0 0
    %2574 = vmatpush2.bf16.msra.mxu0 0
    %2575 = vmatprep.subr.bf16.mxu0 0
    %2576 = vmatpush2.bf16.msra.mxu0 0
    %2577 = vmatprep.mubr.bf16.mxu0 0
    %2578 = vmatmul.mubr.bf16.gmra.mxu0 %v2543
    %v2579 = vpop.f32.mrf.mxu0
    %v2580 = vadd.f32 %v2529, %v2579
    %v2581 = vpop.f32.mrf.mxu0
    %v2582 = vpop.f32.mrf.mxu0
    %v2583 = vadd.f32 %v2529, %v2582
    %v2584 = vpop.f32.mrf.mxu0
    %2585 = vdwg.mxu0
    %v2586 = vmax.f32 %v2580, 0.0
    %v2587 = vmax.f32 %v2583, 0.0
    %v2588 = vpack.c.bf16 %v2587, %v2586
    %v2589 = vld [vmem:[%s6] sm:$0xf]
    %v2590 = vld [vmem:[%s6 + $0x4] sm:$0xf]
    %v2591 = vld [vmem:[%s6 + $0x8] sm:$0xf]
    %v2592 = vld [vmem:[%s6 + $0xc] sm:$0xf]
    %v2593 = vld [vmem:[%s6 + $0x10] sm:$0xf]
    %v2594 = vld [vmem:[%s6 + $0x14] sm:$0xf]
    %v2595 = vld [vmem:[%s6 + $0x18] sm:$0xf]
    %v2596 = vld [vmem:[%s6 + $0x1c] sm:$0xf]
    %v2597 = vlaneseq
    %v2598 = vshrl.u32 %v2597, 7
    %v2599 = vsub.s32 0, %v2598
    %v2600 = vrot.slane %v78, %v2599
    %v2609 = vunpack.c.l.b16 %v2589
    %v2610 = vunpack.c.l.b16 %v2590
    %v2611 = vunpack.c.l.b16 %v2591
    %v2612 = vunpack.c.l.b16 %v2592
    %v2613 = vunpack.c.l.b16 %v2593
    %v2614 = vunpack.c.l.b16 %v2594
    %v2615 = vunpack.c.l.b16 %v2595
    %v2616 = vunpack.c.l.b16 %v2596
    %v2617 = vpack.c.b16 %v2610, %v2609
    %v2618 = vpack.c.b16 %v2612, %v2611
    %v2619 = vpack.c.b16 %v2614, %v2613
    %v2620 = vpack.c.b16 %v2616, %v2615
    %vm2625 = vcmask 523264
    %v2627 = vsel %vm2625, %v2588, 0
    %2629 = vmatprep.subr.bf16.mxu0 0
    %2630 = vmatpush1.bf16.msra.mxu0 0
    %2631 = vmatprep.subr.bf16.mxu0 0
    %2632 = vmatpush1.bf16.msra.mxu0 0
    %2633 = vmatprep.subr.bf16.mxu0 0
    %2634 = vmatpush1.bf16.msra.mxu0 0
    %2635 = vmatprep.subr.bf16.mxu0 0
    %2636 = vmatpush1.bf16.msra.mxu0 0
    %2637 = vmatprep.subr.bf16.mxu0 0
    %2638 = vmatpush1.bf16.msra.mxu0 %v2620
    %2639 = vmatprep.subr.bf16.mxu0 0
    %2640 = vmatpush1.bf16.msra.mxu0 %v2619
    %2641 = vmatprep.subr.bf16.mxu0 0
    %2642 = vmatpush1.bf16.msra.mxu0 %v2618
    %2643 = vmatprep.subr.bf16.mxu0 0
    %2644 = vmatpush1.bf16.msra.mxu0 %v2617
    %2645 = vmatprep.subr.bf16.mxu0 0
    %2646 = vmatpush2.bf16.msra.mxu0 0
    %2647 = vmatprep.subr.bf16.mxu0 0
    %2648 = vmatpush2.bf16.msra.mxu0 0
    %2649 = vmatprep.subr.bf16.mxu0 0
    %2650 = vmatpush2.bf16.msra.mxu0 0
    %2651 = vmatprep.subr.bf16.mxu0 0
    %2652 = vmatpush2.bf16.msra.mxu0 0
    %2653 = vmatprep.subr.bf16.mxu0 0
    %2654 = vmatpush2.bf16.msra.mxu0 0
    %2655 = vmatprep.subr.bf16.mxu0 0
    %2656 = vmatpush2.bf16.msra.mxu0 0
    %2657 = vmatprep.subr.bf16.mxu0 0
    %2658 = vmatpush2.bf16.msra.mxu0 0
    %2659 = vmatprep.subr.bf16.mxu0 0
    %2660 = vmatpush2.bf16.msra.mxu0 0
    %2661 = vmatprep.mubr.bf16.mxu0 0
    %2662 = vmatmul.mubr.bf16.gmra.mxu0 %v2627
    %v2663 = vpop.f32.mrf.mxu0
    %v2664 = vadd.f32 %v2600, %v2663
    %v2665 = vpop.f32.mrf.mxu0
    %v2666 = vpop.f32.mrf.mxu0
    %v2667 = vadd.f32 %v2600, %v2666
    %v2668 = vpop.f32.mrf.mxu0
    %2669 = vdwg.mxu0
    %v2670 = vadd.f32 %v2664, %v2519
    %v2671 = vadd.f32 %v2667, %v2520
    %v2672 = vsel %vm141, %v2670, 0.0
    %2673 = vadd.xlane.f32.xlu0 %v2672
    %v2674 = vpop.xlane.xlu0 %2673
    %v2675 = vsel %vm141, %v2671, 0.0
    %2676 = vadd.xlane.f32.xlu0 %v2675
    %v2677 = vpop.xlane.xlu0 %2676
    %v2678 = vmul.f32 %v2674, %v1288
    %v2679 = vmul.f32 %v2677, %v1288
    %v2680 = vsub.f32 %v2670, %v2678
    %v2681 = vsub.f32 %v2671, %v2679
    %v2682 = vmul.f32 %v2680, %v2680
    %v2683 = vmul.f32 %v2681, %v2681
    %v2684 = vsel %vm141, %v2682, 0.0
    %2685 = vadd.xlane.f32.xlu0 %v2684
    %v2686 = vpop.xlane.xlu0 %2685
    %v2687 = vsel %vm141, %v2683, 0.0
    %2688 = vadd.xlane.f32.xlu0 %v2687
    %v2689 = vpop.xlane.xlu0 %2688
    %v2690 = vmul.f32 %v2686, %v1288
    %v2691 = vmul.f32 %v2689, %v1288
    %v2692 = vadd.f32 %v2690, 1e-05
    %v2693 = vadd.f32 %v2691, 1e-05
    %v2694 = vrsqrt.pop %v2692
    %v2695 = vrsqrt.pop %v2693
    %v2696 = vmul.f32 %v2680, %v2694
    %v2697 = vmul.f32 %v2681, %v2695
    %v2698 = vlaneseq
    %v2699 = vshrl.u32 %v2698, 7
    %v2700 = vsub.s32 5, %v2699
    %v2701 = vrot.slane %v78, %v2700
    %v2702 = vmul.f32 %v2696, %v2701
    %v2703 = vmul.f32 %v2697, %v2701
    %v2704 = vlaneseq
    %v2705 = vshrl.u32 %v2704, 7
    %v2706 = vsub.s32 6, %v2705
    %v2707 = vrot.slane %v78, %v2706
    %v2708 = vadd.f32 %v2702, %v2707
    %v2709 = vadd.f32 %v2703, %v2707
    %s2710 = scalar_lea.vmem %s4, 128
    %v2711 = vld [vmem:[%s2710] sm:$0xf]
    %v2712 = vld [vmem:[%s2710 + $0x4] sm:$0xf]
    %v2713 = vld [vmem:[%s2710 + $0x8] sm:$0xf]
    %v2714 = vld [vmem:[%s2710 + $0xc] sm:$0xf]
    %v2715 = vld [vmem:[%s2710 + $0x10] sm:$0xf]
    %v2716 = vld [vmem:[%s2710 + $0x14] sm:$0xf]
    %v2717 = vld [vmem:[%s2710 + $0x18] sm:$0xf]
    %v2718 = vld [vmem:[%s2710 + $0x1c] sm:$0xf]
    %v2719 = vld [vmem:[%s2710 + $0x20] sm:$0xf]
    %v2720 = vld [vmem:[%s2710 + $0x24] sm:$0xf]
    %v2721 = vld [vmem:[%s2710 + $0x28] sm:$0xf]
    %v2722 = vld [vmem:[%s2710 + $0x2c] sm:$0xf]
    %v2723 = vld [vmem:[%s2710 + $0x30] sm:$0xf]
    %v2724 = vld [vmem:[%s2710 + $0x34] sm:$0xf]
    %v2725 = vld [vmem:[%s2710 + $0x38] sm:$0xf]
    %v2726 = vld [vmem:[%s2710 + $0x3c] sm:$0xf]
    %v2727 = vld [vmem:[%s2710 + $0x40] sm:$0xf]
    %v2728 = vld [vmem:[%s2710 + $0x44] sm:$0xf]
    %v2729 = vld [vmem:[%s2710 + $0x48] sm:$0xf]
    %v2730 = vld [vmem:[%s2710 + $0x4c] sm:$0xf]
    %v2731 = vld [vmem:[%s2710 + $0x50] sm:$0xf]
    %v2732 = vld [vmem:[%s2710 + $0x54] sm:$0xf]
    %v2733 = vld [vmem:[%s2710 + $0x58] sm:$0xf]
    %v2734 = vld [vmem:[%s2710 + $0x5c] sm:$0xf]
    %v2735 = vld [vmem:[%s2710 + $0x60] sm:$0xf]
    %v2736 = vld [vmem:[%s2710 + $0x64] sm:$0xf]
    %v2737 = vld [vmem:[%s2710 + $0x68] sm:$0xf]
    %v2738 = vld [vmem:[%s2710 + $0x6c] sm:$0xf]
    %v2739 = vld [vmem:[%s2710 + $0x70] sm:$0xf]
    %v2740 = vld [vmem:[%s2710 + $0x74] sm:$0xf]
    %v2741 = vld [vmem:[%s2710 + $0x78] sm:$0xf]
    %v2742 = vld [vmem:[%s2710 + $0x7c] sm:$0xf]
    %v2743 = vadd.f32 %v2708, %v66
    %v2744 = vadd.f32 %v2709, %v67
    %v2745 = vpack.c.bf16 %v2744, %v2743
    %v2746 = vpack.c.bf16 %v2709, %v2708
    %v2747 = vlaneseq
    %v2748 = vshrl.u32 %v2747, 7
    %v2749 = vsub.s32 0, %v2748
    %v2750 = vrot.slane %v79, %v2749
    %v2755 = vunpack.c.l.b16 %v2711
    %v2756 = vunpack.c.l.b16 %v2712
    %v2757 = vunpack.c.l.b16 %v2713
    %v2758 = vunpack.c.l.b16 %v2714
    %v2759 = vpack.c.b16 %v2756, %v2755
    %v2760 = vpack.c.b16 %v2758, %v2757
    %v2764 = vsel %vm141, %v2745, 0
    %2766 = vmatprep.subr.bf16.mxu0 0
    %2767 = vmatpush1.bf16.msra.mxu0 0
    %2768 = vmatprep.subr.bf16.mxu0 0
    %2769 = vmatpush1.bf16.msra.mxu0 0
    %2770 = vmatprep.subr.bf16.mxu0 0
    %2771 = vmatpush1.bf16.msra.mxu0 0
    %2772 = vmatprep.subr.bf16.mxu0 0
    %2773 = vmatpush1.bf16.msra.mxu0 0
    %2774 = vmatprep.subr.bf16.mxu0 0
    %2775 = vmatpush1.bf16.msra.mxu0 0
    %2776 = vmatprep.subr.bf16.mxu0 0
    %2777 = vmatpush1.bf16.msra.mxu0 0
    %2778 = vmatprep.subr.bf16.mxu0 0
    %2779 = vmatpush1.bf16.msra.mxu0 %v2760
    %2780 = vmatprep.subr.bf16.mxu0 0
    %2781 = vmatpush1.bf16.msra.mxu0 %v2759
    %2782 = vmatprep.subr.bf16.mxu0 0
    %2783 = vmatpush2.bf16.msra.mxu0 0
    %2784 = vmatprep.subr.bf16.mxu0 0
    %2785 = vmatpush2.bf16.msra.mxu0 0
    %2786 = vmatprep.subr.bf16.mxu0 0
    %2787 = vmatpush2.bf16.msra.mxu0 0
    %2788 = vmatprep.subr.bf16.mxu0 0
    %2789 = vmatpush2.bf16.msra.mxu0 0
    %2790 = vmatprep.subr.bf16.mxu0 0
    %2791 = vmatpush2.bf16.msra.mxu0 0
    %2792 = vmatprep.subr.bf16.mxu0 0
    %2793 = vmatpush2.bf16.msra.mxu0 0
    %2794 = vmatprep.subr.bf16.mxu0 0
    %2795 = vmatpush2.bf16.msra.mxu0 0
    %2796 = vmatprep.subr.bf16.mxu0 0
    %2797 = vmatpush2.bf16.msra.mxu0 0
    %2798 = vmatprep.mubr.bf16.mxu0 0
    %2799 = vmatmul.mubr.bf16.gmra.mxu0 %v2764
    %v2800 = vpop.f32.mrf.mxu0
    %v2801 = vadd.f32 %v2750, %v2800
    %v2802 = vpop.f32.mrf.mxu0
    %v2803 = vpop.f32.mrf.mxu0
    %v2804 = vadd.f32 %v2750, %v2803
    %v2805 = vpop.f32.mrf.mxu0
    %2806 = vdwg.mxu0
    %v2807 = vlaneseq
    %v2808 = vshrl.u32 %v2807, 7
    %v2809 = vsub.s32 1, %v2808
    %v2810 = vrot.slane %v79, %v2809
    %v2815 = vunpack.c.l.b16 %v2715
    %v2816 = vunpack.c.l.b16 %v2716
    %v2817 = vunpack.c.l.b16 %v2717
    %v2818 = vunpack.c.l.b16 %v2718
    %v2819 = vpack.c.b16 %v2816, %v2815
    %v2820 = vpack.c.b16 %v2818, %v2817
    %2823 = vmatprep.subr.bf16.mxu0 0
    %2824 = vmatpush1.bf16.msra.mxu0 0
    %2825 = vmatprep.subr.bf16.mxu0 0
    %2826 = vmatpush1.bf16.msra.mxu0 0
    %2827 = vmatprep.subr.bf16.mxu0 0
    %2828 = vmatpush1.bf16.msra.mxu0 0
    %2829 = vmatprep.subr.bf16.mxu0 0
    %2830 = vmatpush1.bf16.msra.mxu0 0
    %2831 = vmatprep.subr.bf16.mxu0 0
    %2832 = vmatpush1.bf16.msra.mxu0 0
    %2833 = vmatprep.subr.bf16.mxu0 0
    %2834 = vmatpush1.bf16.msra.mxu0 0
    %2835 = vmatprep.subr.bf16.mxu0 0
    %2836 = vmatpush1.bf16.msra.mxu0 %v2820
    %2837 = vmatprep.subr.bf16.mxu0 0
    %2838 = vmatpush1.bf16.msra.mxu0 %v2819
    %2839 = vmatprep.subr.bf16.mxu0 0
    %2840 = vmatpush2.bf16.msra.mxu0 0
    %2841 = vmatprep.subr.bf16.mxu0 0
    %2842 = vmatpush2.bf16.msra.mxu0 0
    %2843 = vmatprep.subr.bf16.mxu0 0
    %2844 = vmatpush2.bf16.msra.mxu0 0
    %2845 = vmatprep.subr.bf16.mxu0 0
    %2846 = vmatpush2.bf16.msra.mxu0 0
    %2847 = vmatprep.subr.bf16.mxu0 0
    %2848 = vmatpush2.bf16.msra.mxu0 0
    %2849 = vmatprep.subr.bf16.mxu0 0
    %2850 = vmatpush2.bf16.msra.mxu0 0
    %2851 = vmatprep.subr.bf16.mxu0 0
    %2852 = vmatpush2.bf16.msra.mxu0 0
    %2853 = vmatprep.subr.bf16.mxu0 0
    %2854 = vmatpush2.bf16.msra.mxu0 0
    %2855 = vmatprep.mubr.bf16.mxu0 0
    %2856 = vmatmul.mubr.bf16.gmra.mxu0 %v2764
    %v2857 = vpop.f32.mrf.mxu0
    %v2858 = vadd.f32 %v2810, %v2857
    %v2859 = vpop.f32.mrf.mxu0
    %v2860 = vpop.f32.mrf.mxu0
    %v2861 = vadd.f32 %v2810, %v2860
    %v2862 = vpop.f32.mrf.mxu0
    %2863 = vdwg.mxu0
    %v2864 = vlaneseq
    %v2865 = vshrl.u32 %v2864, 7
    %v2866 = vsub.s32 2, %v2865
    %v2867 = vrot.slane %v79, %v2866
    %v2872 = vunpack.c.l.b16 %v2719
    %v2873 = vunpack.c.l.b16 %v2720
    %v2874 = vunpack.c.l.b16 %v2721
    %v2875 = vunpack.c.l.b16 %v2722
    %v2876 = vpack.c.b16 %v2873, %v2872
    %v2877 = vpack.c.b16 %v2875, %v2874
    %v2881 = vsel %vm141, %v2746, 0
    %2883 = vmatprep.subr.bf16.mxu0 0
    %2884 = vmatpush1.bf16.msra.mxu0 0
    %2885 = vmatprep.subr.bf16.mxu0 0
    %2886 = vmatpush1.bf16.msra.mxu0 0
    %2887 = vmatprep.subr.bf16.mxu0 0
    %2888 = vmatpush1.bf16.msra.mxu0 0
    %2889 = vmatprep.subr.bf16.mxu0 0
    %2890 = vmatpush1.bf16.msra.mxu0 0
    %2891 = vmatprep.subr.bf16.mxu0 0
    %2892 = vmatpush1.bf16.msra.mxu0 0
    %2893 = vmatprep.subr.bf16.mxu0 0
    %2894 = vmatpush1.bf16.msra.mxu0 0
    %2895 = vmatprep.subr.bf16.mxu0 0
    %2896 = vmatpush1.bf16.msra.mxu0 %v2877
    %2897 = vmatprep.subr.bf16.mxu0 0
    %2898 = vmatpush1.bf16.msra.mxu0 %v2876
    %2899 = vmatprep.subr.bf16.mxu0 0
    %2900 = vmatpush2.bf16.msra.mxu0 0
    %2901 = vmatprep.subr.bf16.mxu0 0
    %2902 = vmatpush2.bf16.msra.mxu0 0
    %2903 = vmatprep.subr.bf16.mxu0 0
    %2904 = vmatpush2.bf16.msra.mxu0 0
    %2905 = vmatprep.subr.bf16.mxu0 0
    %2906 = vmatpush2.bf16.msra.mxu0 0
    %2907 = vmatprep.subr.bf16.mxu0 0
    %2908 = vmatpush2.bf16.msra.mxu0 0
    %2909 = vmatprep.subr.bf16.mxu0 0
    %2910 = vmatpush2.bf16.msra.mxu0 0
    %2911 = vmatprep.subr.bf16.mxu0 0
    %2912 = vmatpush2.bf16.msra.mxu0 0
    %2913 = vmatprep.subr.bf16.mxu0 0
    %2914 = vmatpush2.bf16.msra.mxu0 0
    %2915 = vmatprep.mubr.bf16.mxu0 0
    %2916 = vmatmul.mubr.bf16.gmra.mxu0 %v2881
    %v2917 = vpop.f32.mrf.mxu0
    %v2918 = vadd.f32 %v2867, %v2917
    %v2919 = vpop.f32.mrf.mxu0
    %v2920 = vpop.f32.mrf.mxu0
    %v2921 = vadd.f32 %v2867, %v2920
    %v2922 = vpop.f32.mrf.mxu0
    %2923 = vdwg.mxu0
    %v2924 = vmul.f32 %v2801, 0.35355338
    %v2925 = vpack.c.bf16 %v2924, %v2924
    %v2926 = vpack.c.bf16 %v2858, %v2858
    %v2927 = vpack.c.bf16 %v2918, %v2918
    %v2929 = vsel %vm307, %v2925, 0
    %v2932 = vsel %vm307, %v2926, 0
    %2934 = vmatprep.subr.bf16.mxu0 0
    %2935 = vmatpush1.bf16.xpose.msra.mxu0 0
    %2936 = vmatprep.subr.bf16.mxu0 0
    %2937 = vmatpush1.bf16.xpose.msra.mxu0 0
    %2938 = vmatprep.subr.bf16.mxu0 0
    %2939 = vmatpush1.bf16.xpose.msra.mxu0 0
    %2940 = vmatprep.subr.bf16.mxu0 0
    %2941 = vmatpush1.bf16.xpose.msra.mxu0 0
    %2942 = vmatprep.subr.bf16.mxu0 0
    %2943 = vmatpush1.bf16.xpose.msra.mxu0 0
    %2944 = vmatprep.subr.bf16.mxu0 0
    %2945 = vmatpush1.bf16.xpose.msra.mxu0 0
    %2946 = vmatprep.subr.bf16.mxu0 0
    %2947 = vmatpush1.bf16.xpose.msra.mxu0 0
    %2948 = vmatprep.subr.bf16.mxu0 0
    %2949 = vmatpush1.bf16.xpose.msra.mxu0 %v2932
    %2950 = vmatprep.subr.bf16.mxu0 0
    %2951 = vmatpush2.bf16.xpose.msra.mxu0 0
    %2952 = vmatprep.subr.bf16.mxu0 0
    %2953 = vmatpush2.bf16.xpose.msra.mxu0 0
    %2954 = vmatprep.subr.bf16.mxu0 0
    %2955 = vmatpush2.bf16.xpose.msra.mxu0 0
    %2956 = vmatprep.subr.bf16.mxu0 0
    %2957 = vmatpush2.bf16.xpose.msra.mxu0 0
    %2958 = vmatprep.subr.bf16.mxu0 0
    %2959 = vmatpush2.bf16.xpose.msra.mxu0 0
    %2960 = vmatprep.subr.bf16.mxu0 0
    %2961 = vmatpush2.bf16.xpose.msra.mxu0 0
    %2962 = vmatprep.subr.bf16.mxu0 0
    %2963 = vmatpush2.bf16.xpose.msra.mxu0 0
    %2964 = vmatprep.subr.bf16.mxu0 0
    %2965 = vmatpush2.bf16.xpose.msra.mxu0 0
    %2966 = vmatprep.mubr.bf16.mxu0 0
    %2967 = vmatmul.mubr.bf16.gmra.mxu0 %v2929
    %v2968 = vpop.f32.mrf.mxu0
    %v2969 = vadd.f32 0.0, %v2968
    %v2970 = vpop.f32.mrf.mxu0
    %v2971 = vpop.f32.mrf.mxu0
    %v2972 = vpop.f32.mrf.mxu0
    %2973 = vdwg.mxu0
    %v2974 = vsel %vm307, %v2969, -inf
    %2975 = vmax.xlane.f32.xlu0 %v2974
    %v2976 = vpop.xlane.xlu0 %2975
    %v2977 = vsub.f32 %v2969, %v2976
    %v2978 = vmul.f32 %v2977, 1.442695
    %v2979 = vpow.pop %v2978
    %v2980 = vsel %vm307, %v2979, 0.0
    %2981 = vadd.xlane.f32.xlu0 %v2980
    %v2982 = vpop.xlane.xlu0 %2981
    %v2983 = vrcp.pop %v2982
    %v2984 = vmul.f32 %v2979, %v2983
    %v2985 = vpack.c.bf16 %v2984, %v2984
    %v2987 = vsel %vm307, %v2985, 0
    %v2990 = vsel %vm369, %v2927, 0
    %2992 = vmatprep.subr.bf16.mxu0 0
    %2993 = vmatpush1.bf16.msra.mxu0 0
    %2994 = vmatprep.subr.bf16.mxu0 0
    %2995 = vmatpush1.bf16.msra.mxu0 0
    %2996 = vmatprep.subr.bf16.mxu0 0
    %2997 = vmatpush1.bf16.msra.mxu0 0
    %2998 = vmatprep.subr.bf16.mxu0 0
    %2999 = vmatpush1.bf16.msra.mxu0 0
    %3000 = vmatprep.subr.bf16.mxu0 0
    %3001 = vmatpush1.bf16.msra.mxu0 0
    %3002 = vmatprep.subr.bf16.mxu0 0
    %3003 = vmatpush1.bf16.msra.mxu0 0
    %3004 = vmatprep.subr.bf16.mxu0 0
    %3005 = vmatpush1.bf16.msra.mxu0 0
    %3006 = vmatprep.subr.bf16.mxu0 0
    %3007 = vmatpush1.bf16.msra.mxu0 %v2990
    %3008 = vmatprep.subr.bf16.mxu0 0
    %3009 = vmatpush2.bf16.msra.mxu0 0
    %3010 = vmatprep.subr.bf16.mxu0 0
    %3011 = vmatpush2.bf16.msra.mxu0 0
    %3012 = vmatprep.subr.bf16.mxu0 0
    %3013 = vmatpush2.bf16.msra.mxu0 0
    %3014 = vmatprep.subr.bf16.mxu0 0
    %3015 = vmatpush2.bf16.msra.mxu0 0
    %3016 = vmatprep.subr.bf16.mxu0 0
    %3017 = vmatpush2.bf16.msra.mxu0 0
    %3018 = vmatprep.subr.bf16.mxu0 0
    %3019 = vmatpush2.bf16.msra.mxu0 0
    %3020 = vmatprep.subr.bf16.mxu0 0
    %3021 = vmatpush2.bf16.msra.mxu0 0
    %3022 = vmatprep.subr.bf16.mxu0 0
    %3023 = vmatpush2.bf16.msra.mxu0 0
    %3024 = vmatprep.mubr.bf16.mxu0 0
    %3025 = vmatmul.mubr.bf16.gmra.mxu0 %v2987
    %v3026 = vpop.f32.mrf.mxu0
    %v3027 = vadd.f32 0.0, %v3026
    %v3028 = vpop.f32.mrf.mxu0
    %v3029 = vpop.f32.mrf.mxu0
    %v3030 = vpop.f32.mrf.mxu0
    %3031 = vdwg.mxu0
    %3033 = vrot.lane.b32.xlu0 %v2925, 120
    %v3034 = vpop.permute.xlu0 %3033
    %3036 = vrot.lane.b32.xlu0 %v2926, 120
    %v3037 = vpop.permute.xlu0 %3036
    %v3039 = vsel %vm307, %v3034, 0
    %v3042 = vsel %vm307, %v3037, 0
    %3044 = vmatprep.subr.bf16.mxu0 0
    %3045 = vmatpush1.bf16.xpose.msra.mxu0 0
    %3046 = vmatprep.subr.bf16.mxu0 0
    %3047 = vmatpush1.bf16.xpose.msra.mxu0 0
    %3048 = vmatprep.subr.bf16.mxu0 0
    %3049 = vmatpush1.bf16.xpose.msra.mxu0 0
    %3050 = vmatprep.subr.bf16.mxu0 0
    %3051 = vmatpush1.bf16.xpose.msra.mxu0 0
    %3052 = vmatprep.subr.bf16.mxu0 0
    %3053 = vmatpush1.bf16.xpose.msra.mxu0 0
    %3054 = vmatprep.subr.bf16.mxu0 0
    %3055 = vmatpush1.bf16.xpose.msra.mxu0 0
    %3056 = vmatprep.subr.bf16.mxu0 0
    %3057 = vmatpush1.bf16.xpose.msra.mxu0 0
    %3058 = vmatprep.subr.bf16.mxu0 0
    %3059 = vmatpush1.bf16.xpose.msra.mxu0 %v3042
    %3060 = vmatprep.subr.bf16.mxu0 0
    %3061 = vmatpush2.bf16.xpose.msra.mxu0 0
    %3062 = vmatprep.subr.bf16.mxu0 0
    %3063 = vmatpush2.bf16.xpose.msra.mxu0 0
    %3064 = vmatprep.subr.bf16.mxu0 0
    %3065 = vmatpush2.bf16.xpose.msra.mxu0 0
    %3066 = vmatprep.subr.bf16.mxu0 0
    %3067 = vmatpush2.bf16.xpose.msra.mxu0 0
    %3068 = vmatprep.subr.bf16.mxu0 0
    %3069 = vmatpush2.bf16.xpose.msra.mxu0 0
    %3070 = vmatprep.subr.bf16.mxu0 0
    %3071 = vmatpush2.bf16.xpose.msra.mxu0 0
    %3072 = vmatprep.subr.bf16.mxu0 0
    %3073 = vmatpush2.bf16.xpose.msra.mxu0 0
    %3074 = vmatprep.subr.bf16.mxu0 0
    %3075 = vmatpush2.bf16.xpose.msra.mxu0 0
    %3076 = vmatprep.mubr.bf16.mxu0 0
    %3077 = vmatmul.mubr.bf16.gmra.mxu0 %v3039
    %v3078 = vpop.f32.mrf.mxu0
    %v3079 = vadd.f32 0.0, %v3078
    %v3080 = vpop.f32.mrf.mxu0
    %v3081 = vpop.f32.mrf.mxu0
    %v3082 = vpop.f32.mrf.mxu0
    %3083 = vdwg.mxu0
    %v3084 = vsel %vm307, %v3079, -inf
    %3085 = vmax.xlane.f32.xlu0 %v3084
    %v3086 = vpop.xlane.xlu0 %3085
    %v3087 = vsub.f32 %v3079, %v3086
    %v3088 = vmul.f32 %v3087, 1.442695
    %v3089 = vpow.pop %v3088
    %v3090 = vsel %vm307, %v3089, 0.0
    %3091 = vadd.xlane.f32.xlu0 %v3090
    %v3092 = vpop.xlane.xlu0 %3091
    %v3093 = vrcp.pop %v3092
    %v3094 = vmul.f32 %v3089, %v3093
    %v3095 = vpack.c.bf16 %v3094, %v3094
    %3097 = vrot.lane.b32.xlu0 %v2927, 120
    %v3098 = vpop.permute.xlu0 %3097
    %v3100 = vsel %vm307, %v3095, 0
    %v3103 = vsel %vm369, %v3098, 0
    %3105 = vmatprep.subr.bf16.mxu0 0
    %3106 = vmatpush1.bf16.msra.mxu0 0
    %3107 = vmatprep.subr.bf16.mxu0 0
    %3108 = vmatpush1.bf16.msra.mxu0 0
    %3109 = vmatprep.subr.bf16.mxu0 0
    %3110 = vmatpush1.bf16.msra.mxu0 0
    %3111 = vmatprep.subr.bf16.mxu0 0
    %3112 = vmatpush1.bf16.msra.mxu0 0
    %3113 = vmatprep.subr.bf16.mxu0 0
    %3114 = vmatpush1.bf16.msra.mxu0 0
    %3115 = vmatprep.subr.bf16.mxu0 0
    %3116 = vmatpush1.bf16.msra.mxu0 0
    %3117 = vmatprep.subr.bf16.mxu0 0
    %3118 = vmatpush1.bf16.msra.mxu0 0
    %3119 = vmatprep.subr.bf16.mxu0 0
    %3120 = vmatpush1.bf16.msra.mxu0 %v3103
    %3121 = vmatprep.subr.bf16.mxu0 0
    %3122 = vmatpush2.bf16.msra.mxu0 0
    %3123 = vmatprep.subr.bf16.mxu0 0
    %3124 = vmatpush2.bf16.msra.mxu0 0
    %3125 = vmatprep.subr.bf16.mxu0 0
    %3126 = vmatpush2.bf16.msra.mxu0 0
    %3127 = vmatprep.subr.bf16.mxu0 0
    %3128 = vmatpush2.bf16.msra.mxu0 0
    %3129 = vmatprep.subr.bf16.mxu0 0
    %3130 = vmatpush2.bf16.msra.mxu0 0
    %3131 = vmatprep.subr.bf16.mxu0 0
    %3132 = vmatpush2.bf16.msra.mxu0 0
    %3133 = vmatprep.subr.bf16.mxu0 0
    %3134 = vmatpush2.bf16.msra.mxu0 0
    %3135 = vmatprep.subr.bf16.mxu0 0
    %3136 = vmatpush2.bf16.msra.mxu0 0
    %3137 = vmatprep.mubr.bf16.mxu0 0
    %3138 = vmatmul.mubr.bf16.gmra.mxu0 %v3100
    %v3139 = vpop.f32.mrf.mxu0
    %v3140 = vadd.f32 0.0, %v3139
    %v3141 = vpop.f32.mrf.mxu0
    %v3142 = vpop.f32.mrf.mxu0
    %v3143 = vpop.f32.mrf.mxu0
    %3144 = vdwg.mxu0
    %3145 = vrot.lane.b32.xlu0 %v2925, 112
    %v3146 = vpop.permute.xlu0 %3145
    %3147 = vrot.lane.b32.xlu0 %v2926, 112
    %v3148 = vpop.permute.xlu0 %3147
    %v3150 = vsel %vm307, %v3146, 0
    %v3153 = vsel %vm307, %v3148, 0
    %3155 = vmatprep.subr.bf16.mxu0 0
    %3156 = vmatpush1.bf16.xpose.msra.mxu0 0
    %3157 = vmatprep.subr.bf16.mxu0 0
    %3158 = vmatpush1.bf16.xpose.msra.mxu0 0
    %3159 = vmatprep.subr.bf16.mxu0 0
    %3160 = vmatpush1.bf16.xpose.msra.mxu0 0
    %3161 = vmatprep.subr.bf16.mxu0 0
    %3162 = vmatpush1.bf16.xpose.msra.mxu0 0
    %3163 = vmatprep.subr.bf16.mxu0 0
    %3164 = vmatpush1.bf16.xpose.msra.mxu0 0
    %3165 = vmatprep.subr.bf16.mxu0 0
    %3166 = vmatpush1.bf16.xpose.msra.mxu0 0
    %3167 = vmatprep.subr.bf16.mxu0 0
    %3168 = vmatpush1.bf16.xpose.msra.mxu0 0
    %3169 = vmatprep.subr.bf16.mxu0 0
    %3170 = vmatpush1.bf16.xpose.msra.mxu0 %v3153
    %3171 = vmatprep.subr.bf16.mxu0 0
    %3172 = vmatpush2.bf16.xpose.msra.mxu0 0
    %3173 = vmatprep.subr.bf16.mxu0 0
    %3174 = vmatpush2.bf16.xpose.msra.mxu0 0
    %3175 = vmatprep.subr.bf16.mxu0 0
    %3176 = vmatpush2.bf16.xpose.msra.mxu0 0
    %3177 = vmatprep.subr.bf16.mxu0 0
    %3178 = vmatpush2.bf16.xpose.msra.mxu0 0
    %3179 = vmatprep.subr.bf16.mxu0 0
    %3180 = vmatpush2.bf16.xpose.msra.mxu0 0
    %3181 = vmatprep.subr.bf16.mxu0 0
    %3182 = vmatpush2.bf16.xpose.msra.mxu0 0
    %3183 = vmatprep.subr.bf16.mxu0 0
    %3184 = vmatpush2.bf16.xpose.msra.mxu0 0
    %3185 = vmatprep.subr.bf16.mxu0 0
    %3186 = vmatpush2.bf16.xpose.msra.mxu0 0
    %3187 = vmatprep.mubr.bf16.mxu0 0
    %3188 = vmatmul.mubr.bf16.gmra.mxu0 %v3150
    %v3189 = vpop.f32.mrf.mxu0
    %v3190 = vadd.f32 0.0, %v3189
    %v3191 = vpop.f32.mrf.mxu0
    %v3192 = vpop.f32.mrf.mxu0
    %v3193 = vpop.f32.mrf.mxu0
    %3194 = vdwg.mxu0
    %v3195 = vsel %vm307, %v3190, -inf
    %3196 = vmax.xlane.f32.xlu0 %v3195
    %v3197 = vpop.xlane.xlu0 %3196
    %v3198 = vsub.f32 %v3190, %v3197
    %v3199 = vmul.f32 %v3198, 1.442695
    %v3200 = vpow.pop %v3199
    %v3201 = vsel %vm307, %v3200, 0.0
    %3202 = vadd.xlane.f32.xlu0 %v3201
    %v3203 = vpop.xlane.xlu0 %3202
    %v3204 = vrcp.pop %v3203
    %v3205 = vmul.f32 %v3200, %v3204
    %v3206 = vpack.c.bf16 %v3205, %v3205
    %3207 = vrot.lane.b32.xlu0 %v2927, 112
    %v3208 = vpop.permute.xlu0 %3207
    %v3210 = vsel %vm307, %v3206, 0
    %v3213 = vsel %vm369, %v3208, 0
    %3215 = vmatprep.subr.bf16.mxu0 0
    %3216 = vmatpush1.bf16.msra.mxu0 0
    %3217 = vmatprep.subr.bf16.mxu0 0
    %3218 = vmatpush1.bf16.msra.mxu0 0
    %3219 = vmatprep.subr.bf16.mxu0 0
    %3220 = vmatpush1.bf16.msra.mxu0 0
    %3221 = vmatprep.subr.bf16.mxu0 0
    %3222 = vmatpush1.bf16.msra.mxu0 0
    %3223 = vmatprep.subr.bf16.mxu0 0
    %3224 = vmatpush1.bf16.msra.mxu0 0
    %3225 = vmatprep.subr.bf16.mxu0 0
    %3226 = vmatpush1.bf16.msra.mxu0 0
    %3227 = vmatprep.subr.bf16.mxu0 0
    %3228 = vmatpush1.bf16.msra.mxu0 0
    %3229 = vmatprep.subr.bf16.mxu0 0
    %3230 = vmatpush1.bf16.msra.mxu0 %v3213
    %3231 = vmatprep.subr.bf16.mxu0 0
    %3232 = vmatpush2.bf16.msra.mxu0 0
    %3233 = vmatprep.subr.bf16.mxu0 0
    %3234 = vmatpush2.bf16.msra.mxu0 0
    %3235 = vmatprep.subr.bf16.mxu0 0
    %3236 = vmatpush2.bf16.msra.mxu0 0
    %3237 = vmatprep.subr.bf16.mxu0 0
    %3238 = vmatpush2.bf16.msra.mxu0 0
    %3239 = vmatprep.subr.bf16.mxu0 0
    %3240 = vmatpush2.bf16.msra.mxu0 0
    %3241 = vmatprep.subr.bf16.mxu0 0
    %3242 = vmatpush2.bf16.msra.mxu0 0
    %3243 = vmatprep.subr.bf16.mxu0 0
    %3244 = vmatpush2.bf16.msra.mxu0 0
    %3245 = vmatprep.subr.bf16.mxu0 0
    %3246 = vmatpush2.bf16.msra.mxu0 0
    %3247 = vmatprep.mubr.bf16.mxu0 0
    %3248 = vmatmul.mubr.bf16.gmra.mxu0 %v3210
    %v3249 = vpop.f32.mrf.mxu0
    %v3250 = vadd.f32 0.0, %v3249
    %v3251 = vpop.f32.mrf.mxu0
    %v3252 = vpop.f32.mrf.mxu0
    %v3253 = vpop.f32.mrf.mxu0
    %3254 = vdwg.mxu0
    %3255 = vrot.lane.b32.xlu0 %v2925, 104
    %v3256 = vpop.permute.xlu0 %3255
    %3257 = vrot.lane.b32.xlu0 %v2926, 104
    %v3258 = vpop.permute.xlu0 %3257
    %v3260 = vsel %vm307, %v3256, 0
    %v3263 = vsel %vm307, %v3258, 0
    %3265 = vmatprep.subr.bf16.mxu0 0
    %3266 = vmatpush1.bf16.xpose.msra.mxu0 0
    %3267 = vmatprep.subr.bf16.mxu0 0
    %3268 = vmatpush1.bf16.xpose.msra.mxu0 0
    %3269 = vmatprep.subr.bf16.mxu0 0
    %3270 = vmatpush1.bf16.xpose.msra.mxu0 0
    %3271 = vmatprep.subr.bf16.mxu0 0
    %3272 = vmatpush1.bf16.xpose.msra.mxu0 0
    %3273 = vmatprep.subr.bf16.mxu0 0
    %3274 = vmatpush1.bf16.xpose.msra.mxu0 0
    %3275 = vmatprep.subr.bf16.mxu0 0
    %3276 = vmatpush1.bf16.xpose.msra.mxu0 0
    %3277 = vmatprep.subr.bf16.mxu0 0
    %3278 = vmatpush1.bf16.xpose.msra.mxu0 0
    %3279 = vmatprep.subr.bf16.mxu0 0
    %3280 = vmatpush1.bf16.xpose.msra.mxu0 %v3263
    %3281 = vmatprep.subr.bf16.mxu0 0
    %3282 = vmatpush2.bf16.xpose.msra.mxu0 0
    %3283 = vmatprep.subr.bf16.mxu0 0
    %3284 = vmatpush2.bf16.xpose.msra.mxu0 0
    %3285 = vmatprep.subr.bf16.mxu0 0
    %3286 = vmatpush2.bf16.xpose.msra.mxu0 0
    %3287 = vmatprep.subr.bf16.mxu0 0
    %3288 = vmatpush2.bf16.xpose.msra.mxu0 0
    %3289 = vmatprep.subr.bf16.mxu0 0
    %3290 = vmatpush2.bf16.xpose.msra.mxu0 0
    %3291 = vmatprep.subr.bf16.mxu0 0
    %3292 = vmatpush2.bf16.xpose.msra.mxu0 0
    %3293 = vmatprep.subr.bf16.mxu0 0
    %3294 = vmatpush2.bf16.xpose.msra.mxu0 0
    %3295 = vmatprep.subr.bf16.mxu0 0
    %3296 = vmatpush2.bf16.xpose.msra.mxu0 0
    %3297 = vmatprep.mubr.bf16.mxu0 0
    %3298 = vmatmul.mubr.bf16.gmra.mxu0 %v3260
    %v3299 = vpop.f32.mrf.mxu0
    %v3300 = vadd.f32 0.0, %v3299
    %v3301 = vpop.f32.mrf.mxu0
    %v3302 = vpop.f32.mrf.mxu0
    %v3303 = vpop.f32.mrf.mxu0
    %3304 = vdwg.mxu0
    %v3305 = vsel %vm307, %v3300, -inf
    %3306 = vmax.xlane.f32.xlu0 %v3305
    %v3307 = vpop.xlane.xlu0 %3306
    %v3308 = vsub.f32 %v3300, %v3307
    %v3309 = vmul.f32 %v3308, 1.442695
    %v3310 = vpow.pop %v3309
    %v3311 = vsel %vm307, %v3310, 0.0
    %3312 = vadd.xlane.f32.xlu0 %v3311
    %v3313 = vpop.xlane.xlu0 %3312
    %v3314 = vrcp.pop %v3313
    %v3315 = vmul.f32 %v3310, %v3314
    %v3316 = vpack.c.bf16 %v3315, %v3315
    %3317 = vrot.lane.b32.xlu0 %v2927, 104
    %v3318 = vpop.permute.xlu0 %3317
    %v3320 = vsel %vm307, %v3316, 0
    %v3323 = vsel %vm369, %v3318, 0
    %3325 = vmatprep.subr.bf16.mxu0 0
    %3326 = vmatpush1.bf16.msra.mxu0 0
    %3327 = vmatprep.subr.bf16.mxu0 0
    %3328 = vmatpush1.bf16.msra.mxu0 0
    %3329 = vmatprep.subr.bf16.mxu0 0
    %3330 = vmatpush1.bf16.msra.mxu0 0
    %3331 = vmatprep.subr.bf16.mxu0 0
    %3332 = vmatpush1.bf16.msra.mxu0 0
    %3333 = vmatprep.subr.bf16.mxu0 0
    %3334 = vmatpush1.bf16.msra.mxu0 0
    %3335 = vmatprep.subr.bf16.mxu0 0
    %3336 = vmatpush1.bf16.msra.mxu0 0
    %3337 = vmatprep.subr.bf16.mxu0 0
    %3338 = vmatpush1.bf16.msra.mxu0 0
    %3339 = vmatprep.subr.bf16.mxu0 0
    %3340 = vmatpush1.bf16.msra.mxu0 %v3323
    %3341 = vmatprep.subr.bf16.mxu0 0
    %3342 = vmatpush2.bf16.msra.mxu0 0
    %3343 = vmatprep.subr.bf16.mxu0 0
    %3344 = vmatpush2.bf16.msra.mxu0 0
    %3345 = vmatprep.subr.bf16.mxu0 0
    %3346 = vmatpush2.bf16.msra.mxu0 0
    %3347 = vmatprep.subr.bf16.mxu0 0
    %3348 = vmatpush2.bf16.msra.mxu0 0
    %3349 = vmatprep.subr.bf16.mxu0 0
    %3350 = vmatpush2.bf16.msra.mxu0 0
    %3351 = vmatprep.subr.bf16.mxu0 0
    %3352 = vmatpush2.bf16.msra.mxu0 0
    %3353 = vmatprep.subr.bf16.mxu0 0
    %3354 = vmatpush2.bf16.msra.mxu0 0
    %3355 = vmatprep.subr.bf16.mxu0 0
    %3356 = vmatpush2.bf16.msra.mxu0 0
    %3357 = vmatprep.mubr.bf16.mxu0 0
    %3358 = vmatmul.mubr.bf16.gmra.mxu0 %v3320
    %v3359 = vpop.f32.mrf.mxu0
    %v3360 = vadd.f32 0.0, %v3359
    %v3361 = vpop.f32.mrf.mxu0
    %v3362 = vpop.f32.mrf.mxu0
    %v3363 = vpop.f32.mrf.mxu0
    %3364 = vdwg.mxu0
    %3366 = vrot.lane.b32.xlu0 %v3140, 8
    %v3367 = vpop.permute.xlu0 %3366
    %3370 = vrot.lane.b32.xlu0 %v3250, 16
    %v3371 = vpop.permute.xlu0 %3370
    %3374 = vrot.lane.b32.xlu0 %v3360, 24
    %v3375 = vpop.permute.xlu0 %3374
    %v3377 = vsel %vm307, %v3027, %v3367
    %v3378 = vsel %vm759, %v3377, %v3371
    %v3379 = vsel %vm761, %v3378, %v3375
    %v3380 = vmul.f32 %v2804, 0.35355338
    %v3381 = vpack.c.bf16 %v3380, %v3380
    %v3382 = vpack.c.bf16 %v2861, %v2861
    %v3383 = vpack.c.bf16 %v2921, %v2921
    %v3385 = vsel %vm307, %v3381, 0
    %v3388 = vsel %vm307, %v3382, 0
    %3390 = vmatprep.subr.bf16.mxu0 0
    %3391 = vmatpush1.bf16.xpose.msra.mxu0 0
    %3392 = vmatprep.subr.bf16.mxu0 0
    %3393 = vmatpush1.bf16.xpose.msra.mxu0 0
    %3394 = vmatprep.subr.bf16.mxu0 0
    %3395 = vmatpush1.bf16.xpose.msra.mxu0 0
    %3396 = vmatprep.subr.bf16.mxu0 0
    %3397 = vmatpush1.bf16.xpose.msra.mxu0 0
    %3398 = vmatprep.subr.bf16.mxu0 0
    %3399 = vmatpush1.bf16.xpose.msra.mxu0 0
    %3400 = vmatprep.subr.bf16.mxu0 0
    %3401 = vmatpush1.bf16.xpose.msra.mxu0 0
    %3402 = vmatprep.subr.bf16.mxu0 0
    %3403 = vmatpush1.bf16.xpose.msra.mxu0 0
    %3404 = vmatprep.subr.bf16.mxu0 0
    %3405 = vmatpush1.bf16.xpose.msra.mxu0 %v3388
    %3406 = vmatprep.subr.bf16.mxu0 0
    %3407 = vmatpush2.bf16.xpose.msra.mxu0 0
    %3408 = vmatprep.subr.bf16.mxu0 0
    %3409 = vmatpush2.bf16.xpose.msra.mxu0 0
    %3410 = vmatprep.subr.bf16.mxu0 0
    %3411 = vmatpush2.bf16.xpose.msra.mxu0 0
    %3412 = vmatprep.subr.bf16.mxu0 0
    %3413 = vmatpush2.bf16.xpose.msra.mxu0 0
    %3414 = vmatprep.subr.bf16.mxu0 0
    %3415 = vmatpush2.bf16.xpose.msra.mxu0 0
    %3416 = vmatprep.subr.bf16.mxu0 0
    %3417 = vmatpush2.bf16.xpose.msra.mxu0 0
    %3418 = vmatprep.subr.bf16.mxu0 0
    %3419 = vmatpush2.bf16.xpose.msra.mxu0 0
    %3420 = vmatprep.subr.bf16.mxu0 0
    %3421 = vmatpush2.bf16.xpose.msra.mxu0 0
    %3422 = vmatprep.mubr.bf16.mxu0 0
    %3423 = vmatmul.mubr.bf16.gmra.mxu0 %v3385
    %v3424 = vpop.f32.mrf.mxu0
    %v3425 = vadd.f32 0.0, %v3424
    %v3426 = vpop.f32.mrf.mxu0
    %v3427 = vpop.f32.mrf.mxu0
    %v3428 = vpop.f32.mrf.mxu0
    %3429 = vdwg.mxu0
    %v3430 = vsel %vm307, %v3425, -inf
    %3431 = vmax.xlane.f32.xlu0 %v3430
    %v3432 = vpop.xlane.xlu0 %3431
    %v3433 = vsub.f32 %v3425, %v3432
    %v3434 = vmul.f32 %v3433, 1.442695
    %v3435 = vpow.pop %v3434
    %v3436 = vsel %vm307, %v3435, 0.0
    %3437 = vadd.xlane.f32.xlu0 %v3436
    %v3438 = vpop.xlane.xlu0 %3437
    %v3439 = vrcp.pop %v3438
    %v3440 = vmul.f32 %v3435, %v3439
    %v3441 = vpack.c.bf16 %v3440, %v3440
    %v3443 = vsel %vm307, %v3441, 0
    %v3446 = vsel %vm369, %v3383, 0
    %3448 = vmatprep.subr.bf16.mxu0 0
    %3449 = vmatpush1.bf16.msra.mxu0 0
    %3450 = vmatprep.subr.bf16.mxu0 0
    %3451 = vmatpush1.bf16.msra.mxu0 0
    %3452 = vmatprep.subr.bf16.mxu0 0
    %3453 = vmatpush1.bf16.msra.mxu0 0
    %3454 = vmatprep.subr.bf16.mxu0 0
    %3455 = vmatpush1.bf16.msra.mxu0 0
    %3456 = vmatprep.subr.bf16.mxu0 0
    %3457 = vmatpush1.bf16.msra.mxu0 0
    %3458 = vmatprep.subr.bf16.mxu0 0
    %3459 = vmatpush1.bf16.msra.mxu0 0
    %3460 = vmatprep.subr.bf16.mxu0 0
    %3461 = vmatpush1.bf16.msra.mxu0 0
    %3462 = vmatprep.subr.bf16.mxu0 0
    %3463 = vmatpush1.bf16.msra.mxu0 %v3446
    %3464 = vmatprep.subr.bf16.mxu0 0
    %3465 = vmatpush2.bf16.msra.mxu0 0
    %3466 = vmatprep.subr.bf16.mxu0 0
    %3467 = vmatpush2.bf16.msra.mxu0 0
    %3468 = vmatprep.subr.bf16.mxu0 0
    %3469 = vmatpush2.bf16.msra.mxu0 0
    %3470 = vmatprep.subr.bf16.mxu0 0
    %3471 = vmatpush2.bf16.msra.mxu0 0
    %3472 = vmatprep.subr.bf16.mxu0 0
    %3473 = vmatpush2.bf16.msra.mxu0 0
    %3474 = vmatprep.subr.bf16.mxu0 0
    %3475 = vmatpush2.bf16.msra.mxu0 0
    %3476 = vmatprep.subr.bf16.mxu0 0
    %3477 = vmatpush2.bf16.msra.mxu0 0
    %3478 = vmatprep.subr.bf16.mxu0 0
    %3479 = vmatpush2.bf16.msra.mxu0 0
    %3480 = vmatprep.mubr.bf16.mxu0 0
    %3481 = vmatmul.mubr.bf16.gmra.mxu0 %v3443
    %v3482 = vpop.f32.mrf.mxu0
    %v3483 = vadd.f32 0.0, %v3482
    %v3484 = vpop.f32.mrf.mxu0
    %v3485 = vpop.f32.mrf.mxu0
    %v3486 = vpop.f32.mrf.mxu0
    %3487 = vdwg.mxu0
    %3489 = vrot.lane.b32.xlu0 %v3381, 120
    %v3490 = vpop.permute.xlu0 %3489
    %3492 = vrot.lane.b32.xlu0 %v3382, 120
    %v3493 = vpop.permute.xlu0 %3492
    %v3495 = vsel %vm307, %v3490, 0
    %v3498 = vsel %vm307, %v3493, 0
    %3500 = vmatprep.subr.bf16.mxu0 0
    %3501 = vmatpush1.bf16.xpose.msra.mxu0 0
    %3502 = vmatprep.subr.bf16.mxu0 0
    %3503 = vmatpush1.bf16.xpose.msra.mxu0 0
    %3504 = vmatprep.subr.bf16.mxu0 0
    %3505 = vmatpush1.bf16.xpose.msra.mxu0 0
    %3506 = vmatprep.subr.bf16.mxu0 0
    %3507 = vmatpush1.bf16.xpose.msra.mxu0 0
    %3508 = vmatprep.subr.bf16.mxu0 0
    %3509 = vmatpush1.bf16.xpose.msra.mxu0 0
    %3510 = vmatprep.subr.bf16.mxu0 0
    %3511 = vmatpush1.bf16.xpose.msra.mxu0 0
    %3512 = vmatprep.subr.bf16.mxu0 0
    %3513 = vmatpush1.bf16.xpose.msra.mxu0 0
    %3514 = vmatprep.subr.bf16.mxu0 0
    %3515 = vmatpush1.bf16.xpose.msra.mxu0 %v3498
    %3516 = vmatprep.subr.bf16.mxu0 0
    %3517 = vmatpush2.bf16.xpose.msra.mxu0 0
    %3518 = vmatprep.subr.bf16.mxu0 0
    %3519 = vmatpush2.bf16.xpose.msra.mxu0 0
    %3520 = vmatprep.subr.bf16.mxu0 0
    %3521 = vmatpush2.bf16.xpose.msra.mxu0 0
    %3522 = vmatprep.subr.bf16.mxu0 0
    %3523 = vmatpush2.bf16.xpose.msra.mxu0 0
    %3524 = vmatprep.subr.bf16.mxu0 0
    %3525 = vmatpush2.bf16.xpose.msra.mxu0 0
    %3526 = vmatprep.subr.bf16.mxu0 0
    %3527 = vmatpush2.bf16.xpose.msra.mxu0 0
    %3528 = vmatprep.subr.bf16.mxu0 0
    %3529 = vmatpush2.bf16.xpose.msra.mxu0 0
    %3530 = vmatprep.subr.bf16.mxu0 0
    %3531 = vmatpush2.bf16.xpose.msra.mxu0 0
    %3532 = vmatprep.mubr.bf16.mxu0 0
    %3533 = vmatmul.mubr.bf16.gmra.mxu0 %v3495
    %v3534 = vpop.f32.mrf.mxu0
    %v3535 = vadd.f32 0.0, %v3534
    %v3536 = vpop.f32.mrf.mxu0
    %v3537 = vpop.f32.mrf.mxu0
    %v3538 = vpop.f32.mrf.mxu0
    %3539 = vdwg.mxu0
    %v3540 = vsel %vm307, %v3535, -inf
    %3541 = vmax.xlane.f32.xlu0 %v3540
    %v3542 = vpop.xlane.xlu0 %3541
    %v3543 = vsub.f32 %v3535, %v3542
    %v3544 = vmul.f32 %v3543, 1.442695
    %v3545 = vpow.pop %v3544
    %v3546 = vsel %vm307, %v3545, 0.0
    %3547 = vadd.xlane.f32.xlu0 %v3546
    %v3548 = vpop.xlane.xlu0 %3547
    %v3549 = vrcp.pop %v3548
    %v3550 = vmul.f32 %v3545, %v3549
    %v3551 = vpack.c.bf16 %v3550, %v3550
    %3553 = vrot.lane.b32.xlu0 %v3383, 120
    %v3554 = vpop.permute.xlu0 %3553
    %v3556 = vsel %vm307, %v3551, 0
    %v3559 = vsel %vm369, %v3554, 0
    %3561 = vmatprep.subr.bf16.mxu0 0
    %3562 = vmatpush1.bf16.msra.mxu0 0
    %3563 = vmatprep.subr.bf16.mxu0 0
    %3564 = vmatpush1.bf16.msra.mxu0 0
    %3565 = vmatprep.subr.bf16.mxu0 0
    %3566 = vmatpush1.bf16.msra.mxu0 0
    %3567 = vmatprep.subr.bf16.mxu0 0
    %3568 = vmatpush1.bf16.msra.mxu0 0
    %3569 = vmatprep.subr.bf16.mxu0 0
    %3570 = vmatpush1.bf16.msra.mxu0 0
    %3571 = vmatprep.subr.bf16.mxu0 0
    %3572 = vmatpush1.bf16.msra.mxu0 0
    %3573 = vmatprep.subr.bf16.mxu0 0
    %3574 = vmatpush1.bf16.msra.mxu0 0
    %3575 = vmatprep.subr.bf16.mxu0 0
    %3576 = vmatpush1.bf16.msra.mxu0 %v3559
    %3577 = vmatprep.subr.bf16.mxu0 0
    %3578 = vmatpush2.bf16.msra.mxu0 0
    %3579 = vmatprep.subr.bf16.mxu0 0
    %3580 = vmatpush2.bf16.msra.mxu0 0
    %3581 = vmatprep.subr.bf16.mxu0 0
    %3582 = vmatpush2.bf16.msra.mxu0 0
    %3583 = vmatprep.subr.bf16.mxu0 0
    %3584 = vmatpush2.bf16.msra.mxu0 0
    %3585 = vmatprep.subr.bf16.mxu0 0
    %3586 = vmatpush2.bf16.msra.mxu0 0
    %3587 = vmatprep.subr.bf16.mxu0 0
    %3588 = vmatpush2.bf16.msra.mxu0 0
    %3589 = vmatprep.subr.bf16.mxu0 0
    %3590 = vmatpush2.bf16.msra.mxu0 0
    %3591 = vmatprep.subr.bf16.mxu0 0
    %3592 = vmatpush2.bf16.msra.mxu0 0
    %3593 = vmatprep.mubr.bf16.mxu0 0
    %3594 = vmatmul.mubr.bf16.gmra.mxu0 %v3556
    %v3595 = vpop.f32.mrf.mxu0
    %v3596 = vadd.f32 0.0, %v3595
    %v3597 = vpop.f32.mrf.mxu0
    %v3598 = vpop.f32.mrf.mxu0
    %v3599 = vpop.f32.mrf.mxu0
    %3600 = vdwg.mxu0
    %3601 = vrot.lane.b32.xlu0 %v3381, 112
    %v3602 = vpop.permute.xlu0 %3601
    %3603 = vrot.lane.b32.xlu0 %v3382, 112
    %v3604 = vpop.permute.xlu0 %3603
    %v3606 = vsel %vm307, %v3602, 0
    %v3609 = vsel %vm307, %v3604, 0
    %3611 = vmatprep.subr.bf16.mxu0 0
    %3612 = vmatpush1.bf16.xpose.msra.mxu0 0
    %3613 = vmatprep.subr.bf16.mxu0 0
    %3614 = vmatpush1.bf16.xpose.msra.mxu0 0
    %3615 = vmatprep.subr.bf16.mxu0 0
    %3616 = vmatpush1.bf16.xpose.msra.mxu0 0
    %3617 = vmatprep.subr.bf16.mxu0 0
    %3618 = vmatpush1.bf16.xpose.msra.mxu0 0
    %3619 = vmatprep.subr.bf16.mxu0 0
    %3620 = vmatpush1.bf16.xpose.msra.mxu0 0
    %3621 = vmatprep.subr.bf16.mxu0 0
    %3622 = vmatpush1.bf16.xpose.msra.mxu0 0
    %3623 = vmatprep.subr.bf16.mxu0 0
    %3624 = vmatpush1.bf16.xpose.msra.mxu0 0
    %3625 = vmatprep.subr.bf16.mxu0 0
    %3626 = vmatpush1.bf16.xpose.msra.mxu0 %v3609
    %3627 = vmatprep.subr.bf16.mxu0 0
    %3628 = vmatpush2.bf16.xpose.msra.mxu0 0
    %3629 = vmatprep.subr.bf16.mxu0 0
    %3630 = vmatpush2.bf16.xpose.msra.mxu0 0
    %3631 = vmatprep.subr.bf16.mxu0 0
    %3632 = vmatpush2.bf16.xpose.msra.mxu0 0
    %3633 = vmatprep.subr.bf16.mxu0 0
    %3634 = vmatpush2.bf16.xpose.msra.mxu0 0
    %3635 = vmatprep.subr.bf16.mxu0 0
    %3636 = vmatpush2.bf16.xpose.msra.mxu0 0
    %3637 = vmatprep.subr.bf16.mxu0 0
    %3638 = vmatpush2.bf16.xpose.msra.mxu0 0
    %3639 = vmatprep.subr.bf16.mxu0 0
    %3640 = vmatpush2.bf16.xpose.msra.mxu0 0
    %3641 = vmatprep.subr.bf16.mxu0 0
    %3642 = vmatpush2.bf16.xpose.msra.mxu0 0
    %3643 = vmatprep.mubr.bf16.mxu0 0
    %3644 = vmatmul.mubr.bf16.gmra.mxu0 %v3606
    %v3645 = vpop.f32.mrf.mxu0
    %v3646 = vadd.f32 0.0, %v3645
    %v3647 = vpop.f32.mrf.mxu0
    %v3648 = vpop.f32.mrf.mxu0
    %v3649 = vpop.f32.mrf.mxu0
    %3650 = vdwg.mxu0
    %v3651 = vsel %vm307, %v3646, -inf
    %3652 = vmax.xlane.f32.xlu0 %v3651
    %v3653 = vpop.xlane.xlu0 %3652
    %v3654 = vsub.f32 %v3646, %v3653
    %v3655 = vmul.f32 %v3654, 1.442695
    %v3656 = vpow.pop %v3655
    %v3657 = vsel %vm307, %v3656, 0.0
    %3658 = vadd.xlane.f32.xlu0 %v3657
    %v3659 = vpop.xlane.xlu0 %3658
    %v3660 = vrcp.pop %v3659
    %v3661 = vmul.f32 %v3656, %v3660
    %v3662 = vpack.c.bf16 %v3661, %v3661
    %3663 = vrot.lane.b32.xlu0 %v3383, 112
    %v3664 = vpop.permute.xlu0 %3663
    %v3666 = vsel %vm307, %v3662, 0
    %v3669 = vsel %vm369, %v3664, 0
    %3671 = vmatprep.subr.bf16.mxu0 0
    %3672 = vmatpush1.bf16.msra.mxu0 0
    %3673 = vmatprep.subr.bf16.mxu0 0
    %3674 = vmatpush1.bf16.msra.mxu0 0
    %3675 = vmatprep.subr.bf16.mxu0 0
    %3676 = vmatpush1.bf16.msra.mxu0 0
    %3677 = vmatprep.subr.bf16.mxu0 0
    %3678 = vmatpush1.bf16.msra.mxu0 0
    %3679 = vmatprep.subr.bf16.mxu0 0
    %3680 = vmatpush1.bf16.msra.mxu0 0
    %3681 = vmatprep.subr.bf16.mxu0 0
    %3682 = vmatpush1.bf16.msra.mxu0 0
    %3683 = vmatprep.subr.bf16.mxu0 0
    %3684 = vmatpush1.bf16.msra.mxu0 0
    %3685 = vmatprep.subr.bf16.mxu0 0
    %3686 = vmatpush1.bf16.msra.mxu0 %v3669
    %3687 = vmatprep.subr.bf16.mxu0 0
    %3688 = vmatpush2.bf16.msra.mxu0 0
    %3689 = vmatprep.subr.bf16.mxu0 0
    %3690 = vmatpush2.bf16.msra.mxu0 0
    %3691 = vmatprep.subr.bf16.mxu0 0
    %3692 = vmatpush2.bf16.msra.mxu0 0
    %3693 = vmatprep.subr.bf16.mxu0 0
    %3694 = vmatpush2.bf16.msra.mxu0 0
    %3695 = vmatprep.subr.bf16.mxu0 0
    %3696 = vmatpush2.bf16.msra.mxu0 0
    %3697 = vmatprep.subr.bf16.mxu0 0
    %3698 = vmatpush2.bf16.msra.mxu0 0
    %3699 = vmatprep.subr.bf16.mxu0 0
    %3700 = vmatpush2.bf16.msra.mxu0 0
    %3701 = vmatprep.subr.bf16.mxu0 0
    %3702 = vmatpush2.bf16.msra.mxu0 0
    %3703 = vmatprep.mubr.bf16.mxu0 0
    %3704 = vmatmul.mubr.bf16.gmra.mxu0 %v3666
    %v3705 = vpop.f32.mrf.mxu0
    %v3706 = vadd.f32 0.0, %v3705
    %v3707 = vpop.f32.mrf.mxu0
    %v3708 = vpop.f32.mrf.mxu0
    %v3709 = vpop.f32.mrf.mxu0
    %3710 = vdwg.mxu0
    %3711 = vrot.lane.b32.xlu0 %v3381, 104
    %v3712 = vpop.permute.xlu0 %3711
    %3713 = vrot.lane.b32.xlu0 %v3382, 104
    %v3714 = vpop.permute.xlu0 %3713
    %v3716 = vsel %vm307, %v3712, 0
    %v3719 = vsel %vm307, %v3714, 0
    %3721 = vmatprep.subr.bf16.mxu0 0
    %3722 = vmatpush1.bf16.xpose.msra.mxu0 0
    %3723 = vmatprep.subr.bf16.mxu0 0
    %3724 = vmatpush1.bf16.xpose.msra.mxu0 0
    %3725 = vmatprep.subr.bf16.mxu0 0
    %3726 = vmatpush1.bf16.xpose.msra.mxu0 0
    %3727 = vmatprep.subr.bf16.mxu0 0
    %3728 = vmatpush1.bf16.xpose.msra.mxu0 0
    %3729 = vmatprep.subr.bf16.mxu0 0
    %3730 = vmatpush1.bf16.xpose.msra.mxu0 0
    %3731 = vmatprep.subr.bf16.mxu0 0
    %3732 = vmatpush1.bf16.xpose.msra.mxu0 0
    %3733 = vmatprep.subr.bf16.mxu0 0
    %3734 = vmatpush1.bf16.xpose.msra.mxu0 0
    %3735 = vmatprep.subr.bf16.mxu0 0
    %3736 = vmatpush1.bf16.xpose.msra.mxu0 %v3719
    %3737 = vmatprep.subr.bf16.mxu0 0
    %3738 = vmatpush2.bf16.xpose.msra.mxu0 0
    %3739 = vmatprep.subr.bf16.mxu0 0
    %3740 = vmatpush2.bf16.xpose.msra.mxu0 0
    %3741 = vmatprep.subr.bf16.mxu0 0
    %3742 = vmatpush2.bf16.xpose.msra.mxu0 0
    %3743 = vmatprep.subr.bf16.mxu0 0
    %3744 = vmatpush2.bf16.xpose.msra.mxu0 0
    %3745 = vmatprep.subr.bf16.mxu0 0
    %3746 = vmatpush2.bf16.xpose.msra.mxu0 0
    %3747 = vmatprep.subr.bf16.mxu0 0
    %3748 = vmatpush2.bf16.xpose.msra.mxu0 0
    %3749 = vmatprep.subr.bf16.mxu0 0
    %3750 = vmatpush2.bf16.xpose.msra.mxu0 0
    %3751 = vmatprep.subr.bf16.mxu0 0
    %3752 = vmatpush2.bf16.xpose.msra.mxu0 0
    %3753 = vmatprep.mubr.bf16.mxu0 0
    %3754 = vmatmul.mubr.bf16.gmra.mxu0 %v3716
    %v3755 = vpop.f32.mrf.mxu0
    %v3756 = vadd.f32 0.0, %v3755
    %v3757 = vpop.f32.mrf.mxu0
    %v3758 = vpop.f32.mrf.mxu0
    %v3759 = vpop.f32.mrf.mxu0
    %3760 = vdwg.mxu0
    %v3761 = vsel %vm307, %v3756, -inf
    %3762 = vmax.xlane.f32.xlu0 %v3761
    %v3763 = vpop.xlane.xlu0 %3762
    %v3764 = vsub.f32 %v3756, %v3763
    %v3765 = vmul.f32 %v3764, 1.442695
    %v3766 = vpow.pop %v3765
    %v3767 = vsel %vm307, %v3766, 0.0
    %3768 = vadd.xlane.f32.xlu0 %v3767
    %v3769 = vpop.xlane.xlu0 %3768
    %v3770 = vrcp.pop %v3769
    %v3771 = vmul.f32 %v3766, %v3770
    %v3772 = vpack.c.bf16 %v3771, %v3771
    %3773 = vrot.lane.b32.xlu0 %v3383, 104
    %v3774 = vpop.permute.xlu0 %3773
    %v3776 = vsel %vm307, %v3772, 0
    %v3779 = vsel %vm369, %v3774, 0
    %3781 = vmatprep.subr.bf16.mxu0 0
    %3782 = vmatpush1.bf16.msra.mxu0 0
    %3783 = vmatprep.subr.bf16.mxu0 0
    %3784 = vmatpush1.bf16.msra.mxu0 0
    %3785 = vmatprep.subr.bf16.mxu0 0
    %3786 = vmatpush1.bf16.msra.mxu0 0
    %3787 = vmatprep.subr.bf16.mxu0 0
    %3788 = vmatpush1.bf16.msra.mxu0 0
    %3789 = vmatprep.subr.bf16.mxu0 0
    %3790 = vmatpush1.bf16.msra.mxu0 0
    %3791 = vmatprep.subr.bf16.mxu0 0
    %3792 = vmatpush1.bf16.msra.mxu0 0
    %3793 = vmatprep.subr.bf16.mxu0 0
    %3794 = vmatpush1.bf16.msra.mxu0 0
    %3795 = vmatprep.subr.bf16.mxu0 0
    %3796 = vmatpush1.bf16.msra.mxu0 %v3779
    %3797 = vmatprep.subr.bf16.mxu0 0
    %3798 = vmatpush2.bf16.msra.mxu0 0
    %3799 = vmatprep.subr.bf16.mxu0 0
    %3800 = vmatpush2.bf16.msra.mxu0 0
    %3801 = vmatprep.subr.bf16.mxu0 0
    %3802 = vmatpush2.bf16.msra.mxu0 0
    %3803 = vmatprep.subr.bf16.mxu0 0
    %3804 = vmatpush2.bf16.msra.mxu0 0
    %3805 = vmatprep.subr.bf16.mxu0 0
    %3806 = vmatpush2.bf16.msra.mxu0 0
    %3807 = vmatprep.subr.bf16.mxu0 0
    %3808 = vmatpush2.bf16.msra.mxu0 0
    %3809 = vmatprep.subr.bf16.mxu0 0
    %3810 = vmatpush2.bf16.msra.mxu0 0
    %3811 = vmatprep.subr.bf16.mxu0 0
    %3812 = vmatpush2.bf16.msra.mxu0 0
    %3813 = vmatprep.mubr.bf16.mxu0 0
    %3814 = vmatmul.mubr.bf16.gmra.mxu0 %v3776
    %v3815 = vpop.f32.mrf.mxu0
    %v3816 = vadd.f32 0.0, %v3815
    %v3817 = vpop.f32.mrf.mxu0
    %v3818 = vpop.f32.mrf.mxu0
    %v3819 = vpop.f32.mrf.mxu0
    %3820 = vdwg.mxu0
    %3822 = vrot.lane.b32.xlu0 %v3596, 8
    %v3823 = vpop.permute.xlu0 %3822
    %3826 = vrot.lane.b32.xlu0 %v3706, 16
    %v3827 = vpop.permute.xlu0 %3826
    %3830 = vrot.lane.b32.xlu0 %v3816, 24
    %v3831 = vpop.permute.xlu0 %3830
    %v3833 = vsel %vm307, %v3483, %v3823
    %v3834 = vsel %vm759, %v3833, %v3827
    %v3835 = vsel %vm761, %v3834, %v3831
    %v3836 = vpack.c.bf16 %v3835, %v3379
    %v3837 = vlaneseq
    %v3838 = vshrl.u32 %v3837, 7
    %v3839 = vsub.s32 3, %v3838
    %v3840 = vrot.slane %v79, %v3839
    %v3845 = vunpack.c.l.b16 %v2723
    %v3846 = vunpack.c.l.b16 %v2724
    %v3847 = vunpack.c.l.b16 %v2725
    %v3848 = vunpack.c.l.b16 %v2726
    %v3849 = vpack.c.b16 %v3846, %v3845
    %v3850 = vpack.c.b16 %v3848, %v3847
    %v3854 = vsel %vm141, %v3836, 0
    %3856 = vmatprep.subr.bf16.mxu0 0
    %3857 = vmatpush1.bf16.msra.mxu0 0
    %3858 = vmatprep.subr.bf16.mxu0 0
    %3859 = vmatpush1.bf16.msra.mxu0 0
    %3860 = vmatprep.subr.bf16.mxu0 0
    %3861 = vmatpush1.bf16.msra.mxu0 0
    %3862 = vmatprep.subr.bf16.mxu0 0
    %3863 = vmatpush1.bf16.msra.mxu0 0
    %3864 = vmatprep.subr.bf16.mxu0 0
    %3865 = vmatpush1.bf16.msra.mxu0 0
    %3866 = vmatprep.subr.bf16.mxu0 0
    %3867 = vmatpush1.bf16.msra.mxu0 0
    %3868 = vmatprep.subr.bf16.mxu0 0
    %3869 = vmatpush1.bf16.msra.mxu0 %v3850
    %3870 = vmatprep.subr.bf16.mxu0 0
    %3871 = vmatpush1.bf16.msra.mxu0 %v3849
    %3872 = vmatprep.subr.bf16.mxu0 0
    %3873 = vmatpush2.bf16.msra.mxu0 0
    %3874 = vmatprep.subr.bf16.mxu0 0
    %3875 = vmatpush2.bf16.msra.mxu0 0
    %3876 = vmatprep.subr.bf16.mxu0 0
    %3877 = vmatpush2.bf16.msra.mxu0 0
    %3878 = vmatprep.subr.bf16.mxu0 0
    %3879 = vmatpush2.bf16.msra.mxu0 0
    %3880 = vmatprep.subr.bf16.mxu0 0
    %3881 = vmatpush2.bf16.msra.mxu0 0
    %3882 = vmatprep.subr.bf16.mxu0 0
    %3883 = vmatpush2.bf16.msra.mxu0 0
    %3884 = vmatprep.subr.bf16.mxu0 0
    %3885 = vmatpush2.bf16.msra.mxu0 0
    %3886 = vmatprep.subr.bf16.mxu0 0
    %3887 = vmatpush2.bf16.msra.mxu0 0
    %3888 = vmatprep.mubr.bf16.mxu0 0
    %3889 = vmatmul.mubr.bf16.gmra.mxu0 %v3854
    %v3890 = vpop.f32.mrf.mxu0
    %v3891 = vadd.f32 %v3840, %v3890
    %v3892 = vpop.f32.mrf.mxu0
    %v3893 = vpop.f32.mrf.mxu0
    %v3894 = vadd.f32 %v3840, %v3893
    %v3895 = vpop.f32.mrf.mxu0
    %3896 = vdwg.mxu0
    %v3897 = vadd.f32 %v3891, %v2708
    %v3898 = vadd.f32 %v3894, %v2709
    %v3899 = vsel %vm141, %v3897, 0.0
    %3900 = vadd.xlane.f32.xlu0 %v3899
    %v3901 = vpop.xlane.xlu0 %3900
    %v3902 = vsel %vm141, %v3898, 0.0
    %3903 = vadd.xlane.f32.xlu0 %v3902
    %v3904 = vpop.xlane.xlu0 %3903
    %v3905 = vmul.f32 %v3901, %v1288
    %v3906 = vmul.f32 %v3904, %v1288
    %v3907 = vsub.f32 %v3897, %v3905
    %v3908 = vsub.f32 %v3898, %v3906
    %v3909 = vmul.f32 %v3907, %v3907
    %v3910 = vmul.f32 %v3908, %v3908
    %v3911 = vsel %vm141, %v3909, 0.0
    %3912 = vadd.xlane.f32.xlu0 %v3911
    %v3913 = vpop.xlane.xlu0 %3912
    %v3914 = vsel %vm141, %v3910, 0.0
    %3915 = vadd.xlane.f32.xlu0 %v3914
    %v3916 = vpop.xlane.xlu0 %3915
    %v3917 = vmul.f32 %v3913, %v1288
    %v3918 = vmul.f32 %v3916, %v1288
    %v3919 = vadd.f32 %v3917, 1e-05
    %v3920 = vadd.f32 %v3918, 1e-05
    %v3921 = vrsqrt.pop %v3919
    %v3922 = vrsqrt.pop %v3920
    %v3923 = vmul.f32 %v3907, %v3921
    %v3924 = vmul.f32 %v3908, %v3922
    %v3925 = vlaneseq
    %v3926 = vshrl.u32 %v3925, 7
    %v3927 = vsub.s32 1, %v3926
    %v3928 = vrot.slane %v80, %v3927
    %v3929 = vmul.f32 %v3923, %v3928
    %v3930 = vmul.f32 %v3924, %v3928
    %v3931 = vlaneseq
    %v3932 = vshrl.u32 %v3931, 7
    %v3933 = vsub.s32 2, %v3932
    %v3934 = vrot.slane %v80, %v3933
    %v3935 = vadd.f32 %v3929, %v3934
    %v3936 = vadd.f32 %v3930, %v3934
    %v3937 = vadd.f32 %v3935, %v66
    %v3938 = vadd.f32 %v3936, %v67
    %v3939 = vpack.c.bf16 %v3938, %v3937
    %v3940 = vlaneseq
    %v3941 = vshrl.u32 %v3940, 7
    %v3942 = vsub.s32 4, %v3941
    %v3943 = vrot.slane %v79, %v3942
    %v3948 = vunpack.c.l.b16 %v2727
    %v3949 = vunpack.c.l.b16 %v2728
    %v3950 = vunpack.c.l.b16 %v2729
    %v3951 = vunpack.c.l.b16 %v2730
    %v3952 = vpack.c.b16 %v3949, %v3948
    %v3953 = vpack.c.b16 %v3951, %v3950
    %v3957 = vsel %vm141, %v3939, 0
    %3959 = vmatprep.subr.bf16.mxu0 0
    %3960 = vmatpush1.bf16.msra.mxu0 0
    %3961 = vmatprep.subr.bf16.mxu0 0
    %3962 = vmatpush1.bf16.msra.mxu0 0
    %3963 = vmatprep.subr.bf16.mxu0 0
    %3964 = vmatpush1.bf16.msra.mxu0 0
    %3965 = vmatprep.subr.bf16.mxu0 0
    %3966 = vmatpush1.bf16.msra.mxu0 0
    %3967 = vmatprep.subr.bf16.mxu0 0
    %3968 = vmatpush1.bf16.msra.mxu0 0
    %3969 = vmatprep.subr.bf16.mxu0 0
    %3970 = vmatpush1.bf16.msra.mxu0 0
    %3971 = vmatprep.subr.bf16.mxu0 0
    %3972 = vmatpush1.bf16.msra.mxu0 %v3953
    %3973 = vmatprep.subr.bf16.mxu0 0
    %3974 = vmatpush1.bf16.msra.mxu0 %v3952
    %3975 = vmatprep.subr.bf16.mxu0 0
    %3976 = vmatpush2.bf16.msra.mxu0 0
    %3977 = vmatprep.subr.bf16.mxu0 0
    %3978 = vmatpush2.bf16.msra.mxu0 0
    %3979 = vmatprep.subr.bf16.mxu0 0
    %3980 = vmatpush2.bf16.msra.mxu0 0
    %3981 = vmatprep.subr.bf16.mxu0 0
    %3982 = vmatpush2.bf16.msra.mxu0 0
    %3983 = vmatprep.subr.bf16.mxu0 0
    %3984 = vmatpush2.bf16.msra.mxu0 0
    %3985 = vmatprep.subr.bf16.mxu0 0
    %3986 = vmatpush2.bf16.msra.mxu0 0
    %3987 = vmatprep.subr.bf16.mxu0 0
    %3988 = vmatpush2.bf16.msra.mxu0 0
    %3989 = vmatprep.subr.bf16.mxu0 0
    %3990 = vmatpush2.bf16.msra.mxu0 0
    %3991 = vmatprep.mubr.bf16.mxu0 0
    %3992 = vmatmul.mubr.bf16.gmra.mxu0 %v3957
    %v3993 = vpop.f32.mrf.mxu0
    %v3994 = vadd.f32 %v3943, %v3993
    %v3995 = vpop.f32.mrf.mxu0
    %v3996 = vpop.f32.mrf.mxu0
    %v3997 = vadd.f32 %v3943, %v3996
    %v3998 = vpop.f32.mrf.mxu0
    %3999 = vdwg.mxu0
    %v4000 = vlaneseq
    %v4001 = vshrl.u32 %v4000, 7
    %v4002 = vsub.s32 5, %v4001
    %v4003 = vrot.slane %v79, %v4002
    %v4008 = vunpack.c.l.b16 %v2731
    %v4009 = vunpack.c.l.b16 %v2732
    %v4010 = vunpack.c.l.b16 %v2733
    %v4011 = vunpack.c.l.b16 %v2734
    %v4012 = vpack.c.b16 %v4009, %v4008
    %v4013 = vpack.c.b16 %v4011, %v4010
    %4016 = vmatprep.subr.bf16.mxu0 0
    %4017 = vmatpush1.bf16.msra.mxu0 0
    %4018 = vmatprep.subr.bf16.mxu0 0
    %4019 = vmatpush1.bf16.msra.mxu0 0
    %4020 = vmatprep.subr.bf16.mxu0 0
    %4021 = vmatpush1.bf16.msra.mxu0 0
    %4022 = vmatprep.subr.bf16.mxu0 0
    %4023 = vmatpush1.bf16.msra.mxu0 0
    %4024 = vmatprep.subr.bf16.mxu0 0
    %4025 = vmatpush1.bf16.msra.mxu0 0
    %4026 = vmatprep.subr.bf16.mxu0 0
    %4027 = vmatpush1.bf16.msra.mxu0 0
    %4028 = vmatprep.subr.bf16.mxu0 0
    %4029 = vmatpush1.bf16.msra.mxu0 %v4013
    %4030 = vmatprep.subr.bf16.mxu0 0
    %4031 = vmatpush1.bf16.msra.mxu0 %v4012
    %4032 = vmatprep.subr.bf16.mxu0 0
    %4033 = vmatpush2.bf16.msra.mxu0 0
    %4034 = vmatprep.subr.bf16.mxu0 0
    %4035 = vmatpush2.bf16.msra.mxu0 0
    %4036 = vmatprep.subr.bf16.mxu0 0
    %4037 = vmatpush2.bf16.msra.mxu0 0
    %4038 = vmatprep.subr.bf16.mxu0 0
    %4039 = vmatpush2.bf16.msra.mxu0 0
    %4040 = vmatprep.subr.bf16.mxu0 0
    %4041 = vmatpush2.bf16.msra.mxu0 0
    %4042 = vmatprep.subr.bf16.mxu0 0
    %4043 = vmatpush2.bf16.msra.mxu0 0
    %4044 = vmatprep.subr.bf16.mxu0 0
    %4045 = vmatpush2.bf16.msra.mxu0 0
    %4046 = vmatprep.subr.bf16.mxu0 0
    %4047 = vmatpush2.bf16.msra.mxu0 0
    %4048 = vmatprep.mubr.bf16.mxu0 0
    %4049 = vmatmul.mubr.bf16.gmra.mxu0 %v1401
    %v4050 = vpop.f32.mrf.mxu0
    %v4051 = vadd.f32 %v4003, %v4050
    %v4052 = vpop.f32.mrf.mxu0
    %v4053 = vpop.f32.mrf.mxu0
    %v4054 = vadd.f32 %v4003, %v4053
    %v4055 = vpop.f32.mrf.mxu0
    %4056 = vmatprep.mubr.bf16.mxu0 0
    %4057 = vmatmul.mubr.bf16.gmra.mxu0 %v1404
    %v4058 = vpop.f32.mrf.mxu0
    %v4059 = vadd.f32 %v4003, %v4058
    %v4060 = vpop.f32.mrf.mxu0
    %v4061 = vpop.f32.mrf.mxu0
    %v4062 = vadd.f32 %v4003, %v4061
    %v4063 = vpop.f32.mrf.mxu0
    %4064 = vdwg.mxu0
    %v4065 = vlaneseq
    %v4066 = vshrl.u32 %v4065, 7
    %v4067 = vsub.s32 6, %v4066
    %v4068 = vrot.slane %v79, %v4067
    %v4073 = vunpack.c.l.b16 %v2735
    %v4074 = vunpack.c.l.b16 %v2736
    %v4075 = vunpack.c.l.b16 %v2737
    %v4076 = vunpack.c.l.b16 %v2738
    %v4077 = vpack.c.b16 %v4074, %v4073
    %v4078 = vpack.c.b16 %v4076, %v4075
    %4081 = vmatprep.subr.bf16.mxu0 0
    %4082 = vmatpush1.bf16.msra.mxu0 0
    %4083 = vmatprep.subr.bf16.mxu0 0
    %4084 = vmatpush1.bf16.msra.mxu0 0
    %4085 = vmatprep.subr.bf16.mxu0 0
    %4086 = vmatpush1.bf16.msra.mxu0 0
    %4087 = vmatprep.subr.bf16.mxu0 0
    %4088 = vmatpush1.bf16.msra.mxu0 0
    %4089 = vmatprep.subr.bf16.mxu0 0
    %4090 = vmatpush1.bf16.msra.mxu0 0
    %4091 = vmatprep.subr.bf16.mxu0 0
    %4092 = vmatpush1.bf16.msra.mxu0 0
    %4093 = vmatprep.subr.bf16.mxu0 0
    %4094 = vmatpush1.bf16.msra.mxu0 %v4078
    %4095 = vmatprep.subr.bf16.mxu0 0
    %4096 = vmatpush1.bf16.msra.mxu0 %v4077
    %4097 = vmatprep.subr.bf16.mxu0 0
    %4098 = vmatpush2.bf16.msra.mxu0 0
    %4099 = vmatprep.subr.bf16.mxu0 0
    %4100 = vmatpush2.bf16.msra.mxu0 0
    %4101 = vmatprep.subr.bf16.mxu0 0
    %4102 = vmatpush2.bf16.msra.mxu0 0
    %4103 = vmatprep.subr.bf16.mxu0 0
    %4104 = vmatpush2.bf16.msra.mxu0 0
    %4105 = vmatprep.subr.bf16.mxu0 0
    %4106 = vmatpush2.bf16.msra.mxu0 0
    %4107 = vmatprep.subr.bf16.mxu0 0
    %4108 = vmatpush2.bf16.msra.mxu0 0
    %4109 = vmatprep.subr.bf16.mxu0 0
    %4110 = vmatpush2.bf16.msra.mxu0 0
    %4111 = vmatprep.subr.bf16.mxu0 0
    %4112 = vmatpush2.bf16.msra.mxu0 0
    %4113 = vmatprep.mubr.bf16.mxu0 0
    %4114 = vmatmul.mubr.bf16.gmra.mxu0 %v1472
    %v4115 = vpop.f32.mrf.mxu0
    %v4116 = vadd.f32 %v4068, %v4115
    %v4117 = vpop.f32.mrf.mxu0
    %v4118 = vpop.f32.mrf.mxu0
    %v4119 = vadd.f32 %v4068, %v4118
    %v4120 = vpop.f32.mrf.mxu0
    %4121 = vmatprep.mubr.bf16.mxu0 0
    %4122 = vmatmul.mubr.bf16.gmra.mxu0 %v1475
    %v4123 = vpop.f32.mrf.mxu0
    %v4124 = vadd.f32 %v4068, %v4123
    %v4125 = vpop.f32.mrf.mxu0
    %v4126 = vpop.f32.mrf.mxu0
    %v4127 = vadd.f32 %v4068, %v4126
    %v4128 = vpop.f32.mrf.mxu0
    %4129 = vdwg.mxu0
    %v4130 = vmul.f32 %v3994, 0.35355338
    %v4131 = vpack.c.bf16 %v4130, %v4130
    %v4132 = vpack.c.bf16 %v4054, %v4051
    %v4133 = vpack.c.bf16 %v4119, %v4116
    %v4135 = vsel %vm307, %v4131, 0
    %v4138 = vsel %vm307, %v4132, 0
    %4140 = vmatprep.subr.bf16.mxu0 0
    %4141 = vmatpush1.bf16.xpose.msra.mxu0 0
    %4142 = vmatprep.subr.bf16.mxu0 0
    %4143 = vmatpush1.bf16.xpose.msra.mxu0 0
    %4144 = vmatprep.subr.bf16.mxu0 0
    %4145 = vmatpush1.bf16.xpose.msra.mxu0 0
    %4146 = vmatprep.subr.bf16.mxu0 0
    %4147 = vmatpush1.bf16.xpose.msra.mxu0 0
    %4148 = vmatprep.subr.bf16.mxu0 0
    %4149 = vmatpush1.bf16.xpose.msra.mxu0 0
    %4150 = vmatprep.subr.bf16.mxu0 0
    %4151 = vmatpush1.bf16.xpose.msra.mxu0 0
    %4152 = vmatprep.subr.bf16.mxu0 0
    %4153 = vmatpush1.bf16.xpose.msra.mxu0 0
    %4154 = vmatprep.subr.bf16.mxu0 0
    %4155 = vmatpush1.bf16.xpose.msra.mxu0 %v4138
    %4156 = vmatprep.subr.bf16.mxu0 0
    %4157 = vmatpush2.bf16.xpose.msra.mxu0 0
    %4158 = vmatprep.subr.bf16.mxu0 0
    %4159 = vmatpush2.bf16.xpose.msra.mxu0 0
    %4160 = vmatprep.subr.bf16.mxu0 0
    %4161 = vmatpush2.bf16.xpose.msra.mxu0 0
    %4162 = vmatprep.subr.bf16.mxu0 0
    %4163 = vmatpush2.bf16.xpose.msra.mxu0 0
    %4164 = vmatprep.subr.bf16.mxu0 0
    %4165 = vmatpush2.bf16.xpose.msra.mxu0 0
    %4166 = vmatprep.subr.bf16.mxu0 0
    %4167 = vmatpush2.bf16.xpose.msra.mxu0 0
    %4168 = vmatprep.subr.bf16.mxu0 0
    %4169 = vmatpush2.bf16.xpose.msra.mxu0 0
    %4170 = vmatprep.subr.bf16.mxu0 0
    %4171 = vmatpush2.bf16.xpose.msra.mxu0 0
    %4172 = vmatprep.mubr.bf16.mxu0 0
    %4173 = vmatmul.mubr.bf16.gmra.mxu0 %v4135
    %v4174 = vpop.f32.mrf.mxu0
    %v4175 = vadd.f32 0.0, %v4174
    %v4176 = vpop.f32.mrf.mxu0
    %v4177 = vpop.f32.mrf.mxu0
    %v4178 = vpop.f32.mrf.mxu0
    %4179 = vdwg.mxu0
    %v4180 = vsel %vm759, %v4175, -inf
    %4181 = vmax.xlane.f32.xlu0 %v4180
    %v4182 = vpop.xlane.xlu0 %4181
    %v4183 = vsub.f32 %v4175, %v4182
    %v4184 = vmul.f32 %v4183, 1.442695
    %v4185 = vpow.pop %v4184
    %v4186 = vsel %vm759, %v4185, 0.0
    %4187 = vadd.xlane.f32.xlu0 %v4186
    %v4188 = vpop.xlane.xlu0 %4187
    %v4189 = vrcp.pop %v4188
    %v4190 = vmul.f32 %v4185, %v4189
    %v4191 = vpack.c.bf16 %v4190, %v4190
    %v4193 = vsel %vm759, %v4191, 0
    %4195 = vmatprep.subr.bf16.mxu0 0
    %4196 = vmatpush1.bf16.msra.mxu0 0
    %4197 = vmatprep.subr.bf16.mxu0 0
    %4198 = vmatpush1.bf16.msra.mxu0 0
    %4199 = vmatprep.subr.bf16.mxu0 0
    %4200 = vmatpush1.bf16.msra.mxu0 0
    %4201 = vmatprep.subr.bf16.mxu0 0
    %4202 = vmatpush1.bf16.msra.mxu0 0
    %4203 = vmatprep.subr.bf16.mxu0 0
    %4204 = vmatpush1.bf16.msra.mxu0 0
    %4205 = vmatprep.subr.bf16.mxu0 0
    %4206 = vmatpush1.bf16.msra.mxu0 0
    %4207 = vmatprep.subr.bf16.mxu0 0
    %4208 = vmatpush1.bf16.msra.mxu0 0
    %4209 = vmatprep.subr.bf16.mxu0 0
    %4210 = vmatpush1.bf16.msra.mxu0 %v4133
    %4211 = vmatprep.subr.bf16.mxu0 0
    %4212 = vmatpush2.bf16.msra.mxu0 0
    %4213 = vmatprep.subr.bf16.mxu0 0
    %4214 = vmatpush2.bf16.msra.mxu0 0
    %4215 = vmatprep.subr.bf16.mxu0 0
    %4216 = vmatpush2.bf16.msra.mxu0 0
    %4217 = vmatprep.subr.bf16.mxu0 0
    %4218 = vmatpush2.bf16.msra.mxu0 0
    %4219 = vmatprep.subr.bf16.mxu0 0
    %4220 = vmatpush2.bf16.msra.mxu0 0
    %4221 = vmatprep.subr.bf16.mxu0 0
    %4222 = vmatpush2.bf16.msra.mxu0 0
    %4223 = vmatprep.subr.bf16.mxu0 0
    %4224 = vmatpush2.bf16.msra.mxu0 0
    %4225 = vmatprep.subr.bf16.mxu0 0
    %4226 = vmatpush2.bf16.msra.mxu0 0
    %4227 = vmatprep.mubr.bf16.mxu0 0
    %4228 = vmatmul.mubr.bf16.gmra.mxu0 %v4193
    %v4229 = vpop.f32.mrf.mxu0
    %v4230 = vadd.f32 0.0, %v4229
    %v4231 = vpop.f32.mrf.mxu0
    %v4232 = vpop.f32.mrf.mxu0
    %v4233 = vpop.f32.mrf.mxu0
    %4234 = vdwg.mxu0
    %4236 = vrot.lane.b32.xlu0 %v4131, 120
    %v4237 = vpop.permute.xlu0 %4236
    %4239 = vrot.lane.b32.xlu0 %v4132, 120
    %v4240 = vpop.permute.xlu0 %4239
    %v4242 = vsel %vm307, %v4237, 0
    %v4245 = vsel %vm307, %v4240, 0
    %4247 = vmatprep.subr.bf16.mxu0 0
    %4248 = vmatpush1.bf16.xpose.msra.mxu0 0
    %4249 = vmatprep.subr.bf16.mxu0 0
    %4250 = vmatpush1.bf16.xpose.msra.mxu0 0
    %4251 = vmatprep.subr.bf16.mxu0 0
    %4252 = vmatpush1.bf16.xpose.msra.mxu0 0
    %4253 = vmatprep.subr.bf16.mxu0 0
    %4254 = vmatpush1.bf16.xpose.msra.mxu0 0
    %4255 = vmatprep.subr.bf16.mxu0 0
    %4256 = vmatpush1.bf16.xpose.msra.mxu0 0
    %4257 = vmatprep.subr.bf16.mxu0 0
    %4258 = vmatpush1.bf16.xpose.msra.mxu0 0
    %4259 = vmatprep.subr.bf16.mxu0 0
    %4260 = vmatpush1.bf16.xpose.msra.mxu0 0
    %4261 = vmatprep.subr.bf16.mxu0 0
    %4262 = vmatpush1.bf16.xpose.msra.mxu0 %v4245
    %4263 = vmatprep.subr.bf16.mxu0 0
    %4264 = vmatpush2.bf16.xpose.msra.mxu0 0
    %4265 = vmatprep.subr.bf16.mxu0 0
    %4266 = vmatpush2.bf16.xpose.msra.mxu0 0
    %4267 = vmatprep.subr.bf16.mxu0 0
    %4268 = vmatpush2.bf16.xpose.msra.mxu0 0
    %4269 = vmatprep.subr.bf16.mxu0 0
    %4270 = vmatpush2.bf16.xpose.msra.mxu0 0
    %4271 = vmatprep.subr.bf16.mxu0 0
    %4272 = vmatpush2.bf16.xpose.msra.mxu0 0
    %4273 = vmatprep.subr.bf16.mxu0 0
    %4274 = vmatpush2.bf16.xpose.msra.mxu0 0
    %4275 = vmatprep.subr.bf16.mxu0 0
    %4276 = vmatpush2.bf16.xpose.msra.mxu0 0
    %4277 = vmatprep.subr.bf16.mxu0 0
    %4278 = vmatpush2.bf16.xpose.msra.mxu0 0
    %4279 = vmatprep.mubr.bf16.mxu0 0
    %4280 = vmatmul.mubr.bf16.gmra.mxu0 %v4242
    %v4281 = vpop.f32.mrf.mxu0
    %v4282 = vadd.f32 0.0, %v4281
    %v4283 = vpop.f32.mrf.mxu0
    %v4284 = vpop.f32.mrf.mxu0
    %v4285 = vpop.f32.mrf.mxu0
    %4286 = vdwg.mxu0
    %v4287 = vsel %vm759, %v4282, -inf
    %4288 = vmax.xlane.f32.xlu0 %v4287
    %v4289 = vpop.xlane.xlu0 %4288
    %v4290 = vsub.f32 %v4282, %v4289
    %v4291 = vmul.f32 %v4290, 1.442695
    %v4292 = vpow.pop %v4291
    %v4293 = vsel %vm759, %v4292, 0.0
    %4294 = vadd.xlane.f32.xlu0 %v4293
    %v4295 = vpop.xlane.xlu0 %4294
    %v4296 = vrcp.pop %v4295
    %v4297 = vmul.f32 %v4292, %v4296
    %v4298 = vpack.c.bf16 %v4297, %v4297
    %4300 = vrot.lane.b32.xlu0 %v4133, 120
    %v4301 = vpop.permute.xlu0 %4300
    %v4304 = vsel %vm759, %v4298, 0
    %4306 = vmatprep.subr.bf16.mxu0 0
    %4307 = vmatpush1.bf16.msra.mxu0 0
    %4308 = vmatprep.subr.bf16.mxu0 0
    %4309 = vmatpush1.bf16.msra.mxu0 0
    %4310 = vmatprep.subr.bf16.mxu0 0
    %4311 = vmatpush1.bf16.msra.mxu0 0
    %4312 = vmatprep.subr.bf16.mxu0 0
    %4313 = vmatpush1.bf16.msra.mxu0 0
    %4314 = vmatprep.subr.bf16.mxu0 0
    %4315 = vmatpush1.bf16.msra.mxu0 0
    %4316 = vmatprep.subr.bf16.mxu0 0
    %4317 = vmatpush1.bf16.msra.mxu0 0
    %4318 = vmatprep.subr.bf16.mxu0 0
    %4319 = vmatpush1.bf16.msra.mxu0 0
    %4320 = vmatprep.subr.bf16.mxu0 0
    %4321 = vmatpush1.bf16.msra.mxu0 %v4301
    %4322 = vmatprep.subr.bf16.mxu0 0
    %4323 = vmatpush2.bf16.msra.mxu0 0
    %4324 = vmatprep.subr.bf16.mxu0 0
    %4325 = vmatpush2.bf16.msra.mxu0 0
    %4326 = vmatprep.subr.bf16.mxu0 0
    %4327 = vmatpush2.bf16.msra.mxu0 0
    %4328 = vmatprep.subr.bf16.mxu0 0
    %4329 = vmatpush2.bf16.msra.mxu0 0
    %4330 = vmatprep.subr.bf16.mxu0 0
    %4331 = vmatpush2.bf16.msra.mxu0 0
    %4332 = vmatprep.subr.bf16.mxu0 0
    %4333 = vmatpush2.bf16.msra.mxu0 0
    %4334 = vmatprep.subr.bf16.mxu0 0
    %4335 = vmatpush2.bf16.msra.mxu0 0
    %4336 = vmatprep.subr.bf16.mxu0 0
    %4337 = vmatpush2.bf16.msra.mxu0 0
    %4338 = vmatprep.mubr.bf16.mxu0 0
    %4339 = vmatmul.mubr.bf16.gmra.mxu0 %v4304
    %v4340 = vpop.f32.mrf.mxu0
    %v4341 = vadd.f32 0.0, %v4340
    %v4342 = vpop.f32.mrf.mxu0
    %v4343 = vpop.f32.mrf.mxu0
    %v4344 = vpop.f32.mrf.mxu0
    %4345 = vdwg.mxu0
    %4346 = vrot.lane.b32.xlu0 %v4131, 112
    %v4347 = vpop.permute.xlu0 %4346
    %4348 = vrot.lane.b32.xlu0 %v4132, 112
    %v4349 = vpop.permute.xlu0 %4348
    %v4351 = vsel %vm307, %v4347, 0
    %v4354 = vsel %vm307, %v4349, 0
    %4356 = vmatprep.subr.bf16.mxu0 0
    %4357 = vmatpush1.bf16.xpose.msra.mxu0 0
    %4358 = vmatprep.subr.bf16.mxu0 0
    %4359 = vmatpush1.bf16.xpose.msra.mxu0 0
    %4360 = vmatprep.subr.bf16.mxu0 0
    %4361 = vmatpush1.bf16.xpose.msra.mxu0 0
    %4362 = vmatprep.subr.bf16.mxu0 0
    %4363 = vmatpush1.bf16.xpose.msra.mxu0 0
    %4364 = vmatprep.subr.bf16.mxu0 0
    %4365 = vmatpush1.bf16.xpose.msra.mxu0 0
    %4366 = vmatprep.subr.bf16.mxu0 0
    %4367 = vmatpush1.bf16.xpose.msra.mxu0 0
    %4368 = vmatprep.subr.bf16.mxu0 0
    %4369 = vmatpush1.bf16.xpose.msra.mxu0 0
    %4370 = vmatprep.subr.bf16.mxu0 0
    %4371 = vmatpush1.bf16.xpose.msra.mxu0 %v4354
    %4372 = vmatprep.subr.bf16.mxu0 0
    %4373 = vmatpush2.bf16.xpose.msra.mxu0 0
    %4374 = vmatprep.subr.bf16.mxu0 0
    %4375 = vmatpush2.bf16.xpose.msra.mxu0 0
    %4376 = vmatprep.subr.bf16.mxu0 0
    %4377 = vmatpush2.bf16.xpose.msra.mxu0 0
    %4378 = vmatprep.subr.bf16.mxu0 0
    %4379 = vmatpush2.bf16.xpose.msra.mxu0 0
    %4380 = vmatprep.subr.bf16.mxu0 0
    %4381 = vmatpush2.bf16.xpose.msra.mxu0 0
    %4382 = vmatprep.subr.bf16.mxu0 0
    %4383 = vmatpush2.bf16.xpose.msra.mxu0 0
    %4384 = vmatprep.subr.bf16.mxu0 0
    %4385 = vmatpush2.bf16.xpose.msra.mxu0 0
    %4386 = vmatprep.subr.bf16.mxu0 0
    %4387 = vmatpush2.bf16.xpose.msra.mxu0 0
    %4388 = vmatprep.mubr.bf16.mxu0 0
    %4389 = vmatmul.mubr.bf16.gmra.mxu0 %v4351
    %v4390 = vpop.f32.mrf.mxu0
    %v4391 = vadd.f32 0.0, %v4390
    %v4392 = vpop.f32.mrf.mxu0
    %v4393 = vpop.f32.mrf.mxu0
    %v4394 = vpop.f32.mrf.mxu0
    %4395 = vdwg.mxu0
    %v4396 = vsel %vm759, %v4391, -inf
    %4397 = vmax.xlane.f32.xlu0 %v4396
    %v4398 = vpop.xlane.xlu0 %4397
    %v4399 = vsub.f32 %v4391, %v4398
    %v4400 = vmul.f32 %v4399, 1.442695
    %v4401 = vpow.pop %v4400
    %v4402 = vsel %vm759, %v4401, 0.0
    %4403 = vadd.xlane.f32.xlu0 %v4402
    %v4404 = vpop.xlane.xlu0 %4403
    %v4405 = vrcp.pop %v4404
    %v4406 = vmul.f32 %v4401, %v4405
    %v4407 = vpack.c.bf16 %v4406, %v4406
    %4408 = vrot.lane.b32.xlu0 %v4133, 112
    %v4409 = vpop.permute.xlu0 %4408
    %v4412 = vsel %vm759, %v4407, 0
    %4414 = vmatprep.subr.bf16.mxu0 0
    %4415 = vmatpush1.bf16.msra.mxu0 0
    %4416 = vmatprep.subr.bf16.mxu0 0
    %4417 = vmatpush1.bf16.msra.mxu0 0
    %4418 = vmatprep.subr.bf16.mxu0 0
    %4419 = vmatpush1.bf16.msra.mxu0 0
    %4420 = vmatprep.subr.bf16.mxu0 0
    %4421 = vmatpush1.bf16.msra.mxu0 0
    %4422 = vmatprep.subr.bf16.mxu0 0
    %4423 = vmatpush1.bf16.msra.mxu0 0
    %4424 = vmatprep.subr.bf16.mxu0 0
    %4425 = vmatpush1.bf16.msra.mxu0 0
    %4426 = vmatprep.subr.bf16.mxu0 0
    %4427 = vmatpush1.bf16.msra.mxu0 0
    %4428 = vmatprep.subr.bf16.mxu0 0
    %4429 = vmatpush1.bf16.msra.mxu0 %v4409
    %4430 = vmatprep.subr.bf16.mxu0 0
    %4431 = vmatpush2.bf16.msra.mxu0 0
    %4432 = vmatprep.subr.bf16.mxu0 0
    %4433 = vmatpush2.bf16.msra.mxu0 0
    %4434 = vmatprep.subr.bf16.mxu0 0
    %4435 = vmatpush2.bf16.msra.mxu0 0
    %4436 = vmatprep.subr.bf16.mxu0 0
    %4437 = vmatpush2.bf16.msra.mxu0 0
    %4438 = vmatprep.subr.bf16.mxu0 0
    %4439 = vmatpush2.bf16.msra.mxu0 0
    %4440 = vmatprep.subr.bf16.mxu0 0
    %4441 = vmatpush2.bf16.msra.mxu0 0
    %4442 = vmatprep.subr.bf16.mxu0 0
    %4443 = vmatpush2.bf16.msra.mxu0 0
    %4444 = vmatprep.subr.bf16.mxu0 0
    %4445 = vmatpush2.bf16.msra.mxu0 0
    %4446 = vmatprep.mubr.bf16.mxu0 0
    %4447 = vmatmul.mubr.bf16.gmra.mxu0 %v4412
    %v4448 = vpop.f32.mrf.mxu0
    %v4449 = vadd.f32 0.0, %v4448
    %v4450 = vpop.f32.mrf.mxu0
    %v4451 = vpop.f32.mrf.mxu0
    %v4452 = vpop.f32.mrf.mxu0
    %4453 = vdwg.mxu0
    %4454 = vrot.lane.b32.xlu0 %v4131, 104
    %v4455 = vpop.permute.xlu0 %4454
    %4456 = vrot.lane.b32.xlu0 %v4132, 104
    %v4457 = vpop.permute.xlu0 %4456
    %v4459 = vsel %vm307, %v4455, 0
    %v4462 = vsel %vm307, %v4457, 0
    %4464 = vmatprep.subr.bf16.mxu0 0
    %4465 = vmatpush1.bf16.xpose.msra.mxu0 0
    %4466 = vmatprep.subr.bf16.mxu0 0
    %4467 = vmatpush1.bf16.xpose.msra.mxu0 0
    %4468 = vmatprep.subr.bf16.mxu0 0
    %4469 = vmatpush1.bf16.xpose.msra.mxu0 0
    %4470 = vmatprep.subr.bf16.mxu0 0
    %4471 = vmatpush1.bf16.xpose.msra.mxu0 0
    %4472 = vmatprep.subr.bf16.mxu0 0
    %4473 = vmatpush1.bf16.xpose.msra.mxu0 0
    %4474 = vmatprep.subr.bf16.mxu0 0
    %4475 = vmatpush1.bf16.xpose.msra.mxu0 0
    %4476 = vmatprep.subr.bf16.mxu0 0
    %4477 = vmatpush1.bf16.xpose.msra.mxu0 0
    %4478 = vmatprep.subr.bf16.mxu0 0
    %4479 = vmatpush1.bf16.xpose.msra.mxu0 %v4462
    %4480 = vmatprep.subr.bf16.mxu0 0
    %4481 = vmatpush2.bf16.xpose.msra.mxu0 0
    %4482 = vmatprep.subr.bf16.mxu0 0
    %4483 = vmatpush2.bf16.xpose.msra.mxu0 0
    %4484 = vmatprep.subr.bf16.mxu0 0
    %4485 = vmatpush2.bf16.xpose.msra.mxu0 0
    %4486 = vmatprep.subr.bf16.mxu0 0
    %4487 = vmatpush2.bf16.xpose.msra.mxu0 0
    %4488 = vmatprep.subr.bf16.mxu0 0
    %4489 = vmatpush2.bf16.xpose.msra.mxu0 0
    %4490 = vmatprep.subr.bf16.mxu0 0
    %4491 = vmatpush2.bf16.xpose.msra.mxu0 0
    %4492 = vmatprep.subr.bf16.mxu0 0
    %4493 = vmatpush2.bf16.xpose.msra.mxu0 0
    %4494 = vmatprep.subr.bf16.mxu0 0
    %4495 = vmatpush2.bf16.xpose.msra.mxu0 0
    %4496 = vmatprep.mubr.bf16.mxu0 0
    %4497 = vmatmul.mubr.bf16.gmra.mxu0 %v4459
    %v4498 = vpop.f32.mrf.mxu0
    %v4499 = vadd.f32 0.0, %v4498
    %v4500 = vpop.f32.mrf.mxu0
    %v4501 = vpop.f32.mrf.mxu0
    %v4502 = vpop.f32.mrf.mxu0
    %4503 = vdwg.mxu0
    %v4504 = vsel %vm759, %v4499, -inf
    %4505 = vmax.xlane.f32.xlu0 %v4504
    %v4506 = vpop.xlane.xlu0 %4505
    %v4507 = vsub.f32 %v4499, %v4506
    %v4508 = vmul.f32 %v4507, 1.442695
    %v4509 = vpow.pop %v4508
    %v4510 = vsel %vm759, %v4509, 0.0
    %4511 = vadd.xlane.f32.xlu0 %v4510
    %v4512 = vpop.xlane.xlu0 %4511
    %v4513 = vrcp.pop %v4512
    %v4514 = vmul.f32 %v4509, %v4513
    %v4515 = vpack.c.bf16 %v4514, %v4514
    %4516 = vrot.lane.b32.xlu0 %v4133, 104
    %v4517 = vpop.permute.xlu0 %4516
    %v4520 = vsel %vm759, %v4515, 0
    %4522 = vmatprep.subr.bf16.mxu0 0
    %4523 = vmatpush1.bf16.msra.mxu0 0
    %4524 = vmatprep.subr.bf16.mxu0 0
    %4525 = vmatpush1.bf16.msra.mxu0 0
    %4526 = vmatprep.subr.bf16.mxu0 0
    %4527 = vmatpush1.bf16.msra.mxu0 0
    %4528 = vmatprep.subr.bf16.mxu0 0
    %4529 = vmatpush1.bf16.msra.mxu0 0
    %4530 = vmatprep.subr.bf16.mxu0 0
    %4531 = vmatpush1.bf16.msra.mxu0 0
    %4532 = vmatprep.subr.bf16.mxu0 0
    %4533 = vmatpush1.bf16.msra.mxu0 0
    %4534 = vmatprep.subr.bf16.mxu0 0
    %4535 = vmatpush1.bf16.msra.mxu0 0
    %4536 = vmatprep.subr.bf16.mxu0 0
    %4537 = vmatpush1.bf16.msra.mxu0 %v4517
    %4538 = vmatprep.subr.bf16.mxu0 0
    %4539 = vmatpush2.bf16.msra.mxu0 0
    %4540 = vmatprep.subr.bf16.mxu0 0
    %4541 = vmatpush2.bf16.msra.mxu0 0
    %4542 = vmatprep.subr.bf16.mxu0 0
    %4543 = vmatpush2.bf16.msra.mxu0 0
    %4544 = vmatprep.subr.bf16.mxu0 0
    %4545 = vmatpush2.bf16.msra.mxu0 0
    %4546 = vmatprep.subr.bf16.mxu0 0
    %4547 = vmatpush2.bf16.msra.mxu0 0
    %4548 = vmatprep.subr.bf16.mxu0 0
    %4549 = vmatpush2.bf16.msra.mxu0 0
    %4550 = vmatprep.subr.bf16.mxu0 0
    %4551 = vmatpush2.bf16.msra.mxu0 0
    %4552 = vmatprep.subr.bf16.mxu0 0
    %4553 = vmatpush2.bf16.msra.mxu0 0
    %4554 = vmatprep.mubr.bf16.mxu0 0
    %4555 = vmatmul.mubr.bf16.gmra.mxu0 %v4520
    %v4556 = vpop.f32.mrf.mxu0
    %v4557 = vadd.f32 0.0, %v4556
    %v4558 = vpop.f32.mrf.mxu0
    %v4559 = vpop.f32.mrf.mxu0
    %v4560 = vpop.f32.mrf.mxu0
    %4561 = vdwg.mxu0
    %4563 = vrot.lane.b32.xlu0 %v4341, 8
    %v4564 = vpop.permute.xlu0 %4563
    %4567 = vrot.lane.b32.xlu0 %v4449, 16
    %v4568 = vpop.permute.xlu0 %4567
    %4571 = vrot.lane.b32.xlu0 %v4557, 24
    %v4572 = vpop.permute.xlu0 %4571
    %v4574 = vsel %vm307, %v4230, %v4564
    %v4575 = vsel %vm759, %v4574, %v4568
    %v4576 = vsel %vm761, %v4575, %v4572
    %v4577 = vmul.f32 %v3997, 0.35355338
    %v4578 = vpack.c.bf16 %v4577, %v4577
    %v4579 = vpack.c.bf16 %v4062, %v4059
    %v4580 = vpack.c.bf16 %v4127, %v4124
    %v4582 = vsel %vm307, %v4578, 0
    %v4585 = vsel %vm307, %v4579, 0
    %4587 = vmatprep.subr.bf16.mxu0 0
    %4588 = vmatpush1.bf16.xpose.msra.mxu0 0
    %4589 = vmatprep.subr.bf16.mxu0 0
    %4590 = vmatpush1.bf16.xpose.msra.mxu0 0
    %4591 = vmatprep.subr.bf16.mxu0 0
    %4592 = vmatpush1.bf16.xpose.msra.mxu0 0
    %4593 = vmatprep.subr.bf16.mxu0 0
    %4594 = vmatpush1.bf16.xpose.msra.mxu0 0
    %4595 = vmatprep.subr.bf16.mxu0 0
    %4596 = vmatpush1.bf16.xpose.msra.mxu0 0
    %4597 = vmatprep.subr.bf16.mxu0 0
    %4598 = vmatpush1.bf16.xpose.msra.mxu0 0
    %4599 = vmatprep.subr.bf16.mxu0 0
    %4600 = vmatpush1.bf16.xpose.msra.mxu0 0
    %4601 = vmatprep.subr.bf16.mxu0 0
    %4602 = vmatpush1.bf16.xpose.msra.mxu0 %v4585
    %4603 = vmatprep.subr.bf16.mxu0 0
    %4604 = vmatpush2.bf16.xpose.msra.mxu0 0
    %4605 = vmatprep.subr.bf16.mxu0 0
    %4606 = vmatpush2.bf16.xpose.msra.mxu0 0
    %4607 = vmatprep.subr.bf16.mxu0 0
    %4608 = vmatpush2.bf16.xpose.msra.mxu0 0
    %4609 = vmatprep.subr.bf16.mxu0 0
    %4610 = vmatpush2.bf16.xpose.msra.mxu0 0
    %4611 = vmatprep.subr.bf16.mxu0 0
    %4612 = vmatpush2.bf16.xpose.msra.mxu0 0
    %4613 = vmatprep.subr.bf16.mxu0 0
    %4614 = vmatpush2.bf16.xpose.msra.mxu0 0
    %4615 = vmatprep.subr.bf16.mxu0 0
    %4616 = vmatpush2.bf16.xpose.msra.mxu0 0
    %4617 = vmatprep.subr.bf16.mxu0 0
    %4618 = vmatpush2.bf16.xpose.msra.mxu0 0
    %4619 = vmatprep.mubr.bf16.mxu0 0
    %4620 = vmatmul.mubr.bf16.gmra.mxu0 %v4582
    %v4621 = vpop.f32.mrf.mxu0
    %v4622 = vadd.f32 0.0, %v4621
    %v4623 = vpop.f32.mrf.mxu0
    %v4624 = vpop.f32.mrf.mxu0
    %v4625 = vpop.f32.mrf.mxu0
    %4626 = vdwg.mxu0
    %v4627 = vsel %vm759, %v4622, -inf
    %4628 = vmax.xlane.f32.xlu0 %v4627
    %v4629 = vpop.xlane.xlu0 %4628
    %v4630 = vsub.f32 %v4622, %v4629
    %v4631 = vmul.f32 %v4630, 1.442695
    %v4632 = vpow.pop %v4631
    %v4633 = vsel %vm759, %v4632, 0.0
    %4634 = vadd.xlane.f32.xlu0 %v4633
    %v4635 = vpop.xlane.xlu0 %4634
    %v4636 = vrcp.pop %v4635
    %v4637 = vmul.f32 %v4632, %v4636
    %v4638 = vpack.c.bf16 %v4637, %v4637
    %v4640 = vsel %vm759, %v4638, 0
    %4642 = vmatprep.subr.bf16.mxu0 0
    %4643 = vmatpush1.bf16.msra.mxu0 0
    %4644 = vmatprep.subr.bf16.mxu0 0
    %4645 = vmatpush1.bf16.msra.mxu0 0
    %4646 = vmatprep.subr.bf16.mxu0 0
    %4647 = vmatpush1.bf16.msra.mxu0 0
    %4648 = vmatprep.subr.bf16.mxu0 0
    %4649 = vmatpush1.bf16.msra.mxu0 0
    %4650 = vmatprep.subr.bf16.mxu0 0
    %4651 = vmatpush1.bf16.msra.mxu0 0
    %4652 = vmatprep.subr.bf16.mxu0 0
    %4653 = vmatpush1.bf16.msra.mxu0 0
    %4654 = vmatprep.subr.bf16.mxu0 0
    %4655 = vmatpush1.bf16.msra.mxu0 0
    %4656 = vmatprep.subr.bf16.mxu0 0
    %4657 = vmatpush1.bf16.msra.mxu0 %v4580
    %4658 = vmatprep.subr.bf16.mxu0 0
    %4659 = vmatpush2.bf16.msra.mxu0 0
    %4660 = vmatprep.subr.bf16.mxu0 0
    %4661 = vmatpush2.bf16.msra.mxu0 0
    %4662 = vmatprep.subr.bf16.mxu0 0
    %4663 = vmatpush2.bf16.msra.mxu0 0
    %4664 = vmatprep.subr.bf16.mxu0 0
    %4665 = vmatpush2.bf16.msra.mxu0 0
    %4666 = vmatprep.subr.bf16.mxu0 0
    %4667 = vmatpush2.bf16.msra.mxu0 0
    %4668 = vmatprep.subr.bf16.mxu0 0
    %4669 = vmatpush2.bf16.msra.mxu0 0
    %4670 = vmatprep.subr.bf16.mxu0 0
    %4671 = vmatpush2.bf16.msra.mxu0 0
    %4672 = vmatprep.subr.bf16.mxu0 0
    %4673 = vmatpush2.bf16.msra.mxu0 0
    %4674 = vmatprep.mubr.bf16.mxu0 0
    %4675 = vmatmul.mubr.bf16.gmra.mxu0 %v4640
    %v4676 = vpop.f32.mrf.mxu0
    %v4677 = vadd.f32 0.0, %v4676
    %v4678 = vpop.f32.mrf.mxu0
    %v4679 = vpop.f32.mrf.mxu0
    %v4680 = vpop.f32.mrf.mxu0
    %4681 = vdwg.mxu0
    %4683 = vrot.lane.b32.xlu0 %v4578, 120
    %v4684 = vpop.permute.xlu0 %4683
    %4686 = vrot.lane.b32.xlu0 %v4579, 120
    %v4687 = vpop.permute.xlu0 %4686
    %v4689 = vsel %vm307, %v4684, 0
    %v4692 = vsel %vm307, %v4687, 0
    %4694 = vmatprep.subr.bf16.mxu0 0
    %4695 = vmatpush1.bf16.xpose.msra.mxu0 0
    %4696 = vmatprep.subr.bf16.mxu0 0
    %4697 = vmatpush1.bf16.xpose.msra.mxu0 0
    %4698 = vmatprep.subr.bf16.mxu0 0
    %4699 = vmatpush1.bf16.xpose.msra.mxu0 0
    %4700 = vmatprep.subr.bf16.mxu0 0
    %4701 = vmatpush1.bf16.xpose.msra.mxu0 0
    %4702 = vmatprep.subr.bf16.mxu0 0
    %4703 = vmatpush1.bf16.xpose.msra.mxu0 0
    %4704 = vmatprep.subr.bf16.mxu0 0
    %4705 = vmatpush1.bf16.xpose.msra.mxu0 0
    %4706 = vmatprep.subr.bf16.mxu0 0
    %4707 = vmatpush1.bf16.xpose.msra.mxu0 0
    %4708 = vmatprep.subr.bf16.mxu0 0
    %4709 = vmatpush1.bf16.xpose.msra.mxu0 %v4692
    %4710 = vmatprep.subr.bf16.mxu0 0
    %4711 = vmatpush2.bf16.xpose.msra.mxu0 0
    %4712 = vmatprep.subr.bf16.mxu0 0
    %4713 = vmatpush2.bf16.xpose.msra.mxu0 0
    %4714 = vmatprep.subr.bf16.mxu0 0
    %4715 = vmatpush2.bf16.xpose.msra.mxu0 0
    %4716 = vmatprep.subr.bf16.mxu0 0
    %4717 = vmatpush2.bf16.xpose.msra.mxu0 0
    %4718 = vmatprep.subr.bf16.mxu0 0
    %4719 = vmatpush2.bf16.xpose.msra.mxu0 0
    %4720 = vmatprep.subr.bf16.mxu0 0
    %4721 = vmatpush2.bf16.xpose.msra.mxu0 0
    %4722 = vmatprep.subr.bf16.mxu0 0
    %4723 = vmatpush2.bf16.xpose.msra.mxu0 0
    %4724 = vmatprep.subr.bf16.mxu0 0
    %4725 = vmatpush2.bf16.xpose.msra.mxu0 0
    %4726 = vmatprep.mubr.bf16.mxu0 0
    %4727 = vmatmul.mubr.bf16.gmra.mxu0 %v4689
    %v4728 = vpop.f32.mrf.mxu0
    %v4729 = vadd.f32 0.0, %v4728
    %v4730 = vpop.f32.mrf.mxu0
    %v4731 = vpop.f32.mrf.mxu0
    %v4732 = vpop.f32.mrf.mxu0
    %4733 = vdwg.mxu0
    %v4734 = vsel %vm759, %v4729, -inf
    %4735 = vmax.xlane.f32.xlu0 %v4734
    %v4736 = vpop.xlane.xlu0 %4735
    %v4737 = vsub.f32 %v4729, %v4736
    %v4738 = vmul.f32 %v4737, 1.442695
    %v4739 = vpow.pop %v4738
    %v4740 = vsel %vm759, %v4739, 0.0
    %4741 = vadd.xlane.f32.xlu0 %v4740
    %v4742 = vpop.xlane.xlu0 %4741
    %v4743 = vrcp.pop %v4742
    %v4744 = vmul.f32 %v4739, %v4743
    %v4745 = vpack.c.bf16 %v4744, %v4744
    %4747 = vrot.lane.b32.xlu0 %v4580, 120
    %v4748 = vpop.permute.xlu0 %4747
    %v4751 = vsel %vm759, %v4745, 0
    %4753 = vmatprep.subr.bf16.mxu0 0
    %4754 = vmatpush1.bf16.msra.mxu0 0
    %4755 = vmatprep.subr.bf16.mxu0 0
    %4756 = vmatpush1.bf16.msra.mxu0 0
    %4757 = vmatprep.subr.bf16.mxu0 0
    %4758 = vmatpush1.bf16.msra.mxu0 0
    %4759 = vmatprep.subr.bf16.mxu0 0
    %4760 = vmatpush1.bf16.msra.mxu0 0
    %4761 = vmatprep.subr.bf16.mxu0 0
    %4762 = vmatpush1.bf16.msra.mxu0 0
    %4763 = vmatprep.subr.bf16.mxu0 0
    %4764 = vmatpush1.bf16.msra.mxu0 0
    %4765 = vmatprep.subr.bf16.mxu0 0
    %4766 = vmatpush1.bf16.msra.mxu0 0
    %4767 = vmatprep.subr.bf16.mxu0 0
    %4768 = vmatpush1.bf16.msra.mxu0 %v4748
    %4769 = vmatprep.subr.bf16.mxu0 0
    %4770 = vmatpush2.bf16.msra.mxu0 0
    %4771 = vmatprep.subr.bf16.mxu0 0
    %4772 = vmatpush2.bf16.msra.mxu0 0
    %4773 = vmatprep.subr.bf16.mxu0 0
    %4774 = vmatpush2.bf16.msra.mxu0 0
    %4775 = vmatprep.subr.bf16.mxu0 0
    %4776 = vmatpush2.bf16.msra.mxu0 0
    %4777 = vmatprep.subr.bf16.mxu0 0
    %4778 = vmatpush2.bf16.msra.mxu0 0
    %4779 = vmatprep.subr.bf16.mxu0 0
    %4780 = vmatpush2.bf16.msra.mxu0 0
    %4781 = vmatprep.subr.bf16.mxu0 0
    %4782 = vmatpush2.bf16.msra.mxu0 0
    %4783 = vmatprep.subr.bf16.mxu0 0
    %4784 = vmatpush2.bf16.msra.mxu0 0
    %4785 = vmatprep.mubr.bf16.mxu0 0
    %4786 = vmatmul.mubr.bf16.gmra.mxu0 %v4751
    %v4787 = vpop.f32.mrf.mxu0
    %v4788 = vadd.f32 0.0, %v4787
    %v4789 = vpop.f32.mrf.mxu0
    %v4790 = vpop.f32.mrf.mxu0
    %v4791 = vpop.f32.mrf.mxu0
    %4792 = vdwg.mxu0
    %4793 = vrot.lane.b32.xlu0 %v4578, 112
    %v4794 = vpop.permute.xlu0 %4793
    %4795 = vrot.lane.b32.xlu0 %v4579, 112
    %v4796 = vpop.permute.xlu0 %4795
    %v4798 = vsel %vm307, %v4794, 0
    %v4801 = vsel %vm307, %v4796, 0
    %4803 = vmatprep.subr.bf16.mxu0 0
    %4804 = vmatpush1.bf16.xpose.msra.mxu0 0
    %4805 = vmatprep.subr.bf16.mxu0 0
    %4806 = vmatpush1.bf16.xpose.msra.mxu0 0
    %4807 = vmatprep.subr.bf16.mxu0 0
    %4808 = vmatpush1.bf16.xpose.msra.mxu0 0
    %4809 = vmatprep.subr.bf16.mxu0 0
    %4810 = vmatpush1.bf16.xpose.msra.mxu0 0
    %4811 = vmatprep.subr.bf16.mxu0 0
    %4812 = vmatpush1.bf16.xpose.msra.mxu0 0
    %4813 = vmatprep.subr.bf16.mxu0 0
    %4814 = vmatpush1.bf16.xpose.msra.mxu0 0
    %4815 = vmatprep.subr.bf16.mxu0 0
    %4816 = vmatpush1.bf16.xpose.msra.mxu0 0
    %4817 = vmatprep.subr.bf16.mxu0 0
    %4818 = vmatpush1.bf16.xpose.msra.mxu0 %v4801
    %4819 = vmatprep.subr.bf16.mxu0 0
    %4820 = vmatpush2.bf16.xpose.msra.mxu0 0
    %4821 = vmatprep.subr.bf16.mxu0 0
    %4822 = vmatpush2.bf16.xpose.msra.mxu0 0
    %4823 = vmatprep.subr.bf16.mxu0 0
    %4824 = vmatpush2.bf16.xpose.msra.mxu0 0
    %4825 = vmatprep.subr.bf16.mxu0 0
    %4826 = vmatpush2.bf16.xpose.msra.mxu0 0
    %4827 = vmatprep.subr.bf16.mxu0 0
    %4828 = vmatpush2.bf16.xpose.msra.mxu0 0
    %4829 = vmatprep.subr.bf16.mxu0 0
    %4830 = vmatpush2.bf16.xpose.msra.mxu0 0
    %4831 = vmatprep.subr.bf16.mxu0 0
    %4832 = vmatpush2.bf16.xpose.msra.mxu0 0
    %4833 = vmatprep.subr.bf16.mxu0 0
    %4834 = vmatpush2.bf16.xpose.msra.mxu0 0
    %4835 = vmatprep.mubr.bf16.mxu0 0
    %4836 = vmatmul.mubr.bf16.gmra.mxu0 %v4798
    %v4837 = vpop.f32.mrf.mxu0
    %v4838 = vadd.f32 0.0, %v4837
    %v4839 = vpop.f32.mrf.mxu0
    %v4840 = vpop.f32.mrf.mxu0
    %v4841 = vpop.f32.mrf.mxu0
    %4842 = vdwg.mxu0
    %v4843 = vsel %vm759, %v4838, -inf
    %4844 = vmax.xlane.f32.xlu0 %v4843
    %v4845 = vpop.xlane.xlu0 %4844
    %v4846 = vsub.f32 %v4838, %v4845
    %v4847 = vmul.f32 %v4846, 1.442695
    %v4848 = vpow.pop %v4847
    %v4849 = vsel %vm759, %v4848, 0.0
    %4850 = vadd.xlane.f32.xlu0 %v4849
    %v4851 = vpop.xlane.xlu0 %4850
    %v4852 = vrcp.pop %v4851
    %v4853 = vmul.f32 %v4848, %v4852
    %v4854 = vpack.c.bf16 %v4853, %v4853
    %4855 = vrot.lane.b32.xlu0 %v4580, 112
    %v4856 = vpop.permute.xlu0 %4855
    %v4859 = vsel %vm759, %v4854, 0
    %4861 = vmatprep.subr.bf16.mxu0 0
    %4862 = vmatpush1.bf16.msra.mxu0 0
    %4863 = vmatprep.subr.bf16.mxu0 0
    %4864 = vmatpush1.bf16.msra.mxu0 0
    %4865 = vmatprep.subr.bf16.mxu0 0
    %4866 = vmatpush1.bf16.msra.mxu0 0
    %4867 = vmatprep.subr.bf16.mxu0 0
    %4868 = vmatpush1.bf16.msra.mxu0 0
    %4869 = vmatprep.subr.bf16.mxu0 0
    %4870 = vmatpush1.bf16.msra.mxu0 0
    %4871 = vmatprep.subr.bf16.mxu0 0
    %4872 = vmatpush1.bf16.msra.mxu0 0
    %4873 = vmatprep.subr.bf16.mxu0 0
    %4874 = vmatpush1.bf16.msra.mxu0 0
    %4875 = vmatprep.subr.bf16.mxu0 0
    %4876 = vmatpush1.bf16.msra.mxu0 %v4856
    %4877 = vmatprep.subr.bf16.mxu0 0
    %4878 = vmatpush2.bf16.msra.mxu0 0
    %4879 = vmatprep.subr.bf16.mxu0 0
    %4880 = vmatpush2.bf16.msra.mxu0 0
    %4881 = vmatprep.subr.bf16.mxu0 0
    %4882 = vmatpush2.bf16.msra.mxu0 0
    %4883 = vmatprep.subr.bf16.mxu0 0
    %4884 = vmatpush2.bf16.msra.mxu0 0
    %4885 = vmatprep.subr.bf16.mxu0 0
    %4886 = vmatpush2.bf16.msra.mxu0 0
    %4887 = vmatprep.subr.bf16.mxu0 0
    %4888 = vmatpush2.bf16.msra.mxu0 0
    %4889 = vmatprep.subr.bf16.mxu0 0
    %4890 = vmatpush2.bf16.msra.mxu0 0
    %4891 = vmatprep.subr.bf16.mxu0 0
    %4892 = vmatpush2.bf16.msra.mxu0 0
    %4893 = vmatprep.mubr.bf16.mxu0 0
    %4894 = vmatmul.mubr.bf16.gmra.mxu0 %v4859
    %v4895 = vpop.f32.mrf.mxu0
    %v4896 = vadd.f32 0.0, %v4895
    %v4897 = vpop.f32.mrf.mxu0
    %v4898 = vpop.f32.mrf.mxu0
    %v4899 = vpop.f32.mrf.mxu0
    %4900 = vdwg.mxu0
    %4901 = vrot.lane.b32.xlu0 %v4578, 104
    %v4902 = vpop.permute.xlu0 %4901
    %4903 = vrot.lane.b32.xlu0 %v4579, 104
    %v4904 = vpop.permute.xlu0 %4903
    %v4906 = vsel %vm307, %v4902, 0
    %v4909 = vsel %vm307, %v4904, 0
    %4911 = vmatprep.subr.bf16.mxu0 0
    %4912 = vmatpush1.bf16.xpose.msra.mxu0 0
    %4913 = vmatprep.subr.bf16.mxu0 0
    %4914 = vmatpush1.bf16.xpose.msra.mxu0 0
    %4915 = vmatprep.subr.bf16.mxu0 0
    %4916 = vmatpush1.bf16.xpose.msra.mxu0 0
    %4917 = vmatprep.subr.bf16.mxu0 0
    %4918 = vmatpush1.bf16.xpose.msra.mxu0 0
    %4919 = vmatprep.subr.bf16.mxu0 0
    %4920 = vmatpush1.bf16.xpose.msra.mxu0 0
    %4921 = vmatprep.subr.bf16.mxu0 0
    %4922 = vmatpush1.bf16.xpose.msra.mxu0 0
    %4923 = vmatprep.subr.bf16.mxu0 0
    %4924 = vmatpush1.bf16.xpose.msra.mxu0 0
    %4925 = vmatprep.subr.bf16.mxu0 0
    %4926 = vmatpush1.bf16.xpose.msra.mxu0 %v4909
    %4927 = vmatprep.subr.bf16.mxu0 0
    %4928 = vmatpush2.bf16.xpose.msra.mxu0 0
    %4929 = vmatprep.subr.bf16.mxu0 0
    %4930 = vmatpush2.bf16.xpose.msra.mxu0 0
    %4931 = vmatprep.subr.bf16.mxu0 0
    %4932 = vmatpush2.bf16.xpose.msra.mxu0 0
    %4933 = vmatprep.subr.bf16.mxu0 0
    %4934 = vmatpush2.bf16.xpose.msra.mxu0 0
    %4935 = vmatprep.subr.bf16.mxu0 0
    %4936 = vmatpush2.bf16.xpose.msra.mxu0 0
    %4937 = vmatprep.subr.bf16.mxu0 0
    %4938 = vmatpush2.bf16.xpose.msra.mxu0 0
    %4939 = vmatprep.subr.bf16.mxu0 0
    %4940 = vmatpush2.bf16.xpose.msra.mxu0 0
    %4941 = vmatprep.subr.bf16.mxu0 0
    %4942 = vmatpush2.bf16.xpose.msra.mxu0 0
    %4943 = vmatprep.mubr.bf16.mxu0 0
    %4944 = vmatmul.mubr.bf16.gmra.mxu0 %v4906
    %v4945 = vpop.f32.mrf.mxu0
    %v4946 = vadd.f32 0.0, %v4945
    %v4947 = vpop.f32.mrf.mxu0
    %v4948 = vpop.f32.mrf.mxu0
    %v4949 = vpop.f32.mrf.mxu0
    %4950 = vdwg.mxu0
    %v4951 = vsel %vm759, %v4946, -inf
    %4952 = vmax.xlane.f32.xlu0 %v4951
    %v4953 = vpop.xlane.xlu0 %4952
    %v4954 = vsub.f32 %v4946, %v4953
    %v4955 = vmul.f32 %v4954, 1.442695
    %v4956 = vpow.pop %v4955
    %v4957 = vsel %vm759, %v4956, 0.0
    %4958 = vadd.xlane.f32.xlu0 %v4957
    %v4959 = vpop.xlane.xlu0 %4958
    %v4960 = vrcp.pop %v4959
    %v4961 = vmul.f32 %v4956, %v4960
    %v4962 = vpack.c.bf16 %v4961, %v4961
    %4963 = vrot.lane.b32.xlu0 %v4580, 104
    %v4964 = vpop.permute.xlu0 %4963
    %v4967 = vsel %vm759, %v4962, 0
    %4969 = vmatprep.subr.bf16.mxu0 0
    %4970 = vmatpush1.bf16.msra.mxu0 0
    %4971 = vmatprep.subr.bf16.mxu0 0
    %4972 = vmatpush1.bf16.msra.mxu0 0
    %4973 = vmatprep.subr.bf16.mxu0 0
    %4974 = vmatpush1.bf16.msra.mxu0 0
    %4975 = vmatprep.subr.bf16.mxu0 0
    %4976 = vmatpush1.bf16.msra.mxu0 0
    %4977 = vmatprep.subr.bf16.mxu0 0
    %4978 = vmatpush1.bf16.msra.mxu0 0
    %4979 = vmatprep.subr.bf16.mxu0 0
    %4980 = vmatpush1.bf16.msra.mxu0 0
    %4981 = vmatprep.subr.bf16.mxu0 0
    %4982 = vmatpush1.bf16.msra.mxu0 0
    %4983 = vmatprep.subr.bf16.mxu0 0
    %4984 = vmatpush1.bf16.msra.mxu0 %v4964
    %4985 = vmatprep.subr.bf16.mxu0 0
    %4986 = vmatpush2.bf16.msra.mxu0 0
    %4987 = vmatprep.subr.bf16.mxu0 0
    %4988 = vmatpush2.bf16.msra.mxu0 0
    %4989 = vmatprep.subr.bf16.mxu0 0
    %4990 = vmatpush2.bf16.msra.mxu0 0
    %4991 = vmatprep.subr.bf16.mxu0 0
    %4992 = vmatpush2.bf16.msra.mxu0 0
    %4993 = vmatprep.subr.bf16.mxu0 0
    %4994 = vmatpush2.bf16.msra.mxu0 0
    %4995 = vmatprep.subr.bf16.mxu0 0
    %4996 = vmatpush2.bf16.msra.mxu0 0
    %4997 = vmatprep.subr.bf16.mxu0 0
    %4998 = vmatpush2.bf16.msra.mxu0 0
    %4999 = vmatprep.subr.bf16.mxu0 0
    %5000 = vmatpush2.bf16.msra.mxu0 0
    %5001 = vmatprep.mubr.bf16.mxu0 0
    %5002 = vmatmul.mubr.bf16.gmra.mxu0 %v4967
    %v5003 = vpop.f32.mrf.mxu0
    %v5004 = vadd.f32 0.0, %v5003
    %v5005 = vpop.f32.mrf.mxu0
    %v5006 = vpop.f32.mrf.mxu0
    %v5007 = vpop.f32.mrf.mxu0
    %5008 = vdwg.mxu0
    %5010 = vrot.lane.b32.xlu0 %v4788, 8
    %v5011 = vpop.permute.xlu0 %5010
    %5014 = vrot.lane.b32.xlu0 %v4896, 16
    %v5015 = vpop.permute.xlu0 %5014
    %5018 = vrot.lane.b32.xlu0 %v5004, 24
    %v5019 = vpop.permute.xlu0 %5018
    %v5021 = vsel %vm307, %v4677, %v5011
    %v5022 = vsel %vm759, %v5021, %v5015
    %v5023 = vsel %vm761, %v5022, %v5019
    %v5024 = vpack.c.bf16 %v5023, %v4576
    %v5025 = vlaneseq
    %v5026 = vshrl.u32 %v5025, 7
    %v5027 = vsub.s32 7, %v5026
    %v5028 = vrot.slane %v79, %v5027
    %v5033 = vunpack.c.l.b16 %v2739
    %v5034 = vunpack.c.l.b16 %v2740
    %v5035 = vunpack.c.l.b16 %v2741
    %v5036 = vunpack.c.l.b16 %v2742
    %v5037 = vpack.c.b16 %v5034, %v5033
    %v5038 = vpack.c.b16 %v5036, %v5035
    %v5042 = vsel %vm141, %v5024, 0
    %5044 = vmatprep.subr.bf16.mxu0 0
    %5045 = vmatpush1.bf16.msra.mxu0 0
    %5046 = vmatprep.subr.bf16.mxu0 0
    %5047 = vmatpush1.bf16.msra.mxu0 0
    %5048 = vmatprep.subr.bf16.mxu0 0
    %5049 = vmatpush1.bf16.msra.mxu0 0
    %5050 = vmatprep.subr.bf16.mxu0 0
    %5051 = vmatpush1.bf16.msra.mxu0 0
    %5052 = vmatprep.subr.bf16.mxu0 0
    %5053 = vmatpush1.bf16.msra.mxu0 0
    %5054 = vmatprep.subr.bf16.mxu0 0
    %5055 = vmatpush1.bf16.msra.mxu0 0
    %5056 = vmatprep.subr.bf16.mxu0 0
    %5057 = vmatpush1.bf16.msra.mxu0 %v5038
    %5058 = vmatprep.subr.bf16.mxu0 0
    %5059 = vmatpush1.bf16.msra.mxu0 %v5037
    %5060 = vmatprep.subr.bf16.mxu0 0
    %5061 = vmatpush2.bf16.msra.mxu0 0
    %5062 = vmatprep.subr.bf16.mxu0 0
    %5063 = vmatpush2.bf16.msra.mxu0 0
    %5064 = vmatprep.subr.bf16.mxu0 0
    %5065 = vmatpush2.bf16.msra.mxu0 0
    %5066 = vmatprep.subr.bf16.mxu0 0
    %5067 = vmatpush2.bf16.msra.mxu0 0
    %5068 = vmatprep.subr.bf16.mxu0 0
    %5069 = vmatpush2.bf16.msra.mxu0 0
    %5070 = vmatprep.subr.bf16.mxu0 0
    %5071 = vmatpush2.bf16.msra.mxu0 0
    %5072 = vmatprep.subr.bf16.mxu0 0
    %5073 = vmatpush2.bf16.msra.mxu0 0
    %5074 = vmatprep.subr.bf16.mxu0 0
    %5075 = vmatpush2.bf16.msra.mxu0 0
    %5076 = vmatprep.mubr.bf16.mxu0 0
    %5077 = vmatmul.mubr.bf16.gmra.mxu0 %v5042
    %v5078 = vpop.f32.mrf.mxu0
    %v5079 = vadd.f32 %v5028, %v5078
    %v5080 = vpop.f32.mrf.mxu0
    %v5081 = vpop.f32.mrf.mxu0
    %v5082 = vadd.f32 %v5028, %v5081
    %v5083 = vpop.f32.mrf.mxu0
    %5084 = vdwg.mxu0
    %v5085 = vadd.f32 %v5079, %v3935
    %v5086 = vadd.f32 %v5082, %v3936
    %v5087 = vsel %vm141, %v5085, 0.0
    %5088 = vadd.xlane.f32.xlu0 %v5087
    %v5089 = vpop.xlane.xlu0 %5088
    %v5090 = vsel %vm141, %v5086, 0.0
    %5091 = vadd.xlane.f32.xlu0 %v5090
    %v5092 = vpop.xlane.xlu0 %5091
    %v5093 = vmul.f32 %v5089, %v1288
    %v5094 = vmul.f32 %v5092, %v1288
    %v5095 = vsub.f32 %v5085, %v5093
    %v5096 = vsub.f32 %v5086, %v5094
    %v5097 = vmul.f32 %v5095, %v5095
    %v5098 = vmul.f32 %v5096, %v5096
    %v5099 = vsel %vm141, %v5097, 0.0
    %5100 = vadd.xlane.f32.xlu0 %v5099
    %v5101 = vpop.xlane.xlu0 %5100
    %v5102 = vsel %vm141, %v5098, 0.0
    %5103 = vadd.xlane.f32.xlu0 %v5102
    %v5104 = vpop.xlane.xlu0 %5103
    %v5105 = vmul.f32 %v5101, %v1288
    %v5106 = vmul.f32 %v5104, %v1288
    %v5107 = vadd.f32 %v5105, 1e-05
    %v5108 = vadd.f32 %v5106, 1e-05
    %v5109 = vrsqrt.pop %v5107
    %v5110 = vrsqrt.pop %v5108
    %v5111 = vmul.f32 %v5095, %v5109
    %v5112 = vmul.f32 %v5096, %v5110
    %v5113 = vlaneseq
    %v5114 = vshrl.u32 %v5113, 7
    %v5115 = vsub.s32 3, %v5114
    %v5116 = vrot.slane %v80, %v5115
    %v5117 = vmul.f32 %v5111, %v5116
    %v5118 = vmul.f32 %v5112, %v5116
    %v5119 = vlaneseq
    %v5120 = vshrl.u32 %v5119, 7
    %v5121 = vsub.s32 4, %v5120
    %v5122 = vrot.slane %v80, %v5121
    %v5123 = vadd.f32 %v5117, %v5122
    %v5124 = vadd.f32 %v5118, %v5122
    %v5125 = vpack.c.bf16 %v5124, %v5123
    %s5126 = scalar_lea.vmem [#allocation2], 16
    %v5127 = vld [vmem:[%s5126] sm:$0xf]
    %v5128 = vld [vmem:[%s5126 + $0x4] sm:$0xf]
    %v5129 = vld [vmem:[%s5126 + $0x8] sm:$0xf]
    %v5130 = vld [vmem:[%s5126 + $0xc] sm:$0xf]
    %v5131 = vlaneseq
    %v5132 = vshrl.u32 %v5131, 7
    %v5133 = vsub.s32 1, %v5132
    %v5134 = vrot.slane %v76, %v5133
    %v5139 = vunpack.c.l.b16 %v5127
    %v5140 = vunpack.c.l.b16 %v5128
    %v5141 = vunpack.c.l.b16 %v5129
    %v5142 = vunpack.c.l.b16 %v5130
    %v5143 = vpack.c.b16 %v5140, %v5139
    %v5144 = vpack.c.b16 %v5142, %v5141
    %v5148 = vsel %vm141, %v5125, 0
    %5150 = vmatprep.subr.bf16.mxu0 0
    %5151 = vmatpush1.bf16.msra.mxu0 0
    %5152 = vmatprep.subr.bf16.mxu0 0
    %5153 = vmatpush1.bf16.msra.mxu0 0
    %5154 = vmatprep.subr.bf16.mxu0 0
    %5155 = vmatpush1.bf16.msra.mxu0 0
    %5156 = vmatprep.subr.bf16.mxu0 0
    %5157 = vmatpush1.bf16.msra.mxu0 0
    %5158 = vmatprep.subr.bf16.mxu0 0
    %5159 = vmatpush1.bf16.msra.mxu0 0
    %5160 = vmatprep.subr.bf16.mxu0 0
    %5161 = vmatpush1.bf16.msra.mxu0 0
    %5162 = vmatprep.subr.bf16.mxu0 0
    %5163 = vmatpush1.bf16.msra.mxu0 %v5144
    %5164 = vmatprep.subr.bf16.mxu0 0
    %5165 = vmatpush1.bf16.msra.mxu0 %v5143
    %5166 = vmatprep.subr.bf16.mxu0 0
    %5167 = vmatpush2.bf16.msra.mxu0 0
    %5168 = vmatprep.subr.bf16.mxu0 0
    %5169 = vmatpush2.bf16.msra.mxu0 0
    %5170 = vmatprep.subr.bf16.mxu0 0
    %5171 = vmatpush2.bf16.msra.mxu0 0
    %5172 = vmatprep.subr.bf16.mxu0 0
    %5173 = vmatpush2.bf16.msra.mxu0 0
    %5174 = vmatprep.subr.bf16.mxu0 0
    %5175 = vmatpush2.bf16.msra.mxu0 0
    %5176 = vmatprep.subr.bf16.mxu0 0
    %5177 = vmatpush2.bf16.msra.mxu0 0
    %5178 = vmatprep.subr.bf16.mxu0 0
    %5179 = vmatpush2.bf16.msra.mxu0 0
    %5180 = vmatprep.subr.bf16.mxu0 0
    %5181 = vmatpush2.bf16.msra.mxu0 0
    %5182 = vmatprep.mubr.bf16.mxu0 0
    %5183 = vmatmul.mubr.bf16.gmra.mxu0 %v5148
    %v5184 = vpop.f32.mrf.mxu0
    %v5185 = vadd.f32 %v5134, %v5184
    %v5186 = vpop.f32.mrf.mxu0
    %v5187 = vpop.f32.mrf.mxu0
    %v5188 = vadd.f32 %v5134, %v5187
    %v5189 = vpop.f32.mrf.mxu0
    %5190 = vdwg.mxu0
    %v5191 = vmax.f32 %v5185, 0.0
    %v5192 = vmax.f32 %v5188, 0.0
    %v5193 = vpack.c.bf16 %v5192, %v5191
    %s5194 = scalar_lea.vmem %s6, 32
    %v5195 = vld [vmem:[%s5194] sm:$0xf]
    %v5196 = vld [vmem:[%s5194 + $0x4] sm:$0xf]
    %v5197 = vld [vmem:[%s5194 + $0x8] sm:$0xf]
    %v5198 = vld [vmem:[%s5194 + $0xc] sm:$0xf]
    %v5199 = vld [vmem:[%s5194 + $0x10] sm:$0xf]
    %v5200 = vld [vmem:[%s5194 + $0x14] sm:$0xf]
    %v5201 = vld [vmem:[%s5194 + $0x18] sm:$0xf]
    %v5202 = vld [vmem:[%s5194 + $0x1c] sm:$0xf]
    %v5203 = vlaneseq
    %v5204 = vshrl.u32 %v5203, 7
    %v5205 = vsub.s32 0, %v5204
    %v5206 = vrot.slane %v80, %v5205
    %v5215 = vunpack.c.l.b16 %v5195
    %v5216 = vunpack.c.l.b16 %v5196
    %v5217 = vunpack.c.l.b16 %v5197
    %v5218 = vunpack.c.l.b16 %v5198
    %v5219 = vunpack.c.l.b16 %v5199
    %v5220 = vunpack.c.l.b16 %v5200
    %v5221 = vunpack.c.l.b16 %v5201
    %v5222 = vunpack.c.l.b16 %v5202
    %v5223 = vpack.c.b16 %v5216, %v5215
    %v5224 = vpack.c.b16 %v5218, %v5217
    %v5225 = vpack.c.b16 %v5220, %v5219
    %v5226 = vpack.c.b16 %v5222, %v5221
    %v5232 = vsel %vm2625, %v5193, 0
    %5234 = vmatprep.subr.bf16.mxu0 0
    %5235 = vmatpush1.bf16.msra.mxu0 0
    %5236 = vmatprep.subr.bf16.mxu0 0
    %5237 = vmatpush1.bf16.msra.mxu0 0
    %5238 = vmatprep.subr.bf16.mxu0 0
    %5239 = vmatpush1.bf16.msra.mxu0 0
    %5240 = vmatprep.subr.bf16.mxu0 0
    %5241 = vmatpush1.bf16.msra.mxu0 0
    %5242 = vmatprep.subr.bf16.mxu0 0
    %5243 = vmatpush1.bf16.msra.mxu0 %v5226
    %5244 = vmatprep.subr.bf16.mxu0 0
    %5245 = vmatpush1.bf16.msra.mxu0 %v5225
    %5246 = vmatprep.subr.bf16.mxu0 0
    %5247 = vmatpush1.bf16.msra.mxu0 %v5224
    %5248 = vmatprep.subr.bf16.mxu0 0
    %5249 = vmatpush1.bf16.msra.mxu0 %v5223
    %5250 = vmatprep.subr.bf16.mxu0 0
    %5251 = vmatpush2.bf16.msra.mxu0 0
    %5252 = vmatprep.subr.bf16.mxu0 0
    %5253 = vmatpush2.bf16.msra.mxu0 0
    %5254 = vmatprep.subr.bf16.mxu0 0
    %5255 = vmatpush2.bf16.msra.mxu0 0
    %5256 = vmatprep.subr.bf16.mxu0 0
    %5257 = vmatpush2.bf16.msra.mxu0 0
    %5258 = vmatprep.subr.bf16.mxu0 0
    %5259 = vmatpush2.bf16.msra.mxu0 0
    %5260 = vmatprep.subr.bf16.mxu0 0
    %5261 = vmatpush2.bf16.msra.mxu0 0
    %5262 = vmatprep.subr.bf16.mxu0 0
    %5263 = vmatpush2.bf16.msra.mxu0 0
    %5264 = vmatprep.subr.bf16.mxu0 0
    %5265 = vmatpush2.bf16.msra.mxu0 0
    %5266 = vmatprep.mubr.bf16.mxu0 0
    %5267 = vmatmul.mubr.bf16.gmra.mxu0 %v5232
    %v5268 = vpop.f32.mrf.mxu0
    %v5269 = vadd.f32 %v5206, %v5268
    %v5270 = vpop.f32.mrf.mxu0
    %v5271 = vpop.f32.mrf.mxu0
    %v5272 = vadd.f32 %v5206, %v5271
    %v5273 = vpop.f32.mrf.mxu0
    %5274 = vdwg.mxu0
    %v5275 = vadd.f32 %v5269, %v5123
    %v5276 = vadd.f32 %v5272, %v5124
    %v5277 = vsel %vm141, %v5275, 0.0
    %5278 = vadd.xlane.f32.xlu0 %v5277
    %v5279 = vpop.xlane.xlu0 %5278
    %v5280 = vsel %vm141, %v5276, 0.0
    %5281 = vadd.xlane.f32.xlu0 %v5280
    %v5282 = vpop.xlane.xlu0 %5281
    %v5283 = vmul.f32 %v5279, %v1288
    %v5284 = vmul.f32 %v5282, %v1288
    %v5285 = vsub.f32 %v5275, %v5283
    %v5286 = vsub.f32 %v5276, %v5284
    %v5287 = vmul.f32 %v5285, %v5285
    %v5288 = vmul.f32 %v5286, %v5286
    %v5289 = vsel %vm141, %v5287, 0.0
    %5290 = vadd.xlane.f32.xlu0 %v5289
    %v5291 = vpop.xlane.xlu0 %5290
    %v5292 = vsel %vm141, %v5288, 0.0
    %5293 = vadd.xlane.f32.xlu0 %v5292
    %v5294 = vpop.xlane.xlu0 %5293
    %v5295 = vmul.f32 %v5291, %v1288
    %v5296 = vmul.f32 %v5294, %v1288
    %v5297 = vadd.f32 %v5295, 1e-05
    %v5298 = vadd.f32 %v5296, 1e-05
    %v5299 = vrsqrt.pop %v5297
    %v5300 = vrsqrt.pop %v5298
    %v5301 = vmul.f32 %v5285, %v5299
    %v5302 = vmul.f32 %v5286, %v5300
    %v5303 = vlaneseq
    %v5304 = vshrl.u32 %v5303, 7
    %v5305 = vsub.s32 5, %v5304
    %v5306 = vrot.slane %v80, %v5305
    %v5307 = vmul.f32 %v5301, %v5306
    %v5308 = vmul.f32 %v5302, %v5306
    %v5309 = vlaneseq
    %v5310 = vshrl.u32 %v5309, 7
    %v5311 = vsub.s32 6, %v5310
    %v5312 = vrot.slane %v80, %v5311
    %v5313 = vadd.f32 %v5307, %v5312
    %v5314 = vadd.f32 %v5308, %v5312
    %v5315 = vld [vmem:[%s9] sm:$0x3]
    %v5316 = vsel %vm141, %v5313, 0.0
    %5317 = vadd.xlane.f32.xlu0 %v5316
    %v5318 = vpop.xlane.xlu0 %5317
    %v5319 = vsel %vm141, %v5314, 0.0
    %5320 = vadd.xlane.f32.xlu0 %v5319
    %v5321 = vpop.xlane.xlu0 %5320
    %v5322 = vmul.f32 %v5318, %v1288
    %v5323 = vmul.f32 %v5321, %v1288
    %v5324 = vsub.f32 %v5313, %v5322
    %v5325 = vsub.f32 %v5314, %v5323
    %v5326 = vmul.f32 %v5324, %v5324
    %v5327 = vmul.f32 %v5325, %v5325
    %v5328 = vsel %vm141, %v5326, 0.0
    %5329 = vadd.xlane.f32.xlu0 %v5328
    %v5330 = vpop.xlane.xlu0 %5329
    %v5331 = vsel %vm141, %v5327, 0.0
    %5332 = vadd.xlane.f32.xlu0 %v5331
    %v5333 = vpop.xlane.xlu0 %5332
    %v5334 = vmul.f32 %v5330, %v1288
    %v5335 = vmul.f32 %v5333, %v1288
    %v5336 = vadd.f32 %v5334, 1e-05
    %v5337 = vadd.f32 %v5335, 1e-05
    %v5338 = vrsqrt.pop %v5336
    %v5339 = vrsqrt.pop %v5337
    %v5340 = vmul.f32 %v5324, %v5338
    %v5341 = vmul.f32 %v5325, %v5339
    %v5342 = vlaneseq
    %v5343 = vshrl.u32 %v5342, 7
    %v5344 = vsub.s32 0, %v5343
    %v5345 = vrot.slane %v5315, %v5344
    %v5346 = vmul.f32 %v5340, %v5345
    %v5347 = vmul.f32 %v5341, %v5345
    %v5348 = vlaneseq
    %v5349 = vshrl.u32 %v5348, 7
    %v5350 = vsub.s32 1, %v5349
    %v5351 = vrot.slane %v5315, %v5350
    %v5352 = vadd.f32 %v5346, %v5351
    %v5353 = vadd.f32 %v5347, %v5351
    %5354 = vst.msk [vmem:[%s10] sm:$0xff] %vm141, %v5352
    %5355 = vst.msk [vmem:[%s10 + $0x8] sm:$0xff] %vm141, %v5353
    // Predicated region
    $region50: #{fwd.1} parent=1 // pred_check
      _
    $region51: #{fwd.1} parent=1 // pred_check_branch
      %5357 = sbr.rel (0) target = $region53
    $region52: #{fwd.1} parent=1 // pred_region
      _
    $region53: #{fwd.1} parent=1 // pred_fallthru
      _
    // Predicated region
    $region54: #{fwd.1} parent=1 // pred_check
      _
    $region55: #{fwd.1} parent=1 // pred_check_branch
      %5359 = sbr.rel (0) target = $region57
    $region56: #{fwd.1} parent=1 // pred_region
      _
    $region57: #{fwd.1} parent=1 // pred_fallthru
      _
    %5360 = vsyncpa [#allocation3], 1
    %5361 = vsyncpa [#allocation5], 1

</llo_original>
